<compile_context>
chip_gen: v5e
topology: v5e:2x2
jax: 0.10.0
libtpu: 0.0.40
codegen_flags: <defaults>
</compile_context>

<pallas_src>
import math
from functools import partial

import jax
import jax.numpy as jnp
from jax.experimental import pallas as pl
from jax.experimental.pallas import tpu as pltpu


# ----------------------------------------------------------------------------- config
CFG = dict(
    vocab=100,          # vocab size
    hidden=32,          # hidden size H
    heads=2,            # attention heads
    layers=2,           # encoder layers
    intermediate=64,    # FFN intermediate size
    max_pos=16,         # max position embeddings
    type_vocab=2,       # token type vocab (BERT default: 2)
    eps=1e-12,          # LayerNorm eps (HF BERT default)
)

_SELU_ALPHA = 1.6732632423543772848170429916717
_SELU_LAMBDA = 1.0507009873554804934193349852946


# ----------------------------------------------------------------------------- kernel helpers
def _ln(x, g, b, eps):
    mu = jnp.mean(x, axis=-1, keepdims=True)
    xc = x - mu
    var = jnp.mean(xc * xc, axis=-1, keepdims=True)
    return xc * jax.lax.rsqrt(var + eps) * g + b


def _gelu(y):  # exact (erf) GELU, HF BERT default
    return 0.5 * y * (1.0 + jax.lax.erf(y * (1.0 / math.sqrt(2.0))))


# ----------------------------------------------------------------------------- fused kernel
def _bert_cls_kernel(cfg,
                     ids_ref, seg_ref, mask_ref,
                     word_ref, pos_ref, type_ref, embg_ref, embb_ref,
                     wqkv_ref, bqkv_ref, wo_ref, bo_ref, ln1g_ref, ln1b_ref,
                     wi_ref, bi_ref, wf_ref, bf_ref, ln2g_ref, ln2b_ref,
                     poolw_ref, poolb_ref, cw1_ref, cb1_ref, cw2_ref, cb2_ref,
                     out_ref):
    eps = cfg["eps"]
    Hh = cfg["heads"]
    NL = cfg["layers"]
    V, H = word_ref.shape
    Dh = H // Hh
    SB, L = mask_ref.shape[1], mask_ref.shape[2]
    rows = SB * L

    # --- embeddings (word lookup via one-hot MXU matmul; type blend; pos broadcast) -----
    ids = ids_ref[0]                                      # [rows, 1] int32
    segf = seg_ref[0].astype(jnp.float32)                 # [rows, 1]
    one_hot = jnp.where(
        ids == jax.lax.broadcasted_iota(jnp.int32, (rows, V), 1), 1.0, 0.0
    ).astype(jnp.float32)                                  # [rows, V]
    we = jnp.dot(one_hot, word_ref[...], preferred_element_type=jnp.float32)   # [rows, H]
    pos = jnp.tile(pos_ref[...][0:L, :], (SB, 1))          # [rows, H]
    ty = type_ref[...]                                     # [2, H]  (type_vocab == 2)
    te = ty[0:1, :] + segf * (ty[1:2, :] - ty[0:1, :])     # [rows, H]
    x = _ln(we + pos + te, embg_ref[...], embb_ref[...], eps)
    # TODO(synk): embedding/attention/hidden/cls dropouts are identity in eval mode; skipped.

    amask = (1.0 - mask_ref[0]) * -10000.0                 # [SB, L] additive key mask

    # --- encoder layers (stacked weights, Python-unrolled) -------------------------------
    for l in range(NL):
        qkv = jnp.dot(x, wqkv_ref[l], preferred_element_type=jnp.float32) + bqkv_ref[l]
        wo_l = wo_ref[l]                                   # [H, H]
        attn = None
        for h in range(Hh):                                # heads = static lane slices
            qh = qkv[:, h * Dh:(h + 1) * Dh].reshape(SB, L, Dh)
            kh = qkv[:, H + h * Dh:H + (h + 1) * Dh].reshape(SB, L, Dh)
            vh = qkv[:, 2 * H + h * Dh:2 * H + (h + 1) * Dh].reshape(SB, L, Dh)
            s = jnp.einsum('bqd,bkd->bqk', qh, kh,
                           preferred_element_type=jnp.float32)   # 1/sqrt(Dh) folded in Wq
            s = s + amask[:, None, :]
            s = s - jnp.max(s, axis=-1, keepdims=True)
            p = jnp.exp(s)
            p = p * pl.reciprocal(jnp.sum(p, axis=-1, keepdims=True), approx=True)
            ctx = jnp.einsum('bqk,bkd->bqd', p, vh,
                             preferred_element_type=jnp.float32)  # [SB, L, Dh]
            part = jnp.dot(ctx.reshape(rows, Dh), wo_l[h * Dh:(h + 1) * Dh, :],
                           preferred_element_type=jnp.float32)
            attn = part if attn is None else attn + part
        attn = attn + bo_ref[l]
        x = _ln(x + attn, ln1g_ref[l], ln1b_ref[l], eps)
        inter = _gelu(jnp.dot(x, wi_ref[l], preferred_element_type=jnp.float32) + bi_ref[l])
        ffn = jnp.dot(inter, wf_ref[l], preferred_element_type=jnp.float32) + bf_ref[l]
        x = _ln(x + ffn, ln2g_ref[l], ln2b_ref[l], eps)

    # --- pooler (CLS token) + classification head ----------------------------------------
    # select CLS rows (row s*L) via one-hot matmul on the MXU (avoids sublane gather)
    row_iota = jax.lax.broadcasted_iota(jnp.int32, (SB, rows), 1)
    seq_iota = jax.lax.broadcasted_iota(jnp.int32, (SB, rows), 0)
    sel = jnp.where(row_iota == seq_iota * L, 1.0, 0.0).astype(jnp.float32)
    cls_tok = jnp.dot(sel, x, preferred_element_type=jnp.float32)        # [SB, H]

    pooled = jnp.tanh(jnp.dot(cls_tok, poolw_ref[...],
                              preferred_element_type=jnp.float32) + poolb_ref[...])
    h1 = jnp.dot(pooled, cw1_ref[...], preferred_element_type=jnp.float32) + cb1_ref[...]
    h1 = _SELU_LAMBDA * jnp.where(h1 > 0, h1, _SELU_ALPHA * (jnp.exp(h1) - 1.0))
    z = jnp.dot(h1, cw2_ref[...], preferred_element_type=jnp.float32) + cb2_ref[...]
    out_ref[0] = 1.0 / (1.0 + jnp.exp(-z))                 # sigmoid, [SB, 1]


# ----------------------------------------------------------------------------- params
def init_params(key, cfg):
    H, I = cfg["hidden"], cfg["intermediate"]
    ks = iter(jax.random.split(key, 64))
    nrm = lambda shape: (0.02 * jax.random.normal(next(ks), shape)).astype(jnp.float32)
    zeros = lambda shape: jnp.zeros(shape, jnp.float32)
    ones = lambda shape: jnp.ones(shape, jnp.float32)

    params = dict(
        word_emb=nrm((cfg["vocab"], H)),
        pos_emb=nrm((cfg["max_pos"], H)),
        type_emb=nrm((cfg["type_vocab"], H)),
        emb_ln_g=ones((H,)), emb_ln_b=zeros((H,)),
        pool_w=nrm((H, H)), pool_b=zeros((H,)),
        cls_w1=nrm((H, H // 2)), cls_b1=zeros((H // 2,)),
        cls_w2=nrm((H // 2, 1)), cls_b2=zeros((1,)),
        layers=[],
    )
    for _ in range(cfg["layers"]):
        params["layers"].append(dict(
            wq=nrm((H, H)), bq=zeros((H,)),
            wk=nrm((H, H)), bk=zeros((H,)),
            wv=nrm((H, H)), bv=zeros((H,)),
            wo=nrm((H, H)), bo=zeros((H,)),
            ln1_g=ones((H,)), ln1_b=zeros((H,)),
            wi=nrm((H, I)), bi=zeros((I,)),
            wf=nrm((I, H)), bf=zeros((H,)),
            ln2_g=ones((H,)), ln2_b=zeros((H,)),
        ))
    return params


def prepare_params(params, cfg):
    """Stack per-layer weights, fuse Q|K|V, fold attention scale into Wq/bq."""
    H, Hh = cfg["hidden"], cfg["heads"]
    scale = 1.0 / math.sqrt(H // Hh)
    lyrs = params["layers"]
    stack = lambda f: jnp.stack([f(l) for l in lyrs], axis=0)
    return dict(
        word_emb=params["word_emb"],
        pos_emb=params["pos_emb"],
        type_emb=params["type_emb"],
        emb_ln_g=params["emb_ln_g"][None, :],
        emb_ln_b=params["emb_ln_b"][None, :],
        wqkv=stack(lambda l: jnp.concatenate([l["wq"] * scale, l["wk"], l["wv"]], axis=1)),
        bqkv=stack(lambda l: jnp.concatenate([l["bq"] * scale, l["bk"], l["bv"]])[None, :]),
        wo=stack(lambda l: l["wo"]),
        bo=stack(lambda l: l["bo"][None, :]),
        ln1_g=stack(lambda l: l["ln1_g"][None, :]),
        ln1_b=stack(lambda l: l["ln1_b"][None, :]),
        wi=stack(lambda l: l["wi"]),
        bi=stack(lambda l: l["bi"][None, :]),
        wf=stack(lambda l: l["wf"]),
        bf=stack(lambda l: l["bf"][None, :]),
        ln2_g=stack(lambda l: l["ln2_g"][None, :]),
        ln2_b=stack(lambda l: l["ln2_b"][None, :]),
        pool_w=params["pool_w"], pool_b=params["pool_b"][None, :],
        cls_w1=params["cls_w1"], cls_b1=params["cls_b1"][None, :],
        cls_w2=params["cls_w2"], cls_b2=params["cls_b2"][None, :],
    )


# ----------------------------------------------------------------------------- forward
def bert_base_cls_forward(prep, input_ids, segment_ids, attn_masks, cfg=CFG):
    """Eval path of BertBaseCLS: inputs [bs, 10, L] -> sigmoid logits [bs*10]."""
    bs, n_seq, L = input_ids.shape
    N = bs * n_seq
    NB = 2 if N % 2 == 0 else 1          # sequence blocks; "parallel" -> megacore on v7x
    SB = N // NB
    rows = SB * L
    H, I, NL = cfg["hidden"], cfg["intermediate"], cfg["layers"]
    V, P, TV, H2 = cfg["vocab"], cfg["max_pos"], cfg["type_vocab"], cfg["hidden"] // 2

    ids = input_ids.reshape(NB, rows, 1).astype(jnp.int32)
    seg = segment_ids.reshape(NB, rows, 1).astype(jnp.int32)
    mask = attn_masks.reshape(NB, SB, L).astype(jnp.float32)

    seq_blk = lambda i: (i, 0, 0)
    fix2 = lambda i: (0, 0)
    fix3 = lambda i: (0, 0, 0)

    in_specs = [
        pl.BlockSpec((1, rows, 1), seq_blk),        # ids
        pl.BlockSpec((1, rows, 1), seq_blk),        # seg
        pl.BlockSpec((1, SB, L), seq_blk),          # attention mask
        pl.BlockSpec((V, H), fix2),                 # word emb table
        pl.BlockSpec((P, H), fix2),                 # pos emb table
        pl.BlockSpec((TV, H), fix2),                # type emb table
        pl.BlockSpec((1, H), fix2),                 # emb LN gamma
        pl.BlockSpec((1, H), fix2),                 # emb LN beta
        pl.BlockSpec((NL, H, 3 * H), fix3),         # wqkv (fused, scale folded)
        pl.BlockSpec((NL, 1, 3 * H), fix3),         # bqkv
        pl.BlockSpec((NL, H, H), fix3),             # wo
        pl.BlockSpec((NL, 1, H), fix3),             # bo
        pl.BlockSpec((NL, 1, H), fix3),             # ln1 gamma
        pl.BlockSpec((NL, 1, H), fix3),             # ln1 beta
        pl.BlockSpec((NL, H, I), fix3),             # wi
        pl.BlockSpec((NL, 1, I), fix3),             # bi
        pl.BlockSpec((NL, I, H), fix3),             # wf
        pl.BlockSpec((NL, 1, H), fix3),             # bf
        pl.BlockSpec((NL, 1, H), fix3),             # ln2 gamma
        pl.BlockSpec((NL, 1, H), fix3),             # ln2 beta
        pl.BlockSpec((H, H), fix2),                 # pooler W
        pl.BlockSpec((1, H), fix2),                 # pooler b
        pl.BlockSpec((H, H2), fix2),                # cls W1
        pl.BlockSpec((1, H2), fix2),                # cls b1
        pl.BlockSpec((H2, 1), fix2),                # cls W2
        pl.BlockSpec((1, 1), fix2),                 # cls b2
    ]

    logits = pl.pallas_call(
        partial(_bert_cls_kernel, cfg),
        out_shape=jax.ShapeDtypeStruct((NB, SB, 1), jnp.float32),
        grid=(NB,),
        in_specs=in_specs,
        out_specs=pl.BlockSpec((1, SB, 1), seq_blk),
        compiler_params=pltpu.CompilerParams(dimension_semantics=("parallel",)),
    )(ids, seg, mask,
      prep["word_emb"], prep["pos_emb"], prep["type_emb"],
      prep["emb_ln_g"], prep["emb_ln_b"],
      prep["wqkv"], prep["bqkv"], prep["wo"], prep["bo"],
      prep["ln1_g"], prep["ln1_b"],
      prep["wi"], prep["bi"], prep["wf"], prep["bf"],
      prep["ln2_g"], prep["ln2_b"],
      prep["pool_w"], prep["pool_b"],
      prep["cls_w1"], prep["cls_b1"], prep["cls_w2"], prep["cls_b2"])

    return logits.reshape(N)                        # [bs*10]


# ----------------------------------------------------------------------------- main
if __name__ == "__main__":
    key = jax.random.PRNGKey(0)
    k_par, k_ids, k_seg, k_len = jax.random.split(key, 4)

    bs, n_seq, L = 2, 10, 8
    params = init_params(k_par, CFG)
    prep = prepare_params(params, CFG)

    input_ids = jax.random.randint(k_ids, (bs, n_seq, L), 0, CFG["vocab"], dtype=jnp.int32)
    segment_ids = jax.random.randint(k_seg, (bs, n_seq, L), 0, CFG["type_vocab"], dtype=jnp.int32)
    lengths = jax.random.randint(k_len, (bs, n_seq, 1), 4, L + 1, dtype=jnp.int32)
    attn_masks = (jnp.arange(L)[None, None, :] < lengths).astype(jnp.int32)

    fwd = jax.jit(partial(bert_base_cls_forward, cfg=CFG))
    logits = fwd(prep, input_ids, segment_ids, attn_masks)
    jax.block_until_ready(logits)

    assert logits.shape == (bs * n_seq,)
    assert bool(jnp.all(jnp.isfinite(logits)))
    assert bool(jnp.all((logits >= 0.0) & (logits <= 1.0)))  # sigmoid output range
    print("KERNEL_OK")
</pallas_src>

<mosaic_0001>
module attributes {stable_mosaic.version = 11 : i64} {
  func.func @_bert_cls_kernel(%arg0: i32, %arg1: memref<1x80x1xi32, #tpu.memory_space<vmem>>, %arg2: memref<1x80x1xi32, #tpu.memory_space<vmem>>, %arg3: memref<1x10x8xf32, #tpu.memory_space<vmem>>, %arg4: memref<100x32xf32, #tpu.memory_space<vmem>>, %arg5: memref<16x32xf32, #tpu.memory_space<vmem>>, %arg6: memref<2x32xf32, #tpu.memory_space<vmem>>, %arg7: memref<1x32xf32, #tpu.memory_space<vmem>>, %arg8: memref<1x32xf32, #tpu.memory_space<vmem>>, %arg9: memref<2x32x96xf32, #tpu.memory_space<vmem>>, %arg10: memref<2x1x96xf32, #tpu.memory_space<vmem>>, %arg11: memref<2x32x32xf32, #tpu.memory_space<vmem>>, %arg12: memref<2x1x32xf32, #tpu.memory_space<vmem>>, %arg13: memref<2x1x32xf32, #tpu.memory_space<vmem>>, %arg14: memref<2x1x32xf32, #tpu.memory_space<vmem>>, %arg15: memref<2x32x64xf32, #tpu.memory_space<vmem>>, %arg16: memref<2x1x64xf32, #tpu.memory_space<vmem>>, %arg17: memref<2x64x32xf32, #tpu.memory_space<vmem>>, %arg18: memref<2x1x32xf32, #tpu.memory_space<vmem>>, %arg19: memref<2x1x32xf32, #tpu.memory_space<vmem>>, %arg20: memref<2x1x32xf32, #tpu.memory_space<vmem>>, %arg21: memref<32x32xf32, #tpu.memory_space<vmem>>, %arg22: memref<1x32xf32, #tpu.memory_space<vmem>>, %arg23: memref<32x16xf32, #tpu.memory_space<vmem>>, %arg24: memref<1x16xf32, #tpu.memory_space<vmem>>, %arg25: memref<16x1xf32, #tpu.memory_space<vmem>>, %arg26: memref<1x1xf32, #tpu.memory_space<vmem>>, %arg27: memref<1x10x1xf32, #tpu.memory_space<vmem>>) attributes {dimension_semantics = [#tpu.dimension_semantics<parallel>], iteration_bounds = array<i64: 2>, scalar_prefetch = 0 : i64, scratch_operands = 0 : i64, tpu.core_type = #tpu.core_type<tc>, window_params = [{transform_indices = @transform_0, window_bounds = array<i64: 1, 80, 1>}, {transform_indices = @transform_1, window_bounds = array<i64: 1, 80, 1>}, {transform_indices = @transform_2, window_bounds = array<i64: 1, 10, 8>}, {pipeline_mode = #tpu.pipeline_mode<synchronous>, transform_indices = @transform_3, window_bounds = array<i64: 100, 32>}, {pipeline_mode = #tpu.pipeline_mode<synchronous>, transform_indices = @transform_4, window_bounds = array<i64: 16, 32>}, {pipeline_mode = #tpu.pipeline_mode<synchronous>, transform_indices = @transform_5, window_bounds = array<i64: 2, 32>}, {pipeline_mode = #tpu.pipeline_mode<synchronous>, transform_indices = @transform_6, window_bounds = array<i64: 1, 32>}, {pipeline_mode = #tpu.pipeline_mode<synchronous>, transform_indices = @transform_7, window_bounds = array<i64: 1, 32>}, {pipeline_mode = #tpu.pipeline_mode<synchronous>, transform_indices = @transform_8, window_bounds = array<i64: 2, 32, 96>}, {pipeline_mode = #tpu.pipeline_mode<synchronous>, transform_indices = @transform_9, window_bounds = array<i64: 2, 1, 96>}, {pipeline_mode = #tpu.pipeline_mode<synchronous>, transform_indices = @transform_10, window_bounds = array<i64: 2, 32, 32>}, {pipeline_mode = #tpu.pipeline_mode<synchronous>, transform_indices = @transform_11, window_bounds = array<i64: 2, 1, 32>}, {pipeline_mode = #tpu.pipeline_mode<synchronous>, transform_indices = @transform_12, window_bounds = array<i64: 2, 1, 32>}, {pipeline_mode = #tpu.pipeline_mode<synchronous>, transform_indices = @transform_13, window_bounds = array<i64: 2, 1, 32>}, {pipeline_mode = #tpu.pipeline_mode<synchronous>, transform_indices = @transform_14, window_bounds = array<i64: 2, 32, 64>}, {pipeline_mode = #tpu.pipeline_mode<synchronous>, transform_indices = @transform_15, window_bounds = array<i64: 2, 1, 64>}, {pipeline_mode = #tpu.pipeline_mode<synchronous>, transform_indices = @transform_16, window_bounds = array<i64: 2, 64, 32>}, {pipeline_mode = #tpu.pipeline_mode<synchronous>, transform_indices = @transform_17, window_bounds = array<i64: 2, 1, 32>}, {pipeline_mode = #tpu.pipeline_mode<synchronous>, transform_indices = @transform_18, window_bounds = array<i64: 2, 1, 32>}, {pipeline_mode = #tpu.pipeline_mode<synchronous>, transform_indices = @transform_19, window_bounds = array<i64: 2, 1, 32>}, {pipeline_mode = #tpu.pipeline_mode<synchronous>, transform_indices = @transform_20, window_bounds = array<i64: 32, 32>}, {pipeline_mode = #tpu.pipeline_mode<synchronous>, transform_indices = @transform_21, window_bounds = array<i64: 1, 32>}, {pipeline_mode = #tpu.pipeline_mode<synchronous>, transform_indices = @transform_22, window_bounds = array<i64: 32, 16>}, {pipeline_mode = #tpu.pipeline_mode<synchronous>, transform_indices = @transform_23, window_bounds = array<i64: 1, 16>}, {pipeline_mode = #tpu.pipeline_mode<synchronous>, transform_indices = @transform_24, window_bounds = array<i64: 16, 1>}, {pipeline_mode = #tpu.pipeline_mode<synchronous>, transform_indices = @transform_25, window_bounds = array<i64: 1, 1>}, {transform_indices = @transform_26, window_bounds = array<i64: 1, 10, 1>}]} {
    %c0 = arith.constant 0 : index
    %c0_0 = arith.constant 0 : index
    %c0_1 = arith.constant 0 : index
    %0 = vector.load %arg1[%c0, %c0_0, %c0_1] : memref<1x80x1xi32, #tpu.memory_space<vmem>>, vector<1x80x1xi32>
    %1 = vector.shape_cast %0 : vector<1x80x1xi32> to vector<80x1xi32>
    %c0_2 = arith.constant 0 : index
    %c0_3 = arith.constant 0 : index
    %c0_4 = arith.constant 0 : index
    %2 = vector.load %arg2[%c0_2, %c0_3, %c0_4] : memref<1x80x1xi32, #tpu.memory_space<vmem>>, vector<1x80x1xi32>
    %3 = vector.shape_cast %2 : vector<1x80x1xi32> to vector<80x1xi32>
    %4 = arith.sitofp %3 : vector<80x1xi32> to vector<80x1xf32>
    %5 = tpu.iota {dimensions = array<i32: 1>} : vector<80x100xi32>
    %6 = vector.broadcast %1 : vector<80x1xi32> to vector<80x100xi32>
    %7 = arith.cmpi eq, %6, %5 : vector<80x100xi32>
    %cst = arith.constant 1.000000e+00 : f32
    %cst_5 = arith.constant 0.000000e+00 : f32
    %8 = vector.broadcast %cst : f32 to vector<80x100xf32>
    %9 = vector.broadcast %cst_5 : f32 to vector<80x100xf32>
    %10 = arith.select %7, %8, %9 : vector<80x100xi1>, vector<80x100xf32>
    %c0_6 = arith.constant 0 : index
    %c0_7 = arith.constant 0 : index
    %11 = vector.load %arg4[%c0_6, %c0_7] : memref<100x32xf32, #tpu.memory_space<vmem>>, vector<100x32xf32>
    %cst_8 = arith.constant dense<0.000000e+00> : vector<80x32xf32>
    %12 = tpu.matmul %10, %11, %cst_8 {dimension_numbers = #tpu.dot_dimension_numbers<[1], [0], [0], [1], [0, 0, 1, 1], [], []>} : vector<80x100xf32>, vector<100x32xf32>, vector<80x32xf32> -> vector<80x32xf32>
    %c0_9 = arith.constant 0 : index
    %c0_10 = arith.constant 0 : index
    %13 = vector.load %arg5[%c0_9, %c0_10] : memref<16x32xf32, #tpu.memory_space<vmem>>, vector<16x32xf32>
    %14 = vector.extract_strided_slice %13 {offsets = [0, 0], sizes = [8, 32], strides = [1, 1]} : vector<16x32xf32> to vector<8x32xf32>
    %15 = tpu.concatenate %14, %14, %14, %14, %14, %14, %14, %14, %14, %14 in 0 : vector<8x32xf32>, vector<8x32xf32>, vector<8x32xf32>, vector<8x32xf32>, vector<8x32xf32>, vector<8x32xf32>, vector<8x32xf32>, vector<8x32xf32>, vector<8x32xf32>, vector<8x32xf32> -> vector<80x32xf32>
    %c0_11 = arith.constant 0 : index
    %c0_12 = arith.constant 0 : index
    %16 = vector.load %arg6[%c0_11, %c0_12] : memref<2x32xf32, #tpu.memory_space<vmem>>, vector<2x32xf32>
    %17 = vector.extract_strided_slice %16 {offsets = [0, 0], sizes = [1, 32], strides = [1, 1]} : vector<2x32xf32> to vector<1x32xf32>
    %18 = vector.extract_strided_slice %16 {offsets = [1, 0], sizes = [1, 32], strides = [1, 1]} : vector<2x32xf32> to vector<1x32xf32>
    %19 = vector.extract_strided_slice %16 {offsets = [0, 0], sizes = [1, 32], strides = [1, 1]} : vector<2x32xf32> to vector<1x32xf32>
    %20 = arith.subf %18, %19 : vector<1x32xf32>
    %21 = vector.broadcast %4 : vector<80x1xf32> to vector<80x32xf32>
    %22 = vector.broadcast %20 : vector<1x32xf32> to vector<80x32xf32>
    %23 = arith.mulf %21, %22 : vector<80x32xf32>
    %24 = vector.broadcast %17 : vector<1x32xf32> to vector<80x32xf32>
    %25 = arith.addf %24, %23 : vector<80x32xf32>
    %26 = arith.addf %12, %15 : vector<80x32xf32>
    %27 = arith.addf %26, %25 : vector<80x32xf32>
    %c0_13 = arith.constant 0 : index
    %c0_14 = arith.constant 0 : index
    %28 = vector.load %arg7[%c0_13, %c0_14] : memref<1x32xf32, #tpu.memory_space<vmem>>, vector<1x32xf32>
    %c0_15 = arith.constant 0 : index
    %c0_16 = arith.constant 0 : index
    %29 = vector.load %arg8[%c0_15, %c0_16] : memref<1x32xf32, #tpu.memory_space<vmem>>, vector<1x32xf32>
    %cst_17 = arith.constant dense<0.000000e+00> : vector<80xf32>
    %30 = vector.multi_reduction <add>, %27, %cst_17 [1] : vector<80x32xf32> to vector<80xf32>
    %31 = vector.shape_cast %30 : vector<80xf32> to vector<80x1xf32>
    %cst_18 = arith.constant 3.200000e+01 : f32
    %32 = vector.broadcast %cst_18 : f32 to vector<80x1xf32>
    %33 = arith.divf %31, %32 : vector<80x1xf32>
    %34 = vector.broadcast %33 : vector<80x1xf32> to vector<80x32xf32>
    %35 = arith.subf %27, %34 : vector<80x32xf32>
    %36 = arith.mulf %35, %35 : vector<80x32xf32>
    %cst_19 = arith.constant dense<0.000000e+00> : vector<80xf32>
    %37 = vector.multi_reduction <add>, %36, %cst_19 [1] : vector<80x32xf32> to vector<80xf32>
    %38 = vector.shape_cast %37 : vector<80xf32> to vector<80x1xf32>
    %cst_20 = arith.constant 3.200000e+01 : f32
    %39 = vector.broadcast %cst_20 : f32 to vector<80x1xf32>
    %40 = arith.divf %38, %39 : vector<80x1xf32>
    %cst_21 = arith.constant 9.99999996E-13 : f32
    %41 = vector.broadcast %cst_21 : f32 to vector<80x1xf32>
    %42 = arith.addf %40, %41 : vector<80x1xf32>
    %43 = math.rsqrt %42 : vector<80x1xf32>
    %44 = vector.broadcast %43 : vector<80x1xf32> to vector<80x32xf32>
    %45 = arith.mulf %35, %44 : vector<80x32xf32>
    %46 = vector.broadcast %28 : vector<1x32xf32> to vector<80x32xf32>
    %47 = arith.mulf %45, %46 : vector<80x32xf32>
    %48 = vector.broadcast %29 : vector<1x32xf32> to vector<80x32xf32>
    %49 = arith.addf %47, %48 : vector<80x32xf32>
    %c0_22 = arith.constant 0 : index
    %c0_23 = arith.constant 0 : index
    %c0_24 = arith.constant 0 : index
    %50 = vector.load %arg3[%c0_22, %c0_23, %c0_24] : memref<1x10x8xf32, #tpu.memory_space<vmem>>, vector<1x10x8xf32>
    %51 = vector.shape_cast %50 : vector<1x10x8xf32> to vector<10x8xf32>
    %cst_25 = arith.constant 1.000000e+00 : f32
    %52 = vector.broadcast %cst_25 : f32 to vector<10x8xf32>
    %53 = arith.subf %52, %51 : vector<10x8xf32>
    %cst_26 = arith.constant -1.000000e+04 : f32
    %54 = vector.broadcast %cst_26 : f32 to vector<10x8xf32>
    %55 = arith.mulf %53, %54 : vector<10x8xf32>
    %c0_27 = arith.constant 0 : index
    %c0_28 = arith.constant 0 : index
    %c0_29 = arith.constant 0 : index
    %56 = vector.load %arg9[%c0_27, %c0_28, %c0_29] : memref<2x32x96xf32, #tpu.memory_space<vmem>>, vector<1x32x96xf32>
    %57 = vector.shape_cast %56 : vector<1x32x96xf32> to vector<32x96xf32>
    %cst_30 = arith.constant dense<0.000000e+00> : vector<80x96xf32>
    %58 = tpu.matmul %49, %57, %cst_30 {dimension_numbers = #tpu.dot_dimension_numbers<[1], [0], [0], [1], [0, 0, 1, 1], [], []>} : vector<80x32xf32>, vector<32x96xf32>, vector<80x96xf32> -> vector<80x96xf32>
    %c0_31 = arith.constant 0 : index
    %c0_32 = arith.constant 0 : index
    %c0_33 = arith.constant 0 : index
    %59 = vector.load %arg10[%c0_31, %c0_32, %c0_33] : memref<2x1x96xf32, #tpu.memory_space<vmem>>, vector<1x1x96xf32>
    %60 = vector.shape_cast %59 : vector<1x1x96xf32> to vector<1x96xf32>
    %61 = vector.broadcast %60 : vector<1x96xf32> to vector<80x96xf32>
    %62 = arith.addf %58, %61 : vector<80x96xf32>
    %c0_34 = arith.constant 0 : index
    %c0_35 = arith.constant 0 : index
    %c0_36 = arith.constant 0 : index
    %63 = vector.load %arg11[%c0_34, %c0_35, %c0_36] : memref<2x32x32xf32, #tpu.memory_space<vmem>>, vector<1x32x32xf32>
    %64 = vector.shape_cast %63 : vector<1x32x32xf32> to vector<32x32xf32>
    %65 = vector.extract_strided_slice %62 {offsets = [0, 0], sizes = [80, 16], strides = [1, 1]} : vector<80x96xf32> to vector<80x16xf32>
    %66 = vector.shape_cast %65 : vector<80x16xf32> to vector<10x8x16xf32>
    %67 = vector.extract_strided_slice %62 {offsets = [0, 32], sizes = [80, 16], strides = [1, 1]} : vector<80x96xf32> to vector<80x16xf32>
    %68 = vector.shape_cast %67 : vector<80x16xf32> to vector<10x8x16xf32>
    %69 = vector.extract_strided_slice %62 {offsets = [0, 64], sizes = [80, 16], strides = [1, 1]} : vector<80x96xf32> to vector<80x16xf32>
    %70 = vector.shape_cast %69 : vector<80x16xf32> to vector<10x8x16xf32>
    "tpu.trace_start"() <{level = 10 : i32, message = "bqd,bkd->bqk"}> : () -> ()
    %cst_37 = arith.constant dense<0.000000e+00> : vector<10x8x8xf32>
    %71 = tpu.matmul %66, %68, %cst_37 {dimension_numbers = #tpu.dot_dimension_numbers<[2], [2], [1], [1], [0, 0, 0, 1, 1, 1], [0], [0]>} : vector<10x8x16xf32>, vector<10x8x16xf32>, vector<10x8x8xf32> -> vector<10x8x8xf32>
    "tpu.trace_stop"() : () -> ()
    %72 = vector.shape_cast %55 : vector<10x8xf32> to vector<10x1x8xf32>
    %73 = vector.broadcast %72 : vector<10x1x8xf32> to vector<10x8x8xf32>
    %74 = arith.addf %71, %73 : vector<10x8x8xf32>
    %cst_38 = arith.constant dense<0xFF800000> : vector<10x8xf32>
    %75 = vector.multi_reduction <maximumf>, %74, %cst_38 [2] : vector<10x8x8xf32> to vector<10x8xf32>
    %76 = vector.shape_cast %75 : vector<10x8xf32> to vector<10x8x1xf32>
    %77 = vector.broadcast %76 : vector<10x8x1xf32> to vector<10x8x8xf32>
    %78 = arith.subf %74, %77 : vector<10x8x8xf32>
    %79 = math.exp %78 : vector<10x8x8xf32>
    %cst_39 = arith.constant dense<0.000000e+00> : vector<10x8xf32>
    %80 = vector.multi_reduction <add>, %79, %cst_39 [2] : vector<10x8x8xf32> to vector<10x8xf32>
    %81 = vector.shape_cast %80 : vector<10x8xf32> to vector<10x8x1xf32>
    %82 = tpu.reciprocal %81 {approx = true} : vector<10x8x1xf32> -> vector<10x8x1xf32>
    %83 = vector.broadcast %82 : vector<10x8x1xf32> to vector<10x8x8xf32>
    %84 = arith.mulf %79, %83 : vector<10x8x8xf32>
    "tpu.trace_start"() <{level = 10 : i32, message = "bqk,bkd->bqd"}> : () -> ()
    %cst_40 = arith.constant dense<0.000000e+00> : vector<10x8x16xf32>
    %85 = tpu.matmul %84, %70, %cst_40 {dimension_numbers = #tpu.dot_dimension_numbers<[2], [1], [1], [2], [0, 0, 0, 1, 1, 2], [0], [0]>} : vector<10x8x8xf32>, vector<10x8x16xf32>, vector<10x8x16xf32> -> vector<10x8x16xf32>
    "tpu.trace_stop"() : () -> ()
    %86 = vector.shape_cast %85 : vector<10x8x16xf32> to vector<80x16xf32>
    %87 = vector.extract_strided_slice %64 {offsets = [0, 0], sizes = [16, 32], strides = [1, 1]} : vector<32x32xf32> to vector<16x32xf32>
    %cst_41 = arith.constant dense<0.000000e+00> : vector<80x32xf32>
    %88 = tpu.matmul %86, %87, %cst_41 {dimension_numbers = #tpu.dot_dimension_numbers<[1], [0], [0], [1], [0, 0, 1, 1], [], []>} : vector<80x16xf32>, vector<16x32xf32>, vector<80x32xf32> -> vector<80x32xf32>
    %89 = vector.extract_strided_slice %62 {offsets = [0, 16], sizes = [80, 16], strides = [1, 1]} : vector<80x96xf32> to vector<80x16xf32>
    %90 = vector.shape_cast %89 : vector<80x16xf32> to vector<10x8x16xf32>
    %91 = vector.extract_strided_slice %62 {offsets = [0, 48], sizes = [80, 16], strides = [1, 1]} : vector<80x96xf32> to vector<80x16xf32>
    %92 = vector.shape_cast %91 : vector<80x16xf32> to vector<10x8x16xf32>
    %93 = vector.extract_strided_slice %62 {offsets = [0, 80], sizes = [80, 16], strides = [1, 1]} : vector<80x96xf32> to vector<80x16xf32>
    %94 = vector.shape_cast %93 : vector<80x16xf32> to vector<10x8x16xf32>
    "tpu.trace_start"() <{level = 10 : i32, message = "bqd,bkd->bqk"}> : () -> ()
    %cst_42 = arith.constant dense<0.000000e+00> : vector<10x8x8xf32>
    %95 = tpu.matmul %90, %92, %cst_42 {dimension_numbers = #tpu.dot_dimension_numbers<[2], [2], [1], [1], [0, 0, 0, 1, 1, 1], [0], [0]>} : vector<10x8x16xf32>, vector<10x8x16xf32>, vector<10x8x8xf32> -> vector<10x8x8xf32>
    "tpu.trace_stop"() : () -> ()
    %96 = vector.shape_cast %55 : vector<10x8xf32> to vector<10x1x8xf32>
    %97 = vector.broadcast %96 : vector<10x1x8xf32> to vector<10x8x8xf32>
    %98 = arith.addf %95, %97 : vector<10x8x8xf32>
    %cst_43 = arith.constant dense<0xFF800000> : vector<10x8xf32>
    %99 = vector.multi_reduction <maximumf>, %98, %cst_43 [2] : vector<10x8x8xf32> to vector<10x8xf32>
    %100 = vector.shape_cast %99 : vector<10x8xf32> to vector<10x8x1xf32>
    %101 = vector.broadcast %100 : vector<10x8x1xf32> to vector<10x8x8xf32>
    %102 = arith.subf %98, %101 : vector<10x8x8xf32>
    %103 = math.exp %102 : vector<10x8x8xf32>
    %cst_44 = arith.constant dense<0.000000e+00> : vector<10x8xf32>
    %104 = vector.multi_reduction <add>, %103, %cst_44 [2] : vector<10x8x8xf32> to vector<10x8xf32>
    %105 = vector.shape_cast %104 : vector<10x8xf32> to vector<10x8x1xf32>
    %106 = tpu.reciprocal %105 {approx = true} : vector<10x8x1xf32> -> vector<10x8x1xf32>
    %107 = vector.broadcast %106 : vector<10x8x1xf32> to vector<10x8x8xf32>
    %108 = arith.mulf %103, %107 : vector<10x8x8xf32>
    "tpu.trace_start"() <{level = 10 : i32, message = "bqk,bkd->bqd"}> : () -> ()
    %cst_45 = arith.constant dense<0.000000e+00> : vector<10x8x16xf32>
    %109 = tpu.matmul %108, %94, %cst_45 {dimension_numbers = #tpu.dot_dimension_numbers<[2], [1], [1], [2], [0, 0, 0, 1, 1, 2], [0], [0]>} : vector<10x8x8xf32>, vector<10x8x16xf32>, vector<10x8x16xf32> -> vector<10x8x16xf32>
    "tpu.trace_stop"() : () -> ()
    %110 = vector.shape_cast %109 : vector<10x8x16xf32> to vector<80x16xf32>
    %111 = vector.extract_strided_slice %64 {offsets = [16, 0], sizes = [16, 32], strides = [1, 1]} : vector<32x32xf32> to vector<16x32xf32>
    %cst_46 = arith.constant dense<0.000000e+00> : vector<80x32xf32>
    %112 = tpu.matmul %110, %111, %cst_46 {dimension_numbers = #tpu.dot_dimension_numbers<[1], [0], [0], [1], [0, 0, 1, 1], [], []>} : vector<80x16xf32>, vector<16x32xf32>, vector<80x32xf32> -> vector<80x32xf32>
    %113 = arith.addf %88, %112 : vector<80x32xf32>
    %c0_47 = arith.constant 0 : index
    %c0_48 = arith.constant 0 : index
    %c0_49 = arith.constant 0 : index
    %114 = vector.load %arg12[%c0_47, %c0_48, %c0_49] : memref<2x1x32xf32, #tpu.memory_space<vmem>>, vector<1x1x32xf32>
    %115 = vector.shape_cast %114 : vector<1x1x32xf32> to vector<1x32xf32>
    %116 = vector.broadcast %115 : vector<1x32xf32> to vector<80x32xf32>
    %117 = arith.addf %113, %116 : vector<80x32xf32>
    %118 = arith.addf %49, %117 : vector<80x32xf32>
    %c0_50 = arith.constant 0 : index
    %c0_51 = arith.constant 0 : index
    %c0_52 = arith.constant 0 : index
    %119 = vector.load %arg13[%c0_50, %c0_51, %c0_52] : memref<2x1x32xf32, #tpu.memory_space<vmem>>, vector<1x1x32xf32>
    %120 = vector.shape_cast %119 : vector<1x1x32xf32> to vector<1x32xf32>
    %c0_53 = arith.constant 0 : index
    %c0_54 = arith.constant 0 : index
    %c0_55 = arith.constant 0 : index
    %121 = vector.load %arg14[%c0_53, %c0_54, %c0_55] : memref<2x1x32xf32, #tpu.memory_space<vmem>>, vector<1x1x32xf32>
    %122 = vector.shape_cast %121 : vector<1x1x32xf32> to vector<1x32xf32>
    %cst_56 = arith.constant dense<0.000000e+00> : vector<80xf32>
    %123 = vector.multi_reduction <add>, %118, %cst_56 [1] : vector<80x32xf32> to vector<80xf32>
    %124 = vector.shape_cast %123 : vector<80xf32> to vector<80x1xf32>
    %cst_57 = arith.constant 3.200000e+01 : f32
    %125 = vector.broadcast %cst_57 : f32 to vector<80x1xf32>
    %126 = arith.divf %124, %125 : vector<80x1xf32>
    %127 = vector.broadcast %126 : vector<80x1xf32> to vector<80x32xf32>
    %128 = arith.subf %118, %127 : vector<80x32xf32>
    %129 = arith.mulf %128, %128 : vector<80x32xf32>
    %cst_58 = arith.constant dense<0.000000e+00> : vector<80xf32>
    %130 = vector.multi_reduction <add>, %129, %cst_58 [1] : vector<80x32xf32> to vector<80xf32>
    %131 = vector.shape_cast %130 : vector<80xf32> to vector<80x1xf32>
    %cst_59 = arith.constant 3.200000e+01 : f32
    %132 = vector.broadcast %cst_59 : f32 to vector<80x1xf32>
    %133 = arith.divf %131, %132 : vector<80x1xf32>
    %cst_60 = arith.constant 9.99999996E-13 : f32
    %134 = vector.broadcast %cst_60 : f32 to vector<80x1xf32>
    %135 = arith.addf %133, %134 : vector<80x1xf32>
    %136 = math.rsqrt %135 : vector<80x1xf32>
    %137 = vector.broadcast %136 : vector<80x1xf32> to vector<80x32xf32>
    %138 = arith.mulf %128, %137 : vector<80x32xf32>
    %139 = vector.broadcast %120 : vector<1x32xf32> to vector<80x32xf32>
    %140 = arith.mulf %138, %139 : vector<80x32xf32>
    %141 = vector.broadcast %122 : vector<1x32xf32> to vector<80x32xf32>
    %142 = arith.addf %140, %141 : vector<80x32xf32>
    %c0_61 = arith.constant 0 : index
    %c0_62 = arith.constant 0 : index
    %c0_63 = arith.constant 0 : index
    %143 = vector.load %arg15[%c0_61, %c0_62, %c0_63] : memref<2x32x64xf32, #tpu.memory_space<vmem>>, vector<1x32x64xf32>
    %144 = vector.shape_cast %143 : vector<1x32x64xf32> to vector<32x64xf32>
    %cst_64 = arith.constant dense<0.000000e+00> : vector<80x64xf32>
    %145 = tpu.matmul %142, %144, %cst_64 {dimension_numbers = #tpu.dot_dimension_numbers<[1], [0], [0], [1], [0, 0, 1, 1], [], []>} : vector<80x32xf32>, vector<32x64xf32>, vector<80x64xf32> -> vector<80x64xf32>
    %c0_65 = arith.constant 0 : index
    %c0_66 = arith.constant 0 : index
    %c0_67 = arith.constant 0 : index
    %146 = vector.load %arg16[%c0_65, %c0_66, %c0_67] : memref<2x1x64xf32, #tpu.memory_space<vmem>>, vector<1x1x64xf32>
    %147 = vector.shape_cast %146 : vector<1x1x64xf32> to vector<1x64xf32>
    %148 = vector.broadcast %147 : vector<1x64xf32> to vector<80x64xf32>
    %149 = arith.addf %145, %148 : vector<80x64xf32>
    %cst_68 = arith.constant 5.000000e-01 : f32
    %150 = vector.broadcast %cst_68 : f32 to vector<80x64xf32>
    %151 = arith.mulf %150, %149 : vector<80x64xf32>
    %cst_69 = arith.constant 0.707106769 : f32
    %152 = vector.broadcast %cst_69 : f32 to vector<80x64xf32>
    %153 = arith.mulf %149, %152 : vector<80x64xf32>
    %154 = math.erf %153 : vector<80x64xf32>
    %cst_70 = arith.constant 1.000000e+00 : f32
    %155 = vector.broadcast %cst_70 : f32 to vector<80x64xf32>
    %156 = arith.addf %155, %154 : vector<80x64xf32>
    %157 = arith.mulf %151, %156 : vector<80x64xf32>
    %c0_71 = arith.constant 0 : index
    %c0_72 = arith.constant 0 : index
    %c0_73 = arith.constant 0 : index
    %158 = vector.load %arg17[%c0_71, %c0_72, %c0_73] : memref<2x64x32xf32, #tpu.memory_space<vmem>>, vector<1x64x32xf32>
    %159 = vector.shape_cast %158 : vector<1x64x32xf32> to vector<64x32xf32>
    %cst_74 = arith.constant dense<0.000000e+00> : vector<80x32xf32>
    %160 = tpu.matmul %157, %159, %cst_74 {dimension_numbers = #tpu.dot_dimension_numbers<[1], [0], [0], [1], [0, 0, 1, 1], [], []>} : vector<80x64xf32>, vector<64x32xf32>, vector<80x32xf32> -> vector<80x32xf32>
    %c0_75 = arith.constant 0 : index
    %c0_76 = arith.constant 0 : index
    %c0_77 = arith.constant 0 : index
    %161 = vector.load %arg18[%c0_75, %c0_76, %c0_77] : memref<2x1x32xf32, #tpu.memory_space<vmem>>, vector<1x1x32xf32>
    %162 = vector.shape_cast %161 : vector<1x1x32xf32> to vector<1x32xf32>
    %163 = vector.broadcast %162 : vector<1x32xf32> to vector<80x32xf32>
    %164 = arith.addf %160, %163 : vector<80x32xf32>
    %165 = arith.addf %142, %164 : vector<80x32xf32>
    %c0_78 = arith.constant 0 : index
    %c0_79 = arith.constant 0 : index
    %c0_80 = arith.constant 0 : index
    %166 = vector.load %arg19[%c0_78, %c0_79, %c0_80] : memref<2x1x32xf32, #tpu.memory_space<vmem>>, vector<1x1x32xf32>
    %167 = vector.shape_cast %166 : vector<1x1x32xf32> to vector<1x32xf32>
    %c0_81 = arith.constant 0 : index
    %c0_82 = arith.constant 0 : index
    %c0_83 = arith.constant 0 : index
    %168 = vector.load %arg20[%c0_81, %c0_82, %c0_83] : memref<2x1x32xf32, #tpu.memory_space<vmem>>, vector<1x1x32xf32>
    %169 = vector.shape_cast %168 : vector<1x1x32xf32> to vector<1x32xf32>
    %cst_84 = arith.constant dense<0.000000e+00> : vector<80xf32>
    %170 = vector.multi_reduction <add>, %165, %cst_84 [1] : vector<80x32xf32> to vector<80xf32>
    %171 = vector.shape_cast %170 : vector<80xf32> to vector<80x1xf32>
    %cst_85 = arith.constant 3.200000e+01 : f32
    %172 = vector.broadcast %cst_85 : f32 to vector<80x1xf32>
    %173 = arith.divf %171, %172 : vector<80x1xf32>
    %174 = vector.broadcast %173 : vector<80x1xf32> to vector<80x32xf32>
    %175 = arith.subf %165, %174 : vector<80x32xf32>
    %176 = arith.mulf %175, %175 : vector<80x32xf32>
    %cst_86 = arith.constant dense<0.000000e+00> : vector<80xf32>
    %177 = vector.multi_reduction <add>, %176, %cst_86 [1] : vector<80x32xf32> to vector<80xf32>
    %178 = vector.shape_cast %177 : vector<80xf32> to vector<80x1xf32>
    %cst_87 = arith.constant 3.200000e+01 : f32
    %179 = vector.broadcast %cst_87 : f32 to vector<80x1xf32>
    %180 = arith.divf %178, %179 : vector<80x1xf32>
    %cst_88 = arith.constant 9.99999996E-13 : f32
    %181 = vector.broadcast %cst_88 : f32 to vector<80x1xf32>
    %182 = arith.addf %180, %181 : vector<80x1xf32>
    %183 = math.rsqrt %182 : vector<80x1xf32>
    %184 = vector.broadcast %183 : vector<80x1xf32> to vector<80x32xf32>
    %185 = arith.mulf %175, %184 : vector<80x32xf32>
    %186 = vector.broadcast %167 : vector<1x32xf32> to vector<80x32xf32>
    %187 = arith.mulf %185, %186 : vector<80x32xf32>
    %188 = vector.broadcast %169 : vector<1x32xf32> to vector<80x32xf32>
    %189 = arith.addf %187, %188 : vector<80x32xf32>
    %c1 = arith.constant 1 : index
    %c0_89 = arith.constant 0 : index
    %c0_90 = arith.constant 0 : index
    %190 = vector.load %arg9[%c1, %c0_89, %c0_90] : memref<2x32x96xf32, #tpu.memory_space<vmem>>, vector<1x32x96xf32>
    %191 = vector.shape_cast %190 : vector<1x32x96xf32> to vector<32x96xf32>
    %cst_91 = arith.constant dense<0.000000e+00> : vector<80x96xf32>
    %192 = tpu.matmul %189, %191, %cst_91 {dimension_numbers = #tpu.dot_dimension_numbers<[1], [0], [0], [1], [0, 0, 1, 1], [], []>} : vector<80x32xf32>, vector<32x96xf32>, vector<80x96xf32> -> vector<80x96xf32>
    %c1_92 = arith.constant 1 : index
    %c0_93 = arith.constant 0 : index
    %c0_94 = arith.constant 0 : index
    %193 = vector.load %arg10[%c1_92, %c0_93, %c0_94] : memref<2x1x96xf32, #tpu.memory_space<vmem>>, vector<1x1x96xf32>
    %194 = vector.shape_cast %193 : vector<1x1x96xf32> to vector<1x96xf32>
    %195 = vector.broadcast %194 : vector<1x96xf32> to vector<80x96xf32>
    %196 = arith.addf %192, %195 : vector<80x96xf32>
    %c1_95 = arith.constant 1 : index
    %c0_96 = arith.constant 0 : index
    %c0_97 = arith.constant 0 : index
    %197 = vector.load %arg11[%c1_95, %c0_96, %c0_97] : memref<2x32x32xf32, #tpu.memory_space<vmem>>, vector<1x32x32xf32>
    %198 = vector.shape_cast %197 : vector<1x32x32xf32> to vector<32x32xf32>
    %199 = vector.extract_strided_slice %196 {offsets = [0, 0], sizes = [80, 16], strides = [1, 1]} : vector<80x96xf32> to vector<80x16xf32>
    %200 = vector.shape_cast %199 : vector<80x16xf32> to vector<10x8x16xf32>
    %201 = vector.extract_strided_slice %196 {offsets = [0, 32], sizes = [80, 16], strides = [1, 1]} : vector<80x96xf32> to vector<80x16xf32>
    %202 = vector.shape_cast %201 : vector<80x16xf32> to vector<10x8x16xf32>
    %203 = vector.extract_strided_slice %196 {offsets = [0, 64], sizes = [80, 16], strides = [1, 1]} : vector<80x96xf32> to vector<80x16xf32>
    %204 = vector.shape_cast %203 : vector<80x16xf32> to vector<10x8x16xf32>
    "tpu.trace_start"() <{level = 10 : i32, message = "bqd,bkd->bqk"}> : () -> ()
    %cst_98 = arith.constant dense<0.000000e+00> : vector<10x8x8xf32>
    %205 = tpu.matmul %200, %202, %cst_98 {dimension_numbers = #tpu.dot_dimension_numbers<[2], [2], [1], [1], [0, 0, 0, 1, 1, 1], [0], [0]>} : vector<10x8x16xf32>, vector<10x8x16xf32>, vector<10x8x8xf32> -> vector<10x8x8xf32>
    "tpu.trace_stop"() : () -> ()
    %206 = vector.shape_cast %55 : vector<10x8xf32> to vector<10x1x8xf32>
    %207 = vector.broadcast %206 : vector<10x1x8xf32> to vector<10x8x8xf32>
    %208 = arith.addf %205, %207 : vector<10x8x8xf32>
    %cst_99 = arith.constant dense<0xFF800000> : vector<10x8xf32>
    %209 = vector.multi_reduction <maximumf>, %208, %cst_99 [2] : vector<10x8x8xf32> to vector<10x8xf32>
    %210 = vector.shape_cast %209 : vector<10x8xf32> to vector<10x8x1xf32>
    %211 = vector.broadcast %210 : vector<10x8x1xf32> to vector<10x8x8xf32>
    %212 = arith.subf %208, %211 : vector<10x8x8xf32>
    %213 = math.exp %212 : vector<10x8x8xf32>
    %cst_100 = arith.constant dense<0.000000e+00> : vector<10x8xf32>
    %214 = vector.multi_reduction <add>, %213, %cst_100 [2] : vector<10x8x8xf32> to vector<10x8xf32>
    %215 = vector.shape_cast %214 : vector<10x8xf32> to vector<10x8x1xf32>
    %216 = tpu.reciprocal %215 {approx = true} : vector<10x8x1xf32> -> vector<10x8x1xf32>
    %217 = vector.broadcast %216 : vector<10x8x1xf32> to vector<10x8x8xf32>
    %218 = arith.mulf %213, %217 : vector<10x8x8xf32>
    "tpu.trace_start"() <{level = 10 : i32, message = "bqk,bkd->bqd"}> : () -> ()
    %cst_101 = arith.constant dense<0.000000e+00> : vector<10x8x16xf32>
    %219 = tpu.matmul %218, %204, %cst_101 {dimension_numbers = #tpu.dot_dimension_numbers<[2], [1], [1], [2], [0, 0, 0, 1, 1, 2], [0], [0]>} : vector<10x8x8xf32>, vector<10x8x16xf32>, vector<10x8x16xf32> -> vector<10x8x16xf32>
    "tpu.trace_stop"() : () -> ()
    %220 = vector.shape_cast %219 : vector<10x8x16xf32> to vector<80x16xf32>
    %221 = vector.extract_strided_slice %198 {offsets = [0, 0], sizes = [16, 32], strides = [1, 1]} : vector<32x32xf32> to vector<16x32xf32>
    %cst_102 = arith.constant dense<0.000000e+00> : vector<80x32xf32>
    %222 = tpu.matmul %220, %221, %cst_102 {dimension_numbers = #tpu.dot_dimension_numbers<[1], [0], [0], [1], [0, 0, 1, 1], [], []>} : vector<80x16xf32>, vector<16x32xf32>, vector<80x32xf32> -> vector<80x32xf32>
    %223 = vector.extract_strided_slice %196 {offsets = [0, 16], sizes = [80, 16], strides = [1, 1]} : vector<80x96xf32> to vector<80x16xf32>
    %224 = vector.shape_cast %223 : vector<80x16xf32> to vector<10x8x16xf32>
    %225 = vector.extract_strided_slice %196 {offsets = [0, 48], sizes = [80, 16], strides = [1, 1]} : vector<80x96xf32> to vector<80x16xf32>
    %226 = vector.shape_cast %225 : vector<80x16xf32> to vector<10x8x16xf32>
    %227 = vector.extract_strided_slice %196 {offsets = [0, 80], sizes = [80, 16], strides = [1, 1]} : vector<80x96xf32> to vector<80x16xf32>
    %228 = vector.shape_cast %227 : vector<80x16xf32> to vector<10x8x16xf32>
    "tpu.trace_start"() <{level = 10 : i32, message = "bqd,bkd->bqk"}> : () -> ()
    %cst_103 = arith.constant dense<0.000000e+00> : vector<10x8x8xf32>
    %229 = tpu.matmul %224, %226, %cst_103 {dimension_numbers = #tpu.dot_dimension_numbers<[2], [2], [1], [1], [0, 0, 0, 1, 1, 1], [0], [0]>} : vector<10x8x16xf32>, vector<10x8x16xf32>, vector<10x8x8xf32> -> vector<10x8x8xf32>
    "tpu.trace_stop"() : () -> ()
    %230 = vector.shape_cast %55 : vector<10x8xf32> to vector<10x1x8xf32>
    %231 = vector.broadcast %230 : vector<10x1x8xf32> to vector<10x8x8xf32>
    %232 = arith.addf %229, %231 : vector<10x8x8xf32>
    %cst_104 = arith.constant dense<0xFF800000> : vector<10x8xf32>
    %233 = vector.multi_reduction <maximumf>, %232, %cst_104 [2] : vector<10x8x8xf32> to vector<10x8xf32>
    %234 = vector.shape_cast %233 : vector<10x8xf32> to vector<10x8x1xf32>
    %235 = vector.broadcast %234 : vector<10x8x1xf32> to vector<10x8x8xf32>
    %236 = arith.subf %232, %235 : vector<10x8x8xf32>
    %237 = math.exp %236 : vector<10x8x8xf32>
    %cst_105 = arith.constant dense<0.000000e+00> : vector<10x8xf32>
    %238 = vector.multi_reduction <add>, %237, %cst_105 [2] : vector<10x8x8xf32> to vector<10x8xf32>
    %239 = vector.shape_cast %238 : vector<10x8xf32> to vector<10x8x1xf32>
    %240 = tpu.reciprocal %239 {approx = true} : vector<10x8x1xf32> -> vector<10x8x1xf32>
    %241 = vector.broadcast %240 : vector<10x8x1xf32> to vector<10x8x8xf32>
    %242 = arith.mulf %237, %241 : vector<10x8x8xf32>
    "tpu.trace_start"() <{level = 10 : i32, message = "bqk,bkd->bqd"}> : () -> ()
    %cst_106 = arith.constant dense<0.000000e+00> : vector<10x8x16xf32>
    %243 = tpu.matmul %242, %228, %cst_106 {dimension_numbers = #tpu.dot_dimension_numbers<[2], [1], [1], [2], [0, 0, 0, 1, 1, 2], [0], [0]>} : vector<10x8x8xf32>, vector<10x8x16xf32>, vector<10x8x16xf32> -> vector<10x8x16xf32>
    "tpu.trace_stop"() : () -> ()
    %244 = vector.shape_cast %243 : vector<10x8x16xf32> to vector<80x16xf32>
    %245 = vector.extract_strided_slice %198 {offsets = [16, 0], sizes = [16, 32], strides = [1, 1]} : vector<32x32xf32> to vector<16x32xf32>
    %cst_107 = arith.constant dense<0.000000e+00> : vector<80x32xf32>
    %246 = tpu.matmul %244, %245, %cst_107 {dimension_numbers = #tpu.dot_dimension_numbers<[1], [0], [0], [1], [0, 0, 1, 1], [], []>} : vector<80x16xf32>, vector<16x32xf32>, vector<80x32xf32> -> vector<80x32xf32>
    %247 = arith.addf %222, %246 : vector<80x32xf32>
    %c1_108 = arith.constant 1 : index
    %c0_109 = arith.constant 0 : index
    %c0_110 = arith.constant 0 : index
    %248 = vector.load %arg12[%c1_108, %c0_109, %c0_110] : memref<2x1x32xf32, #tpu.memory_space<vmem>>, vector<1x1x32xf32>
    %249 = vector.shape_cast %248 : vector<1x1x32xf32> to vector<1x32xf32>
    %250 = vector.broadcast %249 : vector<1x32xf32> to vector<80x32xf32>
    %251 = arith.addf %247, %250 : vector<80x32xf32>
    %252 = arith.addf %189, %251 : vector<80x32xf32>
    %c1_111 = arith.constant 1 : index
    %c0_112 = arith.constant 0 : index
    %c0_113 = arith.constant 0 : index
    %253 = vector.load %arg13[%c1_111, %c0_112, %c0_113] : memref<2x1x32xf32, #tpu.memory_space<vmem>>, vector<1x1x32xf32>
    %254 = vector.shape_cast %253 : vector<1x1x32xf32> to vector<1x32xf32>
    %c1_114 = arith.constant 1 : index
    %c0_115 = arith.constant 0 : index
    %c0_116 = arith.constant 0 : index
    %255 = vector.load %arg14[%c1_114, %c0_115, %c0_116] : memref<2x1x32xf32, #tpu.memory_space<vmem>>, vector<1x1x32xf32>
    %256 = vector.shape_cast %255 : vector<1x1x32xf32> to vector<1x32xf32>
    %cst_117 = arith.constant dense<0.000000e+00> : vector<80xf32>
    %257 = vector.multi_reduction <add>, %252, %cst_117 [1] : vector<80x32xf32> to vector<80xf32>
    %258 = vector.shape_cast %257 : vector<80xf32> to vector<80x1xf32>
    %cst_118 = arith.constant 3.200000e+01 : f32
    %259 = vector.broadcast %cst_118 : f32 to vector<80x1xf32>
    %260 = arith.divf %258, %259 : vector<80x1xf32>
    %261 = vector.broadcast %260 : vector<80x1xf32> to vector<80x32xf32>
    %262 = arith.subf %252, %261 : vector<80x32xf32>
    %263 = arith.mulf %262, %262 : vector<80x32xf32>
    %cst_119 = arith.constant dense<0.000000e+00> : vector<80xf32>
    %264 = vector.multi_reduction <add>, %263, %cst_119 [1] : vector<80x32xf32> to vector<80xf32>
    %265 = vector.shape_cast %264 : vector<80xf32> to vector<80x1xf32>
    %cst_120 = arith.constant 3.200000e+01 : f32
    %266 = vector.broadcast %cst_120 : f32 to vector<80x1xf32>
    %267 = arith.divf %265, %266 : vector<80x1xf32>
    %cst_121 = arith.constant 9.99999996E-13 : f32
    %268 = vector.broadcast %cst_121 : f32 to vector<80x1xf32>
    %269 = arith.addf %267, %268 : vector<80x1xf32>
    %270 = math.rsqrt %269 : vector<80x1xf32>
    %271 = vector.broadcast %270 : vector<80x1xf32> to vector<80x32xf32>
    %272 = arith.mulf %262, %271 : vector<80x32xf32>
    %273 = vector.broadcast %254 : vector<1x32xf32> to vector<80x32xf32>
    %274 = arith.mulf %272, %273 : vector<80x32xf32>
    %275 = vector.broadcast %256 : vector<1x32xf32> to vector<80x32xf32>
    %276 = arith.addf %274, %275 : vector<80x32xf32>
    %c1_122 = arith.constant 1 : index
    %c0_123 = arith.constant 0 : index
    %c0_124 = arith.constant 0 : index
    %277 = vector.load %arg15[%c1_122, %c0_123, %c0_124] : memref<2x32x64xf32, #tpu.memory_space<vmem>>, vector<1x32x64xf32>
    %278 = vector.shape_cast %277 : vector<1x32x64xf32> to vector<32x64xf32>
    %cst_125 = arith.constant dense<0.000000e+00> : vector<80x64xf32>
    %279 = tpu.matmul %276, %278, %cst_125 {dimension_numbers = #tpu.dot_dimension_numbers<[1], [0], [0], [1], [0, 0, 1, 1], [], []>} : vector<80x32xf32>, vector<32x64xf32>, vector<80x64xf32> -> vector<80x64xf32>
    %c1_126 = arith.constant 1 : index
    %c0_127 = arith.constant 0 : index
    %c0_128 = arith.constant 0 : index
    %280 = vector.load %arg16[%c1_126, %c0_127, %c0_128] : memref<2x1x64xf32, #tpu.memory_space<vmem>>, vector<1x1x64xf32>
    %281 = vector.shape_cast %280 : vector<1x1x64xf32> to vector<1x64xf32>
    %282 = vector.broadcast %281 : vector<1x64xf32> to vector<80x64xf32>
    %283 = arith.addf %279, %282 : vector<80x64xf32>
    %cst_129 = arith.constant 5.000000e-01 : f32
    %284 = vector.broadcast %cst_129 : f32 to vector<80x64xf32>
    %285 = arith.mulf %284, %283 : vector<80x64xf32>
    %cst_130 = arith.constant 0.707106769 : f32
    %286 = vector.broadcast %cst_130 : f32 to vector<80x64xf32>
    %287 = arith.mulf %283, %286 : vector<80x64xf32>
    %288 = math.erf %287 : vector<80x64xf32>
    %cst_131 = arith.constant 1.000000e+00 : f32
    %289 = vector.broadcast %cst_131 : f32 to vector<80x64xf32>
    %290 = arith.addf %289, %288 : vector<80x64xf32>
    %291 = arith.mulf %285, %290 : vector<80x64xf32>
    %c1_132 = arith.constant 1 : index
    %c0_133 = arith.constant 0 : index
    %c0_134 = arith.constant 0 : index
    %292 = vector.load %arg17[%c1_132, %c0_133, %c0_134] : memref<2x64x32xf32, #tpu.memory_space<vmem>>, vector<1x64x32xf32>
    %293 = vector.shape_cast %292 : vector<1x64x32xf32> to vector<64x32xf32>
    %cst_135 = arith.constant dense<0.000000e+00> : vector<80x32xf32>
    %294 = tpu.matmul %291, %293, %cst_135 {dimension_numbers = #tpu.dot_dimension_numbers<[1], [0], [0], [1], [0, 0, 1, 1], [], []>} : vector<80x64xf32>, vector<64x32xf32>, vector<80x32xf32> -> vector<80x32xf32>
    %c1_136 = arith.constant 1 : index
    %c0_137 = arith.constant 0 : index
    %c0_138 = arith.constant 0 : index
    %295 = vector.load %arg18[%c1_136, %c0_137, %c0_138] : memref<2x1x32xf32, #tpu.memory_space<vmem>>, vector<1x1x32xf32>
    %296 = vector.shape_cast %295 : vector<1x1x32xf32> to vector<1x32xf32>
    %297 = vector.broadcast %296 : vector<1x32xf32> to vector<80x32xf32>
    %298 = arith.addf %294, %297 : vector<80x32xf32>
    %299 = arith.addf %276, %298 : vector<80x32xf32>
    %c1_139 = arith.constant 1 : index
    %c0_140 = arith.constant 0 : index
    %c0_141 = arith.constant 0 : index
    %300 = vector.load %arg19[%c1_139, %c0_140, %c0_141] : memref<2x1x32xf32, #tpu.memory_space<vmem>>, vector<1x1x32xf32>
    %301 = vector.shape_cast %300 : vector<1x1x32xf32> to vector<1x32xf32>
    %c1_142 = arith.constant 1 : index
    %c0_143 = arith.constant 0 : index
    %c0_144 = arith.constant 0 : index
    %302 = vector.load %arg20[%c1_142, %c0_143, %c0_144] : memref<2x1x32xf32, #tpu.memory_space<vmem>>, vector<1x1x32xf32>
    %303 = vector.shape_cast %302 : vector<1x1x32xf32> to vector<1x32xf32>
    %cst_145 = arith.constant dense<0.000000e+00> : vector<80xf32>
    %304 = vector.multi_reduction <add>, %299, %cst_145 [1] : vector<80x32xf32> to vector<80xf32>
    %305 = vector.shape_cast %304 : vector<80xf32> to vector<80x1xf32>
    %cst_146 = arith.constant 3.200000e+01 : f32
    %306 = vector.broadcast %cst_146 : f32 to vector<80x1xf32>
    %307 = arith.divf %305, %306 : vector<80x1xf32>
    %308 = vector.broadcast %307 : vector<80x1xf32> to vector<80x32xf32>
    %309 = arith.subf %299, %308 : vector<80x32xf32>
    %310 = arith.mulf %309, %309 : vector<80x32xf32>
    %cst_147 = arith.constant dense<0.000000e+00> : vector<80xf32>
    %311 = vector.multi_reduction <add>, %310, %cst_147 [1] : vector<80x32xf32> to vector<80xf32>
    %312 = vector.shape_cast %311 : vector<80xf32> to vector<80x1xf32>
    %cst_148 = arith.constant 3.200000e+01 : f32
    %313 = vector.broadcast %cst_148 : f32 to vector<80x1xf32>
    %314 = arith.divf %312, %313 : vector<80x1xf32>
    %cst_149 = arith.constant 9.99999996E-13 : f32
    %315 = vector.broadcast %cst_149 : f32 to vector<80x1xf32>
    %316 = arith.addf %314, %315 : vector<80x1xf32>
    %317 = math.rsqrt %316 : vector<80x1xf32>
    %318 = vector.broadcast %317 : vector<80x1xf32> to vector<80x32xf32>
    %319 = arith.mulf %309, %318 : vector<80x32xf32>
    %320 = vector.broadcast %301 : vector<1x32xf32> to vector<80x32xf32>
    %321 = arith.mulf %319, %320 : vector<80x32xf32>
    %322 = vector.broadcast %303 : vector<1x32xf32> to vector<80x32xf32>
    %323 = arith.addf %321, %322 : vector<80x32xf32>
    %324 = tpu.iota {dimensions = array<i32: 1>} : vector<10x80xi32>
    %325 = tpu.iota {dimensions = array<i32: 0>} : vector<10x80xi32>
    %c8_i32 = arith.constant 8 : i32
    %326 = vector.broadcast %c8_i32 : i32 to vector<10x80xi32>
    %327 = arith.muli %325, %326 : vector<10x80xi32>
    %328 = arith.cmpi eq, %324, %327 : vector<10x80xi32>
    %cst_150 = arith.constant 1.000000e+00 : f32
    %cst_151 = arith.constant 0.000000e+00 : f32
    %329 = vector.broadcast %cst_150 : f32 to vector<10x80xf32>
    %330 = vector.broadcast %cst_151 : f32 to vector<10x80xf32>
    %331 = arith.select %328, %329, %330 : vector<10x80xi1>, vector<10x80xf32>
    %cst_152 = arith.constant dense<0.000000e+00> : vector<10x32xf32>
    %332 = tpu.matmul %331, %323, %cst_152 {dimension_numbers = #tpu.dot_dimension_numbers<[1], [0], [0], [1], [0, 0, 1, 1], [], []>} : vector<10x80xf32>, vector<80x32xf32>, vector<10x32xf32> -> vector<10x32xf32>
    %c0_153 = arith.constant 0 : index
    %c0_154 = arith.constant 0 : index
    %333 = vector.load %arg21[%c0_153, %c0_154] : memref<32x32xf32, #tpu.memory_space<vmem>>, vector<32x32xf32>
    %cst_155 = arith.constant dense<0.000000e+00> : vector<10x32xf32>
    %334 = tpu.matmul %332, %333, %cst_155 {dimension_numbers = #tpu.dot_dimension_numbers<[1], [0], [0], [1], [0, 0, 1, 1], [], []>} : vector<10x32xf32>, vector<32x32xf32>, vector<10x32xf32> -> vector<10x32xf32>
    %c0_156 = arith.constant 0 : index
    %c0_157 = arith.constant 0 : index
    %335 = vector.load %arg22[%c0_156, %c0_157] : memref<1x32xf32, #tpu.memory_space<vmem>>, vector<1x32xf32>
    %336 = vector.broadcast %335 : vector<1x32xf32> to vector<10x32xf32>
    %337 = arith.addf %334, %336 : vector<10x32xf32>
    %338 = math.tanh %337 : vector<10x32xf32>
    %c0_158 = arith.constant 0 : index
    %c0_159 = arith.constant 0 : index
    %339 = vector.load %arg23[%c0_158, %c0_159] : memref<32x16xf32, #tpu.memory_space<vmem>>, vector<32x16xf32>
    %cst_160 = arith.constant dense<0.000000e+00> : vector<10x16xf32>
    %340 = tpu.matmul %338, %339, %cst_160 {dimension_numbers = #tpu.dot_dimension_numbers<[1], [0], [0], [1], [0, 0, 1, 1], [], []>} : vector<10x32xf32>, vector<32x16xf32>, vector<10x16xf32> -> vector<10x16xf32>
    %c0_161 = arith.constant 0 : index
    %c0_162 = arith.constant 0 : index
    %341 = vector.load %arg24[%c0_161, %c0_162] : memref<1x16xf32, #tpu.memory_space<vmem>>, vector<1x16xf32>
    %342 = vector.broadcast %341 : vector<1x16xf32> to vector<10x16xf32>
    %343 = arith.addf %340, %342 : vector<10x16xf32>
    %cst_163 = arith.constant 0.000000e+00 : f32
    %344 = vector.broadcast %cst_163 : f32 to vector<10x16xf32>
    %345 = arith.cmpf ogt, %343, %344 : vector<10x16xf32>
    %346 = math.exp %343 : vector<10x16xf32>
    %cst_164 = arith.constant 1.000000e+00 : f32
    %347 = vector.broadcast %cst_164 : f32 to vector<10x16xf32>
    %348 = arith.subf %346, %347 : vector<10x16xf32>
    %cst_165 = arith.constant 1.67326319 : f32
    %349 = vector.broadcast %cst_165 : f32 to vector<10x16xf32>
    %350 = arith.mulf %349, %348 : vector<10x16xf32>
    %351 = arith.select %345, %343, %350 : vector<10x16xi1>, vector<10x16xf32>
    %cst_166 = arith.constant 1.05070102 : f32
    %352 = vector.broadcast %cst_166 : f32 to vector<10x16xf32>
    %353 = arith.mulf %352, %351 : vector<10x16xf32>
    %c0_167 = arith.constant 0 : index
    %c0_168 = arith.constant 0 : index
    %354 = vector.load %arg25[%c0_167, %c0_168] : memref<16x1xf32, #tpu.memory_space<vmem>>, vector<16x1xf32>
    %cst_169 = arith.constant dense<0.000000e+00> : vector<10x1xf32>
    %355 = tpu.matmul %353, %354, %cst_169 {dimension_numbers = #tpu.dot_dimension_numbers<[1], [0], [0], [1], [0, 0, 1, 1], [], []>} : vector<10x16xf32>, vector<16x1xf32>, vector<10x1xf32> -> vector<10x1xf32>
    %c0_170 = arith.constant 0 : index
    %c0_171 = arith.constant 0 : index
    %356 = vector.load %arg26[%c0_170, %c0_171] : memref<1x1xf32, #tpu.memory_space<vmem>>, vector<1x1xf32>
    %357 = vector.broadcast %356 : vector<1x1xf32> to vector<10x1xf32>
    %358 = arith.addf %355, %357 : vector<10x1xf32>
    %cst_172 = arith.constant 0.000000e+00 : f32
    %359 = vector.broadcast %cst_172 : f32 to vector<10x1xf32>
    %360 = arith.subf %359, %358 : vector<10x1xf32>
    %361 = math.exp %360 : vector<10x1xf32>
    %cst_173 = arith.constant 1.000000e+00 : f32
    %362 = vector.broadcast %cst_173 : f32 to vector<10x1xf32>
    %363 = arith.addf %362, %361 : vector<10x1xf32>
    %cst_174 = arith.constant 1.000000e+00 : f32
    %364 = vector.broadcast %cst_174 : f32 to vector<10x1xf32>
    %365 = arith.divf %364, %363 : vector<10x1xf32>
    %c0_175 = arith.constant 0 : index
    %c0_176 = arith.constant 0 : index
    %c0_177 = arith.constant 0 : index
    %366 = vector.load %arg27[%c0_175, %c0_176, %c0_177] : memref<1x10x1xf32, #tpu.memory_space<vmem>>, vector<1x10x1xf32>
    %367 = vector.shape_cast %366 : vector<1x10x1xf32> to vector<10x1xf32>
    %368 = vector.shape_cast %365 : vector<10x1xf32> to vector<1x10x1xf32>
    tpu.vector_store %arg27[%c0_175, %c0_176, %c0_177], %368 {strides = array<i32>} : memref<1x10x1xf32, #tpu.memory_space<vmem>>, vector<1x10x1xf32>,
    return
  }
  func.func @transform_0(%arg0: i32) -> (i32, i32, i32) {
    %c0_i32 = arith.constant 0 : i32
    %c0_i32_0 = arith.constant 0 : i32
    %c0_i32_1 = arith.constant 0 : i32
    return %arg0, %c0_i32, %c0_i32_0 : i32, i32, i32
  }
  func.func @transform_1(%arg0: i32) -> (i32, i32, i32) {
    %c0_i32 = arith.constant 0 : i32
    %c0_i32_0 = arith.constant 0 : i32
    %c0_i32_1 = arith.constant 0 : i32
    return %arg0, %c0_i32, %c0_i32_0 : i32, i32, i32
  }
  func.func @transform_2(%arg0: i32) -> (i32, i32, i32) {
    %c0_i32 = arith.constant 0 : i32
    %c0_i32_0 = arith.constant 0 : i32
    %c0_i32_1 = arith.constant 0 : i32
    return %arg0, %c0_i32, %c0_i32_0 : i32, i32, i32
  }
  func.func @transform_3(%arg0: i32) -> (i32, i32) {
    %c0_i32 = arith.constant 0 : i32
    %c0_i32_0 = arith.constant 0 : i32
    %c0_i32_1 = arith.constant 0 : i32
    return %c0_i32, %c0_i32_0 : i32, i32
  }
  func.func @transform_4(%arg0: i32) -> (i32, i32) {
    %c0_i32 = arith.constant 0 : i32
    %c0_i32_0 = arith.constant 0 : i32
    %c0_i32_1 = arith.constant 0 : i32
    return %c0_i32, %c0_i32_0 : i32, i32
  }
  func.func @transform_5(%arg0: i32) -> (i32, i32) {
    %c0_i32 = arith.constant 0 : i32
    %c0_i32_0 = arith.constant 0 : i32
    %c0_i32_1 = arith.constant 0 : i32
    return %c0_i32, %c0_i32_0 : i32, i32
  }
  func.func @transform_6(%arg0: i32) -> (i32, i32) {
    %c0_i32 = arith.constant 0 : i32
    %c0_i32_0 = arith.constant 0 : i32
    %c0_i32_1 = arith.constant 0 : i32
    return %c0_i32, %c0_i32_0 : i32, i32
  }
  func.func @transform_7(%arg0: i32) -> (i32, i32) {
    %c0_i32 = arith.constant 0 : i32
    %c0_i32_0 = arith.constant 0 : i32
    %c0_i32_1 = arith.constant 0 : i32
    return %c0_i32, %c0_i32_0 : i32, i32
  }
  func.func @transform_8(%arg0: i32) -> (i32, i32, i32) {
    %c0_i32 = arith.constant 0 : i32
    %c0_i32_0 = arith.constant 0 : i32
    %c0_i32_1 = arith.constant 0 : i32
    %c0_i32_2 = arith.constant 0 : i32
    return %c0_i32, %c0_i32_0, %c0_i32_1 : i32, i32, i32
  }
  func.func @transform_9(%arg0: i32) -> (i32, i32, i32) {
    %c0_i32 = arith.constant 0 : i32
    %c0_i32_0 = arith.constant 0 : i32
    %c0_i32_1 = arith.constant 0 : i32
    %c0_i32_2 = arith.constant 0 : i32
    return %c0_i32, %c0_i32_0, %c0_i32_1 : i32, i32, i32
  }
  func.func @transform_10(%arg0: i32) -> (i32, i32, i32) {
    %c0_i32 = arith.constant 0 : i32
    %c0_i32_0 = arith.constant 0 : i32
    %c0_i32_1 = arith.constant 0 : i32
    %c0_i32_2 = arith.constant 0 : i32
    return %c0_i32, %c0_i32_0, %c0_i32_1 : i32, i32, i32
  }
  func.func @transform_11(%arg0: i32) -> (i32, i32, i32) {
    %c0_i32 = arith.constant 0 : i32
    %c0_i32_0 = arith.constant 0 : i32
    %c0_i32_1 = arith.constant 0 : i32
    %c0_i32_2 = arith.constant 0 : i32
    return %c0_i32, %c0_i32_0, %c0_i32_1 : i32, i32, i32
  }
  func.func @transform_12(%arg0: i32) -> (i32, i32, i32) {
    %c0_i32 = arith.constant 0 : i32
    %c0_i32_0 = arith.constant 0 : i32
    %c0_i32_1 = arith.constant 0 : i32
    %c0_i32_2 = arith.constant 0 : i32
    return %c0_i32, %c0_i32_0, %c0_i32_1 : i32, i32, i32
  }
  func.func @transform_13(%arg0: i32) -> (i32, i32, i32) {
    %c0_i32 = arith.constant 0 : i32
    %c0_i32_0 = arith.constant 0 : i32
    %c0_i32_1 = arith.constant 0 : i32
    %c0_i32_2 = arith.constant 0 : i32
    return %c0_i32, %c0_i32_0, %c0_i32_1 : i32, i32, i32
  }
  func.func @transform_14(%arg0: i32) -> (i32, i32, i32) {
    %c0_i32 = arith.constant 0 : i32
    %c0_i32_0 = arith.constant 0 : i32
    %c0_i32_1 = arith.constant 0 : i32
    %c0_i32_2 = arith.constant 0 : i32
    return %c0_i32, %c0_i32_0, %c0_i32_1 : i32, i32, i32
  }
  func.func @transform_15(%arg0: i32) -> (i32, i32, i32) {
    %c0_i32 = arith.constant 0 : i32
    %c0_i32_0 = arith.constant 0 : i32
    %c0_i32_1 = arith.constant 0 : i32
    %c0_i32_2 = arith.constant 0 : i32
    return %c0_i32, %c0_i32_0, %c0_i32_1 : i32, i32, i32
  }
  func.func @transform_16(%arg0: i32) -> (i32, i32, i32) {
    %c0_i32 = arith.constant 0 : i32
    %c0_i32_0 = arith.constant 0 : i32
    %c0_i32_1 = arith.constant 0 : i32
    %c0_i32_2 = arith.constant 0 : i32
    return %c0_i32, %c0_i32_0, %c0_i32_1 : i32, i32, i32
  }
  func.func @transform_17(%arg0: i32) -> (i32, i32, i32) {
    %c0_i32 = arith.constant 0 : i32
    %c0_i32_0 = arith.constant 0 : i32
    %c0_i32_1 = arith.constant 0 : i32
    %c0_i32_2 = arith.constant 0 : i32
    return %c0_i32, %c0_i32_0, %c0_i32_1 : i32, i32, i32
  }
  func.func @transform_18(%arg0: i32) -> (i32, i32, i32) {
    %c0_i32 = arith.constant 0 : i32
    %c0_i32_0 = arith.constant 0 : i32
    %c0_i32_1 = arith.constant 0 : i32
    %c0_i32_2 = arith.constant 0 : i32
    return %c0_i32, %c0_i32_0, %c0_i32_1 : i32, i32, i32
  }
  func.func @transform_19(%arg0: i32) -> (i32, i32, i32) {
    %c0_i32 = arith.constant 0 : i32
    %c0_i32_0 = arith.constant 0 : i32
    %c0_i32_1 = arith.constant 0 : i32
    %c0_i32_2 = arith.constant 0 : i32
    return %c0_i32, %c0_i32_0, %c0_i32_1 : i32, i32, i32
  }
  func.func @transform_20(%arg0: i32) -> (i32, i32) {
    %c0_i32 = arith.constant 0 : i32
    %c0_i32_0 = arith.constant 0 : i32
    %c0_i32_1 = arith.constant 0 : i32
    return %c0_i32, %c0_i32_0 : i32, i32
  }
  func.func @transform_21(%arg0: i32) -> (i32, i32) {
    %c0_i32 = arith.constant 0 : i32
    %c0_i32_0 = arith.constant 0 : i32
    %c0_i32_1 = arith.constant 0 : i32
    return %c0_i32, %c0_i32_0 : i32, i32
  }
  func.func @transform_22(%arg0: i32) -> (i32, i32) {
    %c0_i32 = arith.constant 0 : i32
    %c0_i32_0 = arith.constant 0 : i32
    %c0_i32_1 = arith.constant 0 : i32
    return %c0_i32, %c0_i32_0 : i32, i32
  }
  func.func @transform_23(%arg0: i32) -> (i32, i32) {
    %c0_i32 = arith.constant 0 : i32
    %c0_i32_0 = arith.constant 0 : i32
    %c0_i32_1 = arith.constant 0 : i32
    return %c0_i32, %c0_i32_0 : i32, i32
  }
  func.func @transform_24(%arg0: i32) -> (i32, i32) {
    %c0_i32 = arith.constant 0 : i32
    %c0_i32_0 = arith.constant 0 : i32
    %c0_i32_1 = arith.constant 0 : i32
    return %c0_i32, %c0_i32_0 : i32, i32
  }
  func.func @transform_25(%arg0: i32) -> (i32, i32) {
    %c0_i32 = arith.constant 0 : i32
    %c0_i32_0 = arith.constant 0 : i32
    %c0_i32_1 = arith.constant 0 : i32
    return %c0_i32, %c0_i32_0 : i32, i32
  }
  func.func @transform_26(%arg0: i32) -> (i32, i32, i32) {
    %c0_i32 = arith.constant 0 : i32
    %c0_i32_0 = arith.constant 0 : i32
    %c0_i32_1 = arith.constant 0 : i32
    return %arg0, %c0_i32, %c0_i32_0 : i32, i32, i32
  }
}

</mosaic_0001>

<llo_original>
// kernel: bert_base_cls_forward.1
$region0: #{bert_base_cls_forward.1}
  #allocation0 [shape = 'u32[]', space=smem, size = 0x4, offset = 0x4, fixed_abs, tag = 'smem constant byte address 0x4 - core index']
  #allocation1 [shape = 'u32[72,128]{1,0:T(1,128)}', space=vmem, size = 0x9000, scoped, tag = 'internal scratch']
  #allocation2 [shape = 'f32[1,1]{1,0:T(1,128)S(1)}', space=vmem, size = 0x200, scoped, tag = 'scoped memory for bert_base_cls_forward.1']
  %s0 = inlined_call_operand.vmem [shape: s32[2,80,1], index: 0, kind: input, shape index: {}]
  %s1 = inlined_call_operand.vmem [shape: s32[2,80,1], index: 1, kind: input, shape index: {}]
  %s2 = inlined_call_operand.vmem [shape: f32[2,10,8], index: 2, kind: input, shape index: {}]
  %s3 = inlined_call_operand.vmem [shape: f32[100,32], index: 3, kind: input, shape index: {}]
  %s4 = inlined_call_operand.vmem [shape: f32[16,32], index: 4, kind: input, shape index: {}]
  %s5 = inlined_call_operand.vmem [shape: f32[2,32], index: 5, kind: input, shape index: {}]
  %s6 = inlined_call_operand.vmem [shape: f32[1,32], index: 6, kind: input, shape index: {}]
  %s7 = inlined_call_operand.vmem [shape: f32[1,32], index: 7, kind: input, shape index: {}]
  %s8 = inlined_call_operand.vmem [shape: f32[2,32,96], index: 8, kind: input, shape index: {}]
  %s9 = inlined_call_operand.vmem [shape: f32[2,1,96], index: 9, kind: input, shape index: {}]
  %s10 = inlined_call_operand.vmem [shape: f32[2,32,32], index: 10, kind: input, shape index: {}]
  %s11 = inlined_call_operand.vmem [shape: f32[2,1,32], index: 11, kind: input, shape index: {}]
  %s12 = inlined_call_operand.vmem [shape: f32[2,1,32], index: 12, kind: input, shape index: {}]
  %s13 = inlined_call_operand.vmem [shape: f32[2,1,32], index: 13, kind: input, shape index: {}]
  %s14 = inlined_call_operand.vmem [shape: f32[2,32,64], index: 14, kind: input, shape index: {}]
  %s15 = inlined_call_operand.vmem [shape: f32[2,1,64], index: 15, kind: input, shape index: {}]
  %s16 = inlined_call_operand.vmem [shape: f32[2,64,32], index: 16, kind: input, shape index: {}]
  %s17 = inlined_call_operand.vmem [shape: f32[2,1,32], index: 17, kind: input, shape index: {}]
  %s18 = inlined_call_operand.vmem [shape: f32[2,1,32], index: 18, kind: input, shape index: {}]
  %s19 = inlined_call_operand.vmem [shape: f32[2,1,32], index: 19, kind: input, shape index: {}]
  %s20 = inlined_call_operand.vmem [shape: f32[32,32], index: 20, kind: input, shape index: {}]
  %s21 = inlined_call_operand.vmem [shape: f32[1,32], index: 21, kind: input, shape index: {}]
  %s22 = inlined_call_operand.vmem [shape: f32[32,16], index: 22, kind: input, shape index: {}]
  %s23 = inlined_call_operand.vmem [shape: f32[1,16], index: 23, kind: input, shape index: {}]
  %s24 = inlined_call_operand.vmem [shape: f32[16,1], index: 24, kind: input, shape index: {}]
  %s25 = inlined_call_operand.<no memory space> [shape: f32[1,1], index: 25, kind: input, shape index: {}]
  %s26 = inlined_call_operand.vmem [shape: f32[2,10,1], index: 26, kind: output, shape index: {}]
  %s27 = sld [smem:[#allocation0]]
  $region137: #{bert_base_cls_forward.1} parent=0
    _
  %s29 = ssub.s32 1, %s27
  %s30 = scalar_select 0, %s29, %s27
  %v31 = vstv %s25
  %32 = vst [vmem:[#allocation2] sm:$0x1] %v31
  loop: start=0, step=1, limit=4
  $region2: #{bert_base_cls_forward.1} parent=0 // loop_pre_header
    _
  $region3: #{bert_base_cls_forward.1} parent=0 // loop_header
    %s34 = sphi 0, %s38
    %p35 = scmp.ge.s32.totalorder %s34, 4
    %s44 = sphi 0, %s46
    %s47 = sphi 0, %s44
    %s48 = sphi 0, %s47
    %s64 = sphi 0, %s48
    %s70 = sphi 0, %s72
    %s73 = sphi 0, %s70
    %s74 = sphi 0, %s73
    %s90 = sphi 0, %s74
    %s96 = sphi 0, %s98
    %s99 = sphi 0, %s96
    %s100 = sphi 0, %s99
    %s116 = sphi 0, %s100
    %s120 = sphi 0, %s120
    %s122 = sphi 0, %s120
    %s123 = sphi 0, %s122
    %s137 = sphi 0, %s123
    %s141 = sphi 0, %s141
    %s143 = sphi 0, %s141
    %s144 = sphi 0, %s143
    %s158 = sphi 0, %s144
    %s162 = sphi 0, %s162
    %s164 = sphi 0, %s162
    %s165 = sphi 0, %s164
    %s179 = sphi 0, %s165
    %s183 = sphi 0, %s183
    %s185 = sphi 0, %s183
    %s186 = sphi 0, %s185
    %s200 = sphi 0, %s186
    %s204 = sphi 0, %s204
    %s206 = sphi 0, %s204
    %s207 = sphi 0, %s206
    %s221 = sphi 0, %s207
    %s225 = sphi 0, %s225
    %s227 = sphi 0, %s225
    %s228 = sphi 0, %s227
    %s242 = sphi 0, %s228
    %s246 = sphi 0, %s246
    %s248 = sphi 0, %s246
    %s249 = sphi 0, %s248
    %s263 = sphi 0, %s249
    %s267 = sphi 0, %s267
    %s269 = sphi 0, %s267
    %s270 = sphi 0, %s269
    %s284 = sphi 0, %s270
    %s288 = sphi 0, %s288
    %s290 = sphi 0, %s288
    %s291 = sphi 0, %s290
    %s305 = sphi 0, %s291
    %s309 = sphi 0, %s309
    %s311 = sphi 0, %s309
    %s312 = sphi 0, %s311
    %s326 = sphi 0, %s312
    %s330 = sphi 0, %s330
    %s332 = sphi 0, %s330
    %s333 = sphi 0, %s332
    %s347 = sphi 0, %s333
    %s351 = sphi 0, %s351
    %s353 = sphi 0, %s351
    %s354 = sphi 0, %s353
    %s368 = sphi 0, %s354
    %s372 = sphi 0, %s372
    %s374 = sphi 0, %s372
    %s375 = sphi 0, %s374
    %s389 = sphi 0, %s375
    %s393 = sphi 0, %s393
    %s395 = sphi 0, %s393
    %s396 = sphi 0, %s395
    %s410 = sphi 0, %s396
    %s414 = sphi 0, %s414
    %s416 = sphi 0, %s414
    %s417 = sphi 0, %s416
    %s431 = sphi 0, %s417
    %s435 = sphi 0, %s435
    %s437 = sphi 0, %s435
    %s438 = sphi 0, %s437
    %s452 = sphi 0, %s438
    %s456 = sphi 0, %s456
    %s458 = sphi 0, %s456
    %s459 = sphi 0, %s458
    %s473 = sphi 0, %s459
    %s477 = sphi 0, %s477
    %s479 = sphi 0, %s477
    %s480 = sphi 0, %s479
    %s494 = sphi 0, %s480
    %s498 = sphi 0, %s498
    %s500 = sphi 0, %s498
    %s501 = sphi 0, %s500
    %s515 = sphi 0, %s501
    %s519 = sphi 0, %s519
    %s521 = sphi 0, %s519
    %s522 = sphi 0, %s521
    %s536 = sphi 0, %s522
    %s540 = sphi 0, %s540
    %s542 = sphi 0, %s540
    %s543 = sphi 0, %s542
    %s557 = sphi 0, %s543
    %s561 = sphi 0, %s561
    %s563 = sphi 0, %s561
    %s564 = sphi 0, %s563
    %s578 = sphi 0, %s564
    %s582 = sphi 0, %s582
    %s584 = sphi 0, %s582
    %s585 = sphi 0, %s584
    %s599 = sphi 0, %s585
    %s605 = sphi 0, %s607
    %s608 = sphi 0, %s605
    %s609 = sphi 0, %s608
    %s625 = sphi 0, %s609
  $region4: #{bert_base_cls_forward.1} parent=0 // loop_header_branch
    %37 = sbr.rel (%p35) target = $region8
  $region5: #{bert_base_cls_forward.1} parent=0 // loop_body
    %s39 = ssub.s32 %s34, 1
    %s40 = ssub.s32 %s34, 2
    %s41 = sadd.s32 %s34, 1
    %s42 = ssub.s32 %s34, %s41
    %p43 = scmp.eq.s32.totalorder %s42, 0
    %s45 = sadd.s32 %s44, 1
    %s46 = scalar_select %p43, %s44, %s45
    %p49 = pneg %p43
    %p50 = scmp.eq.s32.totalorder %s34, 1
    %p51 = por %p49, %p50
    %p52 = scmp.ne.s32.totalorder %s44, %s47
    %p53 = scmp.eq.s32.totalorder %s34, 0
    %p54 = por %p52, %p53
    %p55 = scmp.ne.s32.totalorder %s44, %s47
    %p56 = scmp.eq.s32.totalorder %s39, 1
    %p57 = por %p55, %p56
    %p58 = scmp.ne.s32.totalorder %s47, %s48
    %p59 = scmp.eq.s32.totalorder %s39, 0
    %p60 = por %p58, %p59
    %p61 = scmp.ne.s32.totalorder %s47, %s48
    %p62 = scmp.eq.s32.totalorder %s40, 1
    %p63 = por %p61, %p62
    %p65 = scmp.ne.s32.totalorder %s48, %s64
    %p66 = scmp.eq.s32.totalorder %s40, 0
    %p67 = por %p65, %p66
    %s68 = ssub.s32 %s34, %s41
    %p69 = scmp.eq.s32.totalorder %s68, 0
    %s71 = sadd.s32 %s70, 1
    %s72 = scalar_select %p69, %s70, %s71
    %p75 = pneg %p69
    %p76 = scmp.eq.s32.totalorder %s34, 1
    %p77 = por %p75, %p76
    %p78 = scmp.ne.s32.totalorder %s70, %s73
    %p79 = scmp.eq.s32.totalorder %s34, 0
    %p80 = por %p78, %p79
    %p81 = scmp.ne.s32.totalorder %s70, %s73
    %p82 = scmp.eq.s32.totalorder %s39, 1
    %p83 = por %p81, %p82
    %p84 = scmp.ne.s32.totalorder %s73, %s74
    %p85 = scmp.eq.s32.totalorder %s39, 0
    %p86 = por %p84, %p85
    %p87 = scmp.ne.s32.totalorder %s73, %s74
    %p88 = scmp.eq.s32.totalorder %s40, 1
    %p89 = por %p87, %p88
    %p91 = scmp.ne.s32.totalorder %s74, %s90
    %p92 = scmp.eq.s32.totalorder %s40, 0
    %p93 = por %p91, %p92
    %s94 = ssub.s32 %s34, %s41
    %p95 = scmp.eq.s32.totalorder %s94, 0
    %s97 = sadd.s32 %s96, 1
    %s98 = scalar_select %p95, %s96, %s97
    %p101 = pneg %p95
    %p102 = scmp.eq.s32.totalorder %s34, 1
    %p103 = por %p101, %p102
    %p104 = scmp.ne.s32.totalorder %s96, %s99
    %p105 = scmp.eq.s32.totalorder %s34, 0
    %p106 = por %p104, %p105
    %p107 = scmp.ne.s32.totalorder %s96, %s99
    %p108 = scmp.eq.s32.totalorder %s39, 1
    %p109 = por %p107, %p108
    %p110 = scmp.ne.s32.totalorder %s99, %s100
    %p111 = scmp.eq.s32.totalorder %s39, 0
    %p112 = por %p110, %p111
    %p113 = scmp.ne.s32.totalorder %s99, %s100
    %p114 = scmp.eq.s32.totalorder %s40, 1
    %p115 = por %p113, %p114
    %p117 = scmp.ne.s32.totalorder %s100, %s116
    %p118 = scmp.eq.s32.totalorder %s40, 0
    %p119 = por %p117, %p118
    %s121 = sadd.s32 %s120, 1
    %p124 = scmp.eq.s32.totalorder %s34, 1
    %p125 = scmp.ne.s32.totalorder %s120, %s122
    %p126 = scmp.eq.s32.totalorder %s34, 0
    %p127 = por %p125, %p126
    %p128 = scmp.ne.s32.totalorder %s120, %s122
    %p129 = scmp.eq.s32.totalorder %s39, 1
    %p130 = por %p128, %p129
    %p131 = scmp.ne.s32.totalorder %s122, %s123
    %p132 = scmp.eq.s32.totalorder %s39, 0
    %p133 = por %p131, %p132
    %p134 = scmp.ne.s32.totalorder %s122, %s123
    %p135 = scmp.eq.s32.totalorder %s40, 1
    %p136 = por %p134, %p135
    %p138 = scmp.ne.s32.totalorder %s123, %s137
    %p139 = scmp.eq.s32.totalorder %s40, 0
    %p140 = por %p138, %p139
    %s142 = sadd.s32 %s141, 1
    %p145 = scmp.eq.s32.totalorder %s34, 1
    %p146 = scmp.ne.s32.totalorder %s141, %s143
    %p147 = scmp.eq.s32.totalorder %s34, 0
    %p148 = por %p146, %p147
    %p149 = scmp.ne.s32.totalorder %s141, %s143
    %p150 = scmp.eq.s32.totalorder %s39, 1
    %p151 = por %p149, %p150
    %p152 = scmp.ne.s32.totalorder %s143, %s144
    %p153 = scmp.eq.s32.totalorder %s39, 0
    %p154 = por %p152, %p153
    %p155 = scmp.ne.s32.totalorder %s143, %s144
    %p156 = scmp.eq.s32.totalorder %s40, 1
    %p157 = por %p155, %p156
    %p159 = scmp.ne.s32.totalorder %s144, %s158
    %p160 = scmp.eq.s32.totalorder %s40, 0
    %p161 = por %p159, %p160
    %s163 = sadd.s32 %s162, 1
    %p166 = scmp.eq.s32.totalorder %s34, 1
    %p167 = scmp.ne.s32.totalorder %s162, %s164
    %p168 = scmp.eq.s32.totalorder %s34, 0
    %p169 = por %p167, %p168
    %p170 = scmp.ne.s32.totalorder %s162, %s164
    %p171 = scmp.eq.s32.totalorder %s39, 1
    %p172 = por %p170, %p171
    %p173 = scmp.ne.s32.totalorder %s164, %s165
    %p174 = scmp.eq.s32.totalorder %s39, 0
    %p175 = por %p173, %p174
    %p176 = scmp.ne.s32.totalorder %s164, %s165
    %p177 = scmp.eq.s32.totalorder %s40, 1
    %p178 = por %p176, %p177
    %p180 = scmp.ne.s32.totalorder %s165, %s179
    %p181 = scmp.eq.s32.totalorder %s40, 0
    %p182 = por %p180, %p181
    %s184 = sadd.s32 %s183, 1
    %p187 = scmp.eq.s32.totalorder %s34, 1
    %p188 = scmp.ne.s32.totalorder %s183, %s185
    %p189 = scmp.eq.s32.totalorder %s34, 0
    %p190 = por %p188, %p189
    %p191 = scmp.ne.s32.totalorder %s183, %s185
    %p192 = scmp.eq.s32.totalorder %s39, 1
    %p193 = por %p191, %p192
    %p194 = scmp.ne.s32.totalorder %s185, %s186
    %p195 = scmp.eq.s32.totalorder %s39, 0
    %p196 = por %p194, %p195
    %p197 = scmp.ne.s32.totalorder %s185, %s186
    %p198 = scmp.eq.s32.totalorder %s40, 1
    %p199 = por %p197, %p198
    %p201 = scmp.ne.s32.totalorder %s186, %s200
    %p202 = scmp.eq.s32.totalorder %s40, 0
    %p203 = por %p201, %p202
    %s205 = sadd.s32 %s204, 1
    %p208 = scmp.eq.s32.totalorder %s34, 1
    %p209 = scmp.ne.s32.totalorder %s204, %s206
    %p210 = scmp.eq.s32.totalorder %s34, 0
    %p211 = por %p209, %p210
    %p212 = scmp.ne.s32.totalorder %s204, %s206
    %p213 = scmp.eq.s32.totalorder %s39, 1
    %p214 = por %p212, %p213
    %p215 = scmp.ne.s32.totalorder %s206, %s207
    %p216 = scmp.eq.s32.totalorder %s39, 0
    %p217 = por %p215, %p216
    %p218 = scmp.ne.s32.totalorder %s206, %s207
    %p219 = scmp.eq.s32.totalorder %s40, 1
    %p220 = por %p218, %p219
    %p222 = scmp.ne.s32.totalorder %s207, %s221
    %p223 = scmp.eq.s32.totalorder %s40, 0
    %p224 = por %p222, %p223
    %s226 = sadd.s32 %s225, 1
    %p229 = scmp.eq.s32.totalorder %s34, 1
    %p230 = scmp.ne.s32.totalorder %s225, %s227
    %p231 = scmp.eq.s32.totalorder %s34, 0
    %p232 = por %p230, %p231
    %p233 = scmp.ne.s32.totalorder %s225, %s227
    %p234 = scmp.eq.s32.totalorder %s39, 1
    %p235 = por %p233, %p234
    %p236 = scmp.ne.s32.totalorder %s227, %s228
    %p237 = scmp.eq.s32.totalorder %s39, 0
    %p238 = por %p236, %p237
    %p239 = scmp.ne.s32.totalorder %s227, %s228
    %p240 = scmp.eq.s32.totalorder %s40, 1
    %p241 = por %p239, %p240
    %p243 = scmp.ne.s32.totalorder %s228, %s242
    %p244 = scmp.eq.s32.totalorder %s40, 0
    %p245 = por %p243, %p244
    %s247 = sadd.s32 %s246, 1
    %p250 = scmp.eq.s32.totalorder %s34, 1
    %p251 = scmp.ne.s32.totalorder %s246, %s248
    %p252 = scmp.eq.s32.totalorder %s34, 0
    %p253 = por %p251, %p252
    %p254 = scmp.ne.s32.totalorder %s246, %s248
    %p255 = scmp.eq.s32.totalorder %s39, 1
    %p256 = por %p254, %p255
    %p257 = scmp.ne.s32.totalorder %s248, %s249
    %p258 = scmp.eq.s32.totalorder %s39, 0
    %p259 = por %p257, %p258
    %p260 = scmp.ne.s32.totalorder %s248, %s249
    %p261 = scmp.eq.s32.totalorder %s40, 1
    %p262 = por %p260, %p261
    %p264 = scmp.ne.s32.totalorder %s249, %s263
    %p265 = scmp.eq.s32.totalorder %s40, 0
    %p266 = por %p264, %p265
    %s268 = sadd.s32 %s267, 1
    %p271 = scmp.eq.s32.totalorder %s34, 1
    %p272 = scmp.ne.s32.totalorder %s267, %s269
    %p273 = scmp.eq.s32.totalorder %s34, 0
    %p274 = por %p272, %p273
    %p275 = scmp.ne.s32.totalorder %s267, %s269
    %p276 = scmp.eq.s32.totalorder %s39, 1
    %p277 = por %p275, %p276
    %p278 = scmp.ne.s32.totalorder %s269, %s270
    %p279 = scmp.eq.s32.totalorder %s39, 0
    %p280 = por %p278, %p279
    %p281 = scmp.ne.s32.totalorder %s269, %s270
    %p282 = scmp.eq.s32.totalorder %s40, 1
    %p283 = por %p281, %p282
    %p285 = scmp.ne.s32.totalorder %s270, %s284
    %p286 = scmp.eq.s32.totalorder %s40, 0
    %p287 = por %p285, %p286
    %s289 = sadd.s32 %s288, 1
    %p292 = scmp.eq.s32.totalorder %s34, 1
    %p293 = scmp.ne.s32.totalorder %s288, %s290
    %p294 = scmp.eq.s32.totalorder %s34, 0
    %p295 = por %p293, %p294
    %p296 = scmp.ne.s32.totalorder %s288, %s290
    %p297 = scmp.eq.s32.totalorder %s39, 1
    %p298 = por %p296, %p297
    %p299 = scmp.ne.s32.totalorder %s290, %s291
    %p300 = scmp.eq.s32.totalorder %s39, 0
    %p301 = por %p299, %p300
    %p302 = scmp.ne.s32.totalorder %s290, %s291
    %p303 = scmp.eq.s32.totalorder %s40, 1
    %p304 = por %p302, %p303
    %p306 = scmp.ne.s32.totalorder %s291, %s305
    %p307 = scmp.eq.s32.totalorder %s40, 0
    %p308 = por %p306, %p307
    %s310 = sadd.s32 %s309, 1
    %p313 = scmp.eq.s32.totalorder %s34, 1
    %p314 = scmp.ne.s32.totalorder %s309, %s311
    %p315 = scmp.eq.s32.totalorder %s34, 0
    %p316 = por %p314, %p315
    %p317 = scmp.ne.s32.totalorder %s309, %s311
    %p318 = scmp.eq.s32.totalorder %s39, 1
    %p319 = por %p317, %p318
    %p320 = scmp.ne.s32.totalorder %s311, %s312
    %p321 = scmp.eq.s32.totalorder %s39, 0
    %p322 = por %p320, %p321
    %p323 = scmp.ne.s32.totalorder %s311, %s312
    %p324 = scmp.eq.s32.totalorder %s40, 1
    %p325 = por %p323, %p324
    %p327 = scmp.ne.s32.totalorder %s312, %s326
    %p328 = scmp.eq.s32.totalorder %s40, 0
    %p329 = por %p327, %p328
    %s331 = sadd.s32 %s330, 1
    %p334 = scmp.eq.s32.totalorder %s34, 1
    %p335 = scmp.ne.s32.totalorder %s330, %s332
    %p336 = scmp.eq.s32.totalorder %s34, 0
    %p337 = por %p335, %p336
    %p338 = scmp.ne.s32.totalorder %s330, %s332
    %p339 = scmp.eq.s32.totalorder %s39, 1
    %p340 = por %p338, %p339
    %p341 = scmp.ne.s32.totalorder %s332, %s333
    %p342 = scmp.eq.s32.totalorder %s39, 0
    %p343 = por %p341, %p342
    %p344 = scmp.ne.s32.totalorder %s332, %s333
    %p345 = scmp.eq.s32.totalorder %s40, 1
    %p346 = por %p344, %p345
    %p348 = scmp.ne.s32.totalorder %s333, %s347
    %p349 = scmp.eq.s32.totalorder %s40, 0
    %p350 = por %p348, %p349
    %s352 = sadd.s32 %s351, 1
    %p355 = scmp.eq.s32.totalorder %s34, 1
    %p356 = scmp.ne.s32.totalorder %s351, %s353
    %p357 = scmp.eq.s32.totalorder %s34, 0
    %p358 = por %p356, %p357
    %p359 = scmp.ne.s32.totalorder %s351, %s353
    %p360 = scmp.eq.s32.totalorder %s39, 1
    %p361 = por %p359, %p360
    %p362 = scmp.ne.s32.totalorder %s353, %s354
    %p363 = scmp.eq.s32.totalorder %s39, 0
    %p364 = por %p362, %p363
    %p365 = scmp.ne.s32.totalorder %s353, %s354
    %p366 = scmp.eq.s32.totalorder %s40, 1
    %p367 = por %p365, %p366
    %p369 = scmp.ne.s32.totalorder %s354, %s368
    %p370 = scmp.eq.s32.totalorder %s40, 0
    %p371 = por %p369, %p370
    %s373 = sadd.s32 %s372, 1
    %p376 = scmp.eq.s32.totalorder %s34, 1
    %p377 = scmp.ne.s32.totalorder %s372, %s374
    %p378 = scmp.eq.s32.totalorder %s34, 0
    %p379 = por %p377, %p378
    %p380 = scmp.ne.s32.totalorder %s372, %s374
    %p381 = scmp.eq.s32.totalorder %s39, 1
    %p382 = por %p380, %p381
    %p383 = scmp.ne.s32.totalorder %s374, %s375
    %p384 = scmp.eq.s32.totalorder %s39, 0
    %p385 = por %p383, %p384
    %p386 = scmp.ne.s32.totalorder %s374, %s375
    %p387 = scmp.eq.s32.totalorder %s40, 1
    %p388 = por %p386, %p387
    %p390 = scmp.ne.s32.totalorder %s375, %s389
    %p391 = scmp.eq.s32.totalorder %s40, 0
    %p392 = por %p390, %p391
    %s394 = sadd.s32 %s393, 1
    %p397 = scmp.eq.s32.totalorder %s34, 1
    %p398 = scmp.ne.s32.totalorder %s393, %s395
    %p399 = scmp.eq.s32.totalorder %s34, 0
    %p400 = por %p398, %p399
    %p401 = scmp.ne.s32.totalorder %s393, %s395
    %p402 = scmp.eq.s32.totalorder %s39, 1
    %p403 = por %p401, %p402
    %p404 = scmp.ne.s32.totalorder %s395, %s396
    %p405 = scmp.eq.s32.totalorder %s39, 0
    %p406 = por %p404, %p405
    %p407 = scmp.ne.s32.totalorder %s395, %s396
    %p408 = scmp.eq.s32.totalorder %s40, 1
    %p409 = por %p407, %p408
    %p411 = scmp.ne.s32.totalorder %s396, %s410
    %p412 = scmp.eq.s32.totalorder %s40, 0
    %p413 = por %p411, %p412
    %s415 = sadd.s32 %s414, 1
    %p418 = scmp.eq.s32.totalorder %s34, 1
    %p419 = scmp.ne.s32.totalorder %s414, %s416
    %p420 = scmp.eq.s32.totalorder %s34, 0
    %p421 = por %p419, %p420
    %p422 = scmp.ne.s32.totalorder %s414, %s416
    %p423 = scmp.eq.s32.totalorder %s39, 1
    %p424 = por %p422, %p423
    %p425 = scmp.ne.s32.totalorder %s416, %s417
    %p426 = scmp.eq.s32.totalorder %s39, 0
    %p427 = por %p425, %p426
    %p428 = scmp.ne.s32.totalorder %s416, %s417
    %p429 = scmp.eq.s32.totalorder %s40, 1
    %p430 = por %p428, %p429
    %p432 = scmp.ne.s32.totalorder %s417, %s431
    %p433 = scmp.eq.s32.totalorder %s40, 0
    %p434 = por %p432, %p433
    %s436 = sadd.s32 %s435, 1
    %p439 = scmp.eq.s32.totalorder %s34, 1
    %p440 = scmp.ne.s32.totalorder %s435, %s437
    %p441 = scmp.eq.s32.totalorder %s34, 0
    %p442 = por %p440, %p441
    %p443 = scmp.ne.s32.totalorder %s435, %s437
    %p444 = scmp.eq.s32.totalorder %s39, 1
    %p445 = por %p443, %p444
    %p446 = scmp.ne.s32.totalorder %s437, %s438
    %p447 = scmp.eq.s32.totalorder %s39, 0
    %p448 = por %p446, %p447
    %p449 = scmp.ne.s32.totalorder %s437, %s438
    %p450 = scmp.eq.s32.totalorder %s40, 1
    %p451 = por %p449, %p450
    %p453 = scmp.ne.s32.totalorder %s438, %s452
    %p454 = scmp.eq.s32.totalorder %s40, 0
    %p455 = por %p453, %p454
    %s457 = sadd.s32 %s456, 1
    %p460 = scmp.eq.s32.totalorder %s34, 1
    %p461 = scmp.ne.s32.totalorder %s456, %s458
    %p462 = scmp.eq.s32.totalorder %s34, 0
    %p463 = por %p461, %p462
    %p464 = scmp.ne.s32.totalorder %s456, %s458
    %p465 = scmp.eq.s32.totalorder %s39, 1
    %p466 = por %p464, %p465
    %p467 = scmp.ne.s32.totalorder %s458, %s459
    %p468 = scmp.eq.s32.totalorder %s39, 0
    %p469 = por %p467, %p468
    %p470 = scmp.ne.s32.totalorder %s458, %s459
    %p471 = scmp.eq.s32.totalorder %s40, 1
    %p472 = por %p470, %p471
    %p474 = scmp.ne.s32.totalorder %s459, %s473
    %p475 = scmp.eq.s32.totalorder %s40, 0
    %p476 = por %p474, %p475
    %s478 = sadd.s32 %s477, 1
    %p481 = scmp.eq.s32.totalorder %s34, 1
    %p482 = scmp.ne.s32.totalorder %s477, %s479
    %p483 = scmp.eq.s32.totalorder %s34, 0
    %p484 = por %p482, %p483
    %p485 = scmp.ne.s32.totalorder %s477, %s479
    %p486 = scmp.eq.s32.totalorder %s39, 1
    %p487 = por %p485, %p486
    %p488 = scmp.ne.s32.totalorder %s479, %s480
    %p489 = scmp.eq.s32.totalorder %s39, 0
    %p490 = por %p488, %p489
    %p491 = scmp.ne.s32.totalorder %s479, %s480
    %p492 = scmp.eq.s32.totalorder %s40, 1
    %p493 = por %p491, %p492
    %p495 = scmp.ne.s32.totalorder %s480, %s494
    %p496 = scmp.eq.s32.totalorder %s40, 0
    %p497 = por %p495, %p496
    %s499 = sadd.s32 %s498, 1
    %p502 = scmp.eq.s32.totalorder %s34, 1
    %p503 = scmp.ne.s32.totalorder %s498, %s500
    %p504 = scmp.eq.s32.totalorder %s34, 0
    %p505 = por %p503, %p504
    %p506 = scmp.ne.s32.totalorder %s498, %s500
    %p507 = scmp.eq.s32.totalorder %s39, 1
    %p508 = por %p506, %p507
    %p509 = scmp.ne.s32.totalorder %s500, %s501
    %p510 = scmp.eq.s32.totalorder %s39, 0
    %p511 = por %p509, %p510
    %p512 = scmp.ne.s32.totalorder %s500, %s501
    %p513 = scmp.eq.s32.totalorder %s40, 1
    %p514 = por %p512, %p513
    %p516 = scmp.ne.s32.totalorder %s501, %s515
    %p517 = scmp.eq.s32.totalorder %s40, 0
    %p518 = por %p516, %p517
    %s520 = sadd.s32 %s519, 1
    %p523 = scmp.eq.s32.totalorder %s34, 1
    %p524 = scmp.ne.s32.totalorder %s519, %s521
    %p525 = scmp.eq.s32.totalorder %s34, 0
    %p526 = por %p524, %p525
    %p527 = scmp.ne.s32.totalorder %s519, %s521
    %p528 = scmp.eq.s32.totalorder %s39, 1
    %p529 = por %p527, %p528
    %p530 = scmp.ne.s32.totalorder %s521, %s522
    %p531 = scmp.eq.s32.totalorder %s39, 0
    %p532 = por %p530, %p531
    %p533 = scmp.ne.s32.totalorder %s521, %s522
    %p534 = scmp.eq.s32.totalorder %s40, 1
    %p535 = por %p533, %p534
    %p537 = scmp.ne.s32.totalorder %s522, %s536
    %p538 = scmp.eq.s32.totalorder %s40, 0
    %p539 = por %p537, %p538
    %s541 = sadd.s32 %s540, 1
    %p544 = scmp.eq.s32.totalorder %s34, 1
    %p545 = scmp.ne.s32.totalorder %s540, %s542
    %p546 = scmp.eq.s32.totalorder %s34, 0
    %p547 = por %p545, %p546
    %p548 = scmp.ne.s32.totalorder %s540, %s542
    %p549 = scmp.eq.s32.totalorder %s39, 1
    %p550 = por %p548, %p549
    %p551 = scmp.ne.s32.totalorder %s542, %s543
    %p552 = scmp.eq.s32.totalorder %s39, 0
    %p553 = por %p551, %p552
    %p554 = scmp.ne.s32.totalorder %s542, %s543
    %p555 = scmp.eq.s32.totalorder %s40, 1
    %p556 = por %p554, %p555
    %p558 = scmp.ne.s32.totalorder %s543, %s557
    %p559 = scmp.eq.s32.totalorder %s40, 0
    %p560 = por %p558, %p559
    %s562 = sadd.s32 %s561, 1
    %p565 = scmp.eq.s32.totalorder %s34, 1
    %p566 = scmp.ne.s32.totalorder %s561, %s563
    %p567 = scmp.eq.s32.totalorder %s34, 0
    %p568 = por %p566, %p567
    %p569 = scmp.ne.s32.totalorder %s561, %s563
    %p570 = scmp.eq.s32.totalorder %s39, 1
    %p571 = por %p569, %p570
    %p572 = scmp.ne.s32.totalorder %s563, %s564
    %p573 = scmp.eq.s32.totalorder %s39, 0
    %p574 = por %p572, %p573
    %p575 = scmp.ne.s32.totalorder %s563, %s564
    %p576 = scmp.eq.s32.totalorder %s40, 1
    %p577 = por %p575, %p576
    %p579 = scmp.ne.s32.totalorder %s564, %s578
    %p580 = scmp.eq.s32.totalorder %s40, 0
    %p581 = por %p579, %p580
    %s583 = sadd.s32 %s582, 1
    %p586 = scmp.eq.s32.totalorder %s34, 1
    %p587 = scmp.ne.s32.totalorder %s582, %s584
    %p588 = scmp.eq.s32.totalorder %s34, 0
    %p589 = por %p587, %p588
    %p590 = scmp.ne.s32.totalorder %s582, %s584
    %p591 = scmp.eq.s32.totalorder %s39, 1
    %p592 = por %p590, %p591
    %p593 = scmp.ne.s32.totalorder %s584, %s585
    %p594 = scmp.eq.s32.totalorder %s39, 0
    %p595 = por %p593, %p594
    %p596 = scmp.ne.s32.totalorder %s584, %s585
    %p597 = scmp.eq.s32.totalorder %s40, 1
    %p598 = por %p596, %p597
    %p600 = scmp.ne.s32.totalorder %s585, %s599
    %p601 = scmp.eq.s32.totalorder %s40, 0
    %p602 = por %p600, %p601
    %s603 = ssub.s32 %s34, %s41
    %p604 = scmp.eq.s32.totalorder %s603, 0
    %s606 = sadd.s32 %s605, 1
    %s607 = scalar_select %p604, %s605, %s606
    %p610 = pneg %p604
    %p611 = scmp.eq.s32.totalorder %s34, 1
    %p612 = por %p610, %p611
    %p613 = scmp.ne.s32.totalorder %s605, %s608
    %p614 = scmp.eq.s32.totalorder %s34, 0
    %p615 = por %p613, %p614
    %p616 = scmp.ne.s32.totalorder %s605, %s608
    %p617 = scmp.eq.s32.totalorder %s39, 1
    %p618 = por %p616, %p617
    %p619 = scmp.ne.s32.totalorder %s608, %s609
    %p620 = scmp.eq.s32.totalorder %s39, 0
    %p621 = por %p619, %p620
    %p622 = scmp.ne.s32.totalorder %s608, %s609
    %p623 = scmp.eq.s32.totalorder %s40, 1
    %p624 = por %p622, %p623
    %p626 = scmp.ne.s32.totalorder %s609, %s625
    %p627 = scmp.eq.s32.totalorder %s40, 0
    %p628 = por %p626, %p627
    %p629 = scmp.le.s32.totalorder 1, %s34
    %p630 = scmp.lt.s32.totalorder %s34, 3
    %p631 = pnand %p629, %p630
    %p632 = pneg %p631
    // Predicated region
    $region9: #{bert_base_cls_forward.1} parent=5 // pred_check
      _
    $region10: #{bert_base_cls_forward.1} parent=5 // pred_check_branch
      %634 = sbr.rel (%p631) target = $region12
    $region11: #{bert_base_cls_forward.1} parent=5 // pred_region
      %s635 = ssub.s32 %s34, 1
      // Predicated region
      $region13: #{bert_base_cls_forward.1} parent=11 // pred_check
        %p636 = pneg %p133
      $region14: #{bert_base_cls_forward.1} parent=11 // pred_check_branch
        %638 = sbr.rel (%p636) target = $region16
      $region15: #{bert_base_cls_forward.1} parent=11 // pred_region
        _
      $region16: #{bert_base_cls_forward.1} parent=11 // pred_fallthru
        _
      // Predicated region
      $region17: #{bert_base_cls_forward.1} parent=11 // pred_check
        %p639 = pneg %p154
      $region18: #{bert_base_cls_forward.1} parent=11 // pred_check_branch
        %641 = sbr.rel (%p639) target = $region20
      $region19: #{bert_base_cls_forward.1} parent=11 // pred_region
        _
      $region20: #{bert_base_cls_forward.1} parent=11 // pred_fallthru
        _
      // Predicated region
      $region21: #{bert_base_cls_forward.1} parent=11 // pred_check
        %p642 = pneg %p175
      $region22: #{bert_base_cls_forward.1} parent=11 // pred_check_branch
        %644 = sbr.rel (%p642) target = $region24
      $region23: #{bert_base_cls_forward.1} parent=11 // pred_region
        _
      $region24: #{bert_base_cls_forward.1} parent=11 // pred_fallthru
        _
      // Predicated region
      $region25: #{bert_base_cls_forward.1} parent=11 // pred_check
        %p645 = pneg %p196
      $region26: #{bert_base_cls_forward.1} parent=11 // pred_check_branch
        %647 = sbr.rel (%p645) target = $region28
      $region27: #{bert_base_cls_forward.1} parent=11 // pred_region
        _
      $region28: #{bert_base_cls_forward.1} parent=11 // pred_fallthru
        _
      // Predicated region
      $region29: #{bert_base_cls_forward.1} parent=11 // pred_check
        %p648 = pneg %p217
      $region30: #{bert_base_cls_forward.1} parent=11 // pred_check_branch
        %650 = sbr.rel (%p648) target = $region32
      $region31: #{bert_base_cls_forward.1} parent=11 // pred_region
        _
      $region32: #{bert_base_cls_forward.1} parent=11 // pred_fallthru
        _
      // Predicated region
      $region33: #{bert_base_cls_forward.1} parent=11 // pred_check
        %p651 = pneg %p238
      $region34: #{bert_base_cls_forward.1} parent=11 // pred_check_branch
        %653 = sbr.rel (%p651) target = $region36
      $region35: #{bert_base_cls_forward.1} parent=11 // pred_region
        _
      $region36: #{bert_base_cls_forward.1} parent=11 // pred_fallthru
        _
      // Predicated region
      $region37: #{bert_base_cls_forward.1} parent=11 // pred_check
        %p654 = pneg %p259
      $region38: #{bert_base_cls_forward.1} parent=11 // pred_check_branch
        %656 = sbr.rel (%p654) target = $region40
      $region39: #{bert_base_cls_forward.1} parent=11 // pred_region
        _
      $region40: #{bert_base_cls_forward.1} parent=11 // pred_fallthru
        _
      // Predicated region
      $region41: #{bert_base_cls_forward.1} parent=11 // pred_check
        %p657 = pneg %p280
      $region42: #{bert_base_cls_forward.1} parent=11 // pred_check_branch
        %659 = sbr.rel (%p657) target = $region44
      $region43: #{bert_base_cls_forward.1} parent=11 // pred_region
        _
      $region44: #{bert_base_cls_forward.1} parent=11 // pred_fallthru
        _
      // Predicated region
      $region45: #{bert_base_cls_forward.1} parent=11 // pred_check
        %p660 = pneg %p301
      $region46: #{bert_base_cls_forward.1} parent=11 // pred_check_branch
        %662 = sbr.rel (%p660) target = $region48
      $region47: #{bert_base_cls_forward.1} parent=11 // pred_region
        _
      $region48: #{bert_base_cls_forward.1} parent=11 // pred_fallthru
        _
      // Predicated region
      $region49: #{bert_base_cls_forward.1} parent=11 // pred_check
        %p663 = pneg %p322
      $region50: #{bert_base_cls_forward.1} parent=11 // pred_check_branch
        %665 = sbr.rel (%p663) target = $region52
      $region51: #{bert_base_cls_forward.1} parent=11 // pred_region
        _
      $region52: #{bert_base_cls_forward.1} parent=11 // pred_fallthru
        _
      // Predicated region
      $region53: #{bert_base_cls_forward.1} parent=11 // pred_check
        %p666 = pneg %p343
      $region54: #{bert_base_cls_forward.1} parent=11 // pred_check_branch
        %668 = sbr.rel (%p666) target = $region56
      $region55: #{bert_base_cls_forward.1} parent=11 // pred_region
        _
      $region56: #{bert_base_cls_forward.1} parent=11 // pred_fallthru
        _
      // Predicated region
      $region57: #{bert_base_cls_forward.1} parent=11 // pred_check
        %p669 = pneg %p364
      $region58: #{bert_base_cls_forward.1} parent=11 // pred_check_branch
        %671 = sbr.rel (%p669) target = $region60
      $region59: #{bert_base_cls_forward.1} parent=11 // pred_region
        _
      $region60: #{bert_base_cls_forward.1} parent=11 // pred_fallthru
        _
      // Predicated region
      $region61: #{bert_base_cls_forward.1} parent=11 // pred_check
        %p672 = pneg %p385
      $region62: #{bert_base_cls_forward.1} parent=11 // pred_check_branch
        %674 = sbr.rel (%p672) target = $region64
      $region63: #{bert_base_cls_forward.1} parent=11 // pred_region
        _
      $region64: #{bert_base_cls_forward.1} parent=11 // pred_fallthru
        _
      // Predicated region
      $region65: #{bert_base_cls_forward.1} parent=11 // pred_check
        %p675 = pneg %p406
      $region66: #{bert_base_cls_forward.1} parent=11 // pred_check_branch
        %677 = sbr.rel (%p675) target = $region68
      $region67: #{bert_base_cls_forward.1} parent=11 // pred_region
        _
      $region68: #{bert_base_cls_forward.1} parent=11 // pred_fallthru
        _
      // Predicated region
      $region69: #{bert_base_cls_forward.1} parent=11 // pred_check
        %p678 = pneg %p427
      $region70: #{bert_base_cls_forward.1} parent=11 // pred_check_branch
        %680 = sbr.rel (%p678) target = $region72
      $region71: #{bert_base_cls_forward.1} parent=11 // pred_region
        _
      $region72: #{bert_base_cls_forward.1} parent=11 // pred_fallthru
        _
      // Predicated region
      $region73: #{bert_base_cls_forward.1} parent=11 // pred_check
        %p681 = pneg %p448
      $region74: #{bert_base_cls_forward.1} parent=11 // pred_check_branch
        %683 = sbr.rel (%p681) target = $region76
      $region75: #{bert_base_cls_forward.1} parent=11 // pred_region
        _
      $region76: #{bert_base_cls_forward.1} parent=11 // pred_fallthru
        _
      // Predicated region
      $region77: #{bert_base_cls_forward.1} parent=11 // pred_check
        %p684 = pneg %p469
      $region78: #{bert_base_cls_forward.1} parent=11 // pred_check_branch
        %686 = sbr.rel (%p684) target = $region80
      $region79: #{bert_base_cls_forward.1} parent=11 // pred_region
        _
      $region80: #{bert_base_cls_forward.1} parent=11 // pred_fallthru
        _
      // Predicated region
      $region81: #{bert_base_cls_forward.1} parent=11 // pred_check
        %p687 = pneg %p490
      $region82: #{bert_base_cls_forward.1} parent=11 // pred_check_branch
        %689 = sbr.rel (%p687) target = $region84
      $region83: #{bert_base_cls_forward.1} parent=11 // pred_region
        _
      $region84: #{bert_base_cls_forward.1} parent=11 // pred_fallthru
        _
      // Predicated region
      $region85: #{bert_base_cls_forward.1} parent=11 // pred_check
        %p690 = pneg %p511
      $region86: #{bert_base_cls_forward.1} parent=11 // pred_check_branch
        %692 = sbr.rel (%p690) target = $region88
      $region87: #{bert_base_cls_forward.1} parent=11 // pred_region
        _
      $region88: #{bert_base_cls_forward.1} parent=11 // pred_fallthru
        _
      // Predicated region
      $region89: #{bert_base_cls_forward.1} parent=11 // pred_check
        %p693 = pneg %p532
      $region90: #{bert_base_cls_forward.1} parent=11 // pred_check_branch
        %695 = sbr.rel (%p693) target = $region92
      $region91: #{bert_base_cls_forward.1} parent=11 // pred_region
        _
      $region92: #{bert_base_cls_forward.1} parent=11 // pred_fallthru
        _
      // Predicated region
      $region93: #{bert_base_cls_forward.1} parent=11 // pred_check
        %p696 = pneg %p553
      $region94: #{bert_base_cls_forward.1} parent=11 // pred_check_branch
        %698 = sbr.rel (%p696) target = $region96
      $region95: #{bert_base_cls_forward.1} parent=11 // pred_region
        _
      $region96: #{bert_base_cls_forward.1} parent=11 // pred_fallthru
        _
      // Predicated region
      $region97: #{bert_base_cls_forward.1} parent=11 // pred_check
        %p699 = pneg %p574
      $region98: #{bert_base_cls_forward.1} parent=11 // pred_check_branch
        %701 = sbr.rel (%p699) target = $region100
      $region99: #{bert_base_cls_forward.1} parent=11 // pred_region
        _
      $region100: #{bert_base_cls_forward.1} parent=11 // pred_fallthru
        _
      // Predicated region
      $region101: #{bert_base_cls_forward.1} parent=11 // pred_check
        %p702 = pneg %p595
      $region102: #{bert_base_cls_forward.1} parent=11 // pred_check_branch
        %704 = sbr.rel (%p702) target = $region104
      $region103: #{bert_base_cls_forward.1} parent=11 // pred_region
        _
      $region104: #{bert_base_cls_forward.1} parent=11 // pred_fallthru
        _
    $region12: #{bert_base_cls_forward.1} parent=5 // pred_fallthru
      _
    %p705 = scmp.lt.s32.totalorder %s34, 2
    // Predicated region
    $region105: #{bert_base_cls_forward.1} parent=5 // pred_check
      %p706 = pneg %p705
    $region106: #{bert_base_cls_forward.1} parent=5 // pred_check_branch
      %708 = sbr.rel (%p706) target = $region108
    $region107: #{bert_base_cls_forward.1} parent=5 // pred_region
      // Predicated region
      $region109: #{bert_base_cls_forward.1} parent=107 // pred_check
        %p709 = pneg %p54
      $region110: #{bert_base_cls_forward.1} parent=107 // pred_check_branch
        %711 = sbr.rel (%p709) target = $region112
      $region111: #{bert_base_cls_forward.1} parent=107 // pred_region
        %p712 = scmp.lt.s32.totalorder %s34, 1
        %s713 = scalar_select %p712, %s34, 1
        %s714 = smul.addr %s713, 10
        %s715 = smul.addr %s714, 8
        %s716 = scalar_lea.vmem %s0, %s715
      $region112: #{bert_base_cls_forward.1} parent=107 // pred_fallthru
        _
      // Predicated region
      $region113: #{bert_base_cls_forward.1} parent=107 // pred_check
        %p717 = pneg %p80
      $region114: #{bert_base_cls_forward.1} parent=107 // pred_check_branch
        %719 = sbr.rel (%p717) target = $region116
      $region115: #{bert_base_cls_forward.1} parent=107 // pred_region
        %p720 = scmp.lt.s32.totalorder %s34, 1
        %s721 = scalar_select %p720, %s34, 1
        %s722 = smul.addr %s721, 10
        %s723 = smul.addr %s722, 8
        %s724 = scalar_lea.vmem %s1, %s723
      $region116: #{bert_base_cls_forward.1} parent=107 // pred_fallthru
        _
      // Predicated region
      $region117: #{bert_base_cls_forward.1} parent=107 // pred_check
        %p725 = pneg %p106
      $region118: #{bert_base_cls_forward.1} parent=107 // pred_check_branch
        %727 = sbr.rel (%p725) target = $region120
      $region119: #{bert_base_cls_forward.1} parent=107 // pred_region
        %p728 = scmp.lt.s32.totalorder %s34, 1
        %s729 = scalar_select %p728, %s34, 1
        %s730 = smul.addr %s729, 2
        %s731 = smul.addr %s730, 8
        %s732 = scalar_lea.vmem %s2, %s731
      $region120: #{bert_base_cls_forward.1} parent=107 // pred_fallthru
        _
    $region108: #{bert_base_cls_forward.1} parent=5 // pred_fallthru
      _
    %p733 = scmp.le.s32.totalorder 1, %s34
    %p734 = scmp.lt.s32.totalorder %s34, 3
    %p735 = pnand %p733, %p734
    %p736 = pneg %p735
    // Predicated region
    $region121: #{bert_base_cls_forward.1} parent=5 // pred_check
      _
    $region122: #{bert_base_cls_forward.1} parent=5 // pred_check_branch
      %738 = sbr.rel (%p735) target = $region124
    $region123: #{bert_base_cls_forward.1} parent=5 // pred_region
      %s739 = ssub.s32 %s34, 1
      %p740 = scmp.lt.s32.totalorder %s39, 1
      %s741 = scalar_select %p740, %s39, 1
      %s742 = smul.addr %s741, 10
      %s743 = smul.addr %s742, 8
      %s744 = scalar_lea.vmem %s0, %s743
      %p745 = pneg %p60
      %p746 = pneg %p57
      %p747 = scmp.lt.s32.totalorder %s39, 1
      %s748 = scalar_select %p747, %s39, 1
      %s749 = smul.addr %s748, 10
      %s750 = smul.addr %s749, 8
      %s751 = scalar_lea.vmem %s1, %s750
      %p752 = pneg %p86
      %p753 = pneg %p83
      %p754 = scmp.lt.s32.totalorder %s39, 1
      %s755 = scalar_select %p754, %s39, 1
      %s756 = smul.addr %s755, 2
      %s757 = smul.addr %s756, 8
      %s758 = scalar_lea.vmem %s2, %s757
      %p759 = pneg %p112
      %p760 = pneg %p109
      %p761 = pneg %p133
      %p762 = pneg %p130
      %p763 = pneg %p154
      %p764 = pneg %p151
      %p765 = pneg %p175
      %p766 = pneg %p172
      %p767 = pneg %p196
      %p768 = pneg %p193
      %p769 = pneg %p217
      %p770 = pneg %p214
      %p771 = pneg %p238
      %p772 = pneg %p235
      %p773 = pneg %p259
      %p774 = pneg %p256
      %p775 = pneg %p280
      %p776 = pneg %p277
      %p777 = pneg %p301
      %p778 = pneg %p298
      %p779 = pneg %p322
      %p780 = pneg %p319
      %p781 = pneg %p343
      %p782 = pneg %p340
      %p783 = pneg %p364
      %p784 = pneg %p361
      %p785 = pneg %p385
      %p786 = pneg %p382
      %p787 = pneg %p406
      %p788 = pneg %p403
      %p789 = pneg %p427
      %p790 = pneg %p424
      %p791 = pneg %p448
      %p792 = pneg %p445
      %p793 = pneg %p469
      %p794 = pneg %p466
      %p795 = pneg %p490
      %p796 = pneg %p487
      %p797 = pneg %p511
      %p798 = pneg %p508
      %p799 = pneg %p532
      %p800 = pneg %p529
      %p801 = pneg %p553
      %p802 = pneg %p550
      %p803 = pneg %p574
      %p804 = pneg %p571
      %p805 = pneg %p595
      %p806 = pneg %p592
      %p807 = pneg %p621
      %p808 = pneg %p618
      %p809 = scmp.lt.s32.totalorder %s39, 1
      %s810 = scalar_select %p809, %s39, 1
      %s811 = smul.addr %s810, 2
      %s812 = smul.addr %s811, 8
      %s813 = scalar_lea.vmem %s26, %s812
      %p814 = scmp.lt.s32.totalorder %s39, 1
      %s815 = scalar_select %p814, %s39, 1
      %s816 = smul.addr %s815, 10
      %s817 = smul.addr %s816, 8
      %s818 = scalar_lea.vmem %s0, %s817
      %p819 = scmp.lt.s32.totalorder %s39, 1
      %s820 = scalar_select %p819, %s39, 1
      %s821 = smul.addr %s820, 10
      %s822 = smul.addr %s821, 8
      %s823 = scalar_lea.vmem %s1, %s822
      %p824 = scmp.lt.s32.totalorder %s39, 1
      %s825 = scalar_select %p824, %s39, 1
      %s826 = smul.addr %s825, 2
      %s827 = smul.addr %s826, 8
      %s828 = scalar_lea.vmem %s2, %s827
      %p829 = scmp.lt.s32.totalorder %s39, 1
      %s830 = scalar_select %p829, %s39, 1
      %s831 = smul.addr %s830, 2
      %s832 = smul.addr %s831, 8
      %s833 = scalar_lea.vmem %s26, %s832
      %v834 = vld [vmem:[%s818] sm:$0xff]
      %v835 = vld [vmem:[%s818 + $0x8] sm:$0xff]
      %v836 = vld [vmem:[%s818 + $0x10] sm:$0xff]
      %v837 = vld [vmem:[%s818 + $0x18] sm:$0xff]
      %v838 = vld [vmem:[%s818 + $0x20] sm:$0xff]
      %v839 = vld [vmem:[%s818 + $0x28] sm:$0xff]
      %v840 = vld [vmem:[%s818 + $0x30] sm:$0xff]
      %v841 = vld [vmem:[%s818 + $0x38] sm:$0xff]
      %v842 = vld [vmem:[%s818 + $0x40] sm:$0xff]
      %v843 = vld [vmem:[%s818 + $0x48] sm:$0xff]
      %v844 = vld [vmem:[%s823] sm:$0xff]
      %v845 = vld [vmem:[%s823 + $0x8] sm:$0xff]
      %v846 = vld [vmem:[%s823 + $0x10] sm:$0xff]
      %v847 = vld [vmem:[%s823 + $0x18] sm:$0xff]
      %v848 = vld [vmem:[%s823 + $0x20] sm:$0xff]
      %v849 = vld [vmem:[%s823 + $0x28] sm:$0xff]
      %v850 = vld [vmem:[%s823 + $0x30] sm:$0xff]
      %v851 = vld [vmem:[%s823 + $0x38] sm:$0xff]
      %v852 = vld [vmem:[%s823 + $0x40] sm:$0xff]
      %v853 = vld [vmem:[%s823 + $0x48] sm:$0xff]
      %v854 = vcvt.s32.f32 %v844
      %v855 = vcvt.s32.f32 %v845
      %v856 = vcvt.s32.f32 %v846
      %v857 = vcvt.s32.f32 %v847
      %v858 = vcvt.s32.f32 %v848
      %v859 = vcvt.s32.f32 %v849
      %v860 = vcvt.s32.f32 %v850
      %v861 = vcvt.s32.f32 %v851
      %v862 = vcvt.s32.f32 %v852
      %v863 = vcvt.s32.f32 %v853
      %v864 = vlaneseq
      %v865 = vand.u32 %v864, 127
      %866 = vset.pattern.permute.xlu0 0
      %867 = vperm.xlu0 %866, %v834
      %v868 = vpop.permute.xlu0 %867
      %869 = vset.pattern.permute.xlu0 0
      %870 = vperm.xlu0 %869, %v835
      %v871 = vpop.permute.xlu0 %870
      %872 = vset.pattern.permute.xlu0 0
      %873 = vperm.xlu0 %872, %v836
      %v874 = vpop.permute.xlu0 %873
      %875 = vset.pattern.permute.xlu0 0
      %876 = vperm.xlu0 %875, %v837
      %v877 = vpop.permute.xlu0 %876
      %878 = vset.pattern.permute.xlu0 0
      %879 = vperm.xlu0 %878, %v838
      %v880 = vpop.permute.xlu0 %879
      %881 = vset.pattern.permute.xlu0 0
      %882 = vperm.xlu0 %881, %v839
      %v883 = vpop.permute.xlu0 %882
      %884 = vset.pattern.permute.xlu0 0
      %885 = vperm.xlu0 %884, %v840
      %v886 = vpop.permute.xlu0 %885
      %887 = vset.pattern.permute.xlu0 0
      %888 = vperm.xlu0 %887, %v841
      %v889 = vpop.permute.xlu0 %888
      %890 = vset.pattern.permute.xlu0 0
      %891 = vperm.xlu0 %890, %v842
      %v892 = vpop.permute.xlu0 %891
      %893 = vset.pattern.permute.xlu0 0
      %894 = vperm.xlu0 %893, %v843
      %v895 = vpop.permute.xlu0 %894
      %vm896 = vcmp.eq.s32.totalorder %v868, %v865
      %vm897 = vcmp.eq.s32.totalorder %v871, %v865
      %vm898 = vcmp.eq.s32.totalorder %v874, %v865
      %vm899 = vcmp.eq.s32.totalorder %v877, %v865
      %vm900 = vcmp.eq.s32.totalorder %v880, %v865
      %vm901 = vcmp.eq.s32.totalorder %v883, %v865
      %vm902 = vcmp.eq.s32.totalorder %v886, %v865
      %vm903 = vcmp.eq.s32.totalorder %v889, %v865
      %vm904 = vcmp.eq.s32.totalorder %v892, %v865
      %vm905 = vcmp.eq.s32.totalorder %v895, %v865
      %v906 = vsel %vm896, 1.0, 0.0
      %v907 = vsel %vm897, 1.0, 0.0
      %v908 = vsel %vm898, 1.0, 0.0
      %v909 = vsel %vm899, 1.0, 0.0
      %v910 = vsel %vm900, 1.0, 0.0
      %v911 = vsel %vm901, 1.0, 0.0
      %v912 = vsel %vm902, 1.0, 0.0
      %v913 = vsel %vm903, 1.0, 0.0
      %v914 = vsel %vm904, 1.0, 0.0
      %v915 = vsel %vm905, 1.0, 0.0
      %v916 = vld [vmem:[%s3] sm:$0xff]
      %v917 = vld [vmem:[%s3 + $0x8] sm:$0xff]
      %v918 = vld [vmem:[%s3 + $0x10] sm:$0xff]
      %v919 = vld [vmem:[%s3 + $0x18] sm:$0xff]
      %v920 = vld [vmem:[%s3 + $0x20] sm:$0xff]
      %v921 = vld [vmem:[%s3 + $0x28] sm:$0xff]
      %v922 = vld [vmem:[%s3 + $0x30] sm:$0xff]
      %v923 = vld [vmem:[%s3 + $0x38] sm:$0xff]
      %v924 = vld [vmem:[%s3 + $0x40] sm:$0xff]
      %v925 = vld [vmem:[%s3 + $0x48] sm:$0xff]
      %v926 = vld [vmem:[%s3 + $0x50] sm:$0xff]
      %v927 = vld [vmem:[%s3 + $0x58] sm:$0xff]
      %v928 = vld [vmem:[%s3 + $0x60] sm:$0xf]
      %v929 = vld [vmem:[%s4] sm:$0xff]
      %v930 = vld [vmem:[%s5] sm:$0x3]
      %v932 = vrot.slane %v930, 7
      %v934 = vsub.f32 %v930, %v932
      %936 = vset.pattern.permute.xlu0 0
      %937 = vperm.xlu0 %936, %v854
      %v938 = vpop.permute.xlu0 %937
      %941 = vset.pattern.permute.xlu0 0
      %942 = vperm.xlu0 %941, %v855
      %v943 = vpop.permute.xlu0 %942
      %946 = vset.pattern.permute.xlu0 0
      %947 = vperm.xlu0 %946, %v856
      %v948 = vpop.permute.xlu0 %947
      %951 = vset.pattern.permute.xlu0 0
      %952 = vperm.xlu0 %951, %v857
      %v953 = vpop.permute.xlu0 %952
      %956 = vset.pattern.permute.xlu0 0
      %957 = vperm.xlu0 %956, %v858
      %v958 = vpop.permute.xlu0 %957
      %961 = vset.pattern.permute.xlu0 0
      %962 = vperm.xlu0 %961, %v859
      %v963 = vpop.permute.xlu0 %962
      %966 = vset.pattern.permute.xlu0 0
      %967 = vperm.xlu0 %966, %v860
      %v968 = vpop.permute.xlu0 %967
      %971 = vset.pattern.permute.xlu0 0
      %972 = vperm.xlu0 %971, %v861
      %v973 = vpop.permute.xlu0 %972
      %976 = vset.pattern.permute.xlu0 0
      %977 = vperm.xlu0 %976, %v862
      %v978 = vpop.permute.xlu0 %977
      %981 = vset.pattern.permute.xlu0 0
      %982 = vperm.xlu0 %981, %v863
      %v983 = vpop.permute.xlu0 %982
      %v985 = vperm.slane %v934, 1
      %v986 = vmul.f32 %v938, %v985
      %v987 = vmul.f32 %v943, %v985
      %v988 = vmul.f32 %v948, %v985
      %v989 = vmul.f32 %v953, %v985
      %v990 = vmul.f32 %v958, %v985
      %v991 = vmul.f32 %v963, %v985
      %v992 = vmul.f32 %v968, %v985
      %v993 = vmul.f32 %v973, %v985
      %v994 = vmul.f32 %v978, %v985
      %v995 = vmul.f32 %v983, %v985
      %v996 = vperm.slane %v930, 0
      %v997 = vadd.f32 %v996, %v986
      %v998 = vadd.f32 %v996, %v987
      %v999 = vadd.f32 %v996, %v988
      %v1000 = vadd.f32 %v996, %v989
      %v1001 = vadd.f32 %v996, %v990
      %v1002 = vadd.f32 %v996, %v991
      %v1003 = vadd.f32 %v996, %v992
      %v1004 = vadd.f32 %v996, %v993
      %v1005 = vadd.f32 %v996, %v994
      %v1006 = vadd.f32 %v996, %v995
      %vm1007 = vcmask 818176
      %v1009 = vsel %vm1007, %v906, 0
      %v1012 = vsel %vm1007, %v907, 0
      %v1015 = vsel %vm1007, %v908, 0
      %v1018 = vsel %vm1007, %v909, 0
      %v1021 = vsel %vm1007, %v910, 0
      %v1024 = vsel %vm1007, %v911, 0
      %v1027 = vsel %vm1007, %v912, 0
      %v1030 = vsel %vm1007, %v913, 0
      %v1033 = vsel %vm1007, %v914, 0
      %v1036 = vsel %vm1007, %v915, 0
      %vm1038 = vcmask 1043456
      %v1040 = vsel %vm1038, %v928, 0
      %1042 = vmatpush.msra.mxu0 0.0
      %1043 = vmatpush.msra.mxu0 0.0
      %1044 = vmatpush.msra.mxu0 0.0
      %1045 = vmatpush.msra.mxu0 %v1040
      %1046 = vmatpush.msra.mxu0 %v927
      %1047 = vmatpush.msra.mxu0 %v926
      %1048 = vmatpush.msra.mxu0 %v925
      %1049 = vmatpush.msra.mxu0 %v924
      %1050 = vmatpush.msra.mxu0 %v923
      %1051 = vmatpush.msra.mxu0 %v922
      %1052 = vmatpush.msra.mxu0 %v921
      %1053 = vmatpush.msra.mxu0 %v920
      %1054 = vmatpush.msra.mxu0 %v919
      %1055 = vmatpush.msra.mxu0 %v918
      %1056 = vmatpush.msra.mxu0 %v917
      %1057 = vmatpush.msra.mxu0 %v916
      %1058 = vmatmul.f32.gmra.mxu0 %v1009
      %v1059 = vpop.f32.mrf.mxu0
      %v1060 = vadd.f32 %v929, %v1059
      %1061 = vmatmul.f32.gmra.mxu0 %v1012
      %v1062 = vpop.f32.mrf.mxu0
      %v1063 = vadd.f32 %v929, %v1062
      %1064 = vmatmul.f32.gmra.mxu0 %v1015
      %v1065 = vpop.f32.mrf.mxu0
      %v1066 = vadd.f32 %v929, %v1065
      %1067 = vmatmul.f32.gmra.mxu0 %v1018
      %v1068 = vpop.f32.mrf.mxu0
      %v1069 = vadd.f32 %v929, %v1068
      %1070 = vmatmul.f32.gmra.mxu0 %v1021
      %v1071 = vpop.f32.mrf.mxu0
      %v1072 = vadd.f32 %v929, %v1071
      %1073 = vmatmul.f32.gmra.mxu0 %v1024
      %v1074 = vpop.f32.mrf.mxu0
      %v1075 = vadd.f32 %v929, %v1074
      %1076 = vmatmul.f32.gmra.mxu0 %v1027
      %v1077 = vpop.f32.mrf.mxu0
      %v1078 = vadd.f32 %v929, %v1077
      %1079 = vmatmul.f32.gmra.mxu0 %v1030
      %v1080 = vpop.f32.mrf.mxu0
      %v1081 = vadd.f32 %v929, %v1080
      %1082 = vmatmul.f32.gmra.mxu0 %v1033
      %v1083 = vpop.f32.mrf.mxu0
      %v1084 = vadd.f32 %v929, %v1083
      %1085 = vmatmul.f32.gmra.mxu0 %v1036
      %v1086 = vpop.f32.mrf.mxu0
      %v1087 = vadd.f32 %v929, %v1086
      %1088 = vdwg.mxu0
      %v1089 = vadd.f32 %v1060, %v997
      %v1090 = vadd.f32 %v1063, %v998
      %v1091 = vadd.f32 %v1066, %v999
      %v1092 = vadd.f32 %v1069, %v1000
      %v1093 = vadd.f32 %v1072, %v1001
      %v1094 = vadd.f32 %v1075, %v1002
      %v1095 = vadd.f32 %v1078, %v1003
      %v1096 = vadd.f32 %v1081, %v1004
      %v1097 = vadd.f32 %v1084, %v1005
      %v1098 = vadd.f32 %v1087, %v1006
      %v1099 = vld [vmem:[%s6] sm:$0x1]
      %v1100 = vld [vmem:[%s7] sm:$0x1]
      %vm1101 = vcmask 261120
      %v1102 = vsel %vm1101, %v1089, 0.0
      %1103 = vadd.xlane.f32.xlu0 %v1102
      %v1104 = vpop.xlane.xlu0 %1103
      %v1105 = vsel %vm1101, %v1090, 0.0
      %1106 = vadd.xlane.f32.xlu0 %v1105
      %v1107 = vpop.xlane.xlu0 %1106
      %v1108 = vsel %vm1101, %v1091, 0.0
      %1109 = vadd.xlane.f32.xlu0 %v1108
      %v1110 = vpop.xlane.xlu0 %1109
      %v1111 = vsel %vm1101, %v1092, 0.0
      %1112 = vadd.xlane.f32.xlu0 %v1111
      %v1113 = vpop.xlane.xlu0 %1112
      %v1114 = vsel %vm1101, %v1093, 0.0
      %1115 = vadd.xlane.f32.xlu0 %v1114
      %v1116 = vpop.xlane.xlu0 %1115
      %v1117 = vsel %vm1101, %v1094, 0.0
      %1118 = vadd.xlane.f32.xlu0 %v1117
      %v1119 = vpop.xlane.xlu0 %1118
      %v1120 = vsel %vm1101, %v1095, 0.0
      %1121 = vadd.xlane.f32.xlu0 %v1120
      %v1122 = vpop.xlane.xlu0 %1121
      %v1123 = vsel %vm1101, %v1096, 0.0
      %1124 = vadd.xlane.f32.xlu0 %v1123
      %v1125 = vpop.xlane.xlu0 %1124
      %v1126 = vsel %vm1101, %v1097, 0.0
      %1127 = vadd.xlane.f32.xlu0 %v1126
      %v1128 = vpop.xlane.xlu0 %1127
      %v1129 = vsel %vm1101, %v1098, 0.0
      %1130 = vadd.xlane.f32.xlu0 %v1129
      %v1131 = vpop.xlane.xlu0 %1130
      %v1132 = vrcp.pop 32.0
      %v1133 = vmul.f32 32.0, %v1132
      %v1134 = vsub.f32 1.0, %v1133
      %v1135 = vmul.f32 %v1132, %v1134
      %v1136 = vadd.f32 %v1132, %v1135
      %vm1137 = vweird.f32 %v1132
      %v1138 = vsel %vm1137, %v1132, %v1136
      %v1139 = vmul.f32 %v1104, %v1138
      %v1140 = vmul.f32 %v1107, %v1138
      %v1141 = vmul.f32 %v1110, %v1138
      %v1142 = vmul.f32 %v1113, %v1138
      %v1143 = vmul.f32 %v1116, %v1138
      %v1144 = vmul.f32 %v1119, %v1138
      %v1145 = vmul.f32 %v1122, %v1138
      %v1146 = vmul.f32 %v1125, %v1138
      %v1147 = vmul.f32 %v1128, %v1138
      %v1148 = vmul.f32 %v1131, %v1138
      %v1149 = vsub.f32 %v1089, %v1139
      %v1150 = vsub.f32 %v1090, %v1140
      %v1151 = vsub.f32 %v1091, %v1141
      %v1152 = vsub.f32 %v1092, %v1142
      %v1153 = vsub.f32 %v1093, %v1143
      %v1154 = vsub.f32 %v1094, %v1144
      %v1155 = vsub.f32 %v1095, %v1145
      %v1156 = vsub.f32 %v1096, %v1146
      %v1157 = vsub.f32 %v1097, %v1147
      %v1158 = vsub.f32 %v1098, %v1148
      %v1159 = vmul.f32 %v1149, %v1149
      %v1160 = vmul.f32 %v1150, %v1150
      %v1161 = vmul.f32 %v1151, %v1151
      %v1162 = vmul.f32 %v1152, %v1152
      %v1163 = vmul.f32 %v1153, %v1153
      %v1164 = vmul.f32 %v1154, %v1154
      %v1165 = vmul.f32 %v1155, %v1155
      %v1166 = vmul.f32 %v1156, %v1156
      %v1167 = vmul.f32 %v1157, %v1157
      %v1168 = vmul.f32 %v1158, %v1158
      %v1169 = vsel %vm1101, %v1159, 0.0
      %1170 = vadd.xlane.f32.xlu0 %v1169
      %v1171 = vpop.xlane.xlu0 %1170
      %v1172 = vsel %vm1101, %v1160, 0.0
      %1173 = vadd.xlane.f32.xlu0 %v1172
      %v1174 = vpop.xlane.xlu0 %1173
      %v1175 = vsel %vm1101, %v1161, 0.0
      %1176 = vadd.xlane.f32.xlu0 %v1175
      %v1177 = vpop.xlane.xlu0 %1176
      %v1178 = vsel %vm1101, %v1162, 0.0
      %1179 = vadd.xlane.f32.xlu0 %v1178
      %v1180 = vpop.xlane.xlu0 %1179
      %v1181 = vsel %vm1101, %v1163, 0.0
      %1182 = vadd.xlane.f32.xlu0 %v1181
      %v1183 = vpop.xlane.xlu0 %1182
      %v1184 = vsel %vm1101, %v1164, 0.0
      %1185 = vadd.xlane.f32.xlu0 %v1184
      %v1186 = vpop.xlane.xlu0 %1185
      %v1187 = vsel %vm1101, %v1165, 0.0
      %1188 = vadd.xlane.f32.xlu0 %v1187
      %v1189 = vpop.xlane.xlu0 %1188
      %v1190 = vsel %vm1101, %v1166, 0.0
      %1191 = vadd.xlane.f32.xlu0 %v1190
      %v1192 = vpop.xlane.xlu0 %1191
      %v1193 = vsel %vm1101, %v1167, 0.0
      %1194 = vadd.xlane.f32.xlu0 %v1193
      %v1195 = vpop.xlane.xlu0 %1194
      %v1196 = vsel %vm1101, %v1168, 0.0
      %1197 = vadd.xlane.f32.xlu0 %v1196
      %v1198 = vpop.xlane.xlu0 %1197
      %v1199 = vmul.f32 %v1171, %v1138
      %v1200 = vmul.f32 %v1174, %v1138
      %v1201 = vmul.f32 %v1177, %v1138
      %v1202 = vmul.f32 %v1180, %v1138
      %v1203 = vmul.f32 %v1183, %v1138
      %v1204 = vmul.f32 %v1186, %v1138
      %v1205 = vmul.f32 %v1189, %v1138
      %v1206 = vmul.f32 %v1192, %v1138
      %v1207 = vmul.f32 %v1195, %v1138
      %v1208 = vmul.f32 %v1198, %v1138
      %v1209 = vadd.f32 %v1199, 1e-12
      %v1210 = vadd.f32 %v1200, 1e-12
      %v1211 = vadd.f32 %v1201, 1e-12
      %v1212 = vadd.f32 %v1202, 1e-12
      %v1213 = vadd.f32 %v1203, 1e-12
      %v1214 = vadd.f32 %v1204, 1e-12
      %v1215 = vadd.f32 %v1205, 1e-12
      %v1216 = vadd.f32 %v1206, 1e-12
      %v1217 = vadd.f32 %v1207, 1e-12
      %v1218 = vadd.f32 %v1208, 1e-12
      %v1219 = vrsqrt.pop %v1209
      %v1220 = vmul.f32 %v1219, %v1209
      %v1221 = vmul.f32 %v1220, %v1219
      %v1222 = vmul.f32 0.5, %v1221
      %v1223 = vsub.f32 1.5, %v1222
      %v1224 = vmul.f32 %v1219, %v1223
      %vm1225 = vweird.f32 %v1209
      %vm1226 = vweird.f32 %v1219
      %vm1227 = vmor %vm1225, %vm1226
      %v1228 = vsel %vm1227, %v1219, %v1224
      %v1229 = vrsqrt.pop %v1210
      %v1230 = vmul.f32 %v1229, %v1210
      %v1231 = vmul.f32 %v1230, %v1229
      %v1232 = vmul.f32 0.5, %v1231
      %v1233 = vsub.f32 1.5, %v1232
      %v1234 = vmul.f32 %v1229, %v1233
      %vm1235 = vweird.f32 %v1210
      %vm1236 = vweird.f32 %v1229
      %vm1237 = vmor %vm1235, %vm1236
      %v1238 = vsel %vm1237, %v1229, %v1234
      %v1239 = vrsqrt.pop %v1211
      %v1240 = vmul.f32 %v1239, %v1211
      %v1241 = vmul.f32 %v1240, %v1239
      %v1242 = vmul.f32 0.5, %v1241
      %v1243 = vsub.f32 1.5, %v1242
      %v1244 = vmul.f32 %v1239, %v1243
      %vm1245 = vweird.f32 %v1211
      %vm1246 = vweird.f32 %v1239
      %vm1247 = vmor %vm1245, %vm1246
      %v1248 = vsel %vm1247, %v1239, %v1244
      %v1249 = vrsqrt.pop %v1212
      %v1250 = vmul.f32 %v1249, %v1212
      %v1251 = vmul.f32 %v1250, %v1249
      %v1252 = vmul.f32 0.5, %v1251
      %v1253 = vsub.f32 1.5, %v1252
      %v1254 = vmul.f32 %v1249, %v1253
      %vm1255 = vweird.f32 %v1212
      %vm1256 = vweird.f32 %v1249
      %vm1257 = vmor %vm1255, %vm1256
      %v1258 = vsel %vm1257, %v1249, %v1254
      %v1259 = vrsqrt.pop %v1213
      %v1260 = vmul.f32 %v1259, %v1213
      %v1261 = vmul.f32 %v1260, %v1259
      %v1262 = vmul.f32 0.5, %v1261
      %v1263 = vsub.f32 1.5, %v1262
      %v1264 = vmul.f32 %v1259, %v1263
      %vm1265 = vweird.f32 %v1213
      %vm1266 = vweird.f32 %v1259
      %vm1267 = vmor %vm1265, %vm1266
      %v1268 = vsel %vm1267, %v1259, %v1264
      %v1269 = vrsqrt.pop %v1214
      %v1270 = vmul.f32 %v1269, %v1214
      %v1271 = vmul.f32 %v1270, %v1269
      %v1272 = vmul.f32 0.5, %v1271
      %v1273 = vsub.f32 1.5, %v1272
      %v1274 = vmul.f32 %v1269, %v1273
      %vm1275 = vweird.f32 %v1214
      %vm1276 = vweird.f32 %v1269
      %vm1277 = vmor %vm1275, %vm1276
      %v1278 = vsel %vm1277, %v1269, %v1274
      %v1279 = vrsqrt.pop %v1215
      %v1280 = vmul.f32 %v1279, %v1215
      %v1281 = vmul.f32 %v1280, %v1279
      %v1282 = vmul.f32 0.5, %v1281
      %v1283 = vsub.f32 1.5, %v1282
      %v1284 = vmul.f32 %v1279, %v1283
      %vm1285 = vweird.f32 %v1215
      %vm1286 = vweird.f32 %v1279
      %vm1287 = vmor %vm1285, %vm1286
      %v1288 = vsel %vm1287, %v1279, %v1284
      %v1289 = vrsqrt.pop %v1216
      %v1290 = vmul.f32 %v1289, %v1216
      %v1291 = vmul.f32 %v1290, %v1289
      %v1292 = vmul.f32 0.5, %v1291
      %v1293 = vsub.f32 1.5, %v1292
      %v1294 = vmul.f32 %v1289, %v1293
      %vm1295 = vweird.f32 %v1216
      %vm1296 = vweird.f32 %v1289
      %vm1297 = vmor %vm1295, %vm1296
      %v1298 = vsel %vm1297, %v1289, %v1294
      %v1299 = vrsqrt.pop %v1217
      %v1300 = vmul.f32 %v1299, %v1217
      %v1301 = vmul.f32 %v1300, %v1299
      %v1302 = vmul.f32 0.5, %v1301
      %v1303 = vsub.f32 1.5, %v1302
      %v1304 = vmul.f32 %v1299, %v1303
      %vm1305 = vweird.f32 %v1217
      %vm1306 = vweird.f32 %v1299
      %vm1307 = vmor %vm1305, %vm1306
      %v1308 = vsel %vm1307, %v1299, %v1304
      %v1309 = vrsqrt.pop %v1218
      %v1310 = vmul.f32 %v1309, %v1218
      %v1311 = vmul.f32 %v1310, %v1309
      %v1312 = vmul.f32 0.5, %v1311
      %v1313 = vsub.f32 1.5, %v1312
      %v1314 = vmul.f32 %v1309, %v1313
      %vm1315 = vweird.f32 %v1218
      %vm1316 = vweird.f32 %v1309
      %vm1317 = vmor %vm1315, %vm1316
      %v1318 = vsel %vm1317, %v1309, %v1314
      %v1319 = vmul.f32 %v1149, %v1228
      %v1320 = vmul.f32 %v1150, %v1238
      %v1321 = vmul.f32 %v1151, %v1248
      %v1322 = vmul.f32 %v1152, %v1258
      %v1323 = vmul.f32 %v1153, %v1268
      %v1324 = vmul.f32 %v1154, %v1278
      %v1325 = vmul.f32 %v1155, %v1288
      %v1326 = vmul.f32 %v1156, %v1298
      %v1327 = vmul.f32 %v1157, %v1308
      %v1328 = vmul.f32 %v1158, %v1318
      %v1330 = vperm.slane %v1099, 0
      %v1332 = vmul.f32 %v1319, %v1330
      %v1333 = vmul.f32 %v1320, %v1330
      %v1334 = vmul.f32 %v1321, %v1330
      %v1335 = vmul.f32 %v1322, %v1330
      %v1336 = vmul.f32 %v1323, %v1330
      %v1337 = vmul.f32 %v1324, %v1330
      %v1338 = vmul.f32 %v1325, %v1330
      %v1339 = vmul.f32 %v1326, %v1330
      %v1340 = vmul.f32 %v1327, %v1330
      %v1341 = vmul.f32 %v1328, %v1330
      %v1343 = vperm.slane %v1100, 0
      %v1345 = vadd.f32 %v1332, %v1343
      %v1346 = vadd.f32 %v1333, %v1343
      %v1347 = vadd.f32 %v1334, %v1343
      %v1348 = vadd.f32 %v1335, %v1343
      %v1349 = vadd.f32 %v1336, %v1343
      %v1350 = vadd.f32 %v1337, %v1343
      %v1351 = vadd.f32 %v1338, %v1343
      %v1352 = vadd.f32 %v1339, %v1343
      %v1353 = vadd.f32 %v1340, %v1343
      %v1354 = vadd.f32 %v1341, %v1343
      %v1355 = vld [vmem:[%s828] sm:$0xff]
      %v1356 = vld [vmem:[%s828 + $0x8] sm:$0x3]
      %v1357 = vsub.f32 1.0, %v1355
      %v1358 = vsub.f32 1.0, %v1356
      %v1359 = vmul.f32 %v1357, -10000.0
      %v1360 = vmul.f32 %v1358, -10000.0
      %v1361 = vld [vmem:[%s8] sm:$0xff]
      %v1362 = vld [vmem:[%s8 + $0x8] sm:$0xff]
      %v1363 = vld [vmem:[%s8 + $0x10] sm:$0xff]
      %v1364 = vld [vmem:[%s8 + $0x18] sm:$0xff]
      %v1365 = vld [vmem:[%s9] sm:$0x1]
      %v1367 = vperm.slane %v1365, 0
      %v1370 = vsel %vm1101, %v1345, 0
      %v1373 = vsel %vm1101, %v1346, 0
      %v1376 = vsel %vm1101, %v1347, 0
      %v1379 = vsel %vm1101, %v1348, 0
      %v1382 = vsel %vm1101, %v1349, 0
      %v1385 = vsel %vm1101, %v1350, 0
      %v1388 = vsel %vm1101, %v1351, 0
      %v1391 = vsel %vm1101, %v1352, 0
      %v1394 = vsel %vm1101, %v1353, 0
      %v1397 = vsel %vm1101, %v1354, 0
      %1399 = vmatpush.msra.mxu0 0.0
      %1400 = vmatpush.msra.mxu0 0.0
      %1401 = vmatpush.msra.mxu0 0.0
      %1402 = vmatpush.msra.mxu0 0.0
      %1403 = vmatpush.msra.mxu0 0.0
      %1404 = vmatpush.msra.mxu0 0.0
      %1405 = vmatpush.msra.mxu0 0.0
      %1406 = vmatpush.msra.mxu0 0.0
      %1407 = vmatpush.msra.mxu0 0.0
      %1408 = vmatpush.msra.mxu0 0.0
      %1409 = vmatpush.msra.mxu0 0.0
      %1410 = vmatpush.msra.mxu0 0.0
      %1411 = vmatpush.msra.mxu0 %v1364
      %1412 = vmatpush.msra.mxu0 %v1363
      %1413 = vmatpush.msra.mxu0 %v1362
      %1414 = vmatpush.msra.mxu0 %v1361
      %1415 = vmatmul.f32.gmra.mxu0 %v1370
      %v1416 = vpop.f32.mrf.mxu0
      %v1417 = vadd.f32 %v1367, %v1416
      %1418 = vmatmul.f32.gmra.mxu0 %v1373
      %v1419 = vpop.f32.mrf.mxu0
      %v1420 = vadd.f32 %v1367, %v1419
      %1421 = vmatmul.f32.gmra.mxu0 %v1376
      %v1422 = vpop.f32.mrf.mxu0
      %v1423 = vadd.f32 %v1367, %v1422
      %1424 = vmatmul.f32.gmra.mxu0 %v1379
      %v1425 = vpop.f32.mrf.mxu0
      %v1426 = vadd.f32 %v1367, %v1425
      %1427 = vmatmul.f32.gmra.mxu0 %v1382
      %v1428 = vpop.f32.mrf.mxu0
      %v1429 = vadd.f32 %v1367, %v1428
      %1430 = vmatmul.f32.gmra.mxu0 %v1385
      %v1431 = vpop.f32.mrf.mxu0
      %v1432 = vadd.f32 %v1367, %v1431
      %1433 = vmatmul.f32.gmra.mxu0 %v1388
      %v1434 = vpop.f32.mrf.mxu0
      %v1435 = vadd.f32 %v1367, %v1434
      %1436 = vmatmul.f32.gmra.mxu0 %v1391
      %v1437 = vpop.f32.mrf.mxu0
      %v1438 = vadd.f32 %v1367, %v1437
      %1439 = vmatmul.f32.gmra.mxu0 %v1394
      %v1440 = vpop.f32.mrf.mxu0
      %v1441 = vadd.f32 %v1367, %v1440
      %1442 = vmatmul.f32.gmra.mxu0 %v1397
      %v1443 = vpop.f32.mrf.mxu0
      %v1444 = vadd.f32 %v1367, %v1443
      %1445 = vdwg.mxu0
      %v1446 = vld [vmem:[%s10] sm:$0xff]
      %v1447 = vld [vmem:[%s10 + $0x8] sm:$0xff]
      %v1448 = vld [vmem:[%s10 + $0x10] sm:$0xff]
      %v1449 = vld [vmem:[%s10 + $0x18] sm:$0xff]
      %v1452 = vrot.slane %v1359, 1
      %v1453 = vrot.slane %v1359, 2
      %v1454 = vrot.slane %v1359, 3
      %v1455 = vrot.slane %v1359, 4
      %v1456 = vrot.slane %v1359, 5
      %v1457 = vrot.slane %v1359, 6
      %v1458 = vrot.slane %v1359, 7
      %v1459 = vrot.slane %v1360, 1
      %v1460 = vperm.slane %v1359, 0
      %v1461 = vperm.slane %v1452, 0
      %v1462 = vperm.slane %v1453, 0
      %v1463 = vperm.slane %v1454, 0
      %v1464 = vperm.slane %v1455, 0
      %v1465 = vperm.slane %v1456, 0
      %v1466 = vperm.slane %v1457, 0
      %v1467 = vperm.slane %v1458, 0
      %v1468 = vperm.slane %v1360, 0
      %v1469 = vperm.slane %v1459, 0
      %1481 = vrot.lane.b32.xlu0 %v1417, 96
      %v1482 = vpop.permute.xlu0 %1481
      %vm1483 = vcmask 130048
      %v1484 = vsel %vm1483, %v1417, 0
      %v1486 = vsel %vm1483, %v1482, 0
      %1488 = vmatpush.xpose.msra.mxu0 0.0
      %1489 = vmatpush.xpose.msra.mxu0 0.0
      %1490 = vmatpush.xpose.msra.mxu0 0.0
      %1491 = vmatpush.xpose.msra.mxu0 0.0
      %1492 = vmatpush.xpose.msra.mxu0 0.0
      %1493 = vmatpush.xpose.msra.mxu0 0.0
      %1494 = vmatpush.xpose.msra.mxu0 0.0
      %1495 = vmatpush.xpose.msra.mxu0 0.0
      %1496 = vmatpush.xpose.msra.mxu0 0.0
      %1497 = vmatpush.xpose.msra.mxu0 0.0
      %1498 = vmatpush.xpose.msra.mxu0 0.0
      %1499 = vmatpush.xpose.msra.mxu0 0.0
      %1500 = vmatpush.xpose.msra.mxu0 0.0
      %1501 = vmatpush.xpose.msra.mxu0 0.0
      %1502 = vmatpush.xpose.msra.mxu0 0.0
      %1503 = vmatpush.xpose.msra.mxu0 %v1486
      %1504 = vmatmul.f32.gmra.mxu0 %v1484
      %v1505 = vpop.f32.mrf.mxu0
      %v1506 = vadd.f32 %v1460, %v1505
      %1507 = vdwg.mxu0
      %1509 = vrot.lane.b32.xlu0 %v1420, 96
      %v1510 = vpop.permute.xlu0 %1509
      %v1511 = vsel %vm1483, %v1420, 0
      %v1513 = vsel %vm1483, %v1510, 0
      %1515 = vmatpush.xpose.msra.mxu0 0.0
      %1516 = vmatpush.xpose.msra.mxu0 0.0
      %1517 = vmatpush.xpose.msra.mxu0 0.0
      %1518 = vmatpush.xpose.msra.mxu0 0.0
      %1519 = vmatpush.xpose.msra.mxu0 0.0
      %1520 = vmatpush.xpose.msra.mxu0 0.0
      %1521 = vmatpush.xpose.msra.mxu0 0.0
      %1522 = vmatpush.xpose.msra.mxu0 0.0
      %1523 = vmatpush.xpose.msra.mxu0 0.0
      %1524 = vmatpush.xpose.msra.mxu0 0.0
      %1525 = vmatpush.xpose.msra.mxu0 0.0
      %1526 = vmatpush.xpose.msra.mxu0 0.0
      %1527 = vmatpush.xpose.msra.mxu0 0.0
      %1528 = vmatpush.xpose.msra.mxu0 0.0
      %1529 = vmatpush.xpose.msra.mxu0 0.0
      %1530 = vmatpush.xpose.msra.mxu0 %v1513
      %1531 = vmatmul.f32.gmra.mxu0 %v1511
      %v1532 = vpop.f32.mrf.mxu0
      %v1533 = vadd.f32 %v1461, %v1532
      %1534 = vdwg.mxu0
      %1536 = vrot.lane.b32.xlu0 %v1423, 96
      %v1537 = vpop.permute.xlu0 %1536
      %v1538 = vsel %vm1483, %v1423, 0
      %v1540 = vsel %vm1483, %v1537, 0
      %1542 = vmatpush.xpose.msra.mxu0 0.0
      %1543 = vmatpush.xpose.msra.mxu0 0.0
      %1544 = vmatpush.xpose.msra.mxu0 0.0
      %1545 = vmatpush.xpose.msra.mxu0 0.0
      %1546 = vmatpush.xpose.msra.mxu0 0.0
      %1547 = vmatpush.xpose.msra.mxu0 0.0
      %1548 = vmatpush.xpose.msra.mxu0 0.0
      %1549 = vmatpush.xpose.msra.mxu0 0.0
      %1550 = vmatpush.xpose.msra.mxu0 0.0
      %1551 = vmatpush.xpose.msra.mxu0 0.0
      %1552 = vmatpush.xpose.msra.mxu0 0.0
      %1553 = vmatpush.xpose.msra.mxu0 0.0
      %1554 = vmatpush.xpose.msra.mxu0 0.0
      %1555 = vmatpush.xpose.msra.mxu0 0.0
      %1556 = vmatpush.xpose.msra.mxu0 0.0
      %1557 = vmatpush.xpose.msra.mxu0 %v1540
      %1558 = vmatmul.f32.gmra.mxu0 %v1538
      %v1559 = vpop.f32.mrf.mxu0
      %v1560 = vadd.f32 %v1462, %v1559
      %1561 = vdwg.mxu0
      %1563 = vrot.lane.b32.xlu0 %v1426, 96
      %v1564 = vpop.permute.xlu0 %1563
      %v1565 = vsel %vm1483, %v1426, 0
      %v1567 = vsel %vm1483, %v1564, 0
      %1569 = vmatpush.xpose.msra.mxu0 0.0
      %1570 = vmatpush.xpose.msra.mxu0 0.0
      %1571 = vmatpush.xpose.msra.mxu0 0.0
      %1572 = vmatpush.xpose.msra.mxu0 0.0
      %1573 = vmatpush.xpose.msra.mxu0 0.0
      %1574 = vmatpush.xpose.msra.mxu0 0.0
      %1575 = vmatpush.xpose.msra.mxu0 0.0
      %1576 = vmatpush.xpose.msra.mxu0 0.0
      %1577 = vmatpush.xpose.msra.mxu0 0.0
      %1578 = vmatpush.xpose.msra.mxu0 0.0
      %1579 = vmatpush.xpose.msra.mxu0 0.0
      %1580 = vmatpush.xpose.msra.mxu0 0.0
      %1581 = vmatpush.xpose.msra.mxu0 0.0
      %1582 = vmatpush.xpose.msra.mxu0 0.0
      %1583 = vmatpush.xpose.msra.mxu0 0.0
      %1584 = vmatpush.xpose.msra.mxu0 %v1567
      %1585 = vmatmul.f32.gmra.mxu0 %v1565
      %v1586 = vpop.f32.mrf.mxu0
      %v1587 = vadd.f32 %v1463, %v1586
      %1588 = vdwg.mxu0
      %1590 = vrot.lane.b32.xlu0 %v1429, 96
      %v1591 = vpop.permute.xlu0 %1590
      %v1592 = vsel %vm1483, %v1429, 0
      %v1594 = vsel %vm1483, %v1591, 0
      %1596 = vmatpush.xpose.msra.mxu0 0.0
      %1597 = vmatpush.xpose.msra.mxu0 0.0
      %1598 = vmatpush.xpose.msra.mxu0 0.0
      %1599 = vmatpush.xpose.msra.mxu0 0.0
      %1600 = vmatpush.xpose.msra.mxu0 0.0
      %1601 = vmatpush.xpose.msra.mxu0 0.0
      %1602 = vmatpush.xpose.msra.mxu0 0.0
      %1603 = vmatpush.xpose.msra.mxu0 0.0
      %1604 = vmatpush.xpose.msra.mxu0 0.0
      %1605 = vmatpush.xpose.msra.mxu0 0.0
      %1606 = vmatpush.xpose.msra.mxu0 0.0
      %1607 = vmatpush.xpose.msra.mxu0 0.0
      %1608 = vmatpush.xpose.msra.mxu0 0.0
      %1609 = vmatpush.xpose.msra.mxu0 0.0
      %1610 = vmatpush.xpose.msra.mxu0 0.0
      %1611 = vmatpush.xpose.msra.mxu0 %v1594
      %1612 = vmatmul.f32.gmra.mxu0 %v1592
      %v1613 = vpop.f32.mrf.mxu0
      %v1614 = vadd.f32 %v1464, %v1613
      %1615 = vdwg.mxu0
      %1617 = vrot.lane.b32.xlu0 %v1432, 96
      %v1618 = vpop.permute.xlu0 %1617
      %v1619 = vsel %vm1483, %v1432, 0
      %v1621 = vsel %vm1483, %v1618, 0
      %1623 = vmatpush.xpose.msra.mxu0 0.0
      %1624 = vmatpush.xpose.msra.mxu0 0.0
      %1625 = vmatpush.xpose.msra.mxu0 0.0
      %1626 = vmatpush.xpose.msra.mxu0 0.0
      %1627 = vmatpush.xpose.msra.mxu0 0.0
      %1628 = vmatpush.xpose.msra.mxu0 0.0
      %1629 = vmatpush.xpose.msra.mxu0 0.0
      %1630 = vmatpush.xpose.msra.mxu0 0.0
      %1631 = vmatpush.xpose.msra.mxu0 0.0
      %1632 = vmatpush.xpose.msra.mxu0 0.0
      %1633 = vmatpush.xpose.msra.mxu0 0.0
      %1634 = vmatpush.xpose.msra.mxu0 0.0
      %1635 = vmatpush.xpose.msra.mxu0 0.0
      %1636 = vmatpush.xpose.msra.mxu0 0.0
      %1637 = vmatpush.xpose.msra.mxu0 0.0
      %1638 = vmatpush.xpose.msra.mxu0 %v1621
      %1639 = vmatmul.f32.gmra.mxu0 %v1619
      %v1640 = vpop.f32.mrf.mxu0
      %v1641 = vadd.f32 %v1465, %v1640
      %1642 = vdwg.mxu0
      %1644 = vrot.lane.b32.xlu0 %v1435, 96
      %v1645 = vpop.permute.xlu0 %1644
      %v1646 = vsel %vm1483, %v1435, 0
      %v1648 = vsel %vm1483, %v1645, 0
      %1650 = vmatpush.xpose.msra.mxu0 0.0
      %1651 = vmatpush.xpose.msra.mxu0 0.0
      %1652 = vmatpush.xpose.msra.mxu0 0.0
      %1653 = vmatpush.xpose.msra.mxu0 0.0
      %1654 = vmatpush.xpose.msra.mxu0 0.0
      %1655 = vmatpush.xpose.msra.mxu0 0.0
      %1656 = vmatpush.xpose.msra.mxu0 0.0
      %1657 = vmatpush.xpose.msra.mxu0 0.0
      %1658 = vmatpush.xpose.msra.mxu0 0.0
      %1659 = vmatpush.xpose.msra.mxu0 0.0
      %1660 = vmatpush.xpose.msra.mxu0 0.0
      %1661 = vmatpush.xpose.msra.mxu0 0.0
      %1662 = vmatpush.xpose.msra.mxu0 0.0
      %1663 = vmatpush.xpose.msra.mxu0 0.0
      %1664 = vmatpush.xpose.msra.mxu0 0.0
      %1665 = vmatpush.xpose.msra.mxu0 %v1648
      %1666 = vmatmul.f32.gmra.mxu0 %v1646
      %v1667 = vpop.f32.mrf.mxu0
      %v1668 = vadd.f32 %v1466, %v1667
      %1669 = vdwg.mxu0
      %1671 = vrot.lane.b32.xlu0 %v1438, 96
      %v1672 = vpop.permute.xlu0 %1671
      %v1673 = vsel %vm1483, %v1438, 0
      %v1675 = vsel %vm1483, %v1672, 0
      %1677 = vmatpush.xpose.msra.mxu0 0.0
      %1678 = vmatpush.xpose.msra.mxu0 0.0
      %1679 = vmatpush.xpose.msra.mxu0 0.0
      %1680 = vmatpush.xpose.msra.mxu0 0.0
      %1681 = vmatpush.xpose.msra.mxu0 0.0
      %1682 = vmatpush.xpose.msra.mxu0 0.0
      %1683 = vmatpush.xpose.msra.mxu0 0.0
      %1684 = vmatpush.xpose.msra.mxu0 0.0
      %1685 = vmatpush.xpose.msra.mxu0 0.0
      %1686 = vmatpush.xpose.msra.mxu0 0.0
      %1687 = vmatpush.xpose.msra.mxu0 0.0
      %1688 = vmatpush.xpose.msra.mxu0 0.0
      %1689 = vmatpush.xpose.msra.mxu0 0.0
      %1690 = vmatpush.xpose.msra.mxu0 0.0
      %1691 = vmatpush.xpose.msra.mxu0 0.0
      %1692 = vmatpush.xpose.msra.mxu0 %v1675
      %1693 = vmatmul.f32.gmra.mxu0 %v1673
      %v1694 = vpop.f32.mrf.mxu0
      %v1695 = vadd.f32 %v1467, %v1694
      %1696 = vdwg.mxu0
      %1698 = vrot.lane.b32.xlu0 %v1441, 96
      %v1699 = vpop.permute.xlu0 %1698
      %v1700 = vsel %vm1483, %v1441, 0
      %v1702 = vsel %vm1483, %v1699, 0
      %1704 = vmatpush.xpose.msra.mxu0 0.0
      %1705 = vmatpush.xpose.msra.mxu0 0.0
      %1706 = vmatpush.xpose.msra.mxu0 0.0
      %1707 = vmatpush.xpose.msra.mxu0 0.0
      %1708 = vmatpush.xpose.msra.mxu0 0.0
      %1709 = vmatpush.xpose.msra.mxu0 0.0
      %1710 = vmatpush.xpose.msra.mxu0 0.0
      %1711 = vmatpush.xpose.msra.mxu0 0.0
      %1712 = vmatpush.xpose.msra.mxu0 0.0
      %1713 = vmatpush.xpose.msra.mxu0 0.0
      %1714 = vmatpush.xpose.msra.mxu0 0.0
      %1715 = vmatpush.xpose.msra.mxu0 0.0
      %1716 = vmatpush.xpose.msra.mxu0 0.0
      %1717 = vmatpush.xpose.msra.mxu0 0.0
      %1718 = vmatpush.xpose.msra.mxu0 0.0
      %1719 = vmatpush.xpose.msra.mxu0 %v1702
      %1720 = vmatmul.f32.gmra.mxu0 %v1700
      %v1721 = vpop.f32.mrf.mxu0
      %v1722 = vadd.f32 %v1468, %v1721
      %1723 = vdwg.mxu0
      %1725 = vrot.lane.b32.xlu0 %v1444, 96
      %v1726 = vpop.permute.xlu0 %1725
      %v1727 = vsel %vm1483, %v1444, 0
      %v1729 = vsel %vm1483, %v1726, 0
      %1731 = vmatpush.xpose.msra.mxu0 0.0
      %1732 = vmatpush.xpose.msra.mxu0 0.0
      %1733 = vmatpush.xpose.msra.mxu0 0.0
      %1734 = vmatpush.xpose.msra.mxu0 0.0
      %1735 = vmatpush.xpose.msra.mxu0 0.0
      %1736 = vmatpush.xpose.msra.mxu0 0.0
      %1737 = vmatpush.xpose.msra.mxu0 0.0
      %1738 = vmatpush.xpose.msra.mxu0 0.0
      %1739 = vmatpush.xpose.msra.mxu0 0.0
      %1740 = vmatpush.xpose.msra.mxu0 0.0
      %1741 = vmatpush.xpose.msra.mxu0 0.0
      %1742 = vmatpush.xpose.msra.mxu0 0.0
      %1743 = vmatpush.xpose.msra.mxu0 0.0
      %1744 = vmatpush.xpose.msra.mxu0 0.0
      %1745 = vmatpush.xpose.msra.mxu0 0.0
      %1746 = vmatpush.xpose.msra.mxu0 %v1729
      %1747 = vmatmul.f32.gmra.mxu0 %v1727
      %v1748 = vpop.f32.mrf.mxu0
      %v1749 = vadd.f32 %v1469, %v1748
      %1750 = vdwg.mxu0
      %vm1751 = vcmask 64512
      %v1752 = vsel %vm1751, %v1506, -inf
      %1753 = vmax.xlane.f32.xlu0 %v1752
      %v1754 = vpop.xlane.xlu0 %1753
      %v1755 = vsel %vm1751, %v1533, -inf
      %1756 = vmax.xlane.f32.xlu0 %v1755
      %v1757 = vpop.xlane.xlu0 %1756
      %v1758 = vsel %vm1751, %v1560, -inf
      %1759 = vmax.xlane.f32.xlu0 %v1758
      %v1760 = vpop.xlane.xlu0 %1759
      %v1761 = vsel %vm1751, %v1587, -inf
      %1762 = vmax.xlane.f32.xlu0 %v1761
      %v1763 = vpop.xlane.xlu0 %1762
      %v1764 = vsel %vm1751, %v1614, -inf
      %1765 = vmax.xlane.f32.xlu0 %v1764
      %v1766 = vpop.xlane.xlu0 %1765
      %v1767 = vsel %vm1751, %v1641, -inf
      %1768 = vmax.xlane.f32.xlu0 %v1767
      %v1769 = vpop.xlane.xlu0 %1768
      %v1770 = vsel %vm1751, %v1668, -inf
      %1771 = vmax.xlane.f32.xlu0 %v1770
      %v1772 = vpop.xlane.xlu0 %1771
      %v1773 = vsel %vm1751, %v1695, -inf
      %1774 = vmax.xlane.f32.xlu0 %v1773
      %v1775 = vpop.xlane.xlu0 %1774
      %v1776 = vsel %vm1751, %v1722, -inf
      %1777 = vmax.xlane.f32.xlu0 %v1776
      %v1778 = vpop.xlane.xlu0 %1777
      %v1779 = vsel %vm1751, %v1749, -inf
      %1780 = vmax.xlane.f32.xlu0 %v1779
      %v1781 = vpop.xlane.xlu0 %1780
      %v1782 = vsub.f32 %v1506, %v1754
      %v1783 = vsub.f32 %v1533, %v1757
      %v1784 = vsub.f32 %v1560, %v1760
      %v1785 = vsub.f32 %v1587, %v1763
      %v1786 = vsub.f32 %v1614, %v1766
      %v1787 = vsub.f32 %v1641, %v1769
      %v1788 = vsub.f32 %v1668, %v1772
      %v1789 = vsub.f32 %v1695, %v1775
      %v1790 = vsub.f32 %v1722, %v1778
      %v1791 = vsub.f32 %v1749, %v1781
      %v1792 = vmul.f32 %v1782, 1.442695
      %v1793 = vpow.pop %v1792
      %v1794 = vmul.f32 %v1783, 1.442695
      %v1795 = vpow.pop %v1794
      %v1796 = vmul.f32 %v1784, 1.442695
      %v1797 = vpow.pop %v1796
      %v1798 = vmul.f32 %v1785, 1.442695
      %v1799 = vpow.pop %v1798
      %v1800 = vmul.f32 %v1786, 1.442695
      %v1801 = vpow.pop %v1800
      %v1802 = vmul.f32 %v1787, 1.442695
      %v1803 = vpow.pop %v1802
      %v1804 = vmul.f32 %v1788, 1.442695
      %v1805 = vpow.pop %v1804
      %v1806 = vmul.f32 %v1789, 1.442695
      %v1807 = vpow.pop %v1806
      %v1808 = vmul.f32 %v1790, 1.442695
      %v1809 = vpow.pop %v1808
      %v1810 = vmul.f32 %v1791, 1.442695
      %v1811 = vpow.pop %v1810
      %v1812 = vsel %vm1751, %v1793, 0.0
      %1813 = vadd.xlane.f32.xlu0 %v1812
      %v1814 = vpop.xlane.xlu0 %1813
      %v1815 = vsel %vm1751, %v1795, 0.0
      %1816 = vadd.xlane.f32.xlu0 %v1815
      %v1817 = vpop.xlane.xlu0 %1816
      %v1818 = vsel %vm1751, %v1797, 0.0
      %1819 = vadd.xlane.f32.xlu0 %v1818
      %v1820 = vpop.xlane.xlu0 %1819
      %v1821 = vsel %vm1751, %v1799, 0.0
      %1822 = vadd.xlane.f32.xlu0 %v1821
      %v1823 = vpop.xlane.xlu0 %1822
      %v1824 = vsel %vm1751, %v1801, 0.0
      %1825 = vadd.xlane.f32.xlu0 %v1824
      %v1826 = vpop.xlane.xlu0 %1825
      %v1827 = vsel %vm1751, %v1803, 0.0
      %1828 = vadd.xlane.f32.xlu0 %v1827
      %v1829 = vpop.xlane.xlu0 %1828
      %v1830 = vsel %vm1751, %v1805, 0.0
      %1831 = vadd.xlane.f32.xlu0 %v1830
      %v1832 = vpop.xlane.xlu0 %1831
      %v1833 = vsel %vm1751, %v1807, 0.0
      %1834 = vadd.xlane.f32.xlu0 %v1833
      %v1835 = vpop.xlane.xlu0 %1834
      %v1836 = vsel %vm1751, %v1809, 0.0
      %1837 = vadd.xlane.f32.xlu0 %v1836
      %v1838 = vpop.xlane.xlu0 %1837
      %v1839 = vsel %vm1751, %v1811, 0.0
      %1840 = vadd.xlane.f32.xlu0 %v1839
      %v1841 = vpop.xlane.xlu0 %1840
      %v1842 = vrcp.pop %v1814
      %v1843 = vrcp.pop %v1817
      %v1844 = vrcp.pop %v1820
      %v1845 = vrcp.pop %v1823
      %v1846 = vrcp.pop %v1826
      %v1847 = vrcp.pop %v1829
      %v1848 = vrcp.pop %v1832
      %v1849 = vrcp.pop %v1835
      %v1850 = vrcp.pop %v1838
      %v1851 = vrcp.pop %v1841
      %v1852 = vmul.f32 %v1793, %v1842
      %v1853 = vmul.f32 %v1795, %v1843
      %v1854 = vmul.f32 %v1797, %v1844
      %v1855 = vmul.f32 %v1799, %v1845
      %v1856 = vmul.f32 %v1801, %v1846
      %v1857 = vmul.f32 %v1803, %v1847
      %v1858 = vmul.f32 %v1805, %v1848
      %v1859 = vmul.f32 %v1807, %v1849
      %v1860 = vmul.f32 %v1809, %v1850
      %v1861 = vmul.f32 %v1811, %v1851
      %1862 = vrot.lane.b32.xlu0 %v1417, 64
      %v1863 = vpop.permute.xlu0 %1862
      %v1866 = vsel %vm1751, %v1852, 0
      %1868 = vmatpush.msra.mxu0 0.0
      %1869 = vmatpush.msra.mxu0 0.0
      %1870 = vmatpush.msra.mxu0 0.0
      %1871 = vmatpush.msra.mxu0 0.0
      %1872 = vmatpush.msra.mxu0 0.0
      %1873 = vmatpush.msra.mxu0 0.0
      %1874 = vmatpush.msra.mxu0 0.0
      %1875 = vmatpush.msra.mxu0 0.0
      %1876 = vmatpush.msra.mxu0 0.0
      %1877 = vmatpush.msra.mxu0 0.0
      %1878 = vmatpush.msra.mxu0 0.0
      %1879 = vmatpush.msra.mxu0 0.0
      %1880 = vmatpush.msra.mxu0 0.0
      %1881 = vmatpush.msra.mxu0 0.0
      %1882 = vmatpush.msra.mxu0 0.0
      %1883 = vmatpush.msra.mxu0 %v1863
      %1884 = vmatmul.f32.gmra.mxu0 %v1866
      %v1885 = vpop.f32.mrf.mxu0
      %v1886 = vadd.f32 0.0, %v1885
      %1887 = vdwg.mxu0
      %1888 = vrot.lane.b32.xlu0 %v1420, 64
      %v1889 = vpop.permute.xlu0 %1888
      %v1892 = vsel %vm1751, %v1853, 0
      %1894 = vmatpush.msra.mxu0 0.0
      %1895 = vmatpush.msra.mxu0 0.0
      %1896 = vmatpush.msra.mxu0 0.0
      %1897 = vmatpush.msra.mxu0 0.0
      %1898 = vmatpush.msra.mxu0 0.0
      %1899 = vmatpush.msra.mxu0 0.0
      %1900 = vmatpush.msra.mxu0 0.0
      %1901 = vmatpush.msra.mxu0 0.0
      %1902 = vmatpush.msra.mxu0 0.0
      %1903 = vmatpush.msra.mxu0 0.0
      %1904 = vmatpush.msra.mxu0 0.0
      %1905 = vmatpush.msra.mxu0 0.0
      %1906 = vmatpush.msra.mxu0 0.0
      %1907 = vmatpush.msra.mxu0 0.0
      %1908 = vmatpush.msra.mxu0 0.0
      %1909 = vmatpush.msra.mxu0 %v1889
      %1910 = vmatmul.f32.gmra.mxu0 %v1892
      %v1911 = vpop.f32.mrf.mxu0
      %v1912 = vadd.f32 0.0, %v1911
      %1913 = vdwg.mxu0
      %1914 = vrot.lane.b32.xlu0 %v1423, 64
      %v1915 = vpop.permute.xlu0 %1914
      %v1918 = vsel %vm1751, %v1854, 0
      %1920 = vmatpush.msra.mxu0 0.0
      %1921 = vmatpush.msra.mxu0 0.0
      %1922 = vmatpush.msra.mxu0 0.0
      %1923 = vmatpush.msra.mxu0 0.0
      %1924 = vmatpush.msra.mxu0 0.0
      %1925 = vmatpush.msra.mxu0 0.0
      %1926 = vmatpush.msra.mxu0 0.0
      %1927 = vmatpush.msra.mxu0 0.0
      %1928 = vmatpush.msra.mxu0 0.0
      %1929 = vmatpush.msra.mxu0 0.0
      %1930 = vmatpush.msra.mxu0 0.0
      %1931 = vmatpush.msra.mxu0 0.0
      %1932 = vmatpush.msra.mxu0 0.0
      %1933 = vmatpush.msra.mxu0 0.0
      %1934 = vmatpush.msra.mxu0 0.0
      %1935 = vmatpush.msra.mxu0 %v1915
      %1936 = vmatmul.f32.gmra.mxu0 %v1918
      %v1937 = vpop.f32.mrf.mxu0
      %v1938 = vadd.f32 0.0, %v1937
      %1939 = vdwg.mxu0
      %1940 = vrot.lane.b32.xlu0 %v1426, 64
      %v1941 = vpop.permute.xlu0 %1940
      %v1944 = vsel %vm1751, %v1855, 0
      %1946 = vmatpush.msra.mxu0 0.0
      %1947 = vmatpush.msra.mxu0 0.0
      %1948 = vmatpush.msra.mxu0 0.0
      %1949 = vmatpush.msra.mxu0 0.0
      %1950 = vmatpush.msra.mxu0 0.0
      %1951 = vmatpush.msra.mxu0 0.0
      %1952 = vmatpush.msra.mxu0 0.0
      %1953 = vmatpush.msra.mxu0 0.0
      %1954 = vmatpush.msra.mxu0 0.0
      %1955 = vmatpush.msra.mxu0 0.0
      %1956 = vmatpush.msra.mxu0 0.0
      %1957 = vmatpush.msra.mxu0 0.0
      %1958 = vmatpush.msra.mxu0 0.0
      %1959 = vmatpush.msra.mxu0 0.0
      %1960 = vmatpush.msra.mxu0 0.0
      %1961 = vmatpush.msra.mxu0 %v1941
      %1962 = vmatmul.f32.gmra.mxu0 %v1944
      %v1963 = vpop.f32.mrf.mxu0
      %v1964 = vadd.f32 0.0, %v1963
      %1965 = vdwg.mxu0
      %1966 = vrot.lane.b32.xlu0 %v1429, 64
      %v1967 = vpop.permute.xlu0 %1966
      %v1970 = vsel %vm1751, %v1856, 0
      %1972 = vmatpush.msra.mxu0 0.0
      %1973 = vmatpush.msra.mxu0 0.0
      %1974 = vmatpush.msra.mxu0 0.0
      %1975 = vmatpush.msra.mxu0 0.0
      %1976 = vmatpush.msra.mxu0 0.0
      %1977 = vmatpush.msra.mxu0 0.0
      %1978 = vmatpush.msra.mxu0 0.0
      %1979 = vmatpush.msra.mxu0 0.0
      %1980 = vmatpush.msra.mxu0 0.0
      %1981 = vmatpush.msra.mxu0 0.0
      %1982 = vmatpush.msra.mxu0 0.0
      %1983 = vmatpush.msra.mxu0 0.0
      %1984 = vmatpush.msra.mxu0 0.0
      %1985 = vmatpush.msra.mxu0 0.0
      %1986 = vmatpush.msra.mxu0 0.0
      %1987 = vmatpush.msra.mxu0 %v1967
      %1988 = vmatmul.f32.gmra.mxu0 %v1970
      %v1989 = vpop.f32.mrf.mxu0
      %v1990 = vadd.f32 0.0, %v1989
      %1991 = vdwg.mxu0
      %1992 = vrot.lane.b32.xlu0 %v1432, 64
      %v1993 = vpop.permute.xlu0 %1992
      %v1996 = vsel %vm1751, %v1857, 0
      %1998 = vmatpush.msra.mxu0 0.0
      %1999 = vmatpush.msra.mxu0 0.0
      %2000 = vmatpush.msra.mxu0 0.0
      %2001 = vmatpush.msra.mxu0 0.0
      %2002 = vmatpush.msra.mxu0 0.0
      %2003 = vmatpush.msra.mxu0 0.0
      %2004 = vmatpush.msra.mxu0 0.0
      %2005 = vmatpush.msra.mxu0 0.0
      %2006 = vmatpush.msra.mxu0 0.0
      %2007 = vmatpush.msra.mxu0 0.0
      %2008 = vmatpush.msra.mxu0 0.0
      %2009 = vmatpush.msra.mxu0 0.0
      %2010 = vmatpush.msra.mxu0 0.0
      %2011 = vmatpush.msra.mxu0 0.0
      %2012 = vmatpush.msra.mxu0 0.0
      %2013 = vmatpush.msra.mxu0 %v1993
      %2014 = vmatmul.f32.gmra.mxu0 %v1996
      %v2015 = vpop.f32.mrf.mxu0
      %v2016 = vadd.f32 0.0, %v2015
      %2017 = vdwg.mxu0
      %2018 = vrot.lane.b32.xlu0 %v1435, 64
      %v2019 = vpop.permute.xlu0 %2018
      %v2022 = vsel %vm1751, %v1858, 0
      %2024 = vmatpush.msra.mxu0 0.0
      %2025 = vmatpush.msra.mxu0 0.0
      %2026 = vmatpush.msra.mxu0 0.0
      %2027 = vmatpush.msra.mxu0 0.0
      %2028 = vmatpush.msra.mxu0 0.0
      %2029 = vmatpush.msra.mxu0 0.0
      %2030 = vmatpush.msra.mxu0 0.0
      %2031 = vmatpush.msra.mxu0 0.0
      %2032 = vmatpush.msra.mxu0 0.0
      %2033 = vmatpush.msra.mxu0 0.0
      %2034 = vmatpush.msra.mxu0 0.0
      %2035 = vmatpush.msra.mxu0 0.0
      %2036 = vmatpush.msra.mxu0 0.0
      %2037 = vmatpush.msra.mxu0 0.0
      %2038 = vmatpush.msra.mxu0 0.0
      %2039 = vmatpush.msra.mxu0 %v2019
      %2040 = vmatmul.f32.gmra.mxu0 %v2022
      %v2041 = vpop.f32.mrf.mxu0
      %v2042 = vadd.f32 0.0, %v2041
      %2043 = vdwg.mxu0
      %2044 = vrot.lane.b32.xlu0 %v1438, 64
      %v2045 = vpop.permute.xlu0 %2044
      %v2048 = vsel %vm1751, %v1859, 0
      %2050 = vmatpush.msra.mxu0 0.0
      %2051 = vmatpush.msra.mxu0 0.0
      %2052 = vmatpush.msra.mxu0 0.0
      %2053 = vmatpush.msra.mxu0 0.0
      %2054 = vmatpush.msra.mxu0 0.0
      %2055 = vmatpush.msra.mxu0 0.0
      %2056 = vmatpush.msra.mxu0 0.0
      %2057 = vmatpush.msra.mxu0 0.0
      %2058 = vmatpush.msra.mxu0 0.0
      %2059 = vmatpush.msra.mxu0 0.0
      %2060 = vmatpush.msra.mxu0 0.0
      %2061 = vmatpush.msra.mxu0 0.0
      %2062 = vmatpush.msra.mxu0 0.0
      %2063 = vmatpush.msra.mxu0 0.0
      %2064 = vmatpush.msra.mxu0 0.0
      %2065 = vmatpush.msra.mxu0 %v2045
      %2066 = vmatmul.f32.gmra.mxu0 %v2048
      %v2067 = vpop.f32.mrf.mxu0
      %v2068 = vadd.f32 0.0, %v2067
      %2069 = vdwg.mxu0
      %2070 = vrot.lane.b32.xlu0 %v1441, 64
      %v2071 = vpop.permute.xlu0 %2070
      %v2074 = vsel %vm1751, %v1860, 0
      %2076 = vmatpush.msra.mxu0 0.0
      %2077 = vmatpush.msra.mxu0 0.0
      %2078 = vmatpush.msra.mxu0 0.0
      %2079 = vmatpush.msra.mxu0 0.0
      %2080 = vmatpush.msra.mxu0 0.0
      %2081 = vmatpush.msra.mxu0 0.0
      %2082 = vmatpush.msra.mxu0 0.0
      %2083 = vmatpush.msra.mxu0 0.0
      %2084 = vmatpush.msra.mxu0 0.0
      %2085 = vmatpush.msra.mxu0 0.0
      %2086 = vmatpush.msra.mxu0 0.0
      %2087 = vmatpush.msra.mxu0 0.0
      %2088 = vmatpush.msra.mxu0 0.0
      %2089 = vmatpush.msra.mxu0 0.0
      %2090 = vmatpush.msra.mxu0 0.0
      %2091 = vmatpush.msra.mxu0 %v2071
      %2092 = vmatmul.f32.gmra.mxu0 %v2074
      %v2093 = vpop.f32.mrf.mxu0
      %v2094 = vadd.f32 0.0, %v2093
      %2095 = vdwg.mxu0
      %2096 = vrot.lane.b32.xlu0 %v1444, 64
      %v2097 = vpop.permute.xlu0 %2096
      %v2100 = vsel %vm1751, %v1861, 0
      %2102 = vmatpush.msra.mxu0 0.0
      %2103 = vmatpush.msra.mxu0 0.0
      %2104 = vmatpush.msra.mxu0 0.0
      %2105 = vmatpush.msra.mxu0 0.0
      %2106 = vmatpush.msra.mxu0 0.0
      %2107 = vmatpush.msra.mxu0 0.0
      %2108 = vmatpush.msra.mxu0 0.0
      %2109 = vmatpush.msra.mxu0 0.0
      %2110 = vmatpush.msra.mxu0 0.0
      %2111 = vmatpush.msra.mxu0 0.0
      %2112 = vmatpush.msra.mxu0 0.0
      %2113 = vmatpush.msra.mxu0 0.0
      %2114 = vmatpush.msra.mxu0 0.0
      %2115 = vmatpush.msra.mxu0 0.0
      %2116 = vmatpush.msra.mxu0 0.0
      %2117 = vmatpush.msra.mxu0 %v2097
      %2118 = vmatmul.f32.gmra.mxu0 %v2100
      %v2119 = vpop.f32.mrf.mxu0
      %v2120 = vadd.f32 0.0, %v2119
      %2121 = vdwg.mxu0
      %2122 = vrot.lane.b32.xlu0 %v1417, 112
      %v2123 = vpop.permute.xlu0 %2122
      %2124 = vrot.lane.b32.xlu0 %v1417, 80
      %v2125 = vpop.permute.xlu0 %2124
      %v2126 = vsel %vm1483, %v2123, 0
      %v2128 = vsel %vm1483, %v2125, 0
      %2130 = vmatpush.xpose.msra.mxu0 0.0
      %2131 = vmatpush.xpose.msra.mxu0 0.0
      %2132 = vmatpush.xpose.msra.mxu0 0.0
      %2133 = vmatpush.xpose.msra.mxu0 0.0
      %2134 = vmatpush.xpose.msra.mxu0 0.0
      %2135 = vmatpush.xpose.msra.mxu0 0.0
      %2136 = vmatpush.xpose.msra.mxu0 0.0
      %2137 = vmatpush.xpose.msra.mxu0 0.0
      %2138 = vmatpush.xpose.msra.mxu0 0.0
      %2139 = vmatpush.xpose.msra.mxu0 0.0
      %2140 = vmatpush.xpose.msra.mxu0 0.0
      %2141 = vmatpush.xpose.msra.mxu0 0.0
      %2142 = vmatpush.xpose.msra.mxu0 0.0
      %2143 = vmatpush.xpose.msra.mxu0 0.0
      %2144 = vmatpush.xpose.msra.mxu0 0.0
      %2145 = vmatpush.xpose.msra.mxu0 %v2128
      %2146 = vmatmul.f32.gmra.mxu0 %v2126
      %v2147 = vpop.f32.mrf.mxu0
      %v2148 = vadd.f32 %v1460, %v2147
      %2149 = vdwg.mxu0
      %2150 = vrot.lane.b32.xlu0 %v1420, 112
      %v2151 = vpop.permute.xlu0 %2150
      %2152 = vrot.lane.b32.xlu0 %v1420, 80
      %v2153 = vpop.permute.xlu0 %2152
      %v2154 = vsel %vm1483, %v2151, 0
      %v2156 = vsel %vm1483, %v2153, 0
      %2158 = vmatpush.xpose.msra.mxu0 0.0
      %2159 = vmatpush.xpose.msra.mxu0 0.0
      %2160 = vmatpush.xpose.msra.mxu0 0.0
      %2161 = vmatpush.xpose.msra.mxu0 0.0
      %2162 = vmatpush.xpose.msra.mxu0 0.0
      %2163 = vmatpush.xpose.msra.mxu0 0.0
      %2164 = vmatpush.xpose.msra.mxu0 0.0
      %2165 = vmatpush.xpose.msra.mxu0 0.0
      %2166 = vmatpush.xpose.msra.mxu0 0.0
      %2167 = vmatpush.xpose.msra.mxu0 0.0
      %2168 = vmatpush.xpose.msra.mxu0 0.0
      %2169 = vmatpush.xpose.msra.mxu0 0.0
      %2170 = vmatpush.xpose.msra.mxu0 0.0
      %2171 = vmatpush.xpose.msra.mxu0 0.0
      %2172 = vmatpush.xpose.msra.mxu0 0.0
      %2173 = vmatpush.xpose.msra.mxu0 %v2156
      %2174 = vmatmul.f32.gmra.mxu0 %v2154
      %v2175 = vpop.f32.mrf.mxu0
      %v2176 = vadd.f32 %v1461, %v2175
      %2177 = vdwg.mxu0
      %2178 = vrot.lane.b32.xlu0 %v1423, 112
      %v2179 = vpop.permute.xlu0 %2178
      %2180 = vrot.lane.b32.xlu0 %v1423, 80
      %v2181 = vpop.permute.xlu0 %2180
      %v2182 = vsel %vm1483, %v2179, 0
      %v2184 = vsel %vm1483, %v2181, 0
      %2186 = vmatpush.xpose.msra.mxu0 0.0
      %2187 = vmatpush.xpose.msra.mxu0 0.0
      %2188 = vmatpush.xpose.msra.mxu0 0.0
      %2189 = vmatpush.xpose.msra.mxu0 0.0
      %2190 = vmatpush.xpose.msra.mxu0 0.0
      %2191 = vmatpush.xpose.msra.mxu0 0.0
      %2192 = vmatpush.xpose.msra.mxu0 0.0
      %2193 = vmatpush.xpose.msra.mxu0 0.0
      %2194 = vmatpush.xpose.msra.mxu0 0.0
      %2195 = vmatpush.xpose.msra.mxu0 0.0
      %2196 = vmatpush.xpose.msra.mxu0 0.0
      %2197 = vmatpush.xpose.msra.mxu0 0.0
      %2198 = vmatpush.xpose.msra.mxu0 0.0
      %2199 = vmatpush.xpose.msra.mxu0 0.0
      %2200 = vmatpush.xpose.msra.mxu0 0.0
      %2201 = vmatpush.xpose.msra.mxu0 %v2184
      %2202 = vmatmul.f32.gmra.mxu0 %v2182
      %v2203 = vpop.f32.mrf.mxu0
      %v2204 = vadd.f32 %v1462, %v2203
      %2205 = vdwg.mxu0
      %2206 = vrot.lane.b32.xlu0 %v1426, 112
      %v2207 = vpop.permute.xlu0 %2206
      %2208 = vrot.lane.b32.xlu0 %v1426, 80
      %v2209 = vpop.permute.xlu0 %2208
      %v2210 = vsel %vm1483, %v2207, 0
      %v2212 = vsel %vm1483, %v2209, 0
      %2214 = vmatpush.xpose.msra.mxu0 0.0
      %2215 = vmatpush.xpose.msra.mxu0 0.0
      %2216 = vmatpush.xpose.msra.mxu0 0.0
      %2217 = vmatpush.xpose.msra.mxu0 0.0
      %2218 = vmatpush.xpose.msra.mxu0 0.0
      %2219 = vmatpush.xpose.msra.mxu0 0.0
      %2220 = vmatpush.xpose.msra.mxu0 0.0
      %2221 = vmatpush.xpose.msra.mxu0 0.0
      %2222 = vmatpush.xpose.msra.mxu0 0.0
      %2223 = vmatpush.xpose.msra.mxu0 0.0
      %2224 = vmatpush.xpose.msra.mxu0 0.0
      %2225 = vmatpush.xpose.msra.mxu0 0.0
      %2226 = vmatpush.xpose.msra.mxu0 0.0
      %2227 = vmatpush.xpose.msra.mxu0 0.0
      %2228 = vmatpush.xpose.msra.mxu0 0.0
      %2229 = vmatpush.xpose.msra.mxu0 %v2212
      %2230 = vmatmul.f32.gmra.mxu0 %v2210
      %v2231 = vpop.f32.mrf.mxu0
      %v2232 = vadd.f32 %v1463, %v2231
      %2233 = vdwg.mxu0
      %2234 = vrot.lane.b32.xlu0 %v1429, 112
      %v2235 = vpop.permute.xlu0 %2234
      %2236 = vrot.lane.b32.xlu0 %v1429, 80
      %v2237 = vpop.permute.xlu0 %2236
      %v2238 = vsel %vm1483, %v2235, 0
      %v2240 = vsel %vm1483, %v2237, 0
      %2242 = vmatpush.xpose.msra.mxu0 0.0
      %2243 = vmatpush.xpose.msra.mxu0 0.0
      %2244 = vmatpush.xpose.msra.mxu0 0.0
      %2245 = vmatpush.xpose.msra.mxu0 0.0
      %2246 = vmatpush.xpose.msra.mxu0 0.0
      %2247 = vmatpush.xpose.msra.mxu0 0.0
      %2248 = vmatpush.xpose.msra.mxu0 0.0
      %2249 = vmatpush.xpose.msra.mxu0 0.0
      %2250 = vmatpush.xpose.msra.mxu0 0.0
      %2251 = vmatpush.xpose.msra.mxu0 0.0
      %2252 = vmatpush.xpose.msra.mxu0 0.0
      %2253 = vmatpush.xpose.msra.mxu0 0.0
      %2254 = vmatpush.xpose.msra.mxu0 0.0
      %2255 = vmatpush.xpose.msra.mxu0 0.0
      %2256 = vmatpush.xpose.msra.mxu0 0.0
      %2257 = vmatpush.xpose.msra.mxu0 %v2240
      %2258 = vmatmul.f32.gmra.mxu0 %v2238
      %v2259 = vpop.f32.mrf.mxu0
      %v2260 = vadd.f32 %v1464, %v2259
      %2261 = vdwg.mxu0
      %2262 = vrot.lane.b32.xlu0 %v1432, 112
      %v2263 = vpop.permute.xlu0 %2262
      %2264 = vrot.lane.b32.xlu0 %v1432, 80
      %v2265 = vpop.permute.xlu0 %2264
      %v2266 = vsel %vm1483, %v2263, 0
      %v2268 = vsel %vm1483, %v2265, 0
      %2270 = vmatpush.xpose.msra.mxu0 0.0
      %2271 = vmatpush.xpose.msra.mxu0 0.0
      %2272 = vmatpush.xpose.msra.mxu0 0.0
      %2273 = vmatpush.xpose.msra.mxu0 0.0
      %2274 = vmatpush.xpose.msra.mxu0 0.0
      %2275 = vmatpush.xpose.msra.mxu0 0.0
      %2276 = vmatpush.xpose.msra.mxu0 0.0
      %2277 = vmatpush.xpose.msra.mxu0 0.0
      %2278 = vmatpush.xpose.msra.mxu0 0.0
      %2279 = vmatpush.xpose.msra.mxu0 0.0
      %2280 = vmatpush.xpose.msra.mxu0 0.0
      %2281 = vmatpush.xpose.msra.mxu0 0.0
      %2282 = vmatpush.xpose.msra.mxu0 0.0
      %2283 = vmatpush.xpose.msra.mxu0 0.0
      %2284 = vmatpush.xpose.msra.mxu0 0.0
      %2285 = vmatpush.xpose.msra.mxu0 %v2268
      %2286 = vmatmul.f32.gmra.mxu0 %v2266
      %v2287 = vpop.f32.mrf.mxu0
      %v2288 = vadd.f32 %v1465, %v2287
      %2289 = vdwg.mxu0
      %2290 = vrot.lane.b32.xlu0 %v1435, 112
      %v2291 = vpop.permute.xlu0 %2290
      %2292 = vrot.lane.b32.xlu0 %v1435, 80
      %v2293 = vpop.permute.xlu0 %2292
      %v2294 = vsel %vm1483, %v2291, 0
      %v2296 = vsel %vm1483, %v2293, 0
      %2298 = vmatpush.xpose.msra.mxu0 0.0
      %2299 = vmatpush.xpose.msra.mxu0 0.0
      %2300 = vmatpush.xpose.msra.mxu0 0.0
      %2301 = vmatpush.xpose.msra.mxu0 0.0
      %2302 = vmatpush.xpose.msra.mxu0 0.0
      %2303 = vmatpush.xpose.msra.mxu0 0.0
      %2304 = vmatpush.xpose.msra.mxu0 0.0
      %2305 = vmatpush.xpose.msra.mxu0 0.0
      %2306 = vmatpush.xpose.msra.mxu0 0.0
      %2307 = vmatpush.xpose.msra.mxu0 0.0
      %2308 = vmatpush.xpose.msra.mxu0 0.0
      %2309 = vmatpush.xpose.msra.mxu0 0.0
      %2310 = vmatpush.xpose.msra.mxu0 0.0
      %2311 = vmatpush.xpose.msra.mxu0 0.0
      %2312 = vmatpush.xpose.msra.mxu0 0.0
      %2313 = vmatpush.xpose.msra.mxu0 %v2296
      %2314 = vmatmul.f32.gmra.mxu0 %v2294
      %v2315 = vpop.f32.mrf.mxu0
      %v2316 = vadd.f32 %v1466, %v2315
      %2317 = vdwg.mxu0
      %2318 = vrot.lane.b32.xlu0 %v1438, 112
      %v2319 = vpop.permute.xlu0 %2318
      %2320 = vrot.lane.b32.xlu0 %v1438, 80
      %v2321 = vpop.permute.xlu0 %2320
      %v2322 = vsel %vm1483, %v2319, 0
      %v2324 = vsel %vm1483, %v2321, 0
      %2326 = vmatpush.xpose.msra.mxu0 0.0
      %2327 = vmatpush.xpose.msra.mxu0 0.0
      %2328 = vmatpush.xpose.msra.mxu0 0.0
      %2329 = vmatpush.xpose.msra.mxu0 0.0
      %2330 = vmatpush.xpose.msra.mxu0 0.0
      %2331 = vmatpush.xpose.msra.mxu0 0.0
      %2332 = vmatpush.xpose.msra.mxu0 0.0
      %2333 = vmatpush.xpose.msra.mxu0 0.0
      %2334 = vmatpush.xpose.msra.mxu0 0.0
      %2335 = vmatpush.xpose.msra.mxu0 0.0
      %2336 = vmatpush.xpose.msra.mxu0 0.0
      %2337 = vmatpush.xpose.msra.mxu0 0.0
      %2338 = vmatpush.xpose.msra.mxu0 0.0
      %2339 = vmatpush.xpose.msra.mxu0 0.0
      %2340 = vmatpush.xpose.msra.mxu0 0.0
      %2341 = vmatpush.xpose.msra.mxu0 %v2324
      %2342 = vmatmul.f32.gmra.mxu0 %v2322
      %v2343 = vpop.f32.mrf.mxu0
      %v2344 = vadd.f32 %v1467, %v2343
      %2345 = vdwg.mxu0
      %2346 = vrot.lane.b32.xlu0 %v1441, 112
      %v2347 = vpop.permute.xlu0 %2346
      %2348 = vrot.lane.b32.xlu0 %v1441, 80
      %v2349 = vpop.permute.xlu0 %2348
      %v2350 = vsel %vm1483, %v2347, 0
      %v2352 = vsel %vm1483, %v2349, 0
      %2354 = vmatpush.xpose.msra.mxu0 0.0
      %2355 = vmatpush.xpose.msra.mxu0 0.0
      %2356 = vmatpush.xpose.msra.mxu0 0.0
      %2357 = vmatpush.xpose.msra.mxu0 0.0
      %2358 = vmatpush.xpose.msra.mxu0 0.0
      %2359 = vmatpush.xpose.msra.mxu0 0.0
      %2360 = vmatpush.xpose.msra.mxu0 0.0
      %2361 = vmatpush.xpose.msra.mxu0 0.0
      %2362 = vmatpush.xpose.msra.mxu0 0.0
      %2363 = vmatpush.xpose.msra.mxu0 0.0
      %2364 = vmatpush.xpose.msra.mxu0 0.0
      %2365 = vmatpush.xpose.msra.mxu0 0.0
      %2366 = vmatpush.xpose.msra.mxu0 0.0
      %2367 = vmatpush.xpose.msra.mxu0 0.0
      %2368 = vmatpush.xpose.msra.mxu0 0.0
      %2369 = vmatpush.xpose.msra.mxu0 %v2352
      %2370 = vmatmul.f32.gmra.mxu0 %v2350
      %v2371 = vpop.f32.mrf.mxu0
      %v2372 = vadd.f32 %v1468, %v2371
      %2373 = vdwg.mxu0
      %2374 = vrot.lane.b32.xlu0 %v1444, 112
      %v2375 = vpop.permute.xlu0 %2374
      %2376 = vrot.lane.b32.xlu0 %v1444, 80
      %v2377 = vpop.permute.xlu0 %2376
      %v2378 = vsel %vm1483, %v2375, 0
      %v2380 = vsel %vm1483, %v2377, 0
      %2382 = vmatpush.xpose.msra.mxu0 0.0
      %2383 = vmatpush.xpose.msra.mxu0 0.0
      %2384 = vmatpush.xpose.msra.mxu0 0.0
      %2385 = vmatpush.xpose.msra.mxu0 0.0
      %2386 = vmatpush.xpose.msra.mxu0 0.0
      %2387 = vmatpush.xpose.msra.mxu0 0.0
      %2388 = vmatpush.xpose.msra.mxu0 0.0
      %2389 = vmatpush.xpose.msra.mxu0 0.0
      %2390 = vmatpush.xpose.msra.mxu0 0.0
      %2391 = vmatpush.xpose.msra.mxu0 0.0
      %2392 = vmatpush.xpose.msra.mxu0 0.0
      %2393 = vmatpush.xpose.msra.mxu0 0.0
      %2394 = vmatpush.xpose.msra.mxu0 0.0
      %2395 = vmatpush.xpose.msra.mxu0 0.0
      %2396 = vmatpush.xpose.msra.mxu0 0.0
      %2397 = vmatpush.xpose.msra.mxu0 %v2380
      %2398 = vmatmul.f32.gmra.mxu0 %v2378
      %v2399 = vpop.f32.mrf.mxu0
      %v2400 = vadd.f32 %v1469, %v2399
      %2401 = vdwg.mxu0
      %v2402 = vsel %vm1751, %v2148, -inf
      %2403 = vmax.xlane.f32.xlu0 %v2402
      %v2404 = vpop.xlane.xlu0 %2403
      %v2405 = vsel %vm1751, %v2176, -inf
      %2406 = vmax.xlane.f32.xlu0 %v2405
      %v2407 = vpop.xlane.xlu0 %2406
      %v2408 = vsel %vm1751, %v2204, -inf
      %2409 = vmax.xlane.f32.xlu0 %v2408
      %v2410 = vpop.xlane.xlu0 %2409
      %v2411 = vsel %vm1751, %v2232, -inf
      %2412 = vmax.xlane.f32.xlu0 %v2411
      %v2413 = vpop.xlane.xlu0 %2412
      %v2414 = vsel %vm1751, %v2260, -inf
      %2415 = vmax.xlane.f32.xlu0 %v2414
      %v2416 = vpop.xlane.xlu0 %2415
      %v2417 = vsel %vm1751, %v2288, -inf
      %2418 = vmax.xlane.f32.xlu0 %v2417
      %v2419 = vpop.xlane.xlu0 %2418
      %v2420 = vsel %vm1751, %v2316, -inf
      %2421 = vmax.xlane.f32.xlu0 %v2420
      %v2422 = vpop.xlane.xlu0 %2421
      %v2423 = vsel %vm1751, %v2344, -inf
      %2424 = vmax.xlane.f32.xlu0 %v2423
      %v2425 = vpop.xlane.xlu0 %2424
      %v2426 = vsel %vm1751, %v2372, -inf
      %2427 = vmax.xlane.f32.xlu0 %v2426
      %v2428 = vpop.xlane.xlu0 %2427
      %v2429 = vsel %vm1751, %v2400, -inf
      %2430 = vmax.xlane.f32.xlu0 %v2429
      %v2431 = vpop.xlane.xlu0 %2430
      %v2432 = vsub.f32 %v2148, %v2404
      %v2433 = vsub.f32 %v2176, %v2407
      %v2434 = vsub.f32 %v2204, %v2410
      %v2435 = vsub.f32 %v2232, %v2413
      %v2436 = vsub.f32 %v2260, %v2416
      %v2437 = vsub.f32 %v2288, %v2419
      %v2438 = vsub.f32 %v2316, %v2422
      %v2439 = vsub.f32 %v2344, %v2425
      %v2440 = vsub.f32 %v2372, %v2428
      %v2441 = vsub.f32 %v2400, %v2431
      %v2442 = vmul.f32 %v2432, 1.442695
      %v2443 = vpow.pop %v2442
      %v2444 = vmul.f32 %v2433, 1.442695
      %v2445 = vpow.pop %v2444
      %v2446 = vmul.f32 %v2434, 1.442695
      %v2447 = vpow.pop %v2446
      %v2448 = vmul.f32 %v2435, 1.442695
      %v2449 = vpow.pop %v2448
      %v2450 = vmul.f32 %v2436, 1.442695
      %v2451 = vpow.pop %v2450
      %v2452 = vmul.f32 %v2437, 1.442695
      %v2453 = vpow.pop %v2452
      %v2454 = vmul.f32 %v2438, 1.442695
      %v2455 = vpow.pop %v2454
      %v2456 = vmul.f32 %v2439, 1.442695
      %v2457 = vpow.pop %v2456
      %v2458 = vmul.f32 %v2440, 1.442695
      %v2459 = vpow.pop %v2458
      %v2460 = vmul.f32 %v2441, 1.442695
      %v2461 = vpow.pop %v2460
      %v2462 = vsel %vm1751, %v2443, 0.0
      %2463 = vadd.xlane.f32.xlu0 %v2462
      %v2464 = vpop.xlane.xlu0 %2463
      %v2465 = vsel %vm1751, %v2445, 0.0
      %2466 = vadd.xlane.f32.xlu0 %v2465
      %v2467 = vpop.xlane.xlu0 %2466
      %v2468 = vsel %vm1751, %v2447, 0.0
      %2469 = vadd.xlane.f32.xlu0 %v2468
      %v2470 = vpop.xlane.xlu0 %2469
      %v2471 = vsel %vm1751, %v2449, 0.0
      %2472 = vadd.xlane.f32.xlu0 %v2471
      %v2473 = vpop.xlane.xlu0 %2472
      %v2474 = vsel %vm1751, %v2451, 0.0
      %2475 = vadd.xlane.f32.xlu0 %v2474
      %v2476 = vpop.xlane.xlu0 %2475
      %v2477 = vsel %vm1751, %v2453, 0.0
      %2478 = vadd.xlane.f32.xlu0 %v2477
      %v2479 = vpop.xlane.xlu0 %2478
      %v2480 = vsel %vm1751, %v2455, 0.0
      %2481 = vadd.xlane.f32.xlu0 %v2480
      %v2482 = vpop.xlane.xlu0 %2481
      %v2483 = vsel %vm1751, %v2457, 0.0
      %2484 = vadd.xlane.f32.xlu0 %v2483
      %v2485 = vpop.xlane.xlu0 %2484
      %v2486 = vsel %vm1751, %v2459, 0.0
      %2487 = vadd.xlane.f32.xlu0 %v2486
      %v2488 = vpop.xlane.xlu0 %2487
      %v2489 = vsel %vm1751, %v2461, 0.0
      %2490 = vadd.xlane.f32.xlu0 %v2489
      %v2491 = vpop.xlane.xlu0 %2490
      %v2492 = vrcp.pop %v2464
      %v2493 = vrcp.pop %v2467
      %v2494 = vrcp.pop %v2470
      %v2495 = vrcp.pop %v2473
      %v2496 = vrcp.pop %v2476
      %v2497 = vrcp.pop %v2479
      %v2498 = vrcp.pop %v2482
      %v2499 = vrcp.pop %v2485
      %v2500 = vrcp.pop %v2488
      %v2501 = vrcp.pop %v2491
      %v2502 = vmul.f32 %v2443, %v2492
      %v2503 = vmul.f32 %v2445, %v2493
      %v2504 = vmul.f32 %v2447, %v2494
      %v2505 = vmul.f32 %v2449, %v2495
      %v2506 = vmul.f32 %v2451, %v2496
      %v2507 = vmul.f32 %v2453, %v2497
      %v2508 = vmul.f32 %v2455, %v2498
      %v2509 = vmul.f32 %v2457, %v2499
      %v2510 = vmul.f32 %v2459, %v2500
      %v2511 = vmul.f32 %v2461, %v2501
      %2512 = vrot.lane.b32.xlu0 %v1417, 48
      %v2513 = vpop.permute.xlu0 %2512
      %v2516 = vsel %vm1751, %v2502, 0
      %2518 = vmatpush.msra.mxu0 0.0
      %2519 = vmatpush.msra.mxu0 0.0
      %2520 = vmatpush.msra.mxu0 0.0
      %2521 = vmatpush.msra.mxu0 0.0
      %2522 = vmatpush.msra.mxu0 0.0
      %2523 = vmatpush.msra.mxu0 0.0
      %2524 = vmatpush.msra.mxu0 0.0
      %2525 = vmatpush.msra.mxu0 0.0
      %2526 = vmatpush.msra.mxu0 0.0
      %2527 = vmatpush.msra.mxu0 0.0
      %2528 = vmatpush.msra.mxu0 0.0
      %2529 = vmatpush.msra.mxu0 0.0
      %2530 = vmatpush.msra.mxu0 0.0
      %2531 = vmatpush.msra.mxu0 0.0
      %2532 = vmatpush.msra.mxu0 0.0
      %2533 = vmatpush.msra.mxu0 %v2513
      %2534 = vmatmul.f32.gmra.mxu0 %v2516
      %v2535 = vpop.f32.mrf.mxu0
      %v2536 = vadd.f32 0.0, %v2535
      %2537 = vdwg.mxu0
      %2538 = vrot.lane.b32.xlu0 %v1420, 48
      %v2539 = vpop.permute.xlu0 %2538
      %v2542 = vsel %vm1751, %v2503, 0
      %2544 = vmatpush.msra.mxu0 0.0
      %2545 = vmatpush.msra.mxu0 0.0
      %2546 = vmatpush.msra.mxu0 0.0
      %2547 = vmatpush.msra.mxu0 0.0
      %2548 = vmatpush.msra.mxu0 0.0
      %2549 = vmatpush.msra.mxu0 0.0
      %2550 = vmatpush.msra.mxu0 0.0
      %2551 = vmatpush.msra.mxu0 0.0
      %2552 = vmatpush.msra.mxu0 0.0
      %2553 = vmatpush.msra.mxu0 0.0
      %2554 = vmatpush.msra.mxu0 0.0
      %2555 = vmatpush.msra.mxu0 0.0
      %2556 = vmatpush.msra.mxu0 0.0
      %2557 = vmatpush.msra.mxu0 0.0
      %2558 = vmatpush.msra.mxu0 0.0
      %2559 = vmatpush.msra.mxu0 %v2539
      %2560 = vmatmul.f32.gmra.mxu0 %v2542
      %v2561 = vpop.f32.mrf.mxu0
      %v2562 = vadd.f32 0.0, %v2561
      %2563 = vdwg.mxu0
      %2564 = vrot.lane.b32.xlu0 %v1423, 48
      %v2565 = vpop.permute.xlu0 %2564
      %v2568 = vsel %vm1751, %v2504, 0
      %2570 = vmatpush.msra.mxu0 0.0
      %2571 = vmatpush.msra.mxu0 0.0
      %2572 = vmatpush.msra.mxu0 0.0
      %2573 = vmatpush.msra.mxu0 0.0
      %2574 = vmatpush.msra.mxu0 0.0
      %2575 = vmatpush.msra.mxu0 0.0
      %2576 = vmatpush.msra.mxu0 0.0
      %2577 = vmatpush.msra.mxu0 0.0
      %2578 = vmatpush.msra.mxu0 0.0
      %2579 = vmatpush.msra.mxu0 0.0
      %2580 = vmatpush.msra.mxu0 0.0
      %2581 = vmatpush.msra.mxu0 0.0
      %2582 = vmatpush.msra.mxu0 0.0
      %2583 = vmatpush.msra.mxu0 0.0
      %2584 = vmatpush.msra.mxu0 0.0
      %2585 = vmatpush.msra.mxu0 %v2565
      %2586 = vmatmul.f32.gmra.mxu0 %v2568
      %v2587 = vpop.f32.mrf.mxu0
      %v2588 = vadd.f32 0.0, %v2587
      %2589 = vdwg.mxu0
      %2590 = vrot.lane.b32.xlu0 %v1426, 48
      %v2591 = vpop.permute.xlu0 %2590
      %v2594 = vsel %vm1751, %v2505, 0
      %2596 = vmatpush.msra.mxu0 0.0
      %2597 = vmatpush.msra.mxu0 0.0
      %2598 = vmatpush.msra.mxu0 0.0
      %2599 = vmatpush.msra.mxu0 0.0
      %2600 = vmatpush.msra.mxu0 0.0
      %2601 = vmatpush.msra.mxu0 0.0
      %2602 = vmatpush.msra.mxu0 0.0
      %2603 = vmatpush.msra.mxu0 0.0
      %2604 = vmatpush.msra.mxu0 0.0
      %2605 = vmatpush.msra.mxu0 0.0
      %2606 = vmatpush.msra.mxu0 0.0
      %2607 = vmatpush.msra.mxu0 0.0
      %2608 = vmatpush.msra.mxu0 0.0
      %2609 = vmatpush.msra.mxu0 0.0
      %2610 = vmatpush.msra.mxu0 0.0
      %2611 = vmatpush.msra.mxu0 %v2591
      %2612 = vmatmul.f32.gmra.mxu0 %v2594
      %v2613 = vpop.f32.mrf.mxu0
      %v2614 = vadd.f32 0.0, %v2613
      %2615 = vdwg.mxu0
      %2616 = vrot.lane.b32.xlu0 %v1429, 48
      %v2617 = vpop.permute.xlu0 %2616
      %v2620 = vsel %vm1751, %v2506, 0
      %2622 = vmatpush.msra.mxu0 0.0
      %2623 = vmatpush.msra.mxu0 0.0
      %2624 = vmatpush.msra.mxu0 0.0
      %2625 = vmatpush.msra.mxu0 0.0
      %2626 = vmatpush.msra.mxu0 0.0
      %2627 = vmatpush.msra.mxu0 0.0
      %2628 = vmatpush.msra.mxu0 0.0
      %2629 = vmatpush.msra.mxu0 0.0
      %2630 = vmatpush.msra.mxu0 0.0
      %2631 = vmatpush.msra.mxu0 0.0
      %2632 = vmatpush.msra.mxu0 0.0
      %2633 = vmatpush.msra.mxu0 0.0
      %2634 = vmatpush.msra.mxu0 0.0
      %2635 = vmatpush.msra.mxu0 0.0
      %2636 = vmatpush.msra.mxu0 0.0
      %2637 = vmatpush.msra.mxu0 %v2617
      %2638 = vmatmul.f32.gmra.mxu0 %v2620
      %v2639 = vpop.f32.mrf.mxu0
      %v2640 = vadd.f32 0.0, %v2639
      %2641 = vdwg.mxu0
      %2642 = vrot.lane.b32.xlu0 %v1432, 48
      %v2643 = vpop.permute.xlu0 %2642
      %v2646 = vsel %vm1751, %v2507, 0
      %2648 = vmatpush.msra.mxu0 0.0
      %2649 = vmatpush.msra.mxu0 0.0
      %2650 = vmatpush.msra.mxu0 0.0
      %2651 = vmatpush.msra.mxu0 0.0
      %2652 = vmatpush.msra.mxu0 0.0
      %2653 = vmatpush.msra.mxu0 0.0
      %2654 = vmatpush.msra.mxu0 0.0
      %2655 = vmatpush.msra.mxu0 0.0
      %2656 = vmatpush.msra.mxu0 0.0
      %2657 = vmatpush.msra.mxu0 0.0
      %2658 = vmatpush.msra.mxu0 0.0
      %2659 = vmatpush.msra.mxu0 0.0
      %2660 = vmatpush.msra.mxu0 0.0
      %2661 = vmatpush.msra.mxu0 0.0
      %2662 = vmatpush.msra.mxu0 0.0
      %2663 = vmatpush.msra.mxu0 %v2643
      %2664 = vmatmul.f32.gmra.mxu0 %v2646
      %v2665 = vpop.f32.mrf.mxu0
      %v2666 = vadd.f32 0.0, %v2665
      %2667 = vdwg.mxu0
      %2668 = vrot.lane.b32.xlu0 %v1435, 48
      %v2669 = vpop.permute.xlu0 %2668
      %v2672 = vsel %vm1751, %v2508, 0
      %2674 = vmatpush.msra.mxu0 0.0
      %2675 = vmatpush.msra.mxu0 0.0
      %2676 = vmatpush.msra.mxu0 0.0
      %2677 = vmatpush.msra.mxu0 0.0
      %2678 = vmatpush.msra.mxu0 0.0
      %2679 = vmatpush.msra.mxu0 0.0
      %2680 = vmatpush.msra.mxu0 0.0
      %2681 = vmatpush.msra.mxu0 0.0
      %2682 = vmatpush.msra.mxu0 0.0
      %2683 = vmatpush.msra.mxu0 0.0
      %2684 = vmatpush.msra.mxu0 0.0
      %2685 = vmatpush.msra.mxu0 0.0
      %2686 = vmatpush.msra.mxu0 0.0
      %2687 = vmatpush.msra.mxu0 0.0
      %2688 = vmatpush.msra.mxu0 0.0
      %2689 = vmatpush.msra.mxu0 %v2669
      %2690 = vmatmul.f32.gmra.mxu0 %v2672
      %v2691 = vpop.f32.mrf.mxu0
      %v2692 = vadd.f32 0.0, %v2691
      %2693 = vdwg.mxu0
      %2694 = vrot.lane.b32.xlu0 %v1438, 48
      %v2695 = vpop.permute.xlu0 %2694
      %v2698 = vsel %vm1751, %v2509, 0
      %2700 = vmatpush.msra.mxu0 0.0
      %2701 = vmatpush.msra.mxu0 0.0
      %2702 = vmatpush.msra.mxu0 0.0
      %2703 = vmatpush.msra.mxu0 0.0
      %2704 = vmatpush.msra.mxu0 0.0
      %2705 = vmatpush.msra.mxu0 0.0
      %2706 = vmatpush.msra.mxu0 0.0
      %2707 = vmatpush.msra.mxu0 0.0
      %2708 = vmatpush.msra.mxu0 0.0
      %2709 = vmatpush.msra.mxu0 0.0
      %2710 = vmatpush.msra.mxu0 0.0
      %2711 = vmatpush.msra.mxu0 0.0
      %2712 = vmatpush.msra.mxu0 0.0
      %2713 = vmatpush.msra.mxu0 0.0
      %2714 = vmatpush.msra.mxu0 0.0
      %2715 = vmatpush.msra.mxu0 %v2695
      %2716 = vmatmul.f32.gmra.mxu0 %v2698
      %v2717 = vpop.f32.mrf.mxu0
      %v2718 = vadd.f32 0.0, %v2717
      %2719 = vdwg.mxu0
      %2720 = vrot.lane.b32.xlu0 %v1441, 48
      %v2721 = vpop.permute.xlu0 %2720
      %v2724 = vsel %vm1751, %v2510, 0
      %2726 = vmatpush.msra.mxu0 0.0
      %2727 = vmatpush.msra.mxu0 0.0
      %2728 = vmatpush.msra.mxu0 0.0
      %2729 = vmatpush.msra.mxu0 0.0
      %2730 = vmatpush.msra.mxu0 0.0
      %2731 = vmatpush.msra.mxu0 0.0
      %2732 = vmatpush.msra.mxu0 0.0
      %2733 = vmatpush.msra.mxu0 0.0
      %2734 = vmatpush.msra.mxu0 0.0
      %2735 = vmatpush.msra.mxu0 0.0
      %2736 = vmatpush.msra.mxu0 0.0
      %2737 = vmatpush.msra.mxu0 0.0
      %2738 = vmatpush.msra.mxu0 0.0
      %2739 = vmatpush.msra.mxu0 0.0
      %2740 = vmatpush.msra.mxu0 0.0
      %2741 = vmatpush.msra.mxu0 %v2721
      %2742 = vmatmul.f32.gmra.mxu0 %v2724
      %v2743 = vpop.f32.mrf.mxu0
      %v2744 = vadd.f32 0.0, %v2743
      %2745 = vdwg.mxu0
      %2746 = vrot.lane.b32.xlu0 %v1444, 48
      %v2747 = vpop.permute.xlu0 %2746
      %v2750 = vsel %vm1751, %v2511, 0
      %2752 = vmatpush.msra.mxu0 0.0
      %2753 = vmatpush.msra.mxu0 0.0
      %2754 = vmatpush.msra.mxu0 0.0
      %2755 = vmatpush.msra.mxu0 0.0
      %2756 = vmatpush.msra.mxu0 0.0
      %2757 = vmatpush.msra.mxu0 0.0
      %2758 = vmatpush.msra.mxu0 0.0
      %2759 = vmatpush.msra.mxu0 0.0
      %2760 = vmatpush.msra.mxu0 0.0
      %2761 = vmatpush.msra.mxu0 0.0
      %2762 = vmatpush.msra.mxu0 0.0
      %2763 = vmatpush.msra.mxu0 0.0
      %2764 = vmatpush.msra.mxu0 0.0
      %2765 = vmatpush.msra.mxu0 0.0
      %2766 = vmatpush.msra.mxu0 0.0
      %2767 = vmatpush.msra.mxu0 %v2747
      %2768 = vmatmul.f32.gmra.mxu0 %v2750
      %v2769 = vpop.f32.mrf.mxu0
      %v2770 = vadd.f32 0.0, %v2769
      %2771 = vdwg.mxu0
      %v2773 = vsel %vm1483, %v2536, 0
      %v2776 = vsel %vm1483, %v2562, 0
      %v2779 = vsel %vm1483, %v2588, 0
      %v2782 = vsel %vm1483, %v2614, 0
      %v2785 = vsel %vm1483, %v2640, 0
      %v2788 = vsel %vm1483, %v2666, 0
      %v2791 = vsel %vm1483, %v2692, 0
      %v2794 = vsel %vm1483, %v2718, 0
      %v2797 = vsel %vm1483, %v2744, 0
      %v2800 = vsel %vm1483, %v2770, 0
      %2802 = vmatpush.msra.mxu0 0.0
      %2803 = vmatpush.msra.mxu0 0.0
      %2804 = vmatpush.msra.mxu0 0.0
      %2805 = vmatpush.msra.mxu0 0.0
      %2806 = vmatpush.msra.mxu0 0.0
      %2807 = vmatpush.msra.mxu0 0.0
      %2808 = vmatpush.msra.mxu0 0.0
      %2809 = vmatpush.msra.mxu0 0.0
      %2810 = vmatpush.msra.mxu0 0.0
      %2811 = vmatpush.msra.mxu0 0.0
      %2812 = vmatpush.msra.mxu0 0.0
      %2813 = vmatpush.msra.mxu0 0.0
      %2814 = vmatpush.msra.mxu0 0.0
      %2815 = vmatpush.msra.mxu0 0.0
      %2816 = vmatpush.msra.mxu0 %v1449
      %2817 = vmatpush.msra.mxu0 %v1448
      %2818 = vmatmul.f32.gmra.mxu0 %v2773
      %v2819 = vpop.f32.mrf.mxu0
      %v2820 = vadd.f32 0.0, %v2819
      %2821 = vmatmul.f32.gmra.mxu0 %v2776
      %v2822 = vpop.f32.mrf.mxu0
      %v2823 = vadd.f32 0.0, %v2822
      %2824 = vmatmul.f32.gmra.mxu0 %v2779
      %v2825 = vpop.f32.mrf.mxu0
      %v2826 = vadd.f32 0.0, %v2825
      %2827 = vmatmul.f32.gmra.mxu0 %v2782
      %v2828 = vpop.f32.mrf.mxu0
      %v2829 = vadd.f32 0.0, %v2828
      %2830 = vmatmul.f32.gmra.mxu0 %v2785
      %v2831 = vpop.f32.mrf.mxu0
      %v2832 = vadd.f32 0.0, %v2831
      %2833 = vmatmul.f32.gmra.mxu0 %v2788
      %v2834 = vpop.f32.mrf.mxu0
      %v2835 = vadd.f32 0.0, %v2834
      %2836 = vmatmul.f32.gmra.mxu0 %v2791
      %v2837 = vpop.f32.mrf.mxu0
      %v2838 = vadd.f32 0.0, %v2837
      %2839 = vmatmul.f32.gmra.mxu0 %v2794
      %v2840 = vpop.f32.mrf.mxu0
      %v2841 = vadd.f32 0.0, %v2840
      %2842 = vmatmul.f32.gmra.mxu0 %v2797
      %v2843 = vpop.f32.mrf.mxu0
      %v2844 = vadd.f32 0.0, %v2843
      %2845 = vmatmul.f32.gmra.mxu0 %v2800
      %v2846 = vpop.f32.mrf.mxu0
      %v2847 = vadd.f32 0.0, %v2846
      %2848 = vdwg.mxu0
      %v2850 = vsel %vm1483, %v1886, 0
      %v2853 = vsel %vm1483, %v1912, 0
      %v2856 = vsel %vm1483, %v1938, 0
      %v2859 = vsel %vm1483, %v1964, 0
      %v2862 = vsel %vm1483, %v1990, 0
      %v2865 = vsel %vm1483, %v2016, 0
      %v2868 = vsel %vm1483, %v2042, 0
      %v2871 = vsel %vm1483, %v2068, 0
      %v2874 = vsel %vm1483, %v2094, 0
      %v2877 = vsel %vm1483, %v2120, 0
      %2879 = vmatpush.msra.mxu0 0.0
      %2880 = vmatpush.msra.mxu0 0.0
      %2881 = vmatpush.msra.mxu0 0.0
      %2882 = vmatpush.msra.mxu0 0.0
      %2883 = vmatpush.msra.mxu0 0.0
      %2884 = vmatpush.msra.mxu0 0.0
      %2885 = vmatpush.msra.mxu0 0.0
      %2886 = vmatpush.msra.mxu0 0.0
      %2887 = vmatpush.msra.mxu0 0.0
      %2888 = vmatpush.msra.mxu0 0.0
      %2889 = vmatpush.msra.mxu0 0.0
      %2890 = vmatpush.msra.mxu0 0.0
      %2891 = vmatpush.msra.mxu0 0.0
      %2892 = vmatpush.msra.mxu0 0.0
      %2893 = vmatpush.msra.mxu0 %v1447
      %2894 = vmatpush.msra.mxu0 %v1446
      %2895 = vmatmul.f32.gmra.mxu0 %v2850
      %v2896 = vpop.f32.mrf.mxu0
      %v2897 = vadd.f32 %v2820, %v2896
      %2898 = vmatmul.f32.gmra.mxu0 %v2853
      %v2899 = vpop.f32.mrf.mxu0
      %v2900 = vadd.f32 %v2823, %v2899
      %2901 = vmatmul.f32.gmra.mxu0 %v2856
      %v2902 = vpop.f32.mrf.mxu0
      %v2903 = vadd.f32 %v2826, %v2902
      %2904 = vmatmul.f32.gmra.mxu0 %v2859
      %v2905 = vpop.f32.mrf.mxu0
      %v2906 = vadd.f32 %v2829, %v2905
      %2907 = vmatmul.f32.gmra.mxu0 %v2862
      %v2908 = vpop.f32.mrf.mxu0
      %v2909 = vadd.f32 %v2832, %v2908
      %2910 = vmatmul.f32.gmra.mxu0 %v2865
      %v2911 = vpop.f32.mrf.mxu0
      %v2912 = vadd.f32 %v2835, %v2911
      %2913 = vmatmul.f32.gmra.mxu0 %v2868
      %v2914 = vpop.f32.mrf.mxu0
      %v2915 = vadd.f32 %v2838, %v2914
      %2916 = vmatmul.f32.gmra.mxu0 %v2871
      %v2917 = vpop.f32.mrf.mxu0
      %v2918 = vadd.f32 %v2841, %v2917
      %2919 = vmatmul.f32.gmra.mxu0 %v2874
      %v2920 = vpop.f32.mrf.mxu0
      %v2921 = vadd.f32 %v2844, %v2920
      %2922 = vmatmul.f32.gmra.mxu0 %v2877
      %v2923 = vpop.f32.mrf.mxu0
      %v2924 = vadd.f32 %v2847, %v2923
      %2925 = vdwg.mxu0
      %v2926 = vld [vmem:[%s11] sm:$0x1]
      %v2928 = vperm.slane %v2926, 0
      %v2930 = vadd.f32 %v2897, %v2928
      %v2931 = vadd.f32 %v2900, %v2928
      %v2932 = vadd.f32 %v2903, %v2928
      %v2933 = vadd.f32 %v2906, %v2928
      %v2934 = vadd.f32 %v2909, %v2928
      %v2935 = vadd.f32 %v2912, %v2928
      %v2936 = vadd.f32 %v2915, %v2928
      %v2937 = vadd.f32 %v2918, %v2928
      %v2938 = vadd.f32 %v2921, %v2928
      %v2939 = vadd.f32 %v2924, %v2928
      %v2940 = vadd.f32 %v1345, %v2930
      %v2941 = vadd.f32 %v1346, %v2931
      %v2942 = vadd.f32 %v1347, %v2932
      %v2943 = vadd.f32 %v1348, %v2933
      %v2944 = vadd.f32 %v1349, %v2934
      %v2945 = vadd.f32 %v1350, %v2935
      %v2946 = vadd.f32 %v1351, %v2936
      %v2947 = vadd.f32 %v1352, %v2937
      %v2948 = vadd.f32 %v1353, %v2938
      %v2949 = vadd.f32 %v1354, %v2939
      %v2950 = vld [vmem:[%s12] sm:$0x1]
      %v2951 = vld [vmem:[%s13] sm:$0x1]
      %v2952 = vsel %vm1101, %v2940, 0.0
      %2953 = vadd.xlane.f32.xlu0 %v2952
      %v2954 = vpop.xlane.xlu0 %2953
      %v2955 = vsel %vm1101, %v2941, 0.0
      %2956 = vadd.xlane.f32.xlu0 %v2955
      %v2957 = vpop.xlane.xlu0 %2956
      %v2958 = vsel %vm1101, %v2942, 0.0
      %2959 = vadd.xlane.f32.xlu0 %v2958
      %v2960 = vpop.xlane.xlu0 %2959
      %v2961 = vsel %vm1101, %v2943, 0.0
      %2962 = vadd.xlane.f32.xlu0 %v2961
      %v2963 = vpop.xlane.xlu0 %2962
      %v2964 = vsel %vm1101, %v2944, 0.0
      %2965 = vadd.xlane.f32.xlu0 %v2964
      %v2966 = vpop.xlane.xlu0 %2965
      %v2967 = vsel %vm1101, %v2945, 0.0
      %2968 = vadd.xlane.f32.xlu0 %v2967
      %v2969 = vpop.xlane.xlu0 %2968
      %v2970 = vsel %vm1101, %v2946, 0.0
      %2971 = vadd.xlane.f32.xlu0 %v2970
      %v2972 = vpop.xlane.xlu0 %2971
      %v2973 = vsel %vm1101, %v2947, 0.0
      %2974 = vadd.xlane.f32.xlu0 %v2973
      %v2975 = vpop.xlane.xlu0 %2974
      %v2976 = vsel %vm1101, %v2948, 0.0
      %2977 = vadd.xlane.f32.xlu0 %v2976
      %v2978 = vpop.xlane.xlu0 %2977
      %v2979 = vsel %vm1101, %v2949, 0.0
      %2980 = vadd.xlane.f32.xlu0 %v2979
      %v2981 = vpop.xlane.xlu0 %2980
      %v2982 = vmul.f32 %v2954, %v1138
      %v2983 = vmul.f32 %v2957, %v1138
      %v2984 = vmul.f32 %v2960, %v1138
      %v2985 = vmul.f32 %v2963, %v1138
      %v2986 = vmul.f32 %v2966, %v1138
      %v2987 = vmul.f32 %v2969, %v1138
      %v2988 = vmul.f32 %v2972, %v1138
      %v2989 = vmul.f32 %v2975, %v1138
      %v2990 = vmul.f32 %v2978, %v1138
      %v2991 = vmul.f32 %v2981, %v1138
      %v2992 = vsub.f32 %v2940, %v2982
      %v2993 = vsub.f32 %v2941, %v2983
      %v2994 = vsub.f32 %v2942, %v2984
      %v2995 = vsub.f32 %v2943, %v2985
      %v2996 = vsub.f32 %v2944, %v2986
      %v2997 = vsub.f32 %v2945, %v2987
      %v2998 = vsub.f32 %v2946, %v2988
      %v2999 = vsub.f32 %v2947, %v2989
      %v3000 = vsub.f32 %v2948, %v2990
      %v3001 = vsub.f32 %v2949, %v2991
      %v3002 = vmul.f32 %v2992, %v2992
      %v3003 = vmul.f32 %v2993, %v2993
      %v3004 = vmul.f32 %v2994, %v2994
      %v3005 = vmul.f32 %v2995, %v2995
      %v3006 = vmul.f32 %v2996, %v2996
      %v3007 = vmul.f32 %v2997, %v2997
      %v3008 = vmul.f32 %v2998, %v2998
      %v3009 = vmul.f32 %v2999, %v2999
      %v3010 = vmul.f32 %v3000, %v3000
      %v3011 = vmul.f32 %v3001, %v3001
      %v3012 = vsel %vm1101, %v3002, 0.0
      %3013 = vadd.xlane.f32.xlu0 %v3012
      %v3014 = vpop.xlane.xlu0 %3013
      %v3015 = vsel %vm1101, %v3003, 0.0
      %3016 = vadd.xlane.f32.xlu0 %v3015
      %v3017 = vpop.xlane.xlu0 %3016
      %v3018 = vsel %vm1101, %v3004, 0.0
      %3019 = vadd.xlane.f32.xlu0 %v3018
      %v3020 = vpop.xlane.xlu0 %3019
      %v3021 = vsel %vm1101, %v3005, 0.0
      %3022 = vadd.xlane.f32.xlu0 %v3021
      %v3023 = vpop.xlane.xlu0 %3022
      %v3024 = vsel %vm1101, %v3006, 0.0
      %3025 = vadd.xlane.f32.xlu0 %v3024
      %v3026 = vpop.xlane.xlu0 %3025
      %v3027 = vsel %vm1101, %v3007, 0.0
      %3028 = vadd.xlane.f32.xlu0 %v3027
      %v3029 = vpop.xlane.xlu0 %3028
      %v3030 = vsel %vm1101, %v3008, 0.0
      %3031 = vadd.xlane.f32.xlu0 %v3030
      %v3032 = vpop.xlane.xlu0 %3031
      %v3033 = vsel %vm1101, %v3009, 0.0
      %3034 = vadd.xlane.f32.xlu0 %v3033
      %v3035 = vpop.xlane.xlu0 %3034
      %v3036 = vsel %vm1101, %v3010, 0.0
      %3037 = vadd.xlane.f32.xlu0 %v3036
      %v3038 = vpop.xlane.xlu0 %3037
      %v3039 = vsel %vm1101, %v3011, 0.0
      %3040 = vadd.xlane.f32.xlu0 %v3039
      %v3041 = vpop.xlane.xlu0 %3040
      %v3042 = vmul.f32 %v3014, %v1138
      %v3043 = vmul.f32 %v3017, %v1138
      %v3044 = vmul.f32 %v3020, %v1138
      %v3045 = vmul.f32 %v3023, %v1138
      %v3046 = vmul.f32 %v3026, %v1138
      %v3047 = vmul.f32 %v3029, %v1138
      %v3048 = vmul.f32 %v3032, %v1138
      %v3049 = vmul.f32 %v3035, %v1138
      %v3050 = vmul.f32 %v3038, %v1138
      %v3051 = vmul.f32 %v3041, %v1138
      %v3052 = vadd.f32 %v3042, 1e-12
      %v3053 = vadd.f32 %v3043, 1e-12
      %v3054 = vadd.f32 %v3044, 1e-12
      %v3055 = vadd.f32 %v3045, 1e-12
      %v3056 = vadd.f32 %v3046, 1e-12
      %v3057 = vadd.f32 %v3047, 1e-12
      %v3058 = vadd.f32 %v3048, 1e-12
      %v3059 = vadd.f32 %v3049, 1e-12
      %v3060 = vadd.f32 %v3050, 1e-12
      %v3061 = vadd.f32 %v3051, 1e-12
      %v3062 = vrsqrt.pop %v3052
      %v3063 = vmul.f32 %v3062, %v3052
      %v3064 = vmul.f32 %v3063, %v3062
      %v3065 = vmul.f32 0.5, %v3064
      %v3066 = vsub.f32 1.5, %v3065
      %v3067 = vmul.f32 %v3062, %v3066
      %vm3068 = vweird.f32 %v3052
      %vm3069 = vweird.f32 %v3062
      %vm3070 = vmor %vm3068, %vm3069
      %v3071 = vsel %vm3070, %v3062, %v3067
      %v3072 = vrsqrt.pop %v3053
      %v3073 = vmul.f32 %v3072, %v3053
      %v3074 = vmul.f32 %v3073, %v3072
      %v3075 = vmul.f32 0.5, %v3074
      %v3076 = vsub.f32 1.5, %v3075
      %v3077 = vmul.f32 %v3072, %v3076
      %vm3078 = vweird.f32 %v3053
      %vm3079 = vweird.f32 %v3072
      %vm3080 = vmor %vm3078, %vm3079
      %v3081 = vsel %vm3080, %v3072, %v3077
      %v3082 = vrsqrt.pop %v3054
      %v3083 = vmul.f32 %v3082, %v3054
      %v3084 = vmul.f32 %v3083, %v3082
      %v3085 = vmul.f32 0.5, %v3084
      %v3086 = vsub.f32 1.5, %v3085
      %v3087 = vmul.f32 %v3082, %v3086
      %vm3088 = vweird.f32 %v3054
      %vm3089 = vweird.f32 %v3082
      %vm3090 = vmor %vm3088, %vm3089
      %v3091 = vsel %vm3090, %v3082, %v3087
      %v3092 = vrsqrt.pop %v3055
      %v3093 = vmul.f32 %v3092, %v3055
      %v3094 = vmul.f32 %v3093, %v3092
      %v3095 = vmul.f32 0.5, %v3094
      %v3096 = vsub.f32 1.5, %v3095
      %v3097 = vmul.f32 %v3092, %v3096
      %vm3098 = vweird.f32 %v3055
      %vm3099 = vweird.f32 %v3092
      %vm3100 = vmor %vm3098, %vm3099
      %v3101 = vsel %vm3100, %v3092, %v3097
      %v3102 = vrsqrt.pop %v3056
      %v3103 = vmul.f32 %v3102, %v3056
      %v3104 = vmul.f32 %v3103, %v3102
      %v3105 = vmul.f32 0.5, %v3104
      %v3106 = vsub.f32 1.5, %v3105
      %v3107 = vmul.f32 %v3102, %v3106
      %vm3108 = vweird.f32 %v3056
      %vm3109 = vweird.f32 %v3102
      %vm3110 = vmor %vm3108, %vm3109
      %v3111 = vsel %vm3110, %v3102, %v3107
      %v3112 = vrsqrt.pop %v3057
      %v3113 = vmul.f32 %v3112, %v3057
      %v3114 = vmul.f32 %v3113, %v3112
      %v3115 = vmul.f32 0.5, %v3114
      %v3116 = vsub.f32 1.5, %v3115
      %v3117 = vmul.f32 %v3112, %v3116
      %vm3118 = vweird.f32 %v3057
      %vm3119 = vweird.f32 %v3112
      %vm3120 = vmor %vm3118, %vm3119
      %v3121 = vsel %vm3120, %v3112, %v3117
      %v3122 = vrsqrt.pop %v3058
      %v3123 = vmul.f32 %v3122, %v3058
      %v3124 = vmul.f32 %v3123, %v3122
      %v3125 = vmul.f32 0.5, %v3124
      %v3126 = vsub.f32 1.5, %v3125
      %v3127 = vmul.f32 %v3122, %v3126
      %vm3128 = vweird.f32 %v3058
      %vm3129 = vweird.f32 %v3122
      %vm3130 = vmor %vm3128, %vm3129
      %v3131 = vsel %vm3130, %v3122, %v3127
      %v3132 = vrsqrt.pop %v3059
      %v3133 = vmul.f32 %v3132, %v3059
      %v3134 = vmul.f32 %v3133, %v3132
      %v3135 = vmul.f32 0.5, %v3134
      %v3136 = vsub.f32 1.5, %v3135
      %v3137 = vmul.f32 %v3132, %v3136
      %vm3138 = vweird.f32 %v3059
      %vm3139 = vweird.f32 %v3132
      %vm3140 = vmor %vm3138, %vm3139
      %v3141 = vsel %vm3140, %v3132, %v3137
      %v3142 = vrsqrt.pop %v3060
      %v3143 = vmul.f32 %v3142, %v3060
      %v3144 = vmul.f32 %v3143, %v3142
      %v3145 = vmul.f32 0.5, %v3144
      %v3146 = vsub.f32 1.5, %v3145
      %v3147 = vmul.f32 %v3142, %v3146
      %vm3148 = vweird.f32 %v3060
      %vm3149 = vweird.f32 %v3142
      %vm3150 = vmor %vm3148, %vm3149
      %v3151 = vsel %vm3150, %v3142, %v3147
      %v3152 = vrsqrt.pop %v3061
      %v3153 = vmul.f32 %v3152, %v3061
      %v3154 = vmul.f32 %v3153, %v3152
      %v3155 = vmul.f32 0.5, %v3154
      %v3156 = vsub.f32 1.5, %v3155
      %v3157 = vmul.f32 %v3152, %v3156
      %vm3158 = vweird.f32 %v3061
      %vm3159 = vweird.f32 %v3152
      %vm3160 = vmor %vm3158, %vm3159
      %v3161 = vsel %vm3160, %v3152, %v3157
      %v3162 = vmul.f32 %v2992, %v3071
      %v3163 = vmul.f32 %v2993, %v3081
      %v3164 = vmul.f32 %v2994, %v3091
      %v3165 = vmul.f32 %v2995, %v3101
      %v3166 = vmul.f32 %v2996, %v3111
      %v3167 = vmul.f32 %v2997, %v3121
      %v3168 = vmul.f32 %v2998, %v3131
      %v3169 = vmul.f32 %v2999, %v3141
      %v3170 = vmul.f32 %v3000, %v3151
      %v3171 = vmul.f32 %v3001, %v3161
      %v3173 = vperm.slane %v2950, 0
      %v3175 = vmul.f32 %v3162, %v3173
      %v3176 = vmul.f32 %v3163, %v3173
      %v3177 = vmul.f32 %v3164, %v3173
      %v3178 = vmul.f32 %v3165, %v3173
      %v3179 = vmul.f32 %v3166, %v3173
      %v3180 = vmul.f32 %v3167, %v3173
      %v3181 = vmul.f32 %v3168, %v3173
      %v3182 = vmul.f32 %v3169, %v3173
      %v3183 = vmul.f32 %v3170, %v3173
      %v3184 = vmul.f32 %v3171, %v3173
      %v3186 = vperm.slane %v2951, 0
      %v3188 = vadd.f32 %v3175, %v3186
      %v3189 = vadd.f32 %v3176, %v3186
      %v3190 = vadd.f32 %v3177, %v3186
      %v3191 = vadd.f32 %v3178, %v3186
      %v3192 = vadd.f32 %v3179, %v3186
      %v3193 = vadd.f32 %v3180, %v3186
      %v3194 = vadd.f32 %v3181, %v3186
      %v3195 = vadd.f32 %v3182, %v3186
      %v3196 = vadd.f32 %v3183, %v3186
      %v3197 = vadd.f32 %v3184, %v3186
      %v3198 = vld [vmem:[%s14] sm:$0xff]
      %v3199 = vld [vmem:[%s14 + $0x8] sm:$0xff]
      %v3200 = vld [vmem:[%s14 + $0x10] sm:$0xff]
      %v3201 = vld [vmem:[%s14 + $0x18] sm:$0xff]
      %v3202 = vld [vmem:[%s15] sm:$0x1]
      %v3204 = vperm.slane %v3202, 0
      %v3207 = vsel %vm1101, %v3188, 0
      %v3210 = vsel %vm1101, %v3189, 0
      %v3213 = vsel %vm1101, %v3190, 0
      %v3216 = vsel %vm1101, %v3191, 0
      %v3219 = vsel %vm1101, %v3192, 0
      %v3222 = vsel %vm1101, %v3193, 0
      %v3225 = vsel %vm1101, %v3194, 0
      %v3228 = vsel %vm1101, %v3195, 0
      %v3231 = vsel %vm1101, %v3196, 0
      %v3234 = vsel %vm1101, %v3197, 0
      %3236 = vmatpush.msra.mxu0 0.0
      %3237 = vmatpush.msra.mxu0 0.0
      %3238 = vmatpush.msra.mxu0 0.0
      %3239 = vmatpush.msra.mxu0 0.0
      %3240 = vmatpush.msra.mxu0 0.0
      %3241 = vmatpush.msra.mxu0 0.0
      %3242 = vmatpush.msra.mxu0 0.0
      %3243 = vmatpush.msra.mxu0 0.0
      %3244 = vmatpush.msra.mxu0 0.0
      %3245 = vmatpush.msra.mxu0 0.0
      %3246 = vmatpush.msra.mxu0 0.0
      %3247 = vmatpush.msra.mxu0 0.0
      %3248 = vmatpush.msra.mxu0 %v3201
      %3249 = vmatpush.msra.mxu0 %v3200
      %3250 = vmatpush.msra.mxu0 %v3199
      %3251 = vmatpush.msra.mxu0 %v3198
      %3252 = vmatmul.f32.gmra.mxu0 %v3207
      %v3253 = vpop.f32.mrf.mxu0
      %v3254 = vadd.f32 %v3204, %v3253
      %3255 = vmatmul.f32.gmra.mxu0 %v3210
      %v3256 = vpop.f32.mrf.mxu0
      %v3257 = vadd.f32 %v3204, %v3256
      %3258 = vmatmul.f32.gmra.mxu0 %v3213
      %v3259 = vpop.f32.mrf.mxu0
      %v3260 = vadd.f32 %v3204, %v3259
      %3261 = vmatmul.f32.gmra.mxu0 %v3216
      %v3262 = vpop.f32.mrf.mxu0
      %v3263 = vadd.f32 %v3204, %v3262
      %3264 = vmatmul.f32.gmra.mxu0 %v3219
      %v3265 = vpop.f32.mrf.mxu0
      %v3266 = vadd.f32 %v3204, %v3265
      %3267 = vmatmul.f32.gmra.mxu0 %v3222
      %v3268 = vpop.f32.mrf.mxu0
      %v3269 = vadd.f32 %v3204, %v3268
      %3270 = vmatmul.f32.gmra.mxu0 %v3225
      %v3271 = vpop.f32.mrf.mxu0
      %v3272 = vadd.f32 %v3204, %v3271
      %3273 = vmatmul.f32.gmra.mxu0 %v3228
      %v3274 = vpop.f32.mrf.mxu0
      %v3275 = vadd.f32 %v3204, %v3274
      %3276 = vmatmul.f32.gmra.mxu0 %v3231
      %v3277 = vpop.f32.mrf.mxu0
      %v3278 = vadd.f32 %v3204, %v3277
      %3279 = vmatmul.f32.gmra.mxu0 %v3234
      %v3280 = vpop.f32.mrf.mxu0
      %v3281 = vadd.f32 %v3204, %v3280
      %3282 = vdwg.mxu0
      %v3283 = vmul.f32 %v3254, 0.5
      %v3284 = vmul.f32 %v3257, 0.5
      %v3285 = vmul.f32 %v3260, 0.5
      %v3286 = vmul.f32 %v3263, 0.5
      %v3287 = vmul.f32 %v3266, 0.5
      %v3288 = vmul.f32 %v3269, 0.5
      %v3289 = vmul.f32 %v3272, 0.5
      %v3290 = vmul.f32 %v3275, 0.5
      %v3291 = vmul.f32 %v3278, 0.5
      %v3292 = vmul.f32 %v3281, 0.5
      %v3293 = vmul.f32 %v3254, 0.70710677
      %v3294 = vmul.f32 %v3257, 0.70710677
      %v3295 = vmul.f32 %v3260, 0.70710677
      %v3296 = vmul.f32 %v3263, 0.70710677
      %v3297 = vmul.f32 %v3266, 0.70710677
      %v3298 = vmul.f32 %v3269, 0.70710677
      %v3299 = vmul.f32 %v3272, 0.70710677
      %v3300 = vmul.f32 %v3275, 0.70710677
      %v3301 = vmul.f32 %v3278, 0.70710677
      %v3302 = vmul.f32 %v3281, 0.70710677
      %v3303 = vmul.f32 %v3293, %v3293
      %v3304 = vmin.f32 16.0, %v3303
      %v3305 = vmul.f32 %v3304, 2.1237322e-06
      %v3306 = vadd.f32 %v3305, 0.00028619796
      %v3307 = vmul.f32 %v3304, %v3306
      %v3308 = vadd.f32 %v3307, 0.0036580483
      %v3309 = vmul.f32 %v3304, %v3308
      %v3310 = vadd.f32 %v3309, 0.05243302
      %v3311 = vmul.f32 %v3304, %v3310
      %v3312 = vadd.f32 %v3311, 0.18741608
      %v3313 = vmul.f32 %v3304, %v3312
      %v3314 = vadd.f32 %v3313, 1.1283791
      %v3315 = vmul.f32 %v3293, %v3314
      %v3316 = vmul.f32 %v3304, 3.8918573e-05
      %v3317 = vadd.f32 %v3316, 0.001143296
      %v3318 = vmul.f32 %v3304, %v3317
      %v3319 = vadd.f32 %v3318, 0.014752088
      %v3320 = vmul.f32 %v3304, %v3319
      %v3321 = vadd.f32 %v3320, 0.112945676
      %v3322 = vmul.f32 %v3304, %v3321
      %v3323 = vadd.f32 %v3322, 0.4994258
      %v3324 = vmul.f32 %v3304, %v3323
      %v3325 = vadd.f32 %v3324, 1.0
      %v3326 = vrcp.pop %v3325
      %v3327 = vmul.f32 %v3325, %v3326
      %v3328 = vsub.f32 1.0, %v3327
      %v3329 = vmul.f32 %v3326, %v3328
      %v3330 = vadd.f32 %v3326, %v3329
      %vm3331 = vweird.f32 %v3325
      %vm3332 = vweird.f32 %v3326
      %vm3333 = vmor %vm3331, %vm3332
      %v3334 = vsel %vm3333, %v3326, %v3330
      %v3335 = vand.u32 2147483647, %v3325
      %vm3336 = vcmp.eq.f32.partialorder %v3335, 8.507059e+37
      %v3337 = vand.u32 %v3325, 2147483648
      %v3338 = vor.u32 1.1754944e-38, %v3337
      %v3339 = vsel %vm3336, %v3338, %v3334
      %v3340 = vmul.f32 %v3315, %v3339
      %v3341 = vmin.f32 %v3340, 1.0
      %v3342 = vmax.f32 %v3341, -1.0
      %v3343 = vmul.f32 %v3294, %v3294
      %v3344 = vmin.f32 16.0, %v3343
      %v3345 = vmul.f32 %v3344, 2.1237322e-06
      %v3346 = vadd.f32 %v3345, 0.00028619796
      %v3347 = vmul.f32 %v3344, %v3346
      %v3348 = vadd.f32 %v3347, 0.0036580483
      %v3349 = vmul.f32 %v3344, %v3348
      %v3350 = vadd.f32 %v3349, 0.05243302
      %v3351 = vmul.f32 %v3344, %v3350
      %v3352 = vadd.f32 %v3351, 0.18741608
      %v3353 = vmul.f32 %v3344, %v3352
      %v3354 = vadd.f32 %v3353, 1.1283791
      %v3355 = vmul.f32 %v3294, %v3354
      %v3356 = vmul.f32 %v3344, 3.8918573e-05
      %v3357 = vadd.f32 %v3356, 0.001143296
      %v3358 = vmul.f32 %v3344, %v3357
      %v3359 = vadd.f32 %v3358, 0.014752088
      %v3360 = vmul.f32 %v3344, %v3359
      %v3361 = vadd.f32 %v3360, 0.112945676
      %v3362 = vmul.f32 %v3344, %v3361
      %v3363 = vadd.f32 %v3362, 0.4994258
      %v3364 = vmul.f32 %v3344, %v3363
      %v3365 = vadd.f32 %v3364, 1.0
      %v3366 = vrcp.pop %v3365
      %v3367 = vmul.f32 %v3365, %v3366
      %v3368 = vsub.f32 1.0, %v3367
      %v3369 = vmul.f32 %v3366, %v3368
      %v3370 = vadd.f32 %v3366, %v3369
      %vm3371 = vweird.f32 %v3365
      %vm3372 = vweird.f32 %v3366
      %vm3373 = vmor %vm3371, %vm3372
      %v3374 = vsel %vm3373, %v3366, %v3370
      %v3375 = vand.u32 2147483647, %v3365
      %vm3376 = vcmp.eq.f32.partialorder %v3375, 8.507059e+37
      %v3377 = vand.u32 %v3365, 2147483648
      %v3378 = vor.u32 1.1754944e-38, %v3377
      %v3379 = vsel %vm3376, %v3378, %v3374
      %v3380 = vmul.f32 %v3355, %v3379
      %v3381 = vmin.f32 %v3380, 1.0
      %v3382 = vmax.f32 %v3381, -1.0
      %v3383 = vmul.f32 %v3295, %v3295
      %v3384 = vmin.f32 16.0, %v3383
      %v3385 = vmul.f32 %v3384, 2.1237322e-06
      %v3386 = vadd.f32 %v3385, 0.00028619796
      %v3387 = vmul.f32 %v3384, %v3386
      %v3388 = vadd.f32 %v3387, 0.0036580483
      %v3389 = vmul.f32 %v3384, %v3388
      %v3390 = vadd.f32 %v3389, 0.05243302
      %v3391 = vmul.f32 %v3384, %v3390
      %v3392 = vadd.f32 %v3391, 0.18741608
      %v3393 = vmul.f32 %v3384, %v3392
      %v3394 = vadd.f32 %v3393, 1.1283791
      %v3395 = vmul.f32 %v3295, %v3394
      %v3396 = vmul.f32 %v3384, 3.8918573e-05
      %v3397 = vadd.f32 %v3396, 0.001143296
      %v3398 = vmul.f32 %v3384, %v3397
      %v3399 = vadd.f32 %v3398, 0.014752088
      %v3400 = vmul.f32 %v3384, %v3399
      %v3401 = vadd.f32 %v3400, 0.112945676
      %v3402 = vmul.f32 %v3384, %v3401
      %v3403 = vadd.f32 %v3402, 0.4994258
      %v3404 = vmul.f32 %v3384, %v3403
      %v3405 = vadd.f32 %v3404, 1.0
      %v3406 = vrcp.pop %v3405
      %v3407 = vmul.f32 %v3405, %v3406
      %v3408 = vsub.f32 1.0, %v3407
      %v3409 = vmul.f32 %v3406, %v3408
      %v3410 = vadd.f32 %v3406, %v3409
      %vm3411 = vweird.f32 %v3405
      %vm3412 = vweird.f32 %v3406
      %vm3413 = vmor %vm3411, %vm3412
      %v3414 = vsel %vm3413, %v3406, %v3410
      %v3415 = vand.u32 2147483647, %v3405
      %vm3416 = vcmp.eq.f32.partialorder %v3415, 8.507059e+37
      %v3417 = vand.u32 %v3405, 2147483648
      %v3418 = vor.u32 1.1754944e-38, %v3417
      %v3419 = vsel %vm3416, %v3418, %v3414
      %v3420 = vmul.f32 %v3395, %v3419
      %v3421 = vmin.f32 %v3420, 1.0
      %v3422 = vmax.f32 %v3421, -1.0
      %v3423 = vmul.f32 %v3296, %v3296
      %v3424 = vmin.f32 16.0, %v3423
      %v3425 = vmul.f32 %v3424, 2.1237322e-06
      %v3426 = vadd.f32 %v3425, 0.00028619796
      %v3427 = vmul.f32 %v3424, %v3426
      %v3428 = vadd.f32 %v3427, 0.0036580483
      %v3429 = vmul.f32 %v3424, %v3428
      %v3430 = vadd.f32 %v3429, 0.05243302
      %v3431 = vmul.f32 %v3424, %v3430
      %v3432 = vadd.f32 %v3431, 0.18741608
      %v3433 = vmul.f32 %v3424, %v3432
      %v3434 = vadd.f32 %v3433, 1.1283791
      %v3435 = vmul.f32 %v3296, %v3434
      %v3436 = vmul.f32 %v3424, 3.8918573e-05
      %v3437 = vadd.f32 %v3436, 0.001143296
      %v3438 = vmul.f32 %v3424, %v3437
      %v3439 = vadd.f32 %v3438, 0.014752088
      %v3440 = vmul.f32 %v3424, %v3439
      %v3441 = vadd.f32 %v3440, 0.112945676
      %v3442 = vmul.f32 %v3424, %v3441
      %v3443 = vadd.f32 %v3442, 0.4994258
      %v3444 = vmul.f32 %v3424, %v3443
      %v3445 = vadd.f32 %v3444, 1.0
      %v3446 = vrcp.pop %v3445
      %v3447 = vmul.f32 %v3445, %v3446
      %v3448 = vsub.f32 1.0, %v3447
      %v3449 = vmul.f32 %v3446, %v3448
      %v3450 = vadd.f32 %v3446, %v3449
      %vm3451 = vweird.f32 %v3445
      %vm3452 = vweird.f32 %v3446
      %vm3453 = vmor %vm3451, %vm3452
      %v3454 = vsel %vm3453, %v3446, %v3450
      %v3455 = vand.u32 2147483647, %v3445
      %vm3456 = vcmp.eq.f32.partialorder %v3455, 8.507059e+37
      %v3457 = vand.u32 %v3445, 2147483648
      %v3458 = vor.u32 1.1754944e-38, %v3457
      %v3459 = vsel %vm3456, %v3458, %v3454
      %v3460 = vmul.f32 %v3435, %v3459
      %v3461 = vmin.f32 %v3460, 1.0
      %v3462 = vmax.f32 %v3461, -1.0
      %v3463 = vmul.f32 %v3297, %v3297
      %v3464 = vmin.f32 16.0, %v3463
      %v3465 = vmul.f32 %v3464, 2.1237322e-06
      %v3466 = vadd.f32 %v3465, 0.00028619796
      %v3467 = vmul.f32 %v3464, %v3466
      %v3468 = vadd.f32 %v3467, 0.0036580483
      %v3469 = vmul.f32 %v3464, %v3468
      %v3470 = vadd.f32 %v3469, 0.05243302
      %v3471 = vmul.f32 %v3464, %v3470
      %v3472 = vadd.f32 %v3471, 0.18741608
      %v3473 = vmul.f32 %v3464, %v3472
      %v3474 = vadd.f32 %v3473, 1.1283791
      %v3475 = vmul.f32 %v3297, %v3474
      %v3476 = vmul.f32 %v3464, 3.8918573e-05
      %v3477 = vadd.f32 %v3476, 0.001143296
      %v3478 = vmul.f32 %v3464, %v3477
      %v3479 = vadd.f32 %v3478, 0.014752088
      %v3480 = vmul.f32 %v3464, %v3479
      %v3481 = vadd.f32 %v3480, 0.112945676
      %v3482 = vmul.f32 %v3464, %v3481
      %v3483 = vadd.f32 %v3482, 0.4994258
      %v3484 = vmul.f32 %v3464, %v3483
      %v3485 = vadd.f32 %v3484, 1.0
      %v3486 = vrcp.pop %v3485
      %v3487 = vmul.f32 %v3485, %v3486
      %v3488 = vsub.f32 1.0, %v3487
      %v3489 = vmul.f32 %v3486, %v3488
      %v3490 = vadd.f32 %v3486, %v3489
      %vm3491 = vweird.f32 %v3485
      %vm3492 = vweird.f32 %v3486
      %vm3493 = vmor %vm3491, %vm3492
      %v3494 = vsel %vm3493, %v3486, %v3490
      %v3495 = vand.u32 2147483647, %v3485
      %vm3496 = vcmp.eq.f32.partialorder %v3495, 8.507059e+37
      %v3497 = vand.u32 %v3485, 2147483648
      %v3498 = vor.u32 1.1754944e-38, %v3497
      %v3499 = vsel %vm3496, %v3498, %v3494
      %v3500 = vmul.f32 %v3475, %v3499
      %v3501 = vmin.f32 %v3500, 1.0
      %v3502 = vmax.f32 %v3501, -1.0
      %v3503 = vmul.f32 %v3298, %v3298
      %v3504 = vmin.f32 16.0, %v3503
      %v3505 = vmul.f32 %v3504, 2.1237322e-06
      %v3506 = vadd.f32 %v3505, 0.00028619796
      %v3507 = vmul.f32 %v3504, %v3506
      %v3508 = vadd.f32 %v3507, 0.0036580483
      %v3509 = vmul.f32 %v3504, %v3508
      %v3510 = vadd.f32 %v3509, 0.05243302
      %v3511 = vmul.f32 %v3504, %v3510
      %v3512 = vadd.f32 %v3511, 0.18741608
      %v3513 = vmul.f32 %v3504, %v3512
      %v3514 = vadd.f32 %v3513, 1.1283791
      %v3515 = vmul.f32 %v3298, %v3514
      %v3516 = vmul.f32 %v3504, 3.8918573e-05
      %v3517 = vadd.f32 %v3516, 0.001143296
      %v3518 = vmul.f32 %v3504, %v3517
      %v3519 = vadd.f32 %v3518, 0.014752088
      %v3520 = vmul.f32 %v3504, %v3519
      %v3521 = vadd.f32 %v3520, 0.112945676
      %v3522 = vmul.f32 %v3504, %v3521
      %v3523 = vadd.f32 %v3522, 0.4994258
      %v3524 = vmul.f32 %v3504, %v3523
      %v3525 = vadd.f32 %v3524, 1.0
      %v3526 = vrcp.pop %v3525
      %v3527 = vmul.f32 %v3525, %v3526
      %v3528 = vsub.f32 1.0, %v3527
      %v3529 = vmul.f32 %v3526, %v3528
      %v3530 = vadd.f32 %v3526, %v3529
      %vm3531 = vweird.f32 %v3525
      %vm3532 = vweird.f32 %v3526
      %vm3533 = vmor %vm3531, %vm3532
      %v3534 = vsel %vm3533, %v3526, %v3530
      %v3535 = vand.u32 2147483647, %v3525
      %vm3536 = vcmp.eq.f32.partialorder %v3535, 8.507059e+37
      %v3537 = vand.u32 %v3525, 2147483648
      %v3538 = vor.u32 1.1754944e-38, %v3537
      %v3539 = vsel %vm3536, %v3538, %v3534
      %v3540 = vmul.f32 %v3515, %v3539
      %v3541 = vmin.f32 %v3540, 1.0
      %v3542 = vmax.f32 %v3541, -1.0
      %v3543 = vmul.f32 %v3299, %v3299
      %v3544 = vmin.f32 16.0, %v3543
      %v3545 = vmul.f32 %v3544, 2.1237322e-06
      %v3546 = vadd.f32 %v3545, 0.00028619796
      %v3547 = vmul.f32 %v3544, %v3546
      %v3548 = vadd.f32 %v3547, 0.0036580483
      %v3549 = vmul.f32 %v3544, %v3548
      %v3550 = vadd.f32 %v3549, 0.05243302
      %v3551 = vmul.f32 %v3544, %v3550
      %v3552 = vadd.f32 %v3551, 0.18741608
      %v3553 = vmul.f32 %v3544, %v3552
      %v3554 = vadd.f32 %v3553, 1.1283791
      %v3555 = vmul.f32 %v3299, %v3554
      %v3556 = vmul.f32 %v3544, 3.8918573e-05
      %v3557 = vadd.f32 %v3556, 0.001143296
      %v3558 = vmul.f32 %v3544, %v3557
      %v3559 = vadd.f32 %v3558, 0.014752088
      %v3560 = vmul.f32 %v3544, %v3559
      %v3561 = vadd.f32 %v3560, 0.112945676
      %v3562 = vmul.f32 %v3544, %v3561
      %v3563 = vadd.f32 %v3562, 0.4994258
      %v3564 = vmul.f32 %v3544, %v3563
      %v3565 = vadd.f32 %v3564, 1.0
      %v3566 = vrcp.pop %v3565
      %v3567 = vmul.f32 %v3565, %v3566
      %v3568 = vsub.f32 1.0, %v3567
      %v3569 = vmul.f32 %v3566, %v3568
      %v3570 = vadd.f32 %v3566, %v3569
      %vm3571 = vweird.f32 %v3565
      %vm3572 = vweird.f32 %v3566
      %vm3573 = vmor %vm3571, %vm3572
      %v3574 = vsel %vm3573, %v3566, %v3570
      %v3575 = vand.u32 2147483647, %v3565
      %vm3576 = vcmp.eq.f32.partialorder %v3575, 8.507059e+37
      %v3577 = vand.u32 %v3565, 2147483648
      %v3578 = vor.u32 1.1754944e-38, %v3577
      %v3579 = vsel %vm3576, %v3578, %v3574
      %v3580 = vmul.f32 %v3555, %v3579
      %v3581 = vmin.f32 %v3580, 1.0
      %v3582 = vmax.f32 %v3581, -1.0
      %v3583 = vmul.f32 %v3300, %v3300
      %v3584 = vmin.f32 16.0, %v3583
      %v3585 = vmul.f32 %v3584, 2.1237322e-06
      %v3586 = vadd.f32 %v3585, 0.00028619796
      %v3587 = vmul.f32 %v3584, %v3586
      %v3588 = vadd.f32 %v3587, 0.0036580483
      %v3589 = vmul.f32 %v3584, %v3588
      %v3590 = vadd.f32 %v3589, 0.05243302
      %v3591 = vmul.f32 %v3584, %v3590
      %v3592 = vadd.f32 %v3591, 0.18741608
      %v3593 = vmul.f32 %v3584, %v3592
      %v3594 = vadd.f32 %v3593, 1.1283791
      %v3595 = vmul.f32 %v3300, %v3594
      %v3596 = vmul.f32 %v3584, 3.8918573e-05
      %v3597 = vadd.f32 %v3596, 0.001143296
      %v3598 = vmul.f32 %v3584, %v3597
      %v3599 = vadd.f32 %v3598, 0.014752088
      %v3600 = vmul.f32 %v3584, %v3599
      %v3601 = vadd.f32 %v3600, 0.112945676
      %v3602 = vmul.f32 %v3584, %v3601
      %v3603 = vadd.f32 %v3602, 0.4994258
      %v3604 = vmul.f32 %v3584, %v3603
      %v3605 = vadd.f32 %v3604, 1.0
      %v3606 = vrcp.pop %v3605
      %v3607 = vmul.f32 %v3605, %v3606
      %v3608 = vsub.f32 1.0, %v3607
      %v3609 = vmul.f32 %v3606, %v3608
      %v3610 = vadd.f32 %v3606, %v3609
      %vm3611 = vweird.f32 %v3605
      %vm3612 = vweird.f32 %v3606
      %vm3613 = vmor %vm3611, %vm3612
      %v3614 = vsel %vm3613, %v3606, %v3610
      %v3615 = vand.u32 2147483647, %v3605
      %vm3616 = vcmp.eq.f32.partialorder %v3615, 8.507059e+37
      %v3617 = vand.u32 %v3605, 2147483648
      %v3618 = vor.u32 1.1754944e-38, %v3617
      %v3619 = vsel %vm3616, %v3618, %v3614
      %v3620 = vmul.f32 %v3595, %v3619
      %v3621 = vmin.f32 %v3620, 1.0
      %v3622 = vmax.f32 %v3621, -1.0
      %v3623 = vmul.f32 %v3301, %v3301
      %v3624 = vmin.f32 16.0, %v3623
      %v3625 = vmul.f32 %v3624, 2.1237322e-06
      %v3626 = vadd.f32 %v3625, 0.00028619796
      %v3627 = vmul.f32 %v3624, %v3626
      %v3628 = vadd.f32 %v3627, 0.0036580483
      %v3629 = vmul.f32 %v3624, %v3628
      %v3630 = vadd.f32 %v3629, 0.05243302
      %v3631 = vmul.f32 %v3624, %v3630
      %v3632 = vadd.f32 %v3631, 0.18741608
      %v3633 = vmul.f32 %v3624, %v3632
      %v3634 = vadd.f32 %v3633, 1.1283791
      %v3635 = vmul.f32 %v3301, %v3634
      %v3636 = vmul.f32 %v3624, 3.8918573e-05
      %v3637 = vadd.f32 %v3636, 0.001143296
      %v3638 = vmul.f32 %v3624, %v3637
      %v3639 = vadd.f32 %v3638, 0.014752088
      %v3640 = vmul.f32 %v3624, %v3639
      %v3641 = vadd.f32 %v3640, 0.112945676
      %v3642 = vmul.f32 %v3624, %v3641
      %v3643 = vadd.f32 %v3642, 0.4994258
      %v3644 = vmul.f32 %v3624, %v3643
      %v3645 = vadd.f32 %v3644, 1.0
      %v3646 = vrcp.pop %v3645
      %v3647 = vmul.f32 %v3645, %v3646
      %v3648 = vsub.f32 1.0, %v3647
      %v3649 = vmul.f32 %v3646, %v3648
      %v3650 = vadd.f32 %v3646, %v3649
      %vm3651 = vweird.f32 %v3645
      %vm3652 = vweird.f32 %v3646
      %vm3653 = vmor %vm3651, %vm3652
      %v3654 = vsel %vm3653, %v3646, %v3650
      %v3655 = vand.u32 2147483647, %v3645
      %vm3656 = vcmp.eq.f32.partialorder %v3655, 8.507059e+37
      %v3657 = vand.u32 %v3645, 2147483648
      %v3658 = vor.u32 1.1754944e-38, %v3657
      %v3659 = vsel %vm3656, %v3658, %v3654
      %v3660 = vmul.f32 %v3635, %v3659
      %v3661 = vmin.f32 %v3660, 1.0
      %v3662 = vmax.f32 %v3661, -1.0
      %v3663 = vmul.f32 %v3302, %v3302
      %v3664 = vmin.f32 16.0, %v3663
      %v3665 = vmul.f32 %v3664, 2.1237322e-06
      %v3666 = vadd.f32 %v3665, 0.00028619796
      %v3667 = vmul.f32 %v3664, %v3666
      %v3668 = vadd.f32 %v3667, 0.0036580483
      %v3669 = vmul.f32 %v3664, %v3668
      %v3670 = vadd.f32 %v3669, 0.05243302
      %v3671 = vmul.f32 %v3664, %v3670
      %v3672 = vadd.f32 %v3671, 0.18741608
      %v3673 = vmul.f32 %v3664, %v3672
      %v3674 = vadd.f32 %v3673, 1.1283791
      %v3675 = vmul.f32 %v3302, %v3674
      %v3676 = vmul.f32 %v3664, 3.8918573e-05
      %v3677 = vadd.f32 %v3676, 0.001143296
      %v3678 = vmul.f32 %v3664, %v3677
      %v3679 = vadd.f32 %v3678, 0.014752088
      %v3680 = vmul.f32 %v3664, %v3679
      %v3681 = vadd.f32 %v3680, 0.112945676
      %v3682 = vmul.f32 %v3664, %v3681
      %v3683 = vadd.f32 %v3682, 0.4994258
      %v3684 = vmul.f32 %v3664, %v3683
      %v3685 = vadd.f32 %v3684, 1.0
      %v3686 = vrcp.pop %v3685
      %v3687 = vmul.f32 %v3685, %v3686
      %v3688 = vsub.f32 1.0, %v3687
      %v3689 = vmul.f32 %v3686, %v3688
      %v3690 = vadd.f32 %v3686, %v3689
      %vm3691 = vweird.f32 %v3685
      %vm3692 = vweird.f32 %v3686
      %vm3693 = vmor %vm3691, %vm3692
      %v3694 = vsel %vm3693, %v3686, %v3690
      %v3695 = vand.u32 2147483647, %v3685
      %vm3696 = vcmp.eq.f32.partialorder %v3695, 8.507059e+37
      %v3697 = vand.u32 %v3685, 2147483648
      %v3698 = vor.u32 1.1754944e-38, %v3697
      %v3699 = vsel %vm3696, %v3698, %v3694
      %v3700 = vmul.f32 %v3675, %v3699
      %v3701 = vmin.f32 %v3700, 1.0
      %v3702 = vmax.f32 %v3701, -1.0
      %v3703 = vadd.f32 %v3342, 1.0
      %v3704 = vadd.f32 %v3382, 1.0
      %v3705 = vadd.f32 %v3422, 1.0
      %v3706 = vadd.f32 %v3462, 1.0
      %v3707 = vadd.f32 %v3502, 1.0
      %v3708 = vadd.f32 %v3542, 1.0
      %v3709 = vadd.f32 %v3582, 1.0
      %v3710 = vadd.f32 %v3622, 1.0
      %v3711 = vadd.f32 %v3662, 1.0
      %v3712 = vadd.f32 %v3702, 1.0
      %v3713 = vmul.f32 %v3283, %v3703
      %v3714 = vmul.f32 %v3284, %v3704
      %v3715 = vmul.f32 %v3285, %v3705
      %v3716 = vmul.f32 %v3286, %v3706
      %v3717 = vmul.f32 %v3287, %v3707
      %v3718 = vmul.f32 %v3288, %v3708
      %v3719 = vmul.f32 %v3289, %v3709
      %v3720 = vmul.f32 %v3290, %v3710
      %v3721 = vmul.f32 %v3291, %v3711
      %v3722 = vmul.f32 %v3292, %v3712
      %v3723 = vld [vmem:[%s16] sm:$0xff]
      %v3724 = vld [vmem:[%s16 + $0x8] sm:$0xff]
      %v3725 = vld [vmem:[%s16 + $0x10] sm:$0xff]
      %v3726 = vld [vmem:[%s16 + $0x18] sm:$0xff]
      %v3727 = vld [vmem:[%s16 + $0x20] sm:$0xff]
      %v3728 = vld [vmem:[%s16 + $0x28] sm:$0xff]
      %v3729 = vld [vmem:[%s16 + $0x30] sm:$0xff]
      %v3730 = vld [vmem:[%s16 + $0x38] sm:$0xff]
      %v3731 = vld [vmem:[%s17] sm:$0x1]
      %v3733 = vperm.slane %v3731, 0
      %vm3735 = vcmask 523264
      %v3737 = vsel %vm3735, %v3713, 0
      %v3740 = vsel %vm3735, %v3714, 0
      %v3743 = vsel %vm3735, %v3715, 0
      %v3746 = vsel %vm3735, %v3716, 0
      %v3749 = vsel %vm3735, %v3717, 0
      %v3752 = vsel %vm3735, %v3718, 0
      %v3755 = vsel %vm3735, %v3719, 0
      %v3758 = vsel %vm3735, %v3720, 0
      %v3761 = vsel %vm3735, %v3721, 0
      %v3764 = vsel %vm3735, %v3722, 0
      %3766 = vmatpush.msra.mxu0 0.0
      %3767 = vmatpush.msra.mxu0 0.0
      %3768 = vmatpush.msra.mxu0 0.0
      %3769 = vmatpush.msra.mxu0 0.0
      %3770 = vmatpush.msra.mxu0 0.0
      %3771 = vmatpush.msra.mxu0 0.0
      %3772 = vmatpush.msra.mxu0 0.0
      %3773 = vmatpush.msra.mxu0 0.0
      %3774 = vmatpush.msra.mxu0 %v3730
      %3775 = vmatpush.msra.mxu0 %v3729
      %3776 = vmatpush.msra.mxu0 %v3728
      %3777 = vmatpush.msra.mxu0 %v3727
      %3778 = vmatpush.msra.mxu0 %v3726
      %3779 = vmatpush.msra.mxu0 %v3725
      %3780 = vmatpush.msra.mxu0 %v3724
      %3781 = vmatpush.msra.mxu0 %v3723
      %3782 = vmatmul.f32.gmra.mxu0 %v3737
      %v3783 = vpop.f32.mrf.mxu0
      %v3784 = vadd.f32 %v3733, %v3783
      %3785 = vmatmul.f32.gmra.mxu0 %v3740
      %v3786 = vpop.f32.mrf.mxu0
      %v3787 = vadd.f32 %v3733, %v3786
      %3788 = vmatmul.f32.gmra.mxu0 %v3743
      %v3789 = vpop.f32.mrf.mxu0
      %v3790 = vadd.f32 %v3733, %v3789
      %3791 = vmatmul.f32.gmra.mxu0 %v3746
      %v3792 = vpop.f32.mrf.mxu0
      %v3793 = vadd.f32 %v3733, %v3792
      %3794 = vmatmul.f32.gmra.mxu0 %v3749
      %v3795 = vpop.f32.mrf.mxu0
      %v3796 = vadd.f32 %v3733, %v3795
      %3797 = vmatmul.f32.gmra.mxu0 %v3752
      %v3798 = vpop.f32.mrf.mxu0
      %v3799 = vadd.f32 %v3733, %v3798
      %3800 = vmatmul.f32.gmra.mxu0 %v3755
      %v3801 = vpop.f32.mrf.mxu0
      %v3802 = vadd.f32 %v3733, %v3801
      %3803 = vmatmul.f32.gmra.mxu0 %v3758
      %v3804 = vpop.f32.mrf.mxu0
      %v3805 = vadd.f32 %v3733, %v3804
      %3806 = vmatmul.f32.gmra.mxu0 %v3761
      %v3807 = vpop.f32.mrf.mxu0
      %v3808 = vadd.f32 %v3733, %v3807
      %3809 = vmatmul.f32.gmra.mxu0 %v3764
      %v3810 = vpop.f32.mrf.mxu0
      %v3811 = vadd.f32 %v3733, %v3810
      %3812 = vdwg.mxu0
      %v3813 = vadd.f32 %v3188, %v3784
      %v3814 = vadd.f32 %v3189, %v3787
      %v3815 = vadd.f32 %v3190, %v3790
      %v3816 = vadd.f32 %v3191, %v3793
      %v3817 = vadd.f32 %v3192, %v3796
      %v3818 = vadd.f32 %v3193, %v3799
      %v3819 = vadd.f32 %v3194, %v3802
      %v3820 = vadd.f32 %v3195, %v3805
      %v3821 = vadd.f32 %v3196, %v3808
      %v3822 = vadd.f32 %v3197, %v3811
      %v3823 = vld [vmem:[%s18] sm:$0x1]
      %v3824 = vld [vmem:[%s19] sm:$0x1]
      %v3825 = vsel %vm1101, %v3813, 0.0
      %3826 = vadd.xlane.f32.xlu0 %v3825
      %v3827 = vpop.xlane.xlu0 %3826
      %v3828 = vsel %vm1101, %v3814, 0.0
      %3829 = vadd.xlane.f32.xlu0 %v3828
      %v3830 = vpop.xlane.xlu0 %3829
      %v3831 = vsel %vm1101, %v3815, 0.0
      %3832 = vadd.xlane.f32.xlu0 %v3831
      %v3833 = vpop.xlane.xlu0 %3832
      %v3834 = vsel %vm1101, %v3816, 0.0
      %3835 = vadd.xlane.f32.xlu0 %v3834
      %v3836 = vpop.xlane.xlu0 %3835
      %v3837 = vsel %vm1101, %v3817, 0.0
      %3838 = vadd.xlane.f32.xlu0 %v3837
      %v3839 = vpop.xlane.xlu0 %3838
      %v3840 = vsel %vm1101, %v3818, 0.0
      %3841 = vadd.xlane.f32.xlu0 %v3840
      %v3842 = vpop.xlane.xlu0 %3841
      %v3843 = vsel %vm1101, %v3819, 0.0
      %3844 = vadd.xlane.f32.xlu0 %v3843
      %v3845 = vpop.xlane.xlu0 %3844
      %v3846 = vsel %vm1101, %v3820, 0.0
      %3847 = vadd.xlane.f32.xlu0 %v3846
      %v3848 = vpop.xlane.xlu0 %3847
      %v3849 = vsel %vm1101, %v3821, 0.0
      %3850 = vadd.xlane.f32.xlu0 %v3849
      %v3851 = vpop.xlane.xlu0 %3850
      %v3852 = vsel %vm1101, %v3822, 0.0
      %3853 = vadd.xlane.f32.xlu0 %v3852
      %v3854 = vpop.xlane.xlu0 %3853
      %v3855 = vmul.f32 %v3827, %v1138
      %v3856 = vmul.f32 %v3830, %v1138
      %v3857 = vmul.f32 %v3833, %v1138
      %v3858 = vmul.f32 %v3836, %v1138
      %v3859 = vmul.f32 %v3839, %v1138
      %v3860 = vmul.f32 %v3842, %v1138
      %v3861 = vmul.f32 %v3845, %v1138
      %v3862 = vmul.f32 %v3848, %v1138
      %v3863 = vmul.f32 %v3851, %v1138
      %v3864 = vmul.f32 %v3854, %v1138
      %v3865 = vsub.f32 %v3813, %v3855
      %v3866 = vsub.f32 %v3814, %v3856
      %v3867 = vsub.f32 %v3815, %v3857
      %v3868 = vsub.f32 %v3816, %v3858
      %v3869 = vsub.f32 %v3817, %v3859
      %v3870 = vsub.f32 %v3818, %v3860
      %v3871 = vsub.f32 %v3819, %v3861
      %v3872 = vsub.f32 %v3820, %v3862
      %v3873 = vsub.f32 %v3821, %v3863
      %v3874 = vsub.f32 %v3822, %v3864
      %v3875 = vmul.f32 %v3865, %v3865
      %v3876 = vmul.f32 %v3866, %v3866
      %v3877 = vmul.f32 %v3867, %v3867
      %v3878 = vmul.f32 %v3868, %v3868
      %v3879 = vmul.f32 %v3869, %v3869
      %v3880 = vmul.f32 %v3870, %v3870
      %v3881 = vmul.f32 %v3871, %v3871
      %v3882 = vmul.f32 %v3872, %v3872
      %v3883 = vmul.f32 %v3873, %v3873
      %v3884 = vmul.f32 %v3874, %v3874
      %v3885 = vsel %vm1101, %v3875, 0.0
      %3886 = vadd.xlane.f32.xlu0 %v3885
      %v3887 = vpop.xlane.xlu0 %3886
      %v3888 = vsel %vm1101, %v3876, 0.0
      %3889 = vadd.xlane.f32.xlu0 %v3888
      %v3890 = vpop.xlane.xlu0 %3889
      %v3891 = vsel %vm1101, %v3877, 0.0
      %3892 = vadd.xlane.f32.xlu0 %v3891
      %v3893 = vpop.xlane.xlu0 %3892
      %v3894 = vsel %vm1101, %v3878, 0.0
      %3895 = vadd.xlane.f32.xlu0 %v3894
      %v3896 = vpop.xlane.xlu0 %3895
      %v3897 = vsel %vm1101, %v3879, 0.0
      %3898 = vadd.xlane.f32.xlu0 %v3897
      %v3899 = vpop.xlane.xlu0 %3898
      %v3900 = vsel %vm1101, %v3880, 0.0
      %3901 = vadd.xlane.f32.xlu0 %v3900
      %v3902 = vpop.xlane.xlu0 %3901
      %v3903 = vsel %vm1101, %v3881, 0.0
      %3904 = vadd.xlane.f32.xlu0 %v3903
      %v3905 = vpop.xlane.xlu0 %3904
      %v3906 = vsel %vm1101, %v3882, 0.0
      %3907 = vadd.xlane.f32.xlu0 %v3906
      %v3908 = vpop.xlane.xlu0 %3907
      %v3909 = vsel %vm1101, %v3883, 0.0
      %3910 = vadd.xlane.f32.xlu0 %v3909
      %v3911 = vpop.xlane.xlu0 %3910
      %v3912 = vsel %vm1101, %v3884, 0.0
      %3913 = vadd.xlane.f32.xlu0 %v3912
      %v3914 = vpop.xlane.xlu0 %3913
      %v3915 = vmul.f32 %v3887, %v1138
      %v3916 = vmul.f32 %v3890, %v1138
      %v3917 = vmul.f32 %v3893, %v1138
      %v3918 = vmul.f32 %v3896, %v1138
      %v3919 = vmul.f32 %v3899, %v1138
      %v3920 = vmul.f32 %v3902, %v1138
      %v3921 = vmul.f32 %v3905, %v1138
      %v3922 = vmul.f32 %v3908, %v1138
      %v3923 = vmul.f32 %v3911, %v1138
      %v3924 = vmul.f32 %v3914, %v1138
      %v3925 = vadd.f32 %v3915, 1e-12
      %v3926 = vadd.f32 %v3916, 1e-12
      %v3927 = vadd.f32 %v3917, 1e-12
      %v3928 = vadd.f32 %v3918, 1e-12
      %v3929 = vadd.f32 %v3919, 1e-12
      %v3930 = vadd.f32 %v3920, 1e-12
      %v3931 = vadd.f32 %v3921, 1e-12
      %v3932 = vadd.f32 %v3922, 1e-12
      %v3933 = vadd.f32 %v3923, 1e-12
      %v3934 = vadd.f32 %v3924, 1e-12
      %v3935 = vrsqrt.pop %v3925
      %v3936 = vmul.f32 %v3935, %v3925
      %v3937 = vmul.f32 %v3936, %v3935
      %v3938 = vmul.f32 0.5, %v3937
      %v3939 = vsub.f32 1.5, %v3938
      %v3940 = vmul.f32 %v3935, %v3939
      %vm3941 = vweird.f32 %v3925
      %vm3942 = vweird.f32 %v3935
      %vm3943 = vmor %vm3941, %vm3942
      %v3944 = vsel %vm3943, %v3935, %v3940
      %v3945 = vrsqrt.pop %v3926
      %v3946 = vmul.f32 %v3945, %v3926
      %v3947 = vmul.f32 %v3946, %v3945
      %v3948 = vmul.f32 0.5, %v3947
      %v3949 = vsub.f32 1.5, %v3948
      %v3950 = vmul.f32 %v3945, %v3949
      %vm3951 = vweird.f32 %v3926
      %vm3952 = vweird.f32 %v3945
      %vm3953 = vmor %vm3951, %vm3952
      %v3954 = vsel %vm3953, %v3945, %v3950
      %v3955 = vrsqrt.pop %v3927
      %v3956 = vmul.f32 %v3955, %v3927
      %v3957 = vmul.f32 %v3956, %v3955
      %v3958 = vmul.f32 0.5, %v3957
      %v3959 = vsub.f32 1.5, %v3958
      %v3960 = vmul.f32 %v3955, %v3959
      %vm3961 = vweird.f32 %v3927
      %vm3962 = vweird.f32 %v3955
      %vm3963 = vmor %vm3961, %vm3962
      %v3964 = vsel %vm3963, %v3955, %v3960
      %v3965 = vrsqrt.pop %v3928
      %v3966 = vmul.f32 %v3965, %v3928
      %v3967 = vmul.f32 %v3966, %v3965
      %v3968 = vmul.f32 0.5, %v3967
      %v3969 = vsub.f32 1.5, %v3968
      %v3970 = vmul.f32 %v3965, %v3969
      %vm3971 = vweird.f32 %v3928
      %vm3972 = vweird.f32 %v3965
      %vm3973 = vmor %vm3971, %vm3972
      %v3974 = vsel %vm3973, %v3965, %v3970
      %v3975 = vrsqrt.pop %v3929
      %v3976 = vmul.f32 %v3975, %v3929
      %v3977 = vmul.f32 %v3976, %v3975
      %v3978 = vmul.f32 0.5, %v3977
      %v3979 = vsub.f32 1.5, %v3978
      %v3980 = vmul.f32 %v3975, %v3979
      %vm3981 = vweird.f32 %v3929
      %vm3982 = vweird.f32 %v3975
      %vm3983 = vmor %vm3981, %vm3982
      %v3984 = vsel %vm3983, %v3975, %v3980
      %v3985 = vrsqrt.pop %v3930
      %v3986 = vmul.f32 %v3985, %v3930
      %v3987 = vmul.f32 %v3986, %v3985
      %v3988 = vmul.f32 0.5, %v3987
      %v3989 = vsub.f32 1.5, %v3988
      %v3990 = vmul.f32 %v3985, %v3989
      %vm3991 = vweird.f32 %v3930
      %vm3992 = vweird.f32 %v3985
      %vm3993 = vmor %vm3991, %vm3992
      %v3994 = vsel %vm3993, %v3985, %v3990
      %v3995 = vrsqrt.pop %v3931
      %v3996 = vmul.f32 %v3995, %v3931
      %v3997 = vmul.f32 %v3996, %v3995
      %v3998 = vmul.f32 0.5, %v3997
      %v3999 = vsub.f32 1.5, %v3998
      %v4000 = vmul.f32 %v3995, %v3999
      %vm4001 = vweird.f32 %v3931
      %vm4002 = vweird.f32 %v3995
      %vm4003 = vmor %vm4001, %vm4002
      %v4004 = vsel %vm4003, %v3995, %v4000
      %v4005 = vrsqrt.pop %v3932
      %v4006 = vmul.f32 %v4005, %v3932
      %v4007 = vmul.f32 %v4006, %v4005
      %v4008 = vmul.f32 0.5, %v4007
      %v4009 = vsub.f32 1.5, %v4008
      %v4010 = vmul.f32 %v4005, %v4009
      %vm4011 = vweird.f32 %v3932
      %vm4012 = vweird.f32 %v4005
      %vm4013 = vmor %vm4011, %vm4012
      %v4014 = vsel %vm4013, %v4005, %v4010
      %v4015 = vrsqrt.pop %v3933
      %v4016 = vmul.f32 %v4015, %v3933
      %v4017 = vmul.f32 %v4016, %v4015
      %v4018 = vmul.f32 0.5, %v4017
      %v4019 = vsub.f32 1.5, %v4018
      %v4020 = vmul.f32 %v4015, %v4019
      %vm4021 = vweird.f32 %v3933
      %vm4022 = vweird.f32 %v4015
      %vm4023 = vmor %vm4021, %vm4022
      %v4024 = vsel %vm4023, %v4015, %v4020
      %v4025 = vrsqrt.pop %v3934
      %v4026 = vmul.f32 %v4025, %v3934
      %v4027 = vmul.f32 %v4026, %v4025
      %v4028 = vmul.f32 0.5, %v4027
      %v4029 = vsub.f32 1.5, %v4028
      %v4030 = vmul.f32 %v4025, %v4029
      %vm4031 = vweird.f32 %v3934
      %vm4032 = vweird.f32 %v4025
      %vm4033 = vmor %vm4031, %vm4032
      %v4034 = vsel %vm4033, %v4025, %v4030
      %v4035 = vmul.f32 %v3865, %v3944
      %v4036 = vmul.f32 %v3866, %v3954
      %v4037 = vmul.f32 %v3867, %v3964
      %v4038 = vmul.f32 %v3868, %v3974
      %v4039 = vmul.f32 %v3869, %v3984
      %v4040 = vmul.f32 %v3870, %v3994
      %v4041 = vmul.f32 %v3871, %v4004
      %v4042 = vmul.f32 %v3872, %v4014
      %v4043 = vmul.f32 %v3873, %v4024
      %v4044 = vmul.f32 %v3874, %v4034
      %v4046 = vperm.slane %v3823, 0
      %v4048 = vmul.f32 %v4035, %v4046
      %v4049 = vmul.f32 %v4036, %v4046
      %v4050 = vmul.f32 %v4037, %v4046
      %v4051 = vmul.f32 %v4038, %v4046
      %v4052 = vmul.f32 %v4039, %v4046
      %v4053 = vmul.f32 %v4040, %v4046
      %v4054 = vmul.f32 %v4041, %v4046
      %v4055 = vmul.f32 %v4042, %v4046
      %v4056 = vmul.f32 %v4043, %v4046
      %v4057 = vmul.f32 %v4044, %v4046
      %v4059 = vperm.slane %v3824, 0
      %v4061 = vadd.f32 %v4048, %v4059
      %v4062 = vadd.f32 %v4049, %v4059
      %v4063 = vadd.f32 %v4050, %v4059
      %v4064 = vadd.f32 %v4051, %v4059
      %v4065 = vadd.f32 %v4052, %v4059
      %v4066 = vadd.f32 %v4053, %v4059
      %v4067 = vadd.f32 %v4054, %v4059
      %v4068 = vadd.f32 %v4055, %v4059
      %v4069 = vadd.f32 %v4056, %v4059
      %v4070 = vadd.f32 %v4057, %v4059
      %s4071 = scalar_lea.vmem %s8, 32
      %v4072 = vld [vmem:[%s4071] sm:$0xff]
      %v4073 = vld [vmem:[%s4071 + $0x8] sm:$0xff]
      %v4074 = vld [vmem:[%s4071 + $0x10] sm:$0xff]
      %v4075 = vld [vmem:[%s4071 + $0x18] sm:$0xff]
      %s4076 = scalar_lea.vmem %s9, 1
      %v4077 = vld [vmem:[%s4076] sm:$0x1]
      %v4079 = vperm.slane %v4077, 0
      %v4082 = vsel %vm1101, %v4061, 0
      %v4085 = vsel %vm1101, %v4062, 0
      %v4088 = vsel %vm1101, %v4063, 0
      %v4091 = vsel %vm1101, %v4064, 0
      %v4094 = vsel %vm1101, %v4065, 0
      %v4097 = vsel %vm1101, %v4066, 0
      %v4100 = vsel %vm1101, %v4067, 0
      %v4103 = vsel %vm1101, %v4068, 0
      %v4106 = vsel %vm1101, %v4069, 0
      %v4109 = vsel %vm1101, %v4070, 0
      %4111 = vmatpush.msra.mxu0 0.0
      %4112 = vmatpush.msra.mxu0 0.0
      %4113 = vmatpush.msra.mxu0 0.0
      %4114 = vmatpush.msra.mxu0 0.0
      %4115 = vmatpush.msra.mxu0 0.0
      %4116 = vmatpush.msra.mxu0 0.0
      %4117 = vmatpush.msra.mxu0 0.0
      %4118 = vmatpush.msra.mxu0 0.0
      %4119 = vmatpush.msra.mxu0 0.0
      %4120 = vmatpush.msra.mxu0 0.0
      %4121 = vmatpush.msra.mxu0 0.0
      %4122 = vmatpush.msra.mxu0 0.0
      %4123 = vmatpush.msra.mxu0 %v4075
      %4124 = vmatpush.msra.mxu0 %v4074
      %4125 = vmatpush.msra.mxu0 %v4073
      %4126 = vmatpush.msra.mxu0 %v4072
      %4127 = vmatmul.f32.gmra.mxu0 %v4082
      %v4128 = vpop.f32.mrf.mxu0
      %v4129 = vadd.f32 %v4079, %v4128
      %4130 = vmatmul.f32.gmra.mxu0 %v4085
      %v4131 = vpop.f32.mrf.mxu0
      %v4132 = vadd.f32 %v4079, %v4131
      %4133 = vmatmul.f32.gmra.mxu0 %v4088
      %v4134 = vpop.f32.mrf.mxu0
      %v4135 = vadd.f32 %v4079, %v4134
      %4136 = vmatmul.f32.gmra.mxu0 %v4091
      %v4137 = vpop.f32.mrf.mxu0
      %v4138 = vadd.f32 %v4079, %v4137
      %4139 = vmatmul.f32.gmra.mxu0 %v4094
      %v4140 = vpop.f32.mrf.mxu0
      %v4141 = vadd.f32 %v4079, %v4140
      %4142 = vmatmul.f32.gmra.mxu0 %v4097
      %v4143 = vpop.f32.mrf.mxu0
      %v4144 = vadd.f32 %v4079, %v4143
      %4145 = vmatmul.f32.gmra.mxu0 %v4100
      %v4146 = vpop.f32.mrf.mxu0
      %v4147 = vadd.f32 %v4079, %v4146
      %4148 = vmatmul.f32.gmra.mxu0 %v4103
      %v4149 = vpop.f32.mrf.mxu0
      %v4150 = vadd.f32 %v4079, %v4149
      %4151 = vmatmul.f32.gmra.mxu0 %v4106
      %v4152 = vpop.f32.mrf.mxu0
      %v4153 = vadd.f32 %v4079, %v4152
      %4154 = vmatmul.f32.gmra.mxu0 %v4109
      %v4155 = vpop.f32.mrf.mxu0
      %v4156 = vadd.f32 %v4079, %v4155
      %4157 = vdwg.mxu0
      %s4158 = scalar_lea.vmem %s10, 32
      %v4159 = vld [vmem:[%s4158] sm:$0xff]
      %v4160 = vld [vmem:[%s4158 + $0x8] sm:$0xff]
      %v4161 = vld [vmem:[%s4158 + $0x10] sm:$0xff]
      %v4162 = vld [vmem:[%s4158 + $0x18] sm:$0xff]
      %4164 = vrot.lane.b32.xlu0 %v4129, 96
      %v4165 = vpop.permute.xlu0 %4164
      %v4166 = vsel %vm1483, %v4129, 0
      %v4168 = vsel %vm1483, %v4165, 0
      %4170 = vmatpush.xpose.msra.mxu0 0.0
      %4171 = vmatpush.xpose.msra.mxu0 0.0
      %4172 = vmatpush.xpose.msra.mxu0 0.0
      %4173 = vmatpush.xpose.msra.mxu0 0.0
      %4174 = vmatpush.xpose.msra.mxu0 0.0
      %4175 = vmatpush.xpose.msra.mxu0 0.0
      %4176 = vmatpush.xpose.msra.mxu0 0.0
      %4177 = vmatpush.xpose.msra.mxu0 0.0
      %4178 = vmatpush.xpose.msra.mxu0 0.0
      %4179 = vmatpush.xpose.msra.mxu0 0.0
      %4180 = vmatpush.xpose.msra.mxu0 0.0
      %4181 = vmatpush.xpose.msra.mxu0 0.0
      %4182 = vmatpush.xpose.msra.mxu0 0.0
      %4183 = vmatpush.xpose.msra.mxu0 0.0
      %4184 = vmatpush.xpose.msra.mxu0 0.0
      %4185 = vmatpush.xpose.msra.mxu0 %v4168
      %4186 = vmatmul.f32.gmra.mxu0 %v4166
      %v4187 = vpop.f32.mrf.mxu0
      %v4188 = vadd.f32 %v1460, %v4187
      %4189 = vdwg.mxu0
      %4191 = vrot.lane.b32.xlu0 %v4132, 96
      %v4192 = vpop.permute.xlu0 %4191
      %v4193 = vsel %vm1483, %v4132, 0
      %v4195 = vsel %vm1483, %v4192, 0
      %4197 = vmatpush.xpose.msra.mxu0 0.0
      %4198 = vmatpush.xpose.msra.mxu0 0.0
      %4199 = vmatpush.xpose.msra.mxu0 0.0
      %4200 = vmatpush.xpose.msra.mxu0 0.0
      %4201 = vmatpush.xpose.msra.mxu0 0.0
      %4202 = vmatpush.xpose.msra.mxu0 0.0
      %4203 = vmatpush.xpose.msra.mxu0 0.0
      %4204 = vmatpush.xpose.msra.mxu0 0.0
      %4205 = vmatpush.xpose.msra.mxu0 0.0
      %4206 = vmatpush.xpose.msra.mxu0 0.0
      %4207 = vmatpush.xpose.msra.mxu0 0.0
      %4208 = vmatpush.xpose.msra.mxu0 0.0
      %4209 = vmatpush.xpose.msra.mxu0 0.0
      %4210 = vmatpush.xpose.msra.mxu0 0.0
      %4211 = vmatpush.xpose.msra.mxu0 0.0
      %4212 = vmatpush.xpose.msra.mxu0 %v4195
      %4213 = vmatmul.f32.gmra.mxu0 %v4193
      %v4214 = vpop.f32.mrf.mxu0
      %v4215 = vadd.f32 %v1461, %v4214
      %4216 = vdwg.mxu0
      %4218 = vrot.lane.b32.xlu0 %v4135, 96
      %v4219 = vpop.permute.xlu0 %4218
      %v4220 = vsel %vm1483, %v4135, 0
      %v4222 = vsel %vm1483, %v4219, 0
      %4224 = vmatpush.xpose.msra.mxu0 0.0
      %4225 = vmatpush.xpose.msra.mxu0 0.0
      %4226 = vmatpush.xpose.msra.mxu0 0.0
      %4227 = vmatpush.xpose.msra.mxu0 0.0
      %4228 = vmatpush.xpose.msra.mxu0 0.0
      %4229 = vmatpush.xpose.msra.mxu0 0.0
      %4230 = vmatpush.xpose.msra.mxu0 0.0
      %4231 = vmatpush.xpose.msra.mxu0 0.0
      %4232 = vmatpush.xpose.msra.mxu0 0.0
      %4233 = vmatpush.xpose.msra.mxu0 0.0
      %4234 = vmatpush.xpose.msra.mxu0 0.0
      %4235 = vmatpush.xpose.msra.mxu0 0.0
      %4236 = vmatpush.xpose.msra.mxu0 0.0
      %4237 = vmatpush.xpose.msra.mxu0 0.0
      %4238 = vmatpush.xpose.msra.mxu0 0.0
      %4239 = vmatpush.xpose.msra.mxu0 %v4222
      %4240 = vmatmul.f32.gmra.mxu0 %v4220
      %v4241 = vpop.f32.mrf.mxu0
      %v4242 = vadd.f32 %v1462, %v4241
      %4243 = vdwg.mxu0
      %4245 = vrot.lane.b32.xlu0 %v4138, 96
      %v4246 = vpop.permute.xlu0 %4245
      %v4247 = vsel %vm1483, %v4138, 0
      %v4249 = vsel %vm1483, %v4246, 0
      %4251 = vmatpush.xpose.msra.mxu0 0.0
      %4252 = vmatpush.xpose.msra.mxu0 0.0
      %4253 = vmatpush.xpose.msra.mxu0 0.0
      %4254 = vmatpush.xpose.msra.mxu0 0.0
      %4255 = vmatpush.xpose.msra.mxu0 0.0
      %4256 = vmatpush.xpose.msra.mxu0 0.0
      %4257 = vmatpush.xpose.msra.mxu0 0.0
      %4258 = vmatpush.xpose.msra.mxu0 0.0
      %4259 = vmatpush.xpose.msra.mxu0 0.0
      %4260 = vmatpush.xpose.msra.mxu0 0.0
      %4261 = vmatpush.xpose.msra.mxu0 0.0
      %4262 = vmatpush.xpose.msra.mxu0 0.0
      %4263 = vmatpush.xpose.msra.mxu0 0.0
      %4264 = vmatpush.xpose.msra.mxu0 0.0
      %4265 = vmatpush.xpose.msra.mxu0 0.0
      %4266 = vmatpush.xpose.msra.mxu0 %v4249
      %4267 = vmatmul.f32.gmra.mxu0 %v4247
      %v4268 = vpop.f32.mrf.mxu0
      %v4269 = vadd.f32 %v1463, %v4268
      %4270 = vdwg.mxu0
      %4272 = vrot.lane.b32.xlu0 %v4141, 96
      %v4273 = vpop.permute.xlu0 %4272
      %v4274 = vsel %vm1483, %v4141, 0
      %v4276 = vsel %vm1483, %v4273, 0
      %4278 = vmatpush.xpose.msra.mxu0 0.0
      %4279 = vmatpush.xpose.msra.mxu0 0.0
      %4280 = vmatpush.xpose.msra.mxu0 0.0
      %4281 = vmatpush.xpose.msra.mxu0 0.0
      %4282 = vmatpush.xpose.msra.mxu0 0.0
      %4283 = vmatpush.xpose.msra.mxu0 0.0
      %4284 = vmatpush.xpose.msra.mxu0 0.0
      %4285 = vmatpush.xpose.msra.mxu0 0.0
      %4286 = vmatpush.xpose.msra.mxu0 0.0
      %4287 = vmatpush.xpose.msra.mxu0 0.0
      %4288 = vmatpush.xpose.msra.mxu0 0.0
      %4289 = vmatpush.xpose.msra.mxu0 0.0
      %4290 = vmatpush.xpose.msra.mxu0 0.0
      %4291 = vmatpush.xpose.msra.mxu0 0.0
      %4292 = vmatpush.xpose.msra.mxu0 0.0
      %4293 = vmatpush.xpose.msra.mxu0 %v4276
      %4294 = vmatmul.f32.gmra.mxu0 %v4274
      %v4295 = vpop.f32.mrf.mxu0
      %v4296 = vadd.f32 %v1464, %v4295
      %4297 = vdwg.mxu0
      %4299 = vrot.lane.b32.xlu0 %v4144, 96
      %v4300 = vpop.permute.xlu0 %4299
      %v4301 = vsel %vm1483, %v4144, 0
      %v4303 = vsel %vm1483, %v4300, 0
      %4305 = vmatpush.xpose.msra.mxu0 0.0
      %4306 = vmatpush.xpose.msra.mxu0 0.0
      %4307 = vmatpush.xpose.msra.mxu0 0.0
      %4308 = vmatpush.xpose.msra.mxu0 0.0
      %4309 = vmatpush.xpose.msra.mxu0 0.0
      %4310 = vmatpush.xpose.msra.mxu0 0.0
      %4311 = vmatpush.xpose.msra.mxu0 0.0
      %4312 = vmatpush.xpose.msra.mxu0 0.0
      %4313 = vmatpush.xpose.msra.mxu0 0.0
      %4314 = vmatpush.xpose.msra.mxu0 0.0
      %4315 = vmatpush.xpose.msra.mxu0 0.0
      %4316 = vmatpush.xpose.msra.mxu0 0.0
      %4317 = vmatpush.xpose.msra.mxu0 0.0
      %4318 = vmatpush.xpose.msra.mxu0 0.0
      %4319 = vmatpush.xpose.msra.mxu0 0.0
      %4320 = vmatpush.xpose.msra.mxu0 %v4303
      %4321 = vmatmul.f32.gmra.mxu0 %v4301
      %v4322 = vpop.f32.mrf.mxu0
      %v4323 = vadd.f32 %v1465, %v4322
      %4324 = vdwg.mxu0
      %4326 = vrot.lane.b32.xlu0 %v4147, 96
      %v4327 = vpop.permute.xlu0 %4326
      %v4328 = vsel %vm1483, %v4147, 0
      %v4330 = vsel %vm1483, %v4327, 0
      %4332 = vmatpush.xpose.msra.mxu0 0.0
      %4333 = vmatpush.xpose.msra.mxu0 0.0
      %4334 = vmatpush.xpose.msra.mxu0 0.0
      %4335 = vmatpush.xpose.msra.mxu0 0.0
      %4336 = vmatpush.xpose.msra.mxu0 0.0
      %4337 = vmatpush.xpose.msra.mxu0 0.0
      %4338 = vmatpush.xpose.msra.mxu0 0.0
      %4339 = vmatpush.xpose.msra.mxu0 0.0
      %4340 = vmatpush.xpose.msra.mxu0 0.0
      %4341 = vmatpush.xpose.msra.mxu0 0.0
      %4342 = vmatpush.xpose.msra.mxu0 0.0
      %4343 = vmatpush.xpose.msra.mxu0 0.0
      %4344 = vmatpush.xpose.msra.mxu0 0.0
      %4345 = vmatpush.xpose.msra.mxu0 0.0
      %4346 = vmatpush.xpose.msra.mxu0 0.0
      %4347 = vmatpush.xpose.msra.mxu0 %v4330
      %4348 = vmatmul.f32.gmra.mxu0 %v4328
      %v4349 = vpop.f32.mrf.mxu0
      %v4350 = vadd.f32 %v1466, %v4349
      %4351 = vdwg.mxu0
      %4353 = vrot.lane.b32.xlu0 %v4150, 96
      %v4354 = vpop.permute.xlu0 %4353
      %v4355 = vsel %vm1483, %v4150, 0
      %v4357 = vsel %vm1483, %v4354, 0
      %4359 = vmatpush.xpose.msra.mxu0 0.0
      %4360 = vmatpush.xpose.msra.mxu0 0.0
      %4361 = vmatpush.xpose.msra.mxu0 0.0
      %4362 = vmatpush.xpose.msra.mxu0 0.0
      %4363 = vmatpush.xpose.msra.mxu0 0.0
      %4364 = vmatpush.xpose.msra.mxu0 0.0
      %4365 = vmatpush.xpose.msra.mxu0 0.0
      %4366 = vmatpush.xpose.msra.mxu0 0.0
      %4367 = vmatpush.xpose.msra.mxu0 0.0
      %4368 = vmatpush.xpose.msra.mxu0 0.0
      %4369 = vmatpush.xpose.msra.mxu0 0.0
      %4370 = vmatpush.xpose.msra.mxu0 0.0
      %4371 = vmatpush.xpose.msra.mxu0 0.0
      %4372 = vmatpush.xpose.msra.mxu0 0.0
      %4373 = vmatpush.xpose.msra.mxu0 0.0
      %4374 = vmatpush.xpose.msra.mxu0 %v4357
      %4375 = vmatmul.f32.gmra.mxu0 %v4355
      %v4376 = vpop.f32.mrf.mxu0
      %v4377 = vadd.f32 %v1467, %v4376
      %4378 = vdwg.mxu0
      %4380 = vrot.lane.b32.xlu0 %v4153, 96
      %v4381 = vpop.permute.xlu0 %4380
      %v4382 = vsel %vm1483, %v4153, 0
      %v4384 = vsel %vm1483, %v4381, 0
      %4386 = vmatpush.xpose.msra.mxu0 0.0
      %4387 = vmatpush.xpose.msra.mxu0 0.0
      %4388 = vmatpush.xpose.msra.mxu0 0.0
      %4389 = vmatpush.xpose.msra.mxu0 0.0
      %4390 = vmatpush.xpose.msra.mxu0 0.0
      %4391 = vmatpush.xpose.msra.mxu0 0.0
      %4392 = vmatpush.xpose.msra.mxu0 0.0
      %4393 = vmatpush.xpose.msra.mxu0 0.0
      %4394 = vmatpush.xpose.msra.mxu0 0.0
      %4395 = vmatpush.xpose.msra.mxu0 0.0
      %4396 = vmatpush.xpose.msra.mxu0 0.0
      %4397 = vmatpush.xpose.msra.mxu0 0.0
      %4398 = vmatpush.xpose.msra.mxu0 0.0
      %4399 = vmatpush.xpose.msra.mxu0 0.0
      %4400 = vmatpush.xpose.msra.mxu0 0.0
      %4401 = vmatpush.xpose.msra.mxu0 %v4384
      %4402 = vmatmul.f32.gmra.mxu0 %v4382
      %v4403 = vpop.f32.mrf.mxu0
      %v4404 = vadd.f32 %v1468, %v4403
      %4405 = vdwg.mxu0
      %4407 = vrot.lane.b32.xlu0 %v4156, 96
      %v4408 = vpop.permute.xlu0 %4407
      %v4409 = vsel %vm1483, %v4156, 0
      %v4411 = vsel %vm1483, %v4408, 0
      %4413 = vmatpush.xpose.msra.mxu0 0.0
      %4414 = vmatpush.xpose.msra.mxu0 0.0
      %4415 = vmatpush.xpose.msra.mxu0 0.0
      %4416 = vmatpush.xpose.msra.mxu0 0.0
      %4417 = vmatpush.xpose.msra.mxu0 0.0
      %4418 = vmatpush.xpose.msra.mxu0 0.0
      %4419 = vmatpush.xpose.msra.mxu0 0.0
      %4420 = vmatpush.xpose.msra.mxu0 0.0
      %4421 = vmatpush.xpose.msra.mxu0 0.0
      %4422 = vmatpush.xpose.msra.mxu0 0.0
      %4423 = vmatpush.xpose.msra.mxu0 0.0
      %4424 = vmatpush.xpose.msra.mxu0 0.0
      %4425 = vmatpush.xpose.msra.mxu0 0.0
      %4426 = vmatpush.xpose.msra.mxu0 0.0
      %4427 = vmatpush.xpose.msra.mxu0 0.0
      %4428 = vmatpush.xpose.msra.mxu0 %v4411
      %4429 = vmatmul.f32.gmra.mxu0 %v4409
      %v4430 = vpop.f32.mrf.mxu0
      %v4431 = vadd.f32 %v1469, %v4430
      %4432 = vdwg.mxu0
      %v4433 = vsel %vm1751, %v4188, -inf
      %4434 = vmax.xlane.f32.xlu0 %v4433
      %v4435 = vpop.xlane.xlu0 %4434
      %v4436 = vsel %vm1751, %v4215, -inf
      %4437 = vmax.xlane.f32.xlu0 %v4436
      %v4438 = vpop.xlane.xlu0 %4437
      %v4439 = vsel %vm1751, %v4242, -inf
      %4440 = vmax.xlane.f32.xlu0 %v4439
      %v4441 = vpop.xlane.xlu0 %4440
      %v4442 = vsel %vm1751, %v4269, -inf
      %4443 = vmax.xlane.f32.xlu0 %v4442
      %v4444 = vpop.xlane.xlu0 %4443
      %v4445 = vsel %vm1751, %v4296, -inf
      %4446 = vmax.xlane.f32.xlu0 %v4445
      %v4447 = vpop.xlane.xlu0 %4446
      %v4448 = vsel %vm1751, %v4323, -inf
      %4449 = vmax.xlane.f32.xlu0 %v4448
      %v4450 = vpop.xlane.xlu0 %4449
      %v4451 = vsel %vm1751, %v4350, -inf
      %4452 = vmax.xlane.f32.xlu0 %v4451
      %v4453 = vpop.xlane.xlu0 %4452
      %v4454 = vsel %vm1751, %v4377, -inf
      %4455 = vmax.xlane.f32.xlu0 %v4454
      %v4456 = vpop.xlane.xlu0 %4455
      %v4457 = vsel %vm1751, %v4404, -inf
      %4458 = vmax.xlane.f32.xlu0 %v4457
      %v4459 = vpop.xlane.xlu0 %4458
      %v4460 = vsel %vm1751, %v4431, -inf
      %4461 = vmax.xlane.f32.xlu0 %v4460
      %v4462 = vpop.xlane.xlu0 %4461
      %v4463 = vsub.f32 %v4188, %v4435
      %v4464 = vsub.f32 %v4215, %v4438
      %v4465 = vsub.f32 %v4242, %v4441
      %v4466 = vsub.f32 %v4269, %v4444
      %v4467 = vsub.f32 %v4296, %v4447
      %v4468 = vsub.f32 %v4323, %v4450
      %v4469 = vsub.f32 %v4350, %v4453
      %v4470 = vsub.f32 %v4377, %v4456
      %v4471 = vsub.f32 %v4404, %v4459
      %v4472 = vsub.f32 %v4431, %v4462
      %v4473 = vmul.f32 %v4463, 1.442695
      %v4474 = vpow.pop %v4473
      %v4475 = vmul.f32 %v4464, 1.442695
      %v4476 = vpow.pop %v4475
      %v4477 = vmul.f32 %v4465, 1.442695
      %v4478 = vpow.pop %v4477
      %v4479 = vmul.f32 %v4466, 1.442695
      %v4480 = vpow.pop %v4479
      %v4481 = vmul.f32 %v4467, 1.442695
      %v4482 = vpow.pop %v4481
      %v4483 = vmul.f32 %v4468, 1.442695
      %v4484 = vpow.pop %v4483
      %v4485 = vmul.f32 %v4469, 1.442695
      %v4486 = vpow.pop %v4485
      %v4487 = vmul.f32 %v4470, 1.442695
      %v4488 = vpow.pop %v4487
      %v4489 = vmul.f32 %v4471, 1.442695
      %v4490 = vpow.pop %v4489
      %v4491 = vmul.f32 %v4472, 1.442695
      %v4492 = vpow.pop %v4491
      %v4493 = vsel %vm1751, %v4474, 0.0
      %4494 = vadd.xlane.f32.xlu0 %v4493
      %v4495 = vpop.xlane.xlu0 %4494
      %v4496 = vsel %vm1751, %v4476, 0.0
      %4497 = vadd.xlane.f32.xlu0 %v4496
      %v4498 = vpop.xlane.xlu0 %4497
      %v4499 = vsel %vm1751, %v4478, 0.0
      %4500 = vadd.xlane.f32.xlu0 %v4499
      %v4501 = vpop.xlane.xlu0 %4500
      %v4502 = vsel %vm1751, %v4480, 0.0
      %4503 = vadd.xlane.f32.xlu0 %v4502
      %v4504 = vpop.xlane.xlu0 %4503
      %v4505 = vsel %vm1751, %v4482, 0.0
      %4506 = vadd.xlane.f32.xlu0 %v4505
      %v4507 = vpop.xlane.xlu0 %4506
      %v4508 = vsel %vm1751, %v4484, 0.0
      %4509 = vadd.xlane.f32.xlu0 %v4508
      %v4510 = vpop.xlane.xlu0 %4509
      %v4511 = vsel %vm1751, %v4486, 0.0
      %4512 = vadd.xlane.f32.xlu0 %v4511
      %v4513 = vpop.xlane.xlu0 %4512
      %v4514 = vsel %vm1751, %v4488, 0.0
      %4515 = vadd.xlane.f32.xlu0 %v4514
      %v4516 = vpop.xlane.xlu0 %4515
      %v4517 = vsel %vm1751, %v4490, 0.0
      %4518 = vadd.xlane.f32.xlu0 %v4517
      %v4519 = vpop.xlane.xlu0 %4518
      %v4520 = vsel %vm1751, %v4492, 0.0
      %4521 = vadd.xlane.f32.xlu0 %v4520
      %v4522 = vpop.xlane.xlu0 %4521
      %v4523 = vrcp.pop %v4495
      %v4524 = vrcp.pop %v4498
      %v4525 = vrcp.pop %v4501
      %v4526 = vrcp.pop %v4504
      %v4527 = vrcp.pop %v4507
      %v4528 = vrcp.pop %v4510
      %v4529 = vrcp.pop %v4513
      %v4530 = vrcp.pop %v4516
      %v4531 = vrcp.pop %v4519
      %v4532 = vrcp.pop %v4522
      %v4533 = vmul.f32 %v4474, %v4523
      %v4534 = vmul.f32 %v4476, %v4524
      %v4535 = vmul.f32 %v4478, %v4525
      %v4536 = vmul.f32 %v4480, %v4526
      %v4537 = vmul.f32 %v4482, %v4527
      %v4538 = vmul.f32 %v4484, %v4528
      %v4539 = vmul.f32 %v4486, %v4529
      %v4540 = vmul.f32 %v4488, %v4530
      %v4541 = vmul.f32 %v4490, %v4531
      %v4542 = vmul.f32 %v4492, %v4532
      %4543 = vrot.lane.b32.xlu0 %v4129, 64
      %v4544 = vpop.permute.xlu0 %4543
      %v4547 = vsel %vm1751, %v4533, 0
      %4549 = vmatpush.msra.mxu0 0.0
      %4550 = vmatpush.msra.mxu0 0.0
      %4551 = vmatpush.msra.mxu0 0.0
      %4552 = vmatpush.msra.mxu0 0.0
      %4553 = vmatpush.msra.mxu0 0.0
      %4554 = vmatpush.msra.mxu0 0.0
      %4555 = vmatpush.msra.mxu0 0.0
      %4556 = vmatpush.msra.mxu0 0.0
      %4557 = vmatpush.msra.mxu0 0.0
      %4558 = vmatpush.msra.mxu0 0.0
      %4559 = vmatpush.msra.mxu0 0.0
      %4560 = vmatpush.msra.mxu0 0.0
      %4561 = vmatpush.msra.mxu0 0.0
      %4562 = vmatpush.msra.mxu0 0.0
      %4563 = vmatpush.msra.mxu0 0.0
      %4564 = vmatpush.msra.mxu0 %v4544
      %4565 = vmatmul.f32.gmra.mxu0 %v4547
      %v4566 = vpop.f32.mrf.mxu0
      %v4567 = vadd.f32 0.0, %v4566
      %4568 = vdwg.mxu0
      %4569 = vrot.lane.b32.xlu0 %v4132, 64
      %v4570 = vpop.permute.xlu0 %4569
      %v4573 = vsel %vm1751, %v4534, 0
      %4575 = vmatpush.msra.mxu0 0.0
      %4576 = vmatpush.msra.mxu0 0.0
      %4577 = vmatpush.msra.mxu0 0.0
      %4578 = vmatpush.msra.mxu0 0.0
      %4579 = vmatpush.msra.mxu0 0.0
      %4580 = vmatpush.msra.mxu0 0.0
      %4581 = vmatpush.msra.mxu0 0.0
      %4582 = vmatpush.msra.mxu0 0.0
      %4583 = vmatpush.msra.mxu0 0.0
      %4584 = vmatpush.msra.mxu0 0.0
      %4585 = vmatpush.msra.mxu0 0.0
      %4586 = vmatpush.msra.mxu0 0.0
      %4587 = vmatpush.msra.mxu0 0.0
      %4588 = vmatpush.msra.mxu0 0.0
      %4589 = vmatpush.msra.mxu0 0.0
      %4590 = vmatpush.msra.mxu0 %v4570
      %4591 = vmatmul.f32.gmra.mxu0 %v4573
      %v4592 = vpop.f32.mrf.mxu0
      %v4593 = vadd.f32 0.0, %v4592
      %4594 = vdwg.mxu0
      %4595 = vrot.lane.b32.xlu0 %v4135, 64
      %v4596 = vpop.permute.xlu0 %4595
      %v4599 = vsel %vm1751, %v4535, 0
      %4601 = vmatpush.msra.mxu0 0.0
      %4602 = vmatpush.msra.mxu0 0.0
      %4603 = vmatpush.msra.mxu0 0.0
      %4604 = vmatpush.msra.mxu0 0.0
      %4605 = vmatpush.msra.mxu0 0.0
      %4606 = vmatpush.msra.mxu0 0.0
      %4607 = vmatpush.msra.mxu0 0.0
      %4608 = vmatpush.msra.mxu0 0.0
      %4609 = vmatpush.msra.mxu0 0.0
      %4610 = vmatpush.msra.mxu0 0.0
      %4611 = vmatpush.msra.mxu0 0.0
      %4612 = vmatpush.msra.mxu0 0.0
      %4613 = vmatpush.msra.mxu0 0.0
      %4614 = vmatpush.msra.mxu0 0.0
      %4615 = vmatpush.msra.mxu0 0.0
      %4616 = vmatpush.msra.mxu0 %v4596
      %4617 = vmatmul.f32.gmra.mxu0 %v4599
      %v4618 = vpop.f32.mrf.mxu0
      %v4619 = vadd.f32 0.0, %v4618
      %4620 = vdwg.mxu0
      %4621 = vrot.lane.b32.xlu0 %v4138, 64
      %v4622 = vpop.permute.xlu0 %4621
      %v4625 = vsel %vm1751, %v4536, 0
      %4627 = vmatpush.msra.mxu0 0.0
      %4628 = vmatpush.msra.mxu0 0.0
      %4629 = vmatpush.msra.mxu0 0.0
      %4630 = vmatpush.msra.mxu0 0.0
      %4631 = vmatpush.msra.mxu0 0.0
      %4632 = vmatpush.msra.mxu0 0.0
      %4633 = vmatpush.msra.mxu0 0.0
      %4634 = vmatpush.msra.mxu0 0.0
      %4635 = vmatpush.msra.mxu0 0.0
      %4636 = vmatpush.msra.mxu0 0.0
      %4637 = vmatpush.msra.mxu0 0.0
      %4638 = vmatpush.msra.mxu0 0.0
      %4639 = vmatpush.msra.mxu0 0.0
      %4640 = vmatpush.msra.mxu0 0.0
      %4641 = vmatpush.msra.mxu0 0.0
      %4642 = vmatpush.msra.mxu0 %v4622
      %4643 = vmatmul.f32.gmra.mxu0 %v4625
      %v4644 = vpop.f32.mrf.mxu0
      %v4645 = vadd.f32 0.0, %v4644
      %4646 = vdwg.mxu0
      %4647 = vrot.lane.b32.xlu0 %v4141, 64
      %v4648 = vpop.permute.xlu0 %4647
      %v4651 = vsel %vm1751, %v4537, 0
      %4653 = vmatpush.msra.mxu0 0.0
      %4654 = vmatpush.msra.mxu0 0.0
      %4655 = vmatpush.msra.mxu0 0.0
      %4656 = vmatpush.msra.mxu0 0.0
      %4657 = vmatpush.msra.mxu0 0.0
      %4658 = vmatpush.msra.mxu0 0.0
      %4659 = vmatpush.msra.mxu0 0.0
      %4660 = vmatpush.msra.mxu0 0.0
      %4661 = vmatpush.msra.mxu0 0.0
      %4662 = vmatpush.msra.mxu0 0.0
      %4663 = vmatpush.msra.mxu0 0.0
      %4664 = vmatpush.msra.mxu0 0.0
      %4665 = vmatpush.msra.mxu0 0.0
      %4666 = vmatpush.msra.mxu0 0.0
      %4667 = vmatpush.msra.mxu0 0.0
      %4668 = vmatpush.msra.mxu0 %v4648
      %4669 = vmatmul.f32.gmra.mxu0 %v4651
      %v4670 = vpop.f32.mrf.mxu0
      %v4671 = vadd.f32 0.0, %v4670
      %4672 = vdwg.mxu0
      %4673 = vrot.lane.b32.xlu0 %v4144, 64
      %v4674 = vpop.permute.xlu0 %4673
      %v4677 = vsel %vm1751, %v4538, 0
      %4679 = vmatpush.msra.mxu0 0.0
      %4680 = vmatpush.msra.mxu0 0.0
      %4681 = vmatpush.msra.mxu0 0.0
      %4682 = vmatpush.msra.mxu0 0.0
      %4683 = vmatpush.msra.mxu0 0.0
      %4684 = vmatpush.msra.mxu0 0.0
      %4685 = vmatpush.msra.mxu0 0.0
      %4686 = vmatpush.msra.mxu0 0.0
      %4687 = vmatpush.msra.mxu0 0.0
      %4688 = vmatpush.msra.mxu0 0.0
      %4689 = vmatpush.msra.mxu0 0.0
      %4690 = vmatpush.msra.mxu0 0.0
      %4691 = vmatpush.msra.mxu0 0.0
      %4692 = vmatpush.msra.mxu0 0.0
      %4693 = vmatpush.msra.mxu0 0.0
      %4694 = vmatpush.msra.mxu0 %v4674
      %4695 = vmatmul.f32.gmra.mxu0 %v4677
      %v4696 = vpop.f32.mrf.mxu0
      %v4697 = vadd.f32 0.0, %v4696
      %4698 = vdwg.mxu0
      %4699 = vrot.lane.b32.xlu0 %v4147, 64
      %v4700 = vpop.permute.xlu0 %4699
      %v4703 = vsel %vm1751, %v4539, 0
      %4705 = vmatpush.msra.mxu0 0.0
      %4706 = vmatpush.msra.mxu0 0.0
      %4707 = vmatpush.msra.mxu0 0.0
      %4708 = vmatpush.msra.mxu0 0.0
      %4709 = vmatpush.msra.mxu0 0.0
      %4710 = vmatpush.msra.mxu0 0.0
      %4711 = vmatpush.msra.mxu0 0.0
      %4712 = vmatpush.msra.mxu0 0.0
      %4713 = vmatpush.msra.mxu0 0.0
      %4714 = vmatpush.msra.mxu0 0.0
      %4715 = vmatpush.msra.mxu0 0.0
      %4716 = vmatpush.msra.mxu0 0.0
      %4717 = vmatpush.msra.mxu0 0.0
      %4718 = vmatpush.msra.mxu0 0.0
      %4719 = vmatpush.msra.mxu0 0.0
      %4720 = vmatpush.msra.mxu0 %v4700
      %4721 = vmatmul.f32.gmra.mxu0 %v4703
      %v4722 = vpop.f32.mrf.mxu0
      %v4723 = vadd.f32 0.0, %v4722
      %4724 = vdwg.mxu0
      %4725 = vrot.lane.b32.xlu0 %v4150, 64
      %v4726 = vpop.permute.xlu0 %4725
      %v4729 = vsel %vm1751, %v4540, 0
      %4731 = vmatpush.msra.mxu0 0.0
      %4732 = vmatpush.msra.mxu0 0.0
      %4733 = vmatpush.msra.mxu0 0.0
      %4734 = vmatpush.msra.mxu0 0.0
      %4735 = vmatpush.msra.mxu0 0.0
      %4736 = vmatpush.msra.mxu0 0.0
      %4737 = vmatpush.msra.mxu0 0.0
      %4738 = vmatpush.msra.mxu0 0.0
      %4739 = vmatpush.msra.mxu0 0.0
      %4740 = vmatpush.msra.mxu0 0.0
      %4741 = vmatpush.msra.mxu0 0.0
      %4742 = vmatpush.msra.mxu0 0.0
      %4743 = vmatpush.msra.mxu0 0.0
      %4744 = vmatpush.msra.mxu0 0.0
      %4745 = vmatpush.msra.mxu0 0.0
      %4746 = vmatpush.msra.mxu0 %v4726
      %4747 = vmatmul.f32.gmra.mxu0 %v4729
      %v4748 = vpop.f32.mrf.mxu0
      %v4749 = vadd.f32 0.0, %v4748
      %4750 = vdwg.mxu0
      %4751 = vrot.lane.b32.xlu0 %v4153, 64
      %v4752 = vpop.permute.xlu0 %4751
      %v4755 = vsel %vm1751, %v4541, 0
      %4757 = vmatpush.msra.mxu0 0.0
      %4758 = vmatpush.msra.mxu0 0.0
      %4759 = vmatpush.msra.mxu0 0.0
      %4760 = vmatpush.msra.mxu0 0.0
      %4761 = vmatpush.msra.mxu0 0.0
      %4762 = vmatpush.msra.mxu0 0.0
      %4763 = vmatpush.msra.mxu0 0.0
      %4764 = vmatpush.msra.mxu0 0.0
      %4765 = vmatpush.msra.mxu0 0.0
      %4766 = vmatpush.msra.mxu0 0.0
      %4767 = vmatpush.msra.mxu0 0.0
      %4768 = vmatpush.msra.mxu0 0.0
      %4769 = vmatpush.msra.mxu0 0.0
      %4770 = vmatpush.msra.mxu0 0.0
      %4771 = vmatpush.msra.mxu0 0.0
      %4772 = vmatpush.msra.mxu0 %v4752
      %4773 = vmatmul.f32.gmra.mxu0 %v4755
      %v4774 = vpop.f32.mrf.mxu0
      %v4775 = vadd.f32 0.0, %v4774
      %4776 = vdwg.mxu0
      %4777 = vrot.lane.b32.xlu0 %v4156, 64
      %v4778 = vpop.permute.xlu0 %4777
      %v4781 = vsel %vm1751, %v4542, 0
      %4783 = vmatpush.msra.mxu0 0.0
      %4784 = vmatpush.msra.mxu0 0.0
      %4785 = vmatpush.msra.mxu0 0.0
      %4786 = vmatpush.msra.mxu0 0.0
      %4787 = vmatpush.msra.mxu0 0.0
      %4788 = vmatpush.msra.mxu0 0.0
      %4789 = vmatpush.msra.mxu0 0.0
      %4790 = vmatpush.msra.mxu0 0.0
      %4791 = vmatpush.msra.mxu0 0.0
      %4792 = vmatpush.msra.mxu0 0.0
      %4793 = vmatpush.msra.mxu0 0.0
      %4794 = vmatpush.msra.mxu0 0.0
      %4795 = vmatpush.msra.mxu0 0.0
      %4796 = vmatpush.msra.mxu0 0.0
      %4797 = vmatpush.msra.mxu0 0.0
      %4798 = vmatpush.msra.mxu0 %v4778
      %4799 = vmatmul.f32.gmra.mxu0 %v4781
      %v4800 = vpop.f32.mrf.mxu0
      %v4801 = vadd.f32 0.0, %v4800
      %4802 = vdwg.mxu0
      %4803 = vrot.lane.b32.xlu0 %v4129, 112
      %v4804 = vpop.permute.xlu0 %4803
      %4805 = vrot.lane.b32.xlu0 %v4129, 80
      %v4806 = vpop.permute.xlu0 %4805
      %v4807 = vsel %vm1483, %v4804, 0
      %v4809 = vsel %vm1483, %v4806, 0
      %4811 = vmatpush.xpose.msra.mxu0 0.0
      %4812 = vmatpush.xpose.msra.mxu0 0.0
      %4813 = vmatpush.xpose.msra.mxu0 0.0
      %4814 = vmatpush.xpose.msra.mxu0 0.0
      %4815 = vmatpush.xpose.msra.mxu0 0.0
      %4816 = vmatpush.xpose.msra.mxu0 0.0
      %4817 = vmatpush.xpose.msra.mxu0 0.0
      %4818 = vmatpush.xpose.msra.mxu0 0.0
      %4819 = vmatpush.xpose.msra.mxu0 0.0
      %4820 = vmatpush.xpose.msra.mxu0 0.0
      %4821 = vmatpush.xpose.msra.mxu0 0.0
      %4822 = vmatpush.xpose.msra.mxu0 0.0
      %4823 = vmatpush.xpose.msra.mxu0 0.0
      %4824 = vmatpush.xpose.msra.mxu0 0.0
      %4825 = vmatpush.xpose.msra.mxu0 0.0
      %4826 = vmatpush.xpose.msra.mxu0 %v4809
      %4827 = vmatmul.f32.gmra.mxu0 %v4807
      %v4828 = vpop.f32.mrf.mxu0
      %v4829 = vadd.f32 %v1460, %v4828
      %4830 = vdwg.mxu0
      %4831 = vrot.lane.b32.xlu0 %v4132, 112
      %v4832 = vpop.permute.xlu0 %4831
      %4833 = vrot.lane.b32.xlu0 %v4132, 80
      %v4834 = vpop.permute.xlu0 %4833
      %v4835 = vsel %vm1483, %v4832, 0
      %v4837 = vsel %vm1483, %v4834, 0
      %4839 = vmatpush.xpose.msra.mxu0 0.0
      %4840 = vmatpush.xpose.msra.mxu0 0.0
      %4841 = vmatpush.xpose.msra.mxu0 0.0
      %4842 = vmatpush.xpose.msra.mxu0 0.0
      %4843 = vmatpush.xpose.msra.mxu0 0.0
      %4844 = vmatpush.xpose.msra.mxu0 0.0
      %4845 = vmatpush.xpose.msra.mxu0 0.0
      %4846 = vmatpush.xpose.msra.mxu0 0.0
      %4847 = vmatpush.xpose.msra.mxu0 0.0
      %4848 = vmatpush.xpose.msra.mxu0 0.0
      %4849 = vmatpush.xpose.msra.mxu0 0.0
      %4850 = vmatpush.xpose.msra.mxu0 0.0
      %4851 = vmatpush.xpose.msra.mxu0 0.0
      %4852 = vmatpush.xpose.msra.mxu0 0.0
      %4853 = vmatpush.xpose.msra.mxu0 0.0
      %4854 = vmatpush.xpose.msra.mxu0 %v4837
      %4855 = vmatmul.f32.gmra.mxu0 %v4835
      %v4856 = vpop.f32.mrf.mxu0
      %v4857 = vadd.f32 %v1461, %v4856
      %4858 = vdwg.mxu0
      %4859 = vrot.lane.b32.xlu0 %v4135, 112
      %v4860 = vpop.permute.xlu0 %4859
      %4861 = vrot.lane.b32.xlu0 %v4135, 80
      %v4862 = vpop.permute.xlu0 %4861
      %v4863 = vsel %vm1483, %v4860, 0
      %v4865 = vsel %vm1483, %v4862, 0
      %4867 = vmatpush.xpose.msra.mxu0 0.0
      %4868 = vmatpush.xpose.msra.mxu0 0.0
      %4869 = vmatpush.xpose.msra.mxu0 0.0
      %4870 = vmatpush.xpose.msra.mxu0 0.0
      %4871 = vmatpush.xpose.msra.mxu0 0.0
      %4872 = vmatpush.xpose.msra.mxu0 0.0
      %4873 = vmatpush.xpose.msra.mxu0 0.0
      %4874 = vmatpush.xpose.msra.mxu0 0.0
      %4875 = vmatpush.xpose.msra.mxu0 0.0
      %4876 = vmatpush.xpose.msra.mxu0 0.0
      %4877 = vmatpush.xpose.msra.mxu0 0.0
      %4878 = vmatpush.xpose.msra.mxu0 0.0
      %4879 = vmatpush.xpose.msra.mxu0 0.0
      %4880 = vmatpush.xpose.msra.mxu0 0.0
      %4881 = vmatpush.xpose.msra.mxu0 0.0
      %4882 = vmatpush.xpose.msra.mxu0 %v4865
      %4883 = vmatmul.f32.gmra.mxu0 %v4863
      %v4884 = vpop.f32.mrf.mxu0
      %v4885 = vadd.f32 %v1462, %v4884
      %4886 = vdwg.mxu0
      %4887 = vrot.lane.b32.xlu0 %v4138, 112
      %v4888 = vpop.permute.xlu0 %4887
      %4889 = vrot.lane.b32.xlu0 %v4138, 80
      %v4890 = vpop.permute.xlu0 %4889
      %v4891 = vsel %vm1483, %v4888, 0
      %v4893 = vsel %vm1483, %v4890, 0
      %4895 = vmatpush.xpose.msra.mxu0 0.0
      %4896 = vmatpush.xpose.msra.mxu0 0.0
      %4897 = vmatpush.xpose.msra.mxu0 0.0
      %4898 = vmatpush.xpose.msra.mxu0 0.0
      %4899 = vmatpush.xpose.msra.mxu0 0.0
      %4900 = vmatpush.xpose.msra.mxu0 0.0
      %4901 = vmatpush.xpose.msra.mxu0 0.0
      %4902 = vmatpush.xpose.msra.mxu0 0.0
      %4903 = vmatpush.xpose.msra.mxu0 0.0
      %4904 = vmatpush.xpose.msra.mxu0 0.0
      %4905 = vmatpush.xpose.msra.mxu0 0.0
      %4906 = vmatpush.xpose.msra.mxu0 0.0
      %4907 = vmatpush.xpose.msra.mxu0 0.0
      %4908 = vmatpush.xpose.msra.mxu0 0.0
      %4909 = vmatpush.xpose.msra.mxu0 0.0
      %4910 = vmatpush.xpose.msra.mxu0 %v4893
      %4911 = vmatmul.f32.gmra.mxu0 %v4891
      %v4912 = vpop.f32.mrf.mxu0
      %v4913 = vadd.f32 %v1463, %v4912
      %4914 = vdwg.mxu0
      %4915 = vrot.lane.b32.xlu0 %v4141, 112
      %v4916 = vpop.permute.xlu0 %4915
      %4917 = vrot.lane.b32.xlu0 %v4141, 80
      %v4918 = vpop.permute.xlu0 %4917
      %v4919 = vsel %vm1483, %v4916, 0
      %v4921 = vsel %vm1483, %v4918, 0
      %4923 = vmatpush.xpose.msra.mxu0 0.0
      %4924 = vmatpush.xpose.msra.mxu0 0.0
      %4925 = vmatpush.xpose.msra.mxu0 0.0
      %4926 = vmatpush.xpose.msra.mxu0 0.0
      %4927 = vmatpush.xpose.msra.mxu0 0.0
      %4928 = vmatpush.xpose.msra.mxu0 0.0
      %4929 = vmatpush.xpose.msra.mxu0 0.0
      %4930 = vmatpush.xpose.msra.mxu0 0.0
      %4931 = vmatpush.xpose.msra.mxu0 0.0
      %4932 = vmatpush.xpose.msra.mxu0 0.0
      %4933 = vmatpush.xpose.msra.mxu0 0.0
      %4934 = vmatpush.xpose.msra.mxu0 0.0
      %4935 = vmatpush.xpose.msra.mxu0 0.0
      %4936 = vmatpush.xpose.msra.mxu0 0.0
      %4937 = vmatpush.xpose.msra.mxu0 0.0
      %4938 = vmatpush.xpose.msra.mxu0 %v4921
      %4939 = vmatmul.f32.gmra.mxu0 %v4919
      %v4940 = vpop.f32.mrf.mxu0
      %v4941 = vadd.f32 %v1464, %v4940
      %4942 = vdwg.mxu0
      %4943 = vrot.lane.b32.xlu0 %v4144, 112
      %v4944 = vpop.permute.xlu0 %4943
      %4945 = vrot.lane.b32.xlu0 %v4144, 80
      %v4946 = vpop.permute.xlu0 %4945
      %v4947 = vsel %vm1483, %v4944, 0
      %v4949 = vsel %vm1483, %v4946, 0
      %4951 = vmatpush.xpose.msra.mxu0 0.0
      %4952 = vmatpush.xpose.msra.mxu0 0.0
      %4953 = vmatpush.xpose.msra.mxu0 0.0
      %4954 = vmatpush.xpose.msra.mxu0 0.0
      %4955 = vmatpush.xpose.msra.mxu0 0.0
      %4956 = vmatpush.xpose.msra.mxu0 0.0
      %4957 = vmatpush.xpose.msra.mxu0 0.0
      %4958 = vmatpush.xpose.msra.mxu0 0.0
      %4959 = vmatpush.xpose.msra.mxu0 0.0
      %4960 = vmatpush.xpose.msra.mxu0 0.0
      %4961 = vmatpush.xpose.msra.mxu0 0.0
      %4962 = vmatpush.xpose.msra.mxu0 0.0
      %4963 = vmatpush.xpose.msra.mxu0 0.0
      %4964 = vmatpush.xpose.msra.mxu0 0.0
      %4965 = vmatpush.xpose.msra.mxu0 0.0
      %4966 = vmatpush.xpose.msra.mxu0 %v4949
      %4967 = vmatmul.f32.gmra.mxu0 %v4947
      %v4968 = vpop.f32.mrf.mxu0
      %v4969 = vadd.f32 %v1465, %v4968
      %4970 = vdwg.mxu0
      %4971 = vrot.lane.b32.xlu0 %v4147, 112
      %v4972 = vpop.permute.xlu0 %4971
      %4973 = vrot.lane.b32.xlu0 %v4147, 80
      %v4974 = vpop.permute.xlu0 %4973
      %v4975 = vsel %vm1483, %v4972, 0
      %v4977 = vsel %vm1483, %v4974, 0
      %4979 = vmatpush.xpose.msra.mxu0 0.0
      %4980 = vmatpush.xpose.msra.mxu0 0.0
      %4981 = vmatpush.xpose.msra.mxu0 0.0
      %4982 = vmatpush.xpose.msra.mxu0 0.0
      %4983 = vmatpush.xpose.msra.mxu0 0.0
      %4984 = vmatpush.xpose.msra.mxu0 0.0
      %4985 = vmatpush.xpose.msra.mxu0 0.0
      %4986 = vmatpush.xpose.msra.mxu0 0.0
      %4987 = vmatpush.xpose.msra.mxu0 0.0
      %4988 = vmatpush.xpose.msra.mxu0 0.0
      %4989 = vmatpush.xpose.msra.mxu0 0.0
      %4990 = vmatpush.xpose.msra.mxu0 0.0
      %4991 = vmatpush.xpose.msra.mxu0 0.0
      %4992 = vmatpush.xpose.msra.mxu0 0.0
      %4993 = vmatpush.xpose.msra.mxu0 0.0
      %4994 = vmatpush.xpose.msra.mxu0 %v4977
      %4995 = vmatmul.f32.gmra.mxu0 %v4975
      %v4996 = vpop.f32.mrf.mxu0
      %v4997 = vadd.f32 %v1466, %v4996
      %4998 = vdwg.mxu0
      %4999 = vrot.lane.b32.xlu0 %v4150, 112
      %v5000 = vpop.permute.xlu0 %4999
      %5001 = vrot.lane.b32.xlu0 %v4150, 80
      %v5002 = vpop.permute.xlu0 %5001
      %v5003 = vsel %vm1483, %v5000, 0
      %v5005 = vsel %vm1483, %v5002, 0
      %5007 = vmatpush.xpose.msra.mxu0 0.0
      %5008 = vmatpush.xpose.msra.mxu0 0.0
      %5009 = vmatpush.xpose.msra.mxu0 0.0
      %5010 = vmatpush.xpose.msra.mxu0 0.0
      %5011 = vmatpush.xpose.msra.mxu0 0.0
      %5012 = vmatpush.xpose.msra.mxu0 0.0
      %5013 = vmatpush.xpose.msra.mxu0 0.0
      %5014 = vmatpush.xpose.msra.mxu0 0.0
      %5015 = vmatpush.xpose.msra.mxu0 0.0
      %5016 = vmatpush.xpose.msra.mxu0 0.0
      %5017 = vmatpush.xpose.msra.mxu0 0.0
      %5018 = vmatpush.xpose.msra.mxu0 0.0
      %5019 = vmatpush.xpose.msra.mxu0 0.0
      %5020 = vmatpush.xpose.msra.mxu0 0.0
      %5021 = vmatpush.xpose.msra.mxu0 0.0
      %5022 = vmatpush.xpose.msra.mxu0 %v5005
      %5023 = vmatmul.f32.gmra.mxu0 %v5003
      %v5024 = vpop.f32.mrf.mxu0
      %v5025 = vadd.f32 %v1467, %v5024
      %5026 = vdwg.mxu0
      %5027 = vrot.lane.b32.xlu0 %v4153, 112
      %v5028 = vpop.permute.xlu0 %5027
      %5029 = vrot.lane.b32.xlu0 %v4153, 80
      %v5030 = vpop.permute.xlu0 %5029
      %v5031 = vsel %vm1483, %v5028, 0
      %v5033 = vsel %vm1483, %v5030, 0
      %5035 = vmatpush.xpose.msra.mxu0 0.0
      %5036 = vmatpush.xpose.msra.mxu0 0.0
      %5037 = vmatpush.xpose.msra.mxu0 0.0
      %5038 = vmatpush.xpose.msra.mxu0 0.0
      %5039 = vmatpush.xpose.msra.mxu0 0.0
      %5040 = vmatpush.xpose.msra.mxu0 0.0
      %5041 = vmatpush.xpose.msra.mxu0 0.0
      %5042 = vmatpush.xpose.msra.mxu0 0.0
      %5043 = vmatpush.xpose.msra.mxu0 0.0
      %5044 = vmatpush.xpose.msra.mxu0 0.0
      %5045 = vmatpush.xpose.msra.mxu0 0.0
      %5046 = vmatpush.xpose.msra.mxu0 0.0
      %5047 = vmatpush.xpose.msra.mxu0 0.0
      %5048 = vmatpush.xpose.msra.mxu0 0.0
      %5049 = vmatpush.xpose.msra.mxu0 0.0
      %5050 = vmatpush.xpose.msra.mxu0 %v5033
      %5051 = vmatmul.f32.gmra.mxu0 %v5031
      %v5052 = vpop.f32.mrf.mxu0
      %v5053 = vadd.f32 %v1468, %v5052
      %5054 = vdwg.mxu0
      %5055 = vrot.lane.b32.xlu0 %v4156, 112
      %v5056 = vpop.permute.xlu0 %5055
      %5057 = vrot.lane.b32.xlu0 %v4156, 80
      %v5058 = vpop.permute.xlu0 %5057
      %v5059 = vsel %vm1483, %v5056, 0
      %v5061 = vsel %vm1483, %v5058, 0
      %5063 = vmatpush.xpose.msra.mxu0 0.0
      %5064 = vmatpush.xpose.msra.mxu0 0.0
      %5065 = vmatpush.xpose.msra.mxu0 0.0
      %5066 = vmatpush.xpose.msra.mxu0 0.0
      %5067 = vmatpush.xpose.msra.mxu0 0.0
      %5068 = vmatpush.xpose.msra.mxu0 0.0
      %5069 = vmatpush.xpose.msra.mxu0 0.0
      %5070 = vmatpush.xpose.msra.mxu0 0.0
      %5071 = vmatpush.xpose.msra.mxu0 0.0
      %5072 = vmatpush.xpose.msra.mxu0 0.0
      %5073 = vmatpush.xpose.msra.mxu0 0.0
      %5074 = vmatpush.xpose.msra.mxu0 0.0
      %5075 = vmatpush.xpose.msra.mxu0 0.0
      %5076 = vmatpush.xpose.msra.mxu0 0.0
      %5077 = vmatpush.xpose.msra.mxu0 0.0
      %5078 = vmatpush.xpose.msra.mxu0 %v5061
      %5079 = vmatmul.f32.gmra.mxu0 %v5059
      %v5080 = vpop.f32.mrf.mxu0
      %v5081 = vadd.f32 %v1469, %v5080
      %5082 = vdwg.mxu0
      %v5083 = vsel %vm1751, %v4829, -inf
      %5084 = vmax.xlane.f32.xlu0 %v5083
      %v5085 = vpop.xlane.xlu0 %5084
      %v5086 = vsel %vm1751, %v4857, -inf
      %5087 = vmax.xlane.f32.xlu0 %v5086
      %v5088 = vpop.xlane.xlu0 %5087
      %v5089 = vsel %vm1751, %v4885, -inf
      %5090 = vmax.xlane.f32.xlu0 %v5089
      %v5091 = vpop.xlane.xlu0 %5090
      %v5092 = vsel %vm1751, %v4913, -inf
      %5093 = vmax.xlane.f32.xlu0 %v5092
      %v5094 = vpop.xlane.xlu0 %5093
      %v5095 = vsel %vm1751, %v4941, -inf
      %5096 = vmax.xlane.f32.xlu0 %v5095
      %v5097 = vpop.xlane.xlu0 %5096
      %v5098 = vsel %vm1751, %v4969, -inf
      %5099 = vmax.xlane.f32.xlu0 %v5098
      %v5100 = vpop.xlane.xlu0 %5099
      %v5101 = vsel %vm1751, %v4997, -inf
      %5102 = vmax.xlane.f32.xlu0 %v5101
      %v5103 = vpop.xlane.xlu0 %5102
      %v5104 = vsel %vm1751, %v5025, -inf
      %5105 = vmax.xlane.f32.xlu0 %v5104
      %v5106 = vpop.xlane.xlu0 %5105
      %v5107 = vsel %vm1751, %v5053, -inf
      %5108 = vmax.xlane.f32.xlu0 %v5107
      %v5109 = vpop.xlane.xlu0 %5108
      %v5110 = vsel %vm1751, %v5081, -inf
      %5111 = vmax.xlane.f32.xlu0 %v5110
      %v5112 = vpop.xlane.xlu0 %5111
      %v5113 = vsub.f32 %v4829, %v5085
      %v5114 = vsub.f32 %v4857, %v5088
      %v5115 = vsub.f32 %v4885, %v5091
      %v5116 = vsub.f32 %v4913, %v5094
      %v5117 = vsub.f32 %v4941, %v5097
      %v5118 = vsub.f32 %v4969, %v5100
      %v5119 = vsub.f32 %v4997, %v5103
      %v5120 = vsub.f32 %v5025, %v5106
      %v5121 = vsub.f32 %v5053, %v5109
      %v5122 = vsub.f32 %v5081, %v5112
      %v5123 = vmul.f32 %v5113, 1.442695
      %v5124 = vpow.pop %v5123
      %v5125 = vmul.f32 %v5114, 1.442695
      %v5126 = vpow.pop %v5125
      %v5127 = vmul.f32 %v5115, 1.442695
      %v5128 = vpow.pop %v5127
      %v5129 = vmul.f32 %v5116, 1.442695
      %v5130 = vpow.pop %v5129
      %v5131 = vmul.f32 %v5117, 1.442695
      %v5132 = vpow.pop %v5131
      %v5133 = vmul.f32 %v5118, 1.442695
      %v5134 = vpow.pop %v5133
      %v5135 = vmul.f32 %v5119, 1.442695
      %v5136 = vpow.pop %v5135
      %v5137 = vmul.f32 %v5120, 1.442695
      %v5138 = vpow.pop %v5137
      %v5139 = vmul.f32 %v5121, 1.442695
      %v5140 = vpow.pop %v5139
      %v5141 = vmul.f32 %v5122, 1.442695
      %v5142 = vpow.pop %v5141
      %v5143 = vsel %vm1751, %v5124, 0.0
      %5144 = vadd.xlane.f32.xlu0 %v5143
      %v5145 = vpop.xlane.xlu0 %5144
      %v5146 = vsel %vm1751, %v5126, 0.0
      %5147 = vadd.xlane.f32.xlu0 %v5146
      %v5148 = vpop.xlane.xlu0 %5147
      %v5149 = vsel %vm1751, %v5128, 0.0
      %5150 = vadd.xlane.f32.xlu0 %v5149
      %v5151 = vpop.xlane.xlu0 %5150
      %v5152 = vsel %vm1751, %v5130, 0.0
      %5153 = vadd.xlane.f32.xlu0 %v5152
      %v5154 = vpop.xlane.xlu0 %5153
      %v5155 = vsel %vm1751, %v5132, 0.0
      %5156 = vadd.xlane.f32.xlu0 %v5155
      %v5157 = vpop.xlane.xlu0 %5156
      %v5158 = vsel %vm1751, %v5134, 0.0
      %5159 = vadd.xlane.f32.xlu0 %v5158
      %v5160 = vpop.xlane.xlu0 %5159
      %v5161 = vsel %vm1751, %v5136, 0.0
      %5162 = vadd.xlane.f32.xlu0 %v5161
      %v5163 = vpop.xlane.xlu0 %5162
      %v5164 = vsel %vm1751, %v5138, 0.0
      %5165 = vadd.xlane.f32.xlu0 %v5164
      %v5166 = vpop.xlane.xlu0 %5165
      %v5167 = vsel %vm1751, %v5140, 0.0
      %5168 = vadd.xlane.f32.xlu0 %v5167
      %v5169 = vpop.xlane.xlu0 %5168
      %v5170 = vsel %vm1751, %v5142, 0.0
      %5171 = vadd.xlane.f32.xlu0 %v5170
      %v5172 = vpop.xlane.xlu0 %5171
      %v5173 = vrcp.pop %v5145
      %v5174 = vrcp.pop %v5148
      %v5175 = vrcp.pop %v5151
      %v5176 = vrcp.pop %v5154
      %v5177 = vrcp.pop %v5157
      %v5178 = vrcp.pop %v5160
      %v5179 = vrcp.pop %v5163
      %v5180 = vrcp.pop %v5166
      %v5181 = vrcp.pop %v5169
      %v5182 = vrcp.pop %v5172
      %v5183 = vmul.f32 %v5124, %v5173
      %v5184 = vmul.f32 %v5126, %v5174
      %v5185 = vmul.f32 %v5128, %v5175
      %v5186 = vmul.f32 %v5130, %v5176
      %v5187 = vmul.f32 %v5132, %v5177
      %v5188 = vmul.f32 %v5134, %v5178
      %v5189 = vmul.f32 %v5136, %v5179
      %v5190 = vmul.f32 %v5138, %v5180
      %v5191 = vmul.f32 %v5140, %v5181
      %v5192 = vmul.f32 %v5142, %v5182
      %5193 = vrot.lane.b32.xlu0 %v4129, 48
      %v5194 = vpop.permute.xlu0 %5193
      %v5197 = vsel %vm1751, %v5183, 0
      %5199 = vmatpush.msra.mxu0 0.0
      %5200 = vmatpush.msra.mxu0 0.0
      %5201 = vmatpush.msra.mxu0 0.0
      %5202 = vmatpush.msra.mxu0 0.0
      %5203 = vmatpush.msra.mxu0 0.0
      %5204 = vmatpush.msra.mxu0 0.0
      %5205 = vmatpush.msra.mxu0 0.0
      %5206 = vmatpush.msra.mxu0 0.0
      %5207 = vmatpush.msra.mxu0 0.0
      %5208 = vmatpush.msra.mxu0 0.0
      %5209 = vmatpush.msra.mxu0 0.0
      %5210 = vmatpush.msra.mxu0 0.0
      %5211 = vmatpush.msra.mxu0 0.0
      %5212 = vmatpush.msra.mxu0 0.0
      %5213 = vmatpush.msra.mxu0 0.0
      %5214 = vmatpush.msra.mxu0 %v5194
      %5215 = vmatmul.f32.gmra.mxu0 %v5197
      %v5216 = vpop.f32.mrf.mxu0
      %v5217 = vadd.f32 0.0, %v5216
      %5218 = vdwg.mxu0
      %5219 = vrot.lane.b32.xlu0 %v4132, 48
      %v5220 = vpop.permute.xlu0 %5219
      %v5223 = vsel %vm1751, %v5184, 0
      %5225 = vmatpush.msra.mxu0 0.0
      %5226 = vmatpush.msra.mxu0 0.0
      %5227 = vmatpush.msra.mxu0 0.0
      %5228 = vmatpush.msra.mxu0 0.0
      %5229 = vmatpush.msra.mxu0 0.0
      %5230 = vmatpush.msra.mxu0 0.0
      %5231 = vmatpush.msra.mxu0 0.0
      %5232 = vmatpush.msra.mxu0 0.0
      %5233 = vmatpush.msra.mxu0 0.0
      %5234 = vmatpush.msra.mxu0 0.0
      %5235 = vmatpush.msra.mxu0 0.0
      %5236 = vmatpush.msra.mxu0 0.0
      %5237 = vmatpush.msra.mxu0 0.0
      %5238 = vmatpush.msra.mxu0 0.0
      %5239 = vmatpush.msra.mxu0 0.0
      %5240 = vmatpush.msra.mxu0 %v5220
      %5241 = vmatmul.f32.gmra.mxu0 %v5223
      %v5242 = vpop.f32.mrf.mxu0
      %v5243 = vadd.f32 0.0, %v5242
      %5244 = vdwg.mxu0
      %5245 = vrot.lane.b32.xlu0 %v4135, 48
      %v5246 = vpop.permute.xlu0 %5245
      %v5249 = vsel %vm1751, %v5185, 0
      %5251 = vmatpush.msra.mxu0 0.0
      %5252 = vmatpush.msra.mxu0 0.0
      %5253 = vmatpush.msra.mxu0 0.0
      %5254 = vmatpush.msra.mxu0 0.0
      %5255 = vmatpush.msra.mxu0 0.0
      %5256 = vmatpush.msra.mxu0 0.0
      %5257 = vmatpush.msra.mxu0 0.0
      %5258 = vmatpush.msra.mxu0 0.0
      %5259 = vmatpush.msra.mxu0 0.0
      %5260 = vmatpush.msra.mxu0 0.0
      %5261 = vmatpush.msra.mxu0 0.0
      %5262 = vmatpush.msra.mxu0 0.0
      %5263 = vmatpush.msra.mxu0 0.0
      %5264 = vmatpush.msra.mxu0 0.0
      %5265 = vmatpush.msra.mxu0 0.0
      %5266 = vmatpush.msra.mxu0 %v5246
      %5267 = vmatmul.f32.gmra.mxu0 %v5249
      %v5268 = vpop.f32.mrf.mxu0
      %v5269 = vadd.f32 0.0, %v5268
      %5270 = vdwg.mxu0
      %5271 = vrot.lane.b32.xlu0 %v4138, 48
      %v5272 = vpop.permute.xlu0 %5271
      %v5275 = vsel %vm1751, %v5186, 0
      %5277 = vmatpush.msra.mxu0 0.0
      %5278 = vmatpush.msra.mxu0 0.0
      %5279 = vmatpush.msra.mxu0 0.0
      %5280 = vmatpush.msra.mxu0 0.0
      %5281 = vmatpush.msra.mxu0 0.0
      %5282 = vmatpush.msra.mxu0 0.0
      %5283 = vmatpush.msra.mxu0 0.0
      %5284 = vmatpush.msra.mxu0 0.0
      %5285 = vmatpush.msra.mxu0 0.0
      %5286 = vmatpush.msra.mxu0 0.0
      %5287 = vmatpush.msra.mxu0 0.0
      %5288 = vmatpush.msra.mxu0 0.0
      %5289 = vmatpush.msra.mxu0 0.0
      %5290 = vmatpush.msra.mxu0 0.0
      %5291 = vmatpush.msra.mxu0 0.0
      %5292 = vmatpush.msra.mxu0 %v5272
      %5293 = vmatmul.f32.gmra.mxu0 %v5275
      %v5294 = vpop.f32.mrf.mxu0
      %v5295 = vadd.f32 0.0, %v5294
      %5296 = vdwg.mxu0
      %5297 = vrot.lane.b32.xlu0 %v4141, 48
      %v5298 = vpop.permute.xlu0 %5297
      %v5301 = vsel %vm1751, %v5187, 0
      %5303 = vmatpush.msra.mxu0 0.0
      %5304 = vmatpush.msra.mxu0 0.0
      %5305 = vmatpush.msra.mxu0 0.0
      %5306 = vmatpush.msra.mxu0 0.0
      %5307 = vmatpush.msra.mxu0 0.0
      %5308 = vmatpush.msra.mxu0 0.0
      %5309 = vmatpush.msra.mxu0 0.0
      %5310 = vmatpush.msra.mxu0 0.0
      %5311 = vmatpush.msra.mxu0 0.0
      %5312 = vmatpush.msra.mxu0 0.0
      %5313 = vmatpush.msra.mxu0 0.0
      %5314 = vmatpush.msra.mxu0 0.0
      %5315 = vmatpush.msra.mxu0 0.0
      %5316 = vmatpush.msra.mxu0 0.0
      %5317 = vmatpush.msra.mxu0 0.0
      %5318 = vmatpush.msra.mxu0 %v5298
      %5319 = vmatmul.f32.gmra.mxu0 %v5301
      %v5320 = vpop.f32.mrf.mxu0
      %v5321 = vadd.f32 0.0, %v5320
      %5322 = vdwg.mxu0
      %5323 = vrot.lane.b32.xlu0 %v4144, 48
      %v5324 = vpop.permute.xlu0 %5323
      %v5327 = vsel %vm1751, %v5188, 0
      %5329 = vmatpush.msra.mxu0 0.0
      %5330 = vmatpush.msra.mxu0 0.0
      %5331 = vmatpush.msra.mxu0 0.0
      %5332 = vmatpush.msra.mxu0 0.0
      %5333 = vmatpush.msra.mxu0 0.0
      %5334 = vmatpush.msra.mxu0 0.0
      %5335 = vmatpush.msra.mxu0 0.0
      %5336 = vmatpush.msra.mxu0 0.0
      %5337 = vmatpush.msra.mxu0 0.0
      %5338 = vmatpush.msra.mxu0 0.0
      %5339 = vmatpush.msra.mxu0 0.0
      %5340 = vmatpush.msra.mxu0 0.0
      %5341 = vmatpush.msra.mxu0 0.0
      %5342 = vmatpush.msra.mxu0 0.0
      %5343 = vmatpush.msra.mxu0 0.0
      %5344 = vmatpush.msra.mxu0 %v5324
      %5345 = vmatmul.f32.gmra.mxu0 %v5327
      %v5346 = vpop.f32.mrf.mxu0
      %v5347 = vadd.f32 0.0, %v5346
      %5348 = vdwg.mxu0
      %5349 = vrot.lane.b32.xlu0 %v4147, 48
      %v5350 = vpop.permute.xlu0 %5349
      %v5353 = vsel %vm1751, %v5189, 0
      %5355 = vmatpush.msra.mxu0 0.0
      %5356 = vmatpush.msra.mxu0 0.0
      %5357 = vmatpush.msra.mxu0 0.0
      %5358 = vmatpush.msra.mxu0 0.0
      %5359 = vmatpush.msra.mxu0 0.0
      %5360 = vmatpush.msra.mxu0 0.0
      %5361 = vmatpush.msra.mxu0 0.0
      %5362 = vmatpush.msra.mxu0 0.0
      %5363 = vmatpush.msra.mxu0 0.0
      %5364 = vmatpush.msra.mxu0 0.0
      %5365 = vmatpush.msra.mxu0 0.0
      %5366 = vmatpush.msra.mxu0 0.0
      %5367 = vmatpush.msra.mxu0 0.0
      %5368 = vmatpush.msra.mxu0 0.0
      %5369 = vmatpush.msra.mxu0 0.0
      %5370 = vmatpush.msra.mxu0 %v5350
      %5371 = vmatmul.f32.gmra.mxu0 %v5353
      %v5372 = vpop.f32.mrf.mxu0
      %v5373 = vadd.f32 0.0, %v5372
      %5374 = vdwg.mxu0
      %5375 = vrot.lane.b32.xlu0 %v4150, 48
      %v5376 = vpop.permute.xlu0 %5375
      %v5379 = vsel %vm1751, %v5190, 0
      %5381 = vmatpush.msra.mxu0 0.0
      %5382 = vmatpush.msra.mxu0 0.0
      %5383 = vmatpush.msra.mxu0 0.0
      %5384 = vmatpush.msra.mxu0 0.0
      %5385 = vmatpush.msra.mxu0 0.0
      %5386 = vmatpush.msra.mxu0 0.0
      %5387 = vmatpush.msra.mxu0 0.0
      %5388 = vmatpush.msra.mxu0 0.0
      %5389 = vmatpush.msra.mxu0 0.0
      %5390 = vmatpush.msra.mxu0 0.0
      %5391 = vmatpush.msra.mxu0 0.0
      %5392 = vmatpush.msra.mxu0 0.0
      %5393 = vmatpush.msra.mxu0 0.0
      %5394 = vmatpush.msra.mxu0 0.0
      %5395 = vmatpush.msra.mxu0 0.0
      %5396 = vmatpush.msra.mxu0 %v5376
      %5397 = vmatmul.f32.gmra.mxu0 %v5379
      %v5398 = vpop.f32.mrf.mxu0
      %v5399 = vadd.f32 0.0, %v5398
      %5400 = vdwg.mxu0
      %5401 = vrot.lane.b32.xlu0 %v4153, 48
      %v5402 = vpop.permute.xlu0 %5401
      %v5405 = vsel %vm1751, %v5191, 0
      %5407 = vmatpush.msra.mxu0 0.0
      %5408 = vmatpush.msra.mxu0 0.0
      %5409 = vmatpush.msra.mxu0 0.0
      %5410 = vmatpush.msra.mxu0 0.0
      %5411 = vmatpush.msra.mxu0 0.0
      %5412 = vmatpush.msra.mxu0 0.0
      %5413 = vmatpush.msra.mxu0 0.0
      %5414 = vmatpush.msra.mxu0 0.0
      %5415 = vmatpush.msra.mxu0 0.0
      %5416 = vmatpush.msra.mxu0 0.0
      %5417 = vmatpush.msra.mxu0 0.0
      %5418 = vmatpush.msra.mxu0 0.0
      %5419 = vmatpush.msra.mxu0 0.0
      %5420 = vmatpush.msra.mxu0 0.0
      %5421 = vmatpush.msra.mxu0 0.0
      %5422 = vmatpush.msra.mxu0 %v5402
      %5423 = vmatmul.f32.gmra.mxu0 %v5405
      %v5424 = vpop.f32.mrf.mxu0
      %v5425 = vadd.f32 0.0, %v5424
      %5426 = vdwg.mxu0
      %5427 = vrot.lane.b32.xlu0 %v4156, 48
      %v5428 = vpop.permute.xlu0 %5427
      %v5431 = vsel %vm1751, %v5192, 0
      %5433 = vmatpush.msra.mxu0 0.0
      %5434 = vmatpush.msra.mxu0 0.0
      %5435 = vmatpush.msra.mxu0 0.0
      %5436 = vmatpush.msra.mxu0 0.0
      %5437 = vmatpush.msra.mxu0 0.0
      %5438 = vmatpush.msra.mxu0 0.0
      %5439 = vmatpush.msra.mxu0 0.0
      %5440 = vmatpush.msra.mxu0 0.0
      %5441 = vmatpush.msra.mxu0 0.0
      %5442 = vmatpush.msra.mxu0 0.0
      %5443 = vmatpush.msra.mxu0 0.0
      %5444 = vmatpush.msra.mxu0 0.0
      %5445 = vmatpush.msra.mxu0 0.0
      %5446 = vmatpush.msra.mxu0 0.0
      %5447 = vmatpush.msra.mxu0 0.0
      %5448 = vmatpush.msra.mxu0 %v5428
      %5449 = vmatmul.f32.gmra.mxu0 %v5431
      %v5450 = vpop.f32.mrf.mxu0
      %v5451 = vadd.f32 0.0, %v5450
      %5452 = vdwg.mxu0
      %v5454 = vsel %vm1483, %v5217, 0
      %v5457 = vsel %vm1483, %v5243, 0
      %v5460 = vsel %vm1483, %v5269, 0
      %v5463 = vsel %vm1483, %v5295, 0
      %v5466 = vsel %vm1483, %v5321, 0
      %v5469 = vsel %vm1483, %v5347, 0
      %v5472 = vsel %vm1483, %v5373, 0
      %v5475 = vsel %vm1483, %v5399, 0
      %v5478 = vsel %vm1483, %v5425, 0
      %v5481 = vsel %vm1483, %v5451, 0
      %5483 = vmatpush.msra.mxu0 0.0
      %5484 = vmatpush.msra.mxu0 0.0
      %5485 = vmatpush.msra.mxu0 0.0
      %5486 = vmatpush.msra.mxu0 0.0
      %5487 = vmatpush.msra.mxu0 0.0
      %5488 = vmatpush.msra.mxu0 0.0
      %5489 = vmatpush.msra.mxu0 0.0
      %5490 = vmatpush.msra.mxu0 0.0
      %5491 = vmatpush.msra.mxu0 0.0
      %5492 = vmatpush.msra.mxu0 0.0
      %5493 = vmatpush.msra.mxu0 0.0
      %5494 = vmatpush.msra.mxu0 0.0
      %5495 = vmatpush.msra.mxu0 0.0
      %5496 = vmatpush.msra.mxu0 0.0
      %5497 = vmatpush.msra.mxu0 %v4162
      %5498 = vmatpush.msra.mxu0 %v4161
      %5499 = vmatmul.f32.gmra.mxu0 %v5454
      %v5500 = vpop.f32.mrf.mxu0
      %v5501 = vadd.f32 0.0, %v5500
      %5502 = vmatmul.f32.gmra.mxu0 %v5457
      %v5503 = vpop.f32.mrf.mxu0
      %v5504 = vadd.f32 0.0, %v5503
      %5505 = vmatmul.f32.gmra.mxu0 %v5460
      %v5506 = vpop.f32.mrf.mxu0
      %v5507 = vadd.f32 0.0, %v5506
      %5508 = vmatmul.f32.gmra.mxu0 %v5463
      %v5509 = vpop.f32.mrf.mxu0
      %v5510 = vadd.f32 0.0, %v5509
      %5511 = vmatmul.f32.gmra.mxu0 %v5466
      %v5512 = vpop.f32.mrf.mxu0
      %v5513 = vadd.f32 0.0, %v5512
      %5514 = vmatmul.f32.gmra.mxu0 %v5469
      %v5515 = vpop.f32.mrf.mxu0
      %v5516 = vadd.f32 0.0, %v5515
      %5517 = vmatmul.f32.gmra.mxu0 %v5472
      %v5518 = vpop.f32.mrf.mxu0
      %v5519 = vadd.f32 0.0, %v5518
      %5520 = vmatmul.f32.gmra.mxu0 %v5475
      %v5521 = vpop.f32.mrf.mxu0
      %v5522 = vadd.f32 0.0, %v5521
      %5523 = vmatmul.f32.gmra.mxu0 %v5478
      %v5524 = vpop.f32.mrf.mxu0
      %v5525 = vadd.f32 0.0, %v5524
      %5526 = vmatmul.f32.gmra.mxu0 %v5481
      %v5527 = vpop.f32.mrf.mxu0
      %v5528 = vadd.f32 0.0, %v5527
      %5529 = vdwg.mxu0
      %v5531 = vsel %vm1483, %v4567, 0
      %v5534 = vsel %vm1483, %v4593, 0
      %v5537 = vsel %vm1483, %v4619, 0
      %v5540 = vsel %vm1483, %v4645, 0
      %v5543 = vsel %vm1483, %v4671, 0
      %v5546 = vsel %vm1483, %v4697, 0
      %v5549 = vsel %vm1483, %v4723, 0
      %v5552 = vsel %vm1483, %v4749, 0
      %v5555 = vsel %vm1483, %v4775, 0
      %v5558 = vsel %vm1483, %v4801, 0
      %5560 = vmatpush.msra.mxu0 0.0
      %5561 = vmatpush.msra.mxu0 0.0
      %5562 = vmatpush.msra.mxu0 0.0
      %5563 = vmatpush.msra.mxu0 0.0
      %5564 = vmatpush.msra.mxu0 0.0
      %5565 = vmatpush.msra.mxu0 0.0
      %5566 = vmatpush.msra.mxu0 0.0
      %5567 = vmatpush.msra.mxu0 0.0
      %5568 = vmatpush.msra.mxu0 0.0
      %5569 = vmatpush.msra.mxu0 0.0
      %5570 = vmatpush.msra.mxu0 0.0
      %5571 = vmatpush.msra.mxu0 0.0
      %5572 = vmatpush.msra.mxu0 0.0
      %5573 = vmatpush.msra.mxu0 0.0
      %5574 = vmatpush.msra.mxu0 %v4160
      %5575 = vmatpush.msra.mxu0 %v4159
      %5576 = vmatmul.f32.gmra.mxu0 %v5531
      %v5577 = vpop.f32.mrf.mxu0
      %v5578 = vadd.f32 %v5501, %v5577
      %5579 = vmatmul.f32.gmra.mxu0 %v5534
      %v5580 = vpop.f32.mrf.mxu0
      %v5581 = vadd.f32 %v5504, %v5580
      %5582 = vmatmul.f32.gmra.mxu0 %v5537
      %v5583 = vpop.f32.mrf.mxu0
      %v5584 = vadd.f32 %v5507, %v5583
      %5585 = vmatmul.f32.gmra.mxu0 %v5540
      %v5586 = vpop.f32.mrf.mxu0
      %v5587 = vadd.f32 %v5510, %v5586
      %5588 = vmatmul.f32.gmra.mxu0 %v5543
      %v5589 = vpop.f32.mrf.mxu0
      %v5590 = vadd.f32 %v5513, %v5589
      %5591 = vmatmul.f32.gmra.mxu0 %v5546
      %v5592 = vpop.f32.mrf.mxu0
      %v5593 = vadd.f32 %v5516, %v5592
      %5594 = vmatmul.f32.gmra.mxu0 %v5549
      %v5595 = vpop.f32.mrf.mxu0
      %v5596 = vadd.f32 %v5519, %v5595
      %5597 = vmatmul.f32.gmra.mxu0 %v5552
      %v5598 = vpop.f32.mrf.mxu0
      %v5599 = vadd.f32 %v5522, %v5598
      %5600 = vmatmul.f32.gmra.mxu0 %v5555
      %v5601 = vpop.f32.mrf.mxu0
      %v5602 = vadd.f32 %v5525, %v5601
      %5603 = vmatmul.f32.gmra.mxu0 %v5558
      %v5604 = vpop.f32.mrf.mxu0
      %v5605 = vadd.f32 %v5528, %v5604
      %5606 = vdwg.mxu0
      %s5607 = scalar_lea.vmem %s11, 1
      %v5608 = vld [vmem:[%s5607] sm:$0x1]
      %v5610 = vperm.slane %v5608, 0
      %v5612 = vadd.f32 %v5578, %v5610
      %v5613 = vadd.f32 %v5581, %v5610
      %v5614 = vadd.f32 %v5584, %v5610
      %v5615 = vadd.f32 %v5587, %v5610
      %v5616 = vadd.f32 %v5590, %v5610
      %v5617 = vadd.f32 %v5593, %v5610
      %v5618 = vadd.f32 %v5596, %v5610
      %v5619 = vadd.f32 %v5599, %v5610
      %v5620 = vadd.f32 %v5602, %v5610
      %v5621 = vadd.f32 %v5605, %v5610
      %v5622 = vadd.f32 %v4061, %v5612
      %v5623 = vadd.f32 %v4062, %v5613
      %v5624 = vadd.f32 %v4063, %v5614
      %v5625 = vadd.f32 %v4064, %v5615
      %v5626 = vadd.f32 %v4065, %v5616
      %v5627 = vadd.f32 %v4066, %v5617
      %v5628 = vadd.f32 %v4067, %v5618
      %v5629 = vadd.f32 %v4068, %v5619
      %v5630 = vadd.f32 %v4069, %v5620
      %v5631 = vadd.f32 %v4070, %v5621
      %s5632 = scalar_lea.vmem %s12, 1
      %v5633 = vld [vmem:[%s5632] sm:$0x1]
      %s5634 = scalar_lea.vmem %s13, 1
      %v5635 = vld [vmem:[%s5634] sm:$0x1]
      %v5636 = vsel %vm1101, %v5622, 0.0
      %5637 = vadd.xlane.f32.xlu0 %v5636
      %v5638 = vpop.xlane.xlu0 %5637
      %v5639 = vsel %vm1101, %v5623, 0.0
      %5640 = vadd.xlane.f32.xlu0 %v5639
      %v5641 = vpop.xlane.xlu0 %5640
      %v5642 = vsel %vm1101, %v5624, 0.0
      %5643 = vadd.xlane.f32.xlu0 %v5642
      %v5644 = vpop.xlane.xlu0 %5643
      %v5645 = vsel %vm1101, %v5625, 0.0
      %5646 = vadd.xlane.f32.xlu0 %v5645
      %v5647 = vpop.xlane.xlu0 %5646
      %v5648 = vsel %vm1101, %v5626, 0.0
      %5649 = vadd.xlane.f32.xlu0 %v5648
      %v5650 = vpop.xlane.xlu0 %5649
      %v5651 = vsel %vm1101, %v5627, 0.0
      %5652 = vadd.xlane.f32.xlu0 %v5651
      %v5653 = vpop.xlane.xlu0 %5652
      %v5654 = vsel %vm1101, %v5628, 0.0
      %5655 = vadd.xlane.f32.xlu0 %v5654
      %v5656 = vpop.xlane.xlu0 %5655
      %v5657 = vsel %vm1101, %v5629, 0.0
      %5658 = vadd.xlane.f32.xlu0 %v5657
      %v5659 = vpop.xlane.xlu0 %5658
      %v5660 = vsel %vm1101, %v5630, 0.0
      %5661 = vadd.xlane.f32.xlu0 %v5660
      %v5662 = vpop.xlane.xlu0 %5661
      %v5663 = vsel %vm1101, %v5631, 0.0
      %5664 = vadd.xlane.f32.xlu0 %v5663
      %v5665 = vpop.xlane.xlu0 %5664
      %v5666 = vmul.f32 %v5638, %v1138
      %v5667 = vmul.f32 %v5641, %v1138
      %v5668 = vmul.f32 %v5644, %v1138
      %v5669 = vmul.f32 %v5647, %v1138
      %v5670 = vmul.f32 %v5650, %v1138
      %v5671 = vmul.f32 %v5653, %v1138
      %v5672 = vmul.f32 %v5656, %v1138
      %v5673 = vmul.f32 %v5659, %v1138
      %v5674 = vmul.f32 %v5662, %v1138
      %v5675 = vmul.f32 %v5665, %v1138
      %v5676 = vsub.f32 %v5622, %v5666
      %v5677 = vsub.f32 %v5623, %v5667
      %v5678 = vsub.f32 %v5624, %v5668
      %v5679 = vsub.f32 %v5625, %v5669
      %v5680 = vsub.f32 %v5626, %v5670
      %v5681 = vsub.f32 %v5627, %v5671
      %v5682 = vsub.f32 %v5628, %v5672
      %v5683 = vsub.f32 %v5629, %v5673
      %v5684 = vsub.f32 %v5630, %v5674
      %v5685 = vsub.f32 %v5631, %v5675
      %v5686 = vmul.f32 %v5676, %v5676
      %v5687 = vmul.f32 %v5677, %v5677
      %v5688 = vmul.f32 %v5678, %v5678
      %v5689 = vmul.f32 %v5679, %v5679
      %v5690 = vmul.f32 %v5680, %v5680
      %v5691 = vmul.f32 %v5681, %v5681
      %v5692 = vmul.f32 %v5682, %v5682
      %v5693 = vmul.f32 %v5683, %v5683
      %v5694 = vmul.f32 %v5684, %v5684
      %v5695 = vmul.f32 %v5685, %v5685
      %v5696 = vsel %vm1101, %v5686, 0.0
      %5697 = vadd.xlane.f32.xlu0 %v5696
      %v5698 = vpop.xlane.xlu0 %5697
      %v5699 = vsel %vm1101, %v5687, 0.0
      %5700 = vadd.xlane.f32.xlu0 %v5699
      %v5701 = vpop.xlane.xlu0 %5700
      %v5702 = vsel %vm1101, %v5688, 0.0
      %5703 = vadd.xlane.f32.xlu0 %v5702
      %v5704 = vpop.xlane.xlu0 %5703
      %v5705 = vsel %vm1101, %v5689, 0.0
      %5706 = vadd.xlane.f32.xlu0 %v5705
      %v5707 = vpop.xlane.xlu0 %5706
      %v5708 = vsel %vm1101, %v5690, 0.0
      %5709 = vadd.xlane.f32.xlu0 %v5708
      %v5710 = vpop.xlane.xlu0 %5709
      %v5711 = vsel %vm1101, %v5691, 0.0
      %5712 = vadd.xlane.f32.xlu0 %v5711
      %v5713 = vpop.xlane.xlu0 %5712
      %v5714 = vsel %vm1101, %v5692, 0.0
      %5715 = vadd.xlane.f32.xlu0 %v5714
      %v5716 = vpop.xlane.xlu0 %5715
      %v5717 = vsel %vm1101, %v5693, 0.0
      %5718 = vadd.xlane.f32.xlu0 %v5717
      %v5719 = vpop.xlane.xlu0 %5718
      %v5720 = vsel %vm1101, %v5694, 0.0
      %5721 = vadd.xlane.f32.xlu0 %v5720
      %v5722 = vpop.xlane.xlu0 %5721
      %v5723 = vsel %vm1101, %v5695, 0.0
      %5724 = vadd.xlane.f32.xlu0 %v5723
      %v5725 = vpop.xlane.xlu0 %5724
      %v5726 = vmul.f32 %v5698, %v1138
      %v5727 = vmul.f32 %v5701, %v1138
      %v5728 = vmul.f32 %v5704, %v1138
      %v5729 = vmul.f32 %v5707, %v1138
      %v5730 = vmul.f32 %v5710, %v1138
      %v5731 = vmul.f32 %v5713, %v1138
      %v5732 = vmul.f32 %v5716, %v1138
      %v5733 = vmul.f32 %v5719, %v1138
      %v5734 = vmul.f32 %v5722, %v1138
      %v5735 = vmul.f32 %v5725, %v1138
      %v5736 = vadd.f32 %v5726, 1e-12
      %v5737 = vadd.f32 %v5727, 1e-12
      %v5738 = vadd.f32 %v5728, 1e-12
      %v5739 = vadd.f32 %v5729, 1e-12
      %v5740 = vadd.f32 %v5730, 1e-12
      %v5741 = vadd.f32 %v5731, 1e-12
      %v5742 = vadd.f32 %v5732, 1e-12
      %v5743 = vadd.f32 %v5733, 1e-12
      %v5744 = vadd.f32 %v5734, 1e-12
      %v5745 = vadd.f32 %v5735, 1e-12
      %v5746 = vrsqrt.pop %v5736
      %v5747 = vmul.f32 %v5746, %v5736
      %v5748 = vmul.f32 %v5747, %v5746
      %v5749 = vmul.f32 0.5, %v5748
      %v5750 = vsub.f32 1.5, %v5749
      %v5751 = vmul.f32 %v5746, %v5750
      %vm5752 = vweird.f32 %v5736
      %vm5753 = vweird.f32 %v5746
      %vm5754 = vmor %vm5752, %vm5753
      %v5755 = vsel %vm5754, %v5746, %v5751
      %v5756 = vrsqrt.pop %v5737
      %v5757 = vmul.f32 %v5756, %v5737
      %v5758 = vmul.f32 %v5757, %v5756
      %v5759 = vmul.f32 0.5, %v5758
      %v5760 = vsub.f32 1.5, %v5759
      %v5761 = vmul.f32 %v5756, %v5760
      %vm5762 = vweird.f32 %v5737
      %vm5763 = vweird.f32 %v5756
      %vm5764 = vmor %vm5762, %vm5763
      %v5765 = vsel %vm5764, %v5756, %v5761
      %v5766 = vrsqrt.pop %v5738
      %v5767 = vmul.f32 %v5766, %v5738
      %v5768 = vmul.f32 %v5767, %v5766
      %v5769 = vmul.f32 0.5, %v5768
      %v5770 = vsub.f32 1.5, %v5769
      %v5771 = vmul.f32 %v5766, %v5770
      %vm5772 = vweird.f32 %v5738
      %vm5773 = vweird.f32 %v5766
      %vm5774 = vmor %vm5772, %vm5773
      %v5775 = vsel %vm5774, %v5766, %v5771
      %v5776 = vrsqrt.pop %v5739
      %v5777 = vmul.f32 %v5776, %v5739
      %v5778 = vmul.f32 %v5777, %v5776
      %v5779 = vmul.f32 0.5, %v5778
      %v5780 = vsub.f32 1.5, %v5779
      %v5781 = vmul.f32 %v5776, %v5780
      %vm5782 = vweird.f32 %v5739
      %vm5783 = vweird.f32 %v5776
      %vm5784 = vmor %vm5782, %vm5783
      %v5785 = vsel %vm5784, %v5776, %v5781
      %v5786 = vrsqrt.pop %v5740
      %v5787 = vmul.f32 %v5786, %v5740
      %v5788 = vmul.f32 %v5787, %v5786
      %v5789 = vmul.f32 0.5, %v5788
      %v5790 = vsub.f32 1.5, %v5789
      %v5791 = vmul.f32 %v5786, %v5790
      %vm5792 = vweird.f32 %v5740
      %vm5793 = vweird.f32 %v5786
      %vm5794 = vmor %vm5792, %vm5793
      %v5795 = vsel %vm5794, %v5786, %v5791
      %v5796 = vrsqrt.pop %v5741
      %v5797 = vmul.f32 %v5796, %v5741
      %v5798 = vmul.f32 %v5797, %v5796
      %v5799 = vmul.f32 0.5, %v5798
      %v5800 = vsub.f32 1.5, %v5799
      %v5801 = vmul.f32 %v5796, %v5800
      %vm5802 = vweird.f32 %v5741
      %vm5803 = vweird.f32 %v5796
      %vm5804 = vmor %vm5802, %vm5803
      %v5805 = vsel %vm5804, %v5796, %v5801
      %v5806 = vrsqrt.pop %v5742
      %v5807 = vmul.f32 %v5806, %v5742
      %v5808 = vmul.f32 %v5807, %v5806
      %v5809 = vmul.f32 0.5, %v5808
      %v5810 = vsub.f32 1.5, %v5809
      %v5811 = vmul.f32 %v5806, %v5810
      %vm5812 = vweird.f32 %v5742
      %vm5813 = vweird.f32 %v5806
      %vm5814 = vmor %vm5812, %vm5813
      %v5815 = vsel %vm5814, %v5806, %v5811
      %v5816 = vrsqrt.pop %v5743
      %v5817 = vmul.f32 %v5816, %v5743
      %v5818 = vmul.f32 %v5817, %v5816
      %v5819 = vmul.f32 0.5, %v5818
      %v5820 = vsub.f32 1.5, %v5819
      %v5821 = vmul.f32 %v5816, %v5820
      %vm5822 = vweird.f32 %v5743
      %vm5823 = vweird.f32 %v5816
      %vm5824 = vmor %vm5822, %vm5823
      %v5825 = vsel %vm5824, %v5816, %v5821
      %v5826 = vrsqrt.pop %v5744
      %v5827 = vmul.f32 %v5826, %v5744
      %v5828 = vmul.f32 %v5827, %v5826
      %v5829 = vmul.f32 0.5, %v5828
      %v5830 = vsub.f32 1.5, %v5829
      %v5831 = vmul.f32 %v5826, %v5830
      %vm5832 = vweird.f32 %v5744
      %vm5833 = vweird.f32 %v5826
      %vm5834 = vmor %vm5832, %vm5833
      %v5835 = vsel %vm5834, %v5826, %v5831
      %v5836 = vrsqrt.pop %v5745
      %v5837 = vmul.f32 %v5836, %v5745
      %v5838 = vmul.f32 %v5837, %v5836
      %v5839 = vmul.f32 0.5, %v5838
      %v5840 = vsub.f32 1.5, %v5839
      %v5841 = vmul.f32 %v5836, %v5840
      %vm5842 = vweird.f32 %v5745
      %vm5843 = vweird.f32 %v5836
      %vm5844 = vmor %vm5842, %vm5843
      %v5845 = vsel %vm5844, %v5836, %v5841
      %v5846 = vmul.f32 %v5676, %v5755
      %v5847 = vmul.f32 %v5677, %v5765
      %v5848 = vmul.f32 %v5678, %v5775
      %v5849 = vmul.f32 %v5679, %v5785
      %v5850 = vmul.f32 %v5680, %v5795
      %v5851 = vmul.f32 %v5681, %v5805
      %v5852 = vmul.f32 %v5682, %v5815
      %v5853 = vmul.f32 %v5683, %v5825
      %v5854 = vmul.f32 %v5684, %v5835
      %v5855 = vmul.f32 %v5685, %v5845
      %v5857 = vperm.slane %v5633, 0
      %v5859 = vmul.f32 %v5846, %v5857
      %v5860 = vmul.f32 %v5847, %v5857
      %v5861 = vmul.f32 %v5848, %v5857
      %v5862 = vmul.f32 %v5849, %v5857
      %v5863 = vmul.f32 %v5850, %v5857
      %v5864 = vmul.f32 %v5851, %v5857
      %v5865 = vmul.f32 %v5852, %v5857
      %v5866 = vmul.f32 %v5853, %v5857
      %v5867 = vmul.f32 %v5854, %v5857
      %v5868 = vmul.f32 %v5855, %v5857
      %v5870 = vperm.slane %v5635, 0
      %v5872 = vadd.f32 %v5859, %v5870
      %v5873 = vadd.f32 %v5860, %v5870
      %v5874 = vadd.f32 %v5861, %v5870
      %v5875 = vadd.f32 %v5862, %v5870
      %v5876 = vadd.f32 %v5863, %v5870
      %v5877 = vadd.f32 %v5864, %v5870
      %v5878 = vadd.f32 %v5865, %v5870
      %v5879 = vadd.f32 %v5866, %v5870
      %v5880 = vadd.f32 %v5867, %v5870
      %v5881 = vadd.f32 %v5868, %v5870
      %s5882 = scalar_lea.vmem %s14, 32
      %v5883 = vld [vmem:[%s5882] sm:$0xff]
      %v5884 = vld [vmem:[%s5882 + $0x8] sm:$0xff]
      %v5885 = vld [vmem:[%s5882 + $0x10] sm:$0xff]
      %v5886 = vld [vmem:[%s5882 + $0x18] sm:$0xff]
      %s5887 = scalar_lea.vmem %s15, 1
      %v5888 = vld [vmem:[%s5887] sm:$0x1]
      %v5890 = vperm.slane %v5888, 0
      %v5893 = vsel %vm1101, %v5872, 0
      %v5896 = vsel %vm1101, %v5873, 0
      %v5899 = vsel %vm1101, %v5874, 0
      %v5902 = vsel %vm1101, %v5875, 0
      %v5905 = vsel %vm1101, %v5876, 0
      %v5908 = vsel %vm1101, %v5877, 0
      %v5911 = vsel %vm1101, %v5878, 0
      %v5914 = vsel %vm1101, %v5879, 0
      %v5917 = vsel %vm1101, %v5880, 0
      %v5920 = vsel %vm1101, %v5881, 0
      %5922 = vmatpush.msra.mxu0 0.0
      %5923 = vmatpush.msra.mxu0 0.0
      %5924 = vmatpush.msra.mxu0 0.0
      %5925 = vmatpush.msra.mxu0 0.0
      %5926 = vmatpush.msra.mxu0 0.0
      %5927 = vmatpush.msra.mxu0 0.0
      %5928 = vmatpush.msra.mxu0 0.0
      %5929 = vmatpush.msra.mxu0 0.0
      %5930 = vmatpush.msra.mxu0 0.0
      %5931 = vmatpush.msra.mxu0 0.0
      %5932 = vmatpush.msra.mxu0 0.0
      %5933 = vmatpush.msra.mxu0 0.0
      %5934 = vmatpush.msra.mxu0 %v5886
      %5935 = vmatpush.msra.mxu0 %v5885
      %5936 = vmatpush.msra.mxu0 %v5884
      %5937 = vmatpush.msra.mxu0 %v5883
      %5938 = vmatmul.f32.gmra.mxu0 %v5893
      %v5939 = vpop.f32.mrf.mxu0
      %v5940 = vadd.f32 %v5890, %v5939
      %5941 = vmatmul.f32.gmra.mxu0 %v5896
      %v5942 = vpop.f32.mrf.mxu0
      %v5943 = vadd.f32 %v5890, %v5942
      %5944 = vmatmul.f32.gmra.mxu0 %v5899
      %v5945 = vpop.f32.mrf.mxu0
      %v5946 = vadd.f32 %v5890, %v5945
      %5947 = vmatmul.f32.gmra.mxu0 %v5902
      %v5948 = vpop.f32.mrf.mxu0
      %v5949 = vadd.f32 %v5890, %v5948
      %5950 = vmatmul.f32.gmra.mxu0 %v5905
      %v5951 = vpop.f32.mrf.mxu0
      %v5952 = vadd.f32 %v5890, %v5951
      %5953 = vmatmul.f32.gmra.mxu0 %v5908
      %v5954 = vpop.f32.mrf.mxu0
      %v5955 = vadd.f32 %v5890, %v5954
      %5956 = vmatmul.f32.gmra.mxu0 %v5911
      %v5957 = vpop.f32.mrf.mxu0
      %v5958 = vadd.f32 %v5890, %v5957
      %5959 = vmatmul.f32.gmra.mxu0 %v5914
      %v5960 = vpop.f32.mrf.mxu0
      %v5961 = vadd.f32 %v5890, %v5960
      %5962 = vmatmul.f32.gmra.mxu0 %v5917
      %v5963 = vpop.f32.mrf.mxu0
      %v5964 = vadd.f32 %v5890, %v5963
      %5965 = vmatmul.f32.gmra.mxu0 %v5920
      %v5966 = vpop.f32.mrf.mxu0
      %v5967 = vadd.f32 %v5890, %v5966
      %5968 = vdwg.mxu0
      %v5969 = vmul.f32 %v5940, 0.5
      %v5970 = vmul.f32 %v5943, 0.5
      %v5971 = vmul.f32 %v5946, 0.5
      %v5972 = vmul.f32 %v5949, 0.5
      %v5973 = vmul.f32 %v5952, 0.5
      %v5974 = vmul.f32 %v5955, 0.5
      %v5975 = vmul.f32 %v5958, 0.5
      %v5976 = vmul.f32 %v5961, 0.5
      %v5977 = vmul.f32 %v5964, 0.5
      %v5978 = vmul.f32 %v5967, 0.5
      %v5979 = vmul.f32 %v5940, 0.70710677
      %v5980 = vmul.f32 %v5943, 0.70710677
      %v5981 = vmul.f32 %v5946, 0.70710677
      %v5982 = vmul.f32 %v5949, 0.70710677
      %v5983 = vmul.f32 %v5952, 0.70710677
      %v5984 = vmul.f32 %v5955, 0.70710677
      %v5985 = vmul.f32 %v5958, 0.70710677
      %v5986 = vmul.f32 %v5961, 0.70710677
      %v5987 = vmul.f32 %v5964, 0.70710677
      %v5988 = vmul.f32 %v5967, 0.70710677
      %v5989 = vmul.f32 %v5979, %v5979
      %v5990 = vmin.f32 16.0, %v5989
      %v5991 = vmul.f32 %v5990, 2.1237322e-06
      %v5992 = vadd.f32 %v5991, 0.00028619796
      %v5993 = vmul.f32 %v5990, %v5992
      %v5994 = vadd.f32 %v5993, 0.0036580483
      %v5995 = vmul.f32 %v5990, %v5994
      %v5996 = vadd.f32 %v5995, 0.05243302
      %v5997 = vmul.f32 %v5990, %v5996
      %v5998 = vadd.f32 %v5997, 0.18741608
      %v5999 = vmul.f32 %v5990, %v5998
      %v6000 = vadd.f32 %v5999, 1.1283791
      %v6001 = vmul.f32 %v5979, %v6000
      %v6002 = vmul.f32 %v5990, 3.8918573e-05
      %v6003 = vadd.f32 %v6002, 0.001143296
      %v6004 = vmul.f32 %v5990, %v6003
      %v6005 = vadd.f32 %v6004, 0.014752088
      %v6006 = vmul.f32 %v5990, %v6005
      %v6007 = vadd.f32 %v6006, 0.112945676
      %v6008 = vmul.f32 %v5990, %v6007
      %v6009 = vadd.f32 %v6008, 0.4994258
      %v6010 = vmul.f32 %v5990, %v6009
      %v6011 = vadd.f32 %v6010, 1.0
      %v6012 = vrcp.pop %v6011
      %v6013 = vmul.f32 %v6011, %v6012
      %v6014 = vsub.f32 1.0, %v6013
      %v6015 = vmul.f32 %v6012, %v6014
      %v6016 = vadd.f32 %v6012, %v6015
      %vm6017 = vweird.f32 %v6011
      %vm6018 = vweird.f32 %v6012
      %vm6019 = vmor %vm6017, %vm6018
      %v6020 = vsel %vm6019, %v6012, %v6016
      %v6021 = vand.u32 2147483647, %v6011
      %vm6022 = vcmp.eq.f32.partialorder %v6021, 8.507059e+37
      %v6023 = vand.u32 %v6011, 2147483648
      %v6024 = vor.u32 1.1754944e-38, %v6023
      %v6025 = vsel %vm6022, %v6024, %v6020
      %v6026 = vmul.f32 %v6001, %v6025
      %v6027 = vmin.f32 %v6026, 1.0
      %v6028 = vmax.f32 %v6027, -1.0
      %v6029 = vmul.f32 %v5980, %v5980
      %v6030 = vmin.f32 16.0, %v6029
      %v6031 = vmul.f32 %v6030, 2.1237322e-06
      %v6032 = vadd.f32 %v6031, 0.00028619796
      %v6033 = vmul.f32 %v6030, %v6032
      %v6034 = vadd.f32 %v6033, 0.0036580483
      %v6035 = vmul.f32 %v6030, %v6034
      %v6036 = vadd.f32 %v6035, 0.05243302
      %v6037 = vmul.f32 %v6030, %v6036
      %v6038 = vadd.f32 %v6037, 0.18741608
      %v6039 = vmul.f32 %v6030, %v6038
      %v6040 = vadd.f32 %v6039, 1.1283791
      %v6041 = vmul.f32 %v5980, %v6040
      %v6042 = vmul.f32 %v6030, 3.8918573e-05
      %v6043 = vadd.f32 %v6042, 0.001143296
      %v6044 = vmul.f32 %v6030, %v6043
      %v6045 = vadd.f32 %v6044, 0.014752088
      %v6046 = vmul.f32 %v6030, %v6045
      %v6047 = vadd.f32 %v6046, 0.112945676
      %v6048 = vmul.f32 %v6030, %v6047
      %v6049 = vadd.f32 %v6048, 0.4994258
      %v6050 = vmul.f32 %v6030, %v6049
      %v6051 = vadd.f32 %v6050, 1.0
      %v6052 = vrcp.pop %v6051
      %v6053 = vmul.f32 %v6051, %v6052
      %v6054 = vsub.f32 1.0, %v6053
      %v6055 = vmul.f32 %v6052, %v6054
      %v6056 = vadd.f32 %v6052, %v6055
      %vm6057 = vweird.f32 %v6051
      %vm6058 = vweird.f32 %v6052
      %vm6059 = vmor %vm6057, %vm6058
      %v6060 = vsel %vm6059, %v6052, %v6056
      %v6061 = vand.u32 2147483647, %v6051
      %vm6062 = vcmp.eq.f32.partialorder %v6061, 8.507059e+37
      %v6063 = vand.u32 %v6051, 2147483648
      %v6064 = vor.u32 1.1754944e-38, %v6063
      %v6065 = vsel %vm6062, %v6064, %v6060
      %v6066 = vmul.f32 %v6041, %v6065
      %v6067 = vmin.f32 %v6066, 1.0
      %v6068 = vmax.f32 %v6067, -1.0
      %v6069 = vmul.f32 %v5981, %v5981
      %v6070 = vmin.f32 16.0, %v6069
      %v6071 = vmul.f32 %v6070, 2.1237322e-06
      %v6072 = vadd.f32 %v6071, 0.00028619796
      %v6073 = vmul.f32 %v6070, %v6072
      %v6074 = vadd.f32 %v6073, 0.0036580483
      %v6075 = vmul.f32 %v6070, %v6074
      %v6076 = vadd.f32 %v6075, 0.05243302
      %v6077 = vmul.f32 %v6070, %v6076
      %v6078 = vadd.f32 %v6077, 0.18741608
      %v6079 = vmul.f32 %v6070, %v6078
      %v6080 = vadd.f32 %v6079, 1.1283791
      %v6081 = vmul.f32 %v5981, %v6080
      %v6082 = vmul.f32 %v6070, 3.8918573e-05
      %v6083 = vadd.f32 %v6082, 0.001143296
      %v6084 = vmul.f32 %v6070, %v6083
      %v6085 = vadd.f32 %v6084, 0.014752088
      %v6086 = vmul.f32 %v6070, %v6085
      %v6087 = vadd.f32 %v6086, 0.112945676
      %v6088 = vmul.f32 %v6070, %v6087
      %v6089 = vadd.f32 %v6088, 0.4994258
      %v6090 = vmul.f32 %v6070, %v6089
      %v6091 = vadd.f32 %v6090, 1.0
      %v6092 = vrcp.pop %v6091
      %v6093 = vmul.f32 %v6091, %v6092
      %v6094 = vsub.f32 1.0, %v6093
      %v6095 = vmul.f32 %v6092, %v6094
      %v6096 = vadd.f32 %v6092, %v6095
      %vm6097 = vweird.f32 %v6091
      %vm6098 = vweird.f32 %v6092
      %vm6099 = vmor %vm6097, %vm6098
      %v6100 = vsel %vm6099, %v6092, %v6096
      %v6101 = vand.u32 2147483647, %v6091
      %vm6102 = vcmp.eq.f32.partialorder %v6101, 8.507059e+37
      %v6103 = vand.u32 %v6091, 2147483648
      %v6104 = vor.u32 1.1754944e-38, %v6103
      %v6105 = vsel %vm6102, %v6104, %v6100
      %v6106 = vmul.f32 %v6081, %v6105
      %v6107 = vmin.f32 %v6106, 1.0
      %v6108 = vmax.f32 %v6107, -1.0
      %v6109 = vmul.f32 %v5982, %v5982
      %v6110 = vmin.f32 16.0, %v6109
      %v6111 = vmul.f32 %v6110, 2.1237322e-06
      %v6112 = vadd.f32 %v6111, 0.00028619796
      %v6113 = vmul.f32 %v6110, %v6112
      %v6114 = vadd.f32 %v6113, 0.0036580483
      %v6115 = vmul.f32 %v6110, %v6114
      %v6116 = vadd.f32 %v6115, 0.05243302
      %v6117 = vmul.f32 %v6110, %v6116
      %v6118 = vadd.f32 %v6117, 0.18741608
      %v6119 = vmul.f32 %v6110, %v6118
      %v6120 = vadd.f32 %v6119, 1.1283791
      %v6121 = vmul.f32 %v5982, %v6120
      %v6122 = vmul.f32 %v6110, 3.8918573e-05
      %v6123 = vadd.f32 %v6122, 0.001143296
      %v6124 = vmul.f32 %v6110, %v6123
      %v6125 = vadd.f32 %v6124, 0.014752088
      %v6126 = vmul.f32 %v6110, %v6125
      %v6127 = vadd.f32 %v6126, 0.112945676
      %v6128 = vmul.f32 %v6110, %v6127
      %v6129 = vadd.f32 %v6128, 0.4994258
      %v6130 = vmul.f32 %v6110, %v6129
      %v6131 = vadd.f32 %v6130, 1.0
      %v6132 = vrcp.pop %v6131
      %v6133 = vmul.f32 %v6131, %v6132
      %v6134 = vsub.f32 1.0, %v6133
      %v6135 = vmul.f32 %v6132, %v6134
      %v6136 = vadd.f32 %v6132, %v6135
      %vm6137 = vweird.f32 %v6131
      %vm6138 = vweird.f32 %v6132
      %vm6139 = vmor %vm6137, %vm6138
      %v6140 = vsel %vm6139, %v6132, %v6136
      %v6141 = vand.u32 2147483647, %v6131
      %vm6142 = vcmp.eq.f32.partialorder %v6141, 8.507059e+37
      %v6143 = vand.u32 %v6131, 2147483648
      %v6144 = vor.u32 1.1754944e-38, %v6143
      %v6145 = vsel %vm6142, %v6144, %v6140
      %v6146 = vmul.f32 %v6121, %v6145
      %v6147 = vmin.f32 %v6146, 1.0
      %v6148 = vmax.f32 %v6147, -1.0
      %v6149 = vmul.f32 %v5983, %v5983
      %v6150 = vmin.f32 16.0, %v6149
      %v6151 = vmul.f32 %v6150, 2.1237322e-06
      %v6152 = vadd.f32 %v6151, 0.00028619796
      %v6153 = vmul.f32 %v6150, %v6152
      %v6154 = vadd.f32 %v6153, 0.0036580483
      %v6155 = vmul.f32 %v6150, %v6154
      %v6156 = vadd.f32 %v6155, 0.05243302
      %v6157 = vmul.f32 %v6150, %v6156
      %v6158 = vadd.f32 %v6157, 0.18741608
      %v6159 = vmul.f32 %v6150, %v6158
      %v6160 = vadd.f32 %v6159, 1.1283791
      %v6161 = vmul.f32 %v5983, %v6160
      %v6162 = vmul.f32 %v6150, 3.8918573e-05
      %v6163 = vadd.f32 %v6162, 0.001143296
      %v6164 = vmul.f32 %v6150, %v6163
      %v6165 = vadd.f32 %v6164, 0.014752088
      %v6166 = vmul.f32 %v6150, %v6165
      %v6167 = vadd.f32 %v6166, 0.112945676
      %v6168 = vmul.f32 %v6150, %v6167
      %v6169 = vadd.f32 %v6168, 0.4994258
      %v6170 = vmul.f32 %v6150, %v6169
      %v6171 = vadd.f32 %v6170, 1.0
      %v6172 = vrcp.pop %v6171
      %v6173 = vmul.f32 %v6171, %v6172
      %v6174 = vsub.f32 1.0, %v6173
      %v6175 = vmul.f32 %v6172, %v6174
      %v6176 = vadd.f32 %v6172, %v6175
      %vm6177 = vweird.f32 %v6171
      %vm6178 = vweird.f32 %v6172
      %vm6179 = vmor %vm6177, %vm6178
      %v6180 = vsel %vm6179, %v6172, %v6176
      %v6181 = vand.u32 2147483647, %v6171
      %vm6182 = vcmp.eq.f32.partialorder %v6181, 8.507059e+37
      %v6183 = vand.u32 %v6171, 2147483648
      %v6184 = vor.u32 1.1754944e-38, %v6183
      %v6185 = vsel %vm6182, %v6184, %v6180
      %v6186 = vmul.f32 %v6161, %v6185
      %v6187 = vmin.f32 %v6186, 1.0
      %v6188 = vmax.f32 %v6187, -1.0
      %v6189 = vmul.f32 %v5984, %v5984
      %v6190 = vmin.f32 16.0, %v6189
      %v6191 = vmul.f32 %v6190, 2.1237322e-06
      %v6192 = vadd.f32 %v6191, 0.00028619796
      %v6193 = vmul.f32 %v6190, %v6192
      %v6194 = vadd.f32 %v6193, 0.0036580483
      %v6195 = vmul.f32 %v6190, %v6194
      %v6196 = vadd.f32 %v6195, 0.05243302
      %v6197 = vmul.f32 %v6190, %v6196
      %v6198 = vadd.f32 %v6197, 0.18741608
      %v6199 = vmul.f32 %v6190, %v6198
      %v6200 = vadd.f32 %v6199, 1.1283791
      %v6201 = vmul.f32 %v5984, %v6200
      %v6202 = vmul.f32 %v6190, 3.8918573e-05
      %v6203 = vadd.f32 %v6202, 0.001143296
      %v6204 = vmul.f32 %v6190, %v6203
      %v6205 = vadd.f32 %v6204, 0.014752088
      %v6206 = vmul.f32 %v6190, %v6205
      %v6207 = vadd.f32 %v6206, 0.112945676
      %v6208 = vmul.f32 %v6190, %v6207
      %v6209 = vadd.f32 %v6208, 0.4994258
      %v6210 = vmul.f32 %v6190, %v6209
      %v6211 = vadd.f32 %v6210, 1.0
      %v6212 = vrcp.pop %v6211
      %v6213 = vmul.f32 %v6211, %v6212
      %v6214 = vsub.f32 1.0, %v6213
      %v6215 = vmul.f32 %v6212, %v6214
      %v6216 = vadd.f32 %v6212, %v6215
      %vm6217 = vweird.f32 %v6211
      %vm6218 = vweird.f32 %v6212
      %vm6219 = vmor %vm6217, %vm6218
      %v6220 = vsel %vm6219, %v6212, %v6216
      %v6221 = vand.u32 2147483647, %v6211
      %vm6222 = vcmp.eq.f32.partialorder %v6221, 8.507059e+37
      %v6223 = vand.u32 %v6211, 2147483648
      %v6224 = vor.u32 1.1754944e-38, %v6223
      %v6225 = vsel %vm6222, %v6224, %v6220
      %v6226 = vmul.f32 %v6201, %v6225
      %v6227 = vmin.f32 %v6226, 1.0
      %v6228 = vmax.f32 %v6227, -1.0
      %v6229 = vmul.f32 %v5985, %v5985
      %v6230 = vmin.f32 16.0, %v6229
      %v6231 = vmul.f32 %v6230, 2.1237322e-06
      %v6232 = vadd.f32 %v6231, 0.00028619796
      %v6233 = vmul.f32 %v6230, %v6232
      %v6234 = vadd.f32 %v6233, 0.0036580483
      %v6235 = vmul.f32 %v6230, %v6234
      %v6236 = vadd.f32 %v6235, 0.05243302
      %v6237 = vmul.f32 %v6230, %v6236
      %v6238 = vadd.f32 %v6237, 0.18741608
      %v6239 = vmul.f32 %v6230, %v6238
      %v6240 = vadd.f32 %v6239, 1.1283791
      %v6241 = vmul.f32 %v5985, %v6240
      %v6242 = vmul.f32 %v6230, 3.8918573e-05
      %v6243 = vadd.f32 %v6242, 0.001143296
      %v6244 = vmul.f32 %v6230, %v6243
      %v6245 = vadd.f32 %v6244, 0.014752088
      %v6246 = vmul.f32 %v6230, %v6245
      %v6247 = vadd.f32 %v6246, 0.112945676
      %v6248 = vmul.f32 %v6230, %v6247
      %v6249 = vadd.f32 %v6248, 0.4994258
      %v6250 = vmul.f32 %v6230, %v6249
      %v6251 = vadd.f32 %v6250, 1.0
      %v6252 = vrcp.pop %v6251
      %v6253 = vmul.f32 %v6251, %v6252
      %v6254 = vsub.f32 1.0, %v6253
      %v6255 = vmul.f32 %v6252, %v6254
      %v6256 = vadd.f32 %v6252, %v6255
      %vm6257 = vweird.f32 %v6251
      %vm6258 = vweird.f32 %v6252
      %vm6259 = vmor %vm6257, %vm6258
      %v6260 = vsel %vm6259, %v6252, %v6256
      %v6261 = vand.u32 2147483647, %v6251
      %vm6262 = vcmp.eq.f32.partialorder %v6261, 8.507059e+37
      %v6263 = vand.u32 %v6251, 2147483648
      %v6264 = vor.u32 1.1754944e-38, %v6263
      %v6265 = vsel %vm6262, %v6264, %v6260
      %v6266 = vmul.f32 %v6241, %v6265
      %v6267 = vmin.f32 %v6266, 1.0
      %v6268 = vmax.f32 %v6267, -1.0
      %v6269 = vmul.f32 %v5986, %v5986
      %v6270 = vmin.f32 16.0, %v6269
      %v6271 = vmul.f32 %v6270, 2.1237322e-06
      %v6272 = vadd.f32 %v6271, 0.00028619796
      %v6273 = vmul.f32 %v6270, %v6272
      %v6274 = vadd.f32 %v6273, 0.0036580483
      %v6275 = vmul.f32 %v6270, %v6274
      %v6276 = vadd.f32 %v6275, 0.05243302
      %v6277 = vmul.f32 %v6270, %v6276
      %v6278 = vadd.f32 %v6277, 0.18741608
      %v6279 = vmul.f32 %v6270, %v6278
      %v6280 = vadd.f32 %v6279, 1.1283791
      %v6281 = vmul.f32 %v5986, %v6280
      %v6282 = vmul.f32 %v6270, 3.8918573e-05
      %v6283 = vadd.f32 %v6282, 0.001143296
      %v6284 = vmul.f32 %v6270, %v6283
      %v6285 = vadd.f32 %v6284, 0.014752088
      %v6286 = vmul.f32 %v6270, %v6285
      %v6287 = vadd.f32 %v6286, 0.112945676
      %v6288 = vmul.f32 %v6270, %v6287
      %v6289 = vadd.f32 %v6288, 0.4994258
      %v6290 = vmul.f32 %v6270, %v6289
      %v6291 = vadd.f32 %v6290, 1.0
      %v6292 = vrcp.pop %v6291
      %v6293 = vmul.f32 %v6291, %v6292
      %v6294 = vsub.f32 1.0, %v6293
      %v6295 = vmul.f32 %v6292, %v6294
      %v6296 = vadd.f32 %v6292, %v6295
      %vm6297 = vweird.f32 %v6291
      %vm6298 = vweird.f32 %v6292
      %vm6299 = vmor %vm6297, %vm6298
      %v6300 = vsel %vm6299, %v6292, %v6296
      %v6301 = vand.u32 2147483647, %v6291
      %vm6302 = vcmp.eq.f32.partialorder %v6301, 8.507059e+37
      %v6303 = vand.u32 %v6291, 2147483648
      %v6304 = vor.u32 1.1754944e-38, %v6303
      %v6305 = vsel %vm6302, %v6304, %v6300
      %v6306 = vmul.f32 %v6281, %v6305
      %v6307 = vmin.f32 %v6306, 1.0
      %v6308 = vmax.f32 %v6307, -1.0
      %v6309 = vmul.f32 %v5987, %v5987
      %v6310 = vmin.f32 16.0, %v6309
      %v6311 = vmul.f32 %v6310, 2.1237322e-06
      %v6312 = vadd.f32 %v6311, 0.00028619796
      %v6313 = vmul.f32 %v6310, %v6312
      %v6314 = vadd.f32 %v6313, 0.0036580483
      %v6315 = vmul.f32 %v6310, %v6314
      %v6316 = vadd.f32 %v6315, 0.05243302
      %v6317 = vmul.f32 %v6310, %v6316
      %v6318 = vadd.f32 %v6317, 0.18741608
      %v6319 = vmul.f32 %v6310, %v6318
      %v6320 = vadd.f32 %v6319, 1.1283791
      %v6321 = vmul.f32 %v5987, %v6320
      %v6322 = vmul.f32 %v6310, 3.8918573e-05
      %v6323 = vadd.f32 %v6322, 0.001143296
      %v6324 = vmul.f32 %v6310, %v6323
      %v6325 = vadd.f32 %v6324, 0.014752088
      %v6326 = vmul.f32 %v6310, %v6325
      %v6327 = vadd.f32 %v6326, 0.112945676
      %v6328 = vmul.f32 %v6310, %v6327
      %v6329 = vadd.f32 %v6328, 0.4994258
      %v6330 = vmul.f32 %v6310, %v6329
      %v6331 = vadd.f32 %v6330, 1.0
      %v6332 = vrcp.pop %v6331
      %v6333 = vmul.f32 %v6331, %v6332
      %v6334 = vsub.f32 1.0, %v6333
      %v6335 = vmul.f32 %v6332, %v6334
      %v6336 = vadd.f32 %v6332, %v6335
      %vm6337 = vweird.f32 %v6331
      %vm6338 = vweird.f32 %v6332
      %vm6339 = vmor %vm6337, %vm6338
      %v6340 = vsel %vm6339, %v6332, %v6336
      %v6341 = vand.u32 2147483647, %v6331
      %vm6342 = vcmp.eq.f32.partialorder %v6341, 8.507059e+37
      %v6343 = vand.u32 %v6331, 2147483648
      %v6344 = vor.u32 1.1754944e-38, %v6343
      %v6345 = vsel %vm6342, %v6344, %v6340
      %v6346 = vmul.f32 %v6321, %v6345
      %v6347 = vmin.f32 %v6346, 1.0
      %v6348 = vmax.f32 %v6347, -1.0
      %v6349 = vmul.f32 %v5988, %v5988
      %v6350 = vmin.f32 16.0, %v6349
      %v6351 = vmul.f32 %v6350, 2.1237322e-06
      %v6352 = vadd.f32 %v6351, 0.00028619796
      %v6353 = vmul.f32 %v6350, %v6352
      %v6354 = vadd.f32 %v6353, 0.0036580483
      %v6355 = vmul.f32 %v6350, %v6354
      %v6356 = vadd.f32 %v6355, 0.05243302
      %v6357 = vmul.f32 %v6350, %v6356
      %v6358 = vadd.f32 %v6357, 0.18741608
      %v6359 = vmul.f32 %v6350, %v6358
      %v6360 = vadd.f32 %v6359, 1.1283791
      %v6361 = vmul.f32 %v5988, %v6360
      %v6362 = vmul.f32 %v6350, 3.8918573e-05
      %v6363 = vadd.f32 %v6362, 0.001143296
      %v6364 = vmul.f32 %v6350, %v6363
      %v6365 = vadd.f32 %v6364, 0.014752088
      %v6366 = vmul.f32 %v6350, %v6365
      %v6367 = vadd.f32 %v6366, 0.112945676
      %v6368 = vmul.f32 %v6350, %v6367
      %v6369 = vadd.f32 %v6368, 0.4994258
      %v6370 = vmul.f32 %v6350, %v6369
      %v6371 = vadd.f32 %v6370, 1.0
      %v6372 = vrcp.pop %v6371
      %v6373 = vmul.f32 %v6371, %v6372
      %v6374 = vsub.f32 1.0, %v6373
      %v6375 = vmul.f32 %v6372, %v6374
      %v6376 = vadd.f32 %v6372, %v6375
      %vm6377 = vweird.f32 %v6371
      %vm6378 = vweird.f32 %v6372
      %vm6379 = vmor %vm6377, %vm6378
      %v6380 = vsel %vm6379, %v6372, %v6376
      %v6381 = vand.u32 2147483647, %v6371
      %vm6382 = vcmp.eq.f32.partialorder %v6381, 8.507059e+37
      %v6383 = vand.u32 %v6371, 2147483648
      %v6384 = vor.u32 1.1754944e-38, %v6383
      %v6385 = vsel %vm6382, %v6384, %v6380
      %v6386 = vmul.f32 %v6361, %v6385
      %v6387 = vmin.f32 %v6386, 1.0
      %v6388 = vmax.f32 %v6387, -1.0
      %v6389 = vadd.f32 %v6028, 1.0
      %v6390 = vadd.f32 %v6068, 1.0
      %v6391 = vadd.f32 %v6108, 1.0
      %v6392 = vadd.f32 %v6148, 1.0
      %v6393 = vadd.f32 %v6188, 1.0
      %v6394 = vadd.f32 %v6228, 1.0
      %v6395 = vadd.f32 %v6268, 1.0
      %v6396 = vadd.f32 %v6308, 1.0
      %v6397 = vadd.f32 %v6348, 1.0
      %v6398 = vadd.f32 %v6388, 1.0
      %v6399 = vmul.f32 %v5969, %v6389
      %v6400 = vmul.f32 %v5970, %v6390
      %v6401 = vmul.f32 %v5971, %v6391
      %v6402 = vmul.f32 %v5972, %v6392
      %v6403 = vmul.f32 %v5973, %v6393
      %v6404 = vmul.f32 %v5974, %v6394
      %v6405 = vmul.f32 %v5975, %v6395
      %v6406 = vmul.f32 %v5976, %v6396
      %v6407 = vmul.f32 %v5977, %v6397
      %v6408 = vmul.f32 %v5978, %v6398
      %s6409 = scalar_lea.vmem %s16, 64
      %v6410 = vld [vmem:[%s6409] sm:$0xff]
      %v6411 = vld [vmem:[%s6409 + $0x8] sm:$0xff]
      %v6412 = vld [vmem:[%s6409 + $0x10] sm:$0xff]
      %v6413 = vld [vmem:[%s6409 + $0x18] sm:$0xff]
      %v6414 = vld [vmem:[%s6409 + $0x20] sm:$0xff]
      %v6415 = vld [vmem:[%s6409 + $0x28] sm:$0xff]
      %v6416 = vld [vmem:[%s6409 + $0x30] sm:$0xff]
      %v6417 = vld [vmem:[%s6409 + $0x38] sm:$0xff]
      %s6418 = scalar_lea.vmem %s17, 1
      %v6419 = vld [vmem:[%s6418] sm:$0x1]
      %v6421 = vperm.slane %v6419, 0
      %v6424 = vsel %vm3735, %v6399, 0
      %v6427 = vsel %vm3735, %v6400, 0
      %v6430 = vsel %vm3735, %v6401, 0
      %v6433 = vsel %vm3735, %v6402, 0
      %v6436 = vsel %vm3735, %v6403, 0
      %v6439 = vsel %vm3735, %v6404, 0
      %v6442 = vsel %vm3735, %v6405, 0
      %v6445 = vsel %vm3735, %v6406, 0
      %v6448 = vsel %vm3735, %v6407, 0
      %v6451 = vsel %vm3735, %v6408, 0
      %6453 = vmatpush.msra.mxu0 0.0
      %6454 = vmatpush.msra.mxu0 0.0
      %6455 = vmatpush.msra.mxu0 0.0
      %6456 = vmatpush.msra.mxu0 0.0
      %6457 = vmatpush.msra.mxu0 0.0
      %6458 = vmatpush.msra.mxu0 0.0
      %6459 = vmatpush.msra.mxu0 0.0
      %6460 = vmatpush.msra.mxu0 0.0
      %6461 = vmatpush.msra.mxu0 %v6417
      %6462 = vmatpush.msra.mxu0 %v6416
      %6463 = vmatpush.msra.mxu0 %v6415
      %6464 = vmatpush.msra.mxu0 %v6414
      %6465 = vmatpush.msra.mxu0 %v6413
      %6466 = vmatpush.msra.mxu0 %v6412
      %6467 = vmatpush.msra.mxu0 %v6411
      %6468 = vmatpush.msra.mxu0 %v6410
      %6469 = vmatmul.f32.gmra.mxu0 %v6424
      %v6470 = vpop.f32.mrf.mxu0
      %v6471 = vadd.f32 %v6421, %v6470
      %6472 = vmatmul.f32.gmra.mxu0 %v6427
      %v6473 = vpop.f32.mrf.mxu0
      %v6474 = vadd.f32 %v6421, %v6473
      %6475 = vmatmul.f32.gmra.mxu0 %v6430
      %v6476 = vpop.f32.mrf.mxu0
      %v6477 = vadd.f32 %v6421, %v6476
      %6478 = vmatmul.f32.gmra.mxu0 %v6433
      %v6479 = vpop.f32.mrf.mxu0
      %v6480 = vadd.f32 %v6421, %v6479
      %6481 = vmatmul.f32.gmra.mxu0 %v6436
      %v6482 = vpop.f32.mrf.mxu0
      %v6483 = vadd.f32 %v6421, %v6482
      %6484 = vmatmul.f32.gmra.mxu0 %v6439
      %v6485 = vpop.f32.mrf.mxu0
      %v6486 = vadd.f32 %v6421, %v6485
      %6487 = vmatmul.f32.gmra.mxu0 %v6442
      %v6488 = vpop.f32.mrf.mxu0
      %v6489 = vadd.f32 %v6421, %v6488
      %6490 = vmatmul.f32.gmra.mxu0 %v6445
      %v6491 = vpop.f32.mrf.mxu0
      %v6492 = vadd.f32 %v6421, %v6491
      %6493 = vmatmul.f32.gmra.mxu0 %v6448
      %v6494 = vpop.f32.mrf.mxu0
      %v6495 = vadd.f32 %v6421, %v6494
      %6496 = vmatmul.f32.gmra.mxu0 %v6451
      %v6497 = vpop.f32.mrf.mxu0
      %v6498 = vadd.f32 %v6421, %v6497
      %6499 = vdwg.mxu0
      %v6500 = vadd.f32 %v5872, %v6471
      %v6501 = vadd.f32 %v5873, %v6474
      %v6502 = vadd.f32 %v5874, %v6477
      %v6503 = vadd.f32 %v5875, %v6480
      %v6504 = vadd.f32 %v5876, %v6483
      %v6505 = vadd.f32 %v5877, %v6486
      %v6506 = vadd.f32 %v5878, %v6489
      %v6507 = vadd.f32 %v5879, %v6492
      %v6508 = vadd.f32 %v5880, %v6495
      %v6509 = vadd.f32 %v5881, %v6498
      %s6510 = scalar_lea.vmem %s18, 1
      %v6511 = vld [vmem:[%s6510] sm:$0x1]
      %s6512 = scalar_lea.vmem %s19, 1
      %v6513 = vld [vmem:[%s6512] sm:$0x1]
      %v6514 = vsel %vm1101, %v6500, 0.0
      %6515 = vadd.xlane.f32.xlu0 %v6514
      %v6516 = vpop.xlane.xlu0 %6515
      %v6517 = vsel %vm1101, %v6501, 0.0
      %6518 = vadd.xlane.f32.xlu0 %v6517
      %v6519 = vpop.xlane.xlu0 %6518
      %v6520 = vsel %vm1101, %v6502, 0.0
      %6521 = vadd.xlane.f32.xlu0 %v6520
      %v6522 = vpop.xlane.xlu0 %6521
      %v6523 = vsel %vm1101, %v6503, 0.0
      %6524 = vadd.xlane.f32.xlu0 %v6523
      %v6525 = vpop.xlane.xlu0 %6524
      %v6526 = vsel %vm1101, %v6504, 0.0
      %6527 = vadd.xlane.f32.xlu0 %v6526
      %v6528 = vpop.xlane.xlu0 %6527
      %v6529 = vsel %vm1101, %v6505, 0.0
      %6530 = vadd.xlane.f32.xlu0 %v6529
      %v6531 = vpop.xlane.xlu0 %6530
      %v6532 = vsel %vm1101, %v6506, 0.0
      %6533 = vadd.xlane.f32.xlu0 %v6532
      %v6534 = vpop.xlane.xlu0 %6533
      %v6535 = vsel %vm1101, %v6507, 0.0
      %6536 = vadd.xlane.f32.xlu0 %v6535
      %v6537 = vpop.xlane.xlu0 %6536
      %v6538 = vsel %vm1101, %v6508, 0.0
      %6539 = vadd.xlane.f32.xlu0 %v6538
      %v6540 = vpop.xlane.xlu0 %6539
      %v6541 = vsel %vm1101, %v6509, 0.0
      %6542 = vadd.xlane.f32.xlu0 %v6541
      %v6543 = vpop.xlane.xlu0 %6542
      %v6544 = vmul.f32 %v6516, %v1138
      %v6545 = vmul.f32 %v6519, %v1138
      %v6546 = vmul.f32 %v6522, %v1138
      %v6547 = vmul.f32 %v6525, %v1138
      %v6548 = vmul.f32 %v6528, %v1138
      %v6549 = vmul.f32 %v6531, %v1138
      %v6550 = vmul.f32 %v6534, %v1138
      %v6551 = vmul.f32 %v6537, %v1138
      %v6552 = vmul.f32 %v6540, %v1138
      %v6553 = vmul.f32 %v6543, %v1138
      %v6554 = vsub.f32 %v6500, %v6544
      %v6555 = vsub.f32 %v6501, %v6545
      %v6556 = vsub.f32 %v6502, %v6546
      %v6557 = vsub.f32 %v6503, %v6547
      %v6558 = vsub.f32 %v6504, %v6548
      %v6559 = vsub.f32 %v6505, %v6549
      %v6560 = vsub.f32 %v6506, %v6550
      %v6561 = vsub.f32 %v6507, %v6551
      %v6562 = vsub.f32 %v6508, %v6552
      %v6563 = vsub.f32 %v6509, %v6553
      %v6564 = vmul.f32 %v6554, %v6554
      %v6565 = vmul.f32 %v6555, %v6555
      %v6566 = vmul.f32 %v6556, %v6556
      %v6567 = vmul.f32 %v6557, %v6557
      %v6568 = vmul.f32 %v6558, %v6558
      %v6569 = vmul.f32 %v6559, %v6559
      %v6570 = vmul.f32 %v6560, %v6560
      %v6571 = vmul.f32 %v6561, %v6561
      %v6572 = vmul.f32 %v6562, %v6562
      %v6573 = vmul.f32 %v6563, %v6563
      %v6574 = vsel %vm1101, %v6564, 0.0
      %6575 = vadd.xlane.f32.xlu0 %v6574
      %v6576 = vpop.xlane.xlu0 %6575
      %v6577 = vsel %vm1101, %v6565, 0.0
      %6578 = vadd.xlane.f32.xlu0 %v6577
      %v6579 = vpop.xlane.xlu0 %6578
      %v6580 = vsel %vm1101, %v6566, 0.0
      %6581 = vadd.xlane.f32.xlu0 %v6580
      %v6582 = vpop.xlane.xlu0 %6581
      %v6583 = vsel %vm1101, %v6567, 0.0
      %6584 = vadd.xlane.f32.xlu0 %v6583
      %v6585 = vpop.xlane.xlu0 %6584
      %v6586 = vsel %vm1101, %v6568, 0.0
      %6587 = vadd.xlane.f32.xlu0 %v6586
      %v6588 = vpop.xlane.xlu0 %6587
      %v6589 = vsel %vm1101, %v6569, 0.0
      %6590 = vadd.xlane.f32.xlu0 %v6589
      %v6591 = vpop.xlane.xlu0 %6590
      %v6592 = vsel %vm1101, %v6570, 0.0
      %6593 = vadd.xlane.f32.xlu0 %v6592
      %v6594 = vpop.xlane.xlu0 %6593
      %v6595 = vsel %vm1101, %v6571, 0.0
      %6596 = vadd.xlane.f32.xlu0 %v6595
      %v6597 = vpop.xlane.xlu0 %6596
      %v6598 = vsel %vm1101, %v6572, 0.0
      %6599 = vadd.xlane.f32.xlu0 %v6598
      %v6600 = vpop.xlane.xlu0 %6599
      %v6601 = vsel %vm1101, %v6573, 0.0
      %6602 = vadd.xlane.f32.xlu0 %v6601
      %v6603 = vpop.xlane.xlu0 %6602
      %v6604 = vmul.f32 %v6576, %v1138
      %v6605 = vmul.f32 %v6579, %v1138
      %v6606 = vmul.f32 %v6582, %v1138
      %v6607 = vmul.f32 %v6585, %v1138
      %v6608 = vmul.f32 %v6588, %v1138
      %v6609 = vmul.f32 %v6591, %v1138
      %v6610 = vmul.f32 %v6594, %v1138
      %v6611 = vmul.f32 %v6597, %v1138
      %v6612 = vmul.f32 %v6600, %v1138
      %v6613 = vmul.f32 %v6603, %v1138
      %v6614 = vadd.f32 %v6604, 1e-12
      %v6615 = vadd.f32 %v6605, 1e-12
      %v6616 = vadd.f32 %v6606, 1e-12
      %v6617 = vadd.f32 %v6607, 1e-12
      %v6618 = vadd.f32 %v6608, 1e-12
      %v6619 = vadd.f32 %v6609, 1e-12
      %v6620 = vadd.f32 %v6610, 1e-12
      %v6621 = vadd.f32 %v6611, 1e-12
      %v6622 = vadd.f32 %v6612, 1e-12
      %v6623 = vadd.f32 %v6613, 1e-12
      %v6624 = vrsqrt.pop %v6614
      %v6625 = vmul.f32 %v6624, %v6614
      %v6626 = vmul.f32 %v6625, %v6624
      %v6627 = vmul.f32 0.5, %v6626
      %v6628 = vsub.f32 1.5, %v6627
      %v6629 = vmul.f32 %v6624, %v6628
      %vm6630 = vweird.f32 %v6614
      %vm6631 = vweird.f32 %v6624
      %vm6632 = vmor %vm6630, %vm6631
      %v6633 = vsel %vm6632, %v6624, %v6629
      %v6634 = vrsqrt.pop %v6615
      %v6635 = vmul.f32 %v6634, %v6615
      %v6636 = vmul.f32 %v6635, %v6634
      %v6637 = vmul.f32 0.5, %v6636
      %v6638 = vsub.f32 1.5, %v6637
      %v6639 = vmul.f32 %v6634, %v6638
      %vm6640 = vweird.f32 %v6615
      %vm6641 = vweird.f32 %v6634
      %vm6642 = vmor %vm6640, %vm6641
      %v6643 = vsel %vm6642, %v6634, %v6639
      %v6644 = vrsqrt.pop %v6616
      %v6645 = vmul.f32 %v6644, %v6616
      %v6646 = vmul.f32 %v6645, %v6644
      %v6647 = vmul.f32 0.5, %v6646
      %v6648 = vsub.f32 1.5, %v6647
      %v6649 = vmul.f32 %v6644, %v6648
      %vm6650 = vweird.f32 %v6616
      %vm6651 = vweird.f32 %v6644
      %vm6652 = vmor %vm6650, %vm6651
      %v6653 = vsel %vm6652, %v6644, %v6649
      %v6654 = vrsqrt.pop %v6617
      %v6655 = vmul.f32 %v6654, %v6617
      %v6656 = vmul.f32 %v6655, %v6654
      %v6657 = vmul.f32 0.5, %v6656
      %v6658 = vsub.f32 1.5, %v6657
      %v6659 = vmul.f32 %v6654, %v6658
      %vm6660 = vweird.f32 %v6617
      %vm6661 = vweird.f32 %v6654
      %vm6662 = vmor %vm6660, %vm6661
      %v6663 = vsel %vm6662, %v6654, %v6659
      %v6664 = vrsqrt.pop %v6618
      %v6665 = vmul.f32 %v6664, %v6618
      %v6666 = vmul.f32 %v6665, %v6664
      %v6667 = vmul.f32 0.5, %v6666
      %v6668 = vsub.f32 1.5, %v6667
      %v6669 = vmul.f32 %v6664, %v6668
      %vm6670 = vweird.f32 %v6618
      %vm6671 = vweird.f32 %v6664
      %vm6672 = vmor %vm6670, %vm6671
      %v6673 = vsel %vm6672, %v6664, %v6669
      %v6674 = vrsqrt.pop %v6619
      %v6675 = vmul.f32 %v6674, %v6619
      %v6676 = vmul.f32 %v6675, %v6674
      %v6677 = vmul.f32 0.5, %v6676
      %v6678 = vsub.f32 1.5, %v6677
      %v6679 = vmul.f32 %v6674, %v6678
      %vm6680 = vweird.f32 %v6619
      %vm6681 = vweird.f32 %v6674
      %vm6682 = vmor %vm6680, %vm6681
      %v6683 = vsel %vm6682, %v6674, %v6679
      %v6684 = vrsqrt.pop %v6620
      %v6685 = vmul.f32 %v6684, %v6620
      %v6686 = vmul.f32 %v6685, %v6684
      %v6687 = vmul.f32 0.5, %v6686
      %v6688 = vsub.f32 1.5, %v6687
      %v6689 = vmul.f32 %v6684, %v6688
      %vm6690 = vweird.f32 %v6620
      %vm6691 = vweird.f32 %v6684
      %vm6692 = vmor %vm6690, %vm6691
      %v6693 = vsel %vm6692, %v6684, %v6689
      %v6694 = vrsqrt.pop %v6621
      %v6695 = vmul.f32 %v6694, %v6621
      %v6696 = vmul.f32 %v6695, %v6694
      %v6697 = vmul.f32 0.5, %v6696
      %v6698 = vsub.f32 1.5, %v6697
      %v6699 = vmul.f32 %v6694, %v6698
      %vm6700 = vweird.f32 %v6621
      %vm6701 = vweird.f32 %v6694
      %vm6702 = vmor %vm6700, %vm6701
      %v6703 = vsel %vm6702, %v6694, %v6699
      %v6704 = vrsqrt.pop %v6622
      %v6705 = vmul.f32 %v6704, %v6622
      %v6706 = vmul.f32 %v6705, %v6704
      %v6707 = vmul.f32 0.5, %v6706
      %v6708 = vsub.f32 1.5, %v6707
      %v6709 = vmul.f32 %v6704, %v6708
      %vm6710 = vweird.f32 %v6622
      %vm6711 = vweird.f32 %v6704
      %vm6712 = vmor %vm6710, %vm6711
      %v6713 = vsel %vm6712, %v6704, %v6709
      %v6714 = vrsqrt.pop %v6623
      %v6715 = vmul.f32 %v6714, %v6623
      %v6716 = vmul.f32 %v6715, %v6714
      %v6717 = vmul.f32 0.5, %v6716
      %v6718 = vsub.f32 1.5, %v6717
      %v6719 = vmul.f32 %v6714, %v6718
      %vm6720 = vweird.f32 %v6623
      %vm6721 = vweird.f32 %v6714
      %vm6722 = vmor %vm6720, %vm6721
      %v6723 = vsel %vm6722, %v6714, %v6719
      %v6724 = vmul.f32 %v6554, %v6633
      %v6725 = vmul.f32 %v6555, %v6643
      %v6726 = vmul.f32 %v6556, %v6653
      %v6727 = vmul.f32 %v6557, %v6663
      %v6728 = vmul.f32 %v6558, %v6673
      %v6729 = vmul.f32 %v6559, %v6683
      %v6730 = vmul.f32 %v6560, %v6693
      %v6731 = vmul.f32 %v6561, %v6703
      %v6732 = vmul.f32 %v6562, %v6713
      %v6733 = vmul.f32 %v6563, %v6723
      %v6735 = vperm.slane %v6511, 0
      %v6737 = vmul.f32 %v6724, %v6735
      %v6738 = vmul.f32 %v6725, %v6735
      %v6739 = vmul.f32 %v6726, %v6735
      %v6740 = vmul.f32 %v6727, %v6735
      %v6741 = vmul.f32 %v6728, %v6735
      %v6742 = vmul.f32 %v6729, %v6735
      %v6743 = vmul.f32 %v6730, %v6735
      %v6744 = vmul.f32 %v6731, %v6735
      %v6745 = vmul.f32 %v6732, %v6735
      %v6746 = vmul.f32 %v6733, %v6735
      %v6748 = vperm.slane %v6513, 0
      %v6750 = vadd.f32 %v6737, %v6748
      %v6751 = vadd.f32 %v6738, %v6748
      %v6752 = vadd.f32 %v6739, %v6748
      %v6753 = vadd.f32 %v6740, %v6748
      %v6754 = vadd.f32 %v6741, %v6748
      %v6755 = vadd.f32 %v6742, %v6748
      %v6756 = vadd.f32 %v6743, %v6748
      %v6757 = vadd.f32 %v6744, %v6748
      %v6758 = vadd.f32 %v6745, %v6748
      %v6759 = vadd.f32 %v6746, %v6748
      %v6760 = vlaneseq
      %v6761 = vshrl.u32 %v6760, 7
      %v6762 = vadd.s32 %v6761, 8
      %v6763 = vmul.u32 %v6761, 8
      %v6764 = vmul.u32 %v6762, 8
      %vm6765 = vcmp.eq.s32.totalorder %v865, %v6763
      %vm6766 = vcmp.eq.s32.totalorder %v865, %v6764
      %v6767 = vsel %vm6765, 1.0, 0.0
      %v6768 = vsel %vm6766, 1.0, 0.0
      %vm6769 = vcmask 654336
      %v6771 = vsel %vm6769, %v6767, 0
      %v6774 = vsel %vm6769, %v6768, 0
      %6776 = vmatpush.msra.mxu0 0.0
      %6777 = vmatpush.msra.mxu0 0.0
      %6778 = vmatpush.msra.mxu0 0.0
      %6779 = vmatpush.msra.mxu0 0.0
      %6780 = vmatpush.msra.mxu0 0.0
      %6781 = vmatpush.msra.mxu0 0.0
      %6782 = vmatpush.msra.mxu0 %v6759
      %6783 = vmatpush.msra.mxu0 %v6758
      %6784 = vmatpush.msra.mxu0 %v6757
      %6785 = vmatpush.msra.mxu0 %v6756
      %6786 = vmatpush.msra.mxu0 %v6755
      %6787 = vmatpush.msra.mxu0 %v6754
      %6788 = vmatpush.msra.mxu0 %v6753
      %6789 = vmatpush.msra.mxu0 %v6752
      %6790 = vmatpush.msra.mxu0 %v6751
      %6791 = vmatpush.msra.mxu0 %v6750
      %6792 = vmatmul.f32.gmra.mxu0 %v6771
      %v6793 = vpop.f32.mrf.mxu0
      %v6794 = vadd.f32 0.0, %v6793
      %6795 = vmatmul.f32.gmra.mxu0 %v6774
      %v6796 = vpop.f32.mrf.mxu0
      %v6797 = vadd.f32 0.0, %v6796
      %6798 = vdwg.mxu0
      %v6799 = vld [vmem:[%s20] sm:$0xff]
      %v6800 = vld [vmem:[%s20 + $0x8] sm:$0xff]
      %v6801 = vld [vmem:[%s20 + $0x10] sm:$0xff]
      %v6802 = vld [vmem:[%s20 + $0x18] sm:$0xff]
      %v6803 = vld [vmem:[%s21] sm:$0x1]
      %v6805 = vperm.slane %v6803, 0
      %v6808 = vsel %vm1101, %v6794, 0
      %v6811 = vsel %vm1101, %v6797, 0
      %6813 = vmatpush.msra.mxu0 0.0
      %6814 = vmatpush.msra.mxu0 0.0
      %6815 = vmatpush.msra.mxu0 0.0
      %6816 = vmatpush.msra.mxu0 0.0
      %6817 = vmatpush.msra.mxu0 0.0
      %6818 = vmatpush.msra.mxu0 0.0
      %6819 = vmatpush.msra.mxu0 0.0
      %6820 = vmatpush.msra.mxu0 0.0
      %6821 = vmatpush.msra.mxu0 0.0
      %6822 = vmatpush.msra.mxu0 0.0
      %6823 = vmatpush.msra.mxu0 0.0
      %6824 = vmatpush.msra.mxu0 0.0
      %6825 = vmatpush.msra.mxu0 %v6802
      %6826 = vmatpush.msra.mxu0 %v6801
      %6827 = vmatpush.msra.mxu0 %v6800
      %6828 = vmatpush.msra.mxu0 %v6799
      %6829 = vmatmul.f32.gmra.mxu0 %v6808
      %v6830 = vpop.f32.mrf.mxu0
      %v6831 = vadd.f32 %v6805, %v6830
      %6832 = vmatmul.f32.gmra.mxu0 %v6811
      %v6833 = vpop.f32.mrf.mxu0
      %v6834 = vadd.f32 %v6805, %v6833
      %6835 = vdwg.mxu0
      %v6836 = vtanh.pop %v6831
      %v6837 = vtanh.pop %v6834
      %v6838 = vld [vmem:[%s22] sm:$0xff]
      %v6839 = vld [vmem:[%s22 + $0x8] sm:$0xff]
      %v6840 = vld [vmem:[%s22 + $0x10] sm:$0xff]
      %v6841 = vld [vmem:[%s22 + $0x18] sm:$0xff]
      %v6842 = vld [vmem:[%s23] sm:$0x1]
      %v6844 = vperm.slane %v6842, 0
      %v6847 = vsel %vm1101, %v6836, 0
      %v6850 = vsel %vm1101, %v6837, 0
      %6852 = vmatpush.msra.mxu0 0.0
      %6853 = vmatpush.msra.mxu0 0.0
      %6854 = vmatpush.msra.mxu0 0.0
      %6855 = vmatpush.msra.mxu0 0.0
      %6856 = vmatpush.msra.mxu0 0.0
      %6857 = vmatpush.msra.mxu0 0.0
      %6858 = vmatpush.msra.mxu0 0.0
      %6859 = vmatpush.msra.mxu0 0.0
      %6860 = vmatpush.msra.mxu0 0.0
      %6861 = vmatpush.msra.mxu0 0.0
      %6862 = vmatpush.msra.mxu0 0.0
      %6863 = vmatpush.msra.mxu0 0.0
      %6864 = vmatpush.msra.mxu0 %v6841
      %6865 = vmatpush.msra.mxu0 %v6840
      %6866 = vmatpush.msra.mxu0 %v6839
      %6867 = vmatpush.msra.mxu0 %v6838
      %6868 = vmatmul.f32.gmra.mxu0 %v6847
      %v6869 = vpop.f32.mrf.mxu0
      %v6870 = vadd.f32 %v6844, %v6869
      %6871 = vmatmul.f32.gmra.mxu0 %v6850
      %v6872 = vpop.f32.mrf.mxu0
      %v6873 = vadd.f32 %v6844, %v6872
      %6874 = vdwg.mxu0
      %vm6875 = vcmp.gt.f32.partialorder %v6870, 0.0
      %vm6876 = vcmp.gt.f32.partialorder %v6873, 0.0
      %v6877 = vmul.f32 %v6870, 1.442695
      %v6878 = vpow.pop %v6877
      %v6879 = vmul.f32 %v6873, 1.442695
      %v6880 = vpow.pop %v6879
      %v6881 = vsub.f32 %v6878, 1.0
      %v6882 = vsub.f32 %v6880, 1.0
      %v6883 = vmul.f32 %v6881, 1.6732632
      %v6884 = vmul.f32 %v6882, 1.6732632
      %v6885 = vsel %vm6875, %v6870, %v6883
      %v6886 = vsel %vm6876, %v6873, %v6884
      %v6887 = vmul.f32 %v6885, 1.050701
      %v6888 = vmul.f32 %v6886, 1.050701
      %v6889 = vld [vmem:[%s24] sm:$0xff]
      %v6890 = vld [vmem:[%s24 + $0x8] sm:$0xff]
      %v6891 = vld [vmem:[#allocation2] sm:$0x1]
      %v6893 = vperm.slane %v6891, 0
      %v6896 = vsel %vm1483, %v6887, 0
      %v6899 = vsel %vm1483, %v6888, 0
      %6901 = vmatpush.msra.mxu0 0.0
      %6902 = vmatpush.msra.mxu0 0.0
      %6903 = vmatpush.msra.mxu0 0.0
      %6904 = vmatpush.msra.mxu0 0.0
      %6905 = vmatpush.msra.mxu0 0.0
      %6906 = vmatpush.msra.mxu0 0.0
      %6907 = vmatpush.msra.mxu0 0.0
      %6908 = vmatpush.msra.mxu0 0.0
      %6909 = vmatpush.msra.mxu0 0.0
      %6910 = vmatpush.msra.mxu0 0.0
      %6911 = vmatpush.msra.mxu0 0.0
      %6912 = vmatpush.msra.mxu0 0.0
      %6913 = vmatpush.msra.mxu0 0.0
      %6914 = vmatpush.msra.mxu0 0.0
      %6915 = vmatpush.msra.mxu0 %v6890
      %6916 = vmatpush.msra.mxu0 %v6889
      %6917 = vmatmul.f32.gmra.mxu0 %v6896
      %v6918 = vpop.f32.mrf.mxu0
      %v6919 = vadd.f32 %v6893, %v6918
      %6920 = vmatmul.f32.gmra.mxu0 %v6899
      %v6921 = vpop.f32.mrf.mxu0
      %v6922 = vadd.f32 %v6893, %v6921
      %6923 = vdwg.mxu0
      %v6924 = vsub.f32 0.0, %v6919
      %v6925 = vsub.f32 0.0, %v6922
      %v6926 = vmul.f32 %v6924, 1.442695
      %v6927 = vpow.pop %v6926
      %v6928 = vmul.f32 %v6925, 1.442695
      %v6929 = vpow.pop %v6928
      %v6930 = vadd.f32 %v6927, 1.0
      %v6931 = vadd.f32 %v6929, 1.0
      %v6932 = vrcp.pop %v6930
      %v6933 = vmul.f32 %v6930, %v6932
      %v6934 = vsub.f32 1.0, %v6933
      %v6935 = vmul.f32 %v6932, %v6934
      %v6936 = vadd.f32 %v6932, %v6935
      %vm6937 = vweird.f32 %v6930
      %vm6938 = vweird.f32 %v6932
      %vm6939 = vmor %vm6937, %vm6938
      %v6940 = vsel %vm6939, %v6932, %v6936
      %v6941 = vand.u32 2147483647, %v6930
      %vm6942 = vcmp.eq.f32.partialorder %v6941, 8.507059e+37
      %v6943 = vand.u32 %v6930, 2147483648
      %v6944 = vor.u32 1.1754944e-38, %v6943
      %v6945 = vsel %vm6942, %v6944, %v6940
      %v6946 = vmul.f32 1.0, %v6945
      %v6947 = vrcp.pop %v6931
      %v6948 = vmul.f32 %v6931, %v6947
      %v6949 = vsub.f32 1.0, %v6948
      %v6950 = vmul.f32 %v6947, %v6949
      %v6951 = vadd.f32 %v6947, %v6950
      %vm6952 = vweird.f32 %v6931
      %vm6953 = vweird.f32 %v6947
      %vm6954 = vmor %vm6952, %vm6953
      %v6955 = vsel %vm6954, %v6947, %v6951
      %v6956 = vand.u32 2147483647, %v6931
      %vm6957 = vcmp.eq.f32.partialorder %v6956, 8.507059e+37
      %v6958 = vand.u32 %v6931, 2147483648
      %v6959 = vor.u32 1.1754944e-38, %v6958
      %v6960 = vsel %vm6957, %v6959, %v6955
      %v6961 = vmul.f32 1.0, %v6960
      %vm6962 = vcmask 7168
      %6963 = vst.msk [vmem:[%s833] sm:$0xff] %vm6962, %v6946
      %vm6964 = vcmask 1024
      %6965 = vst.msk [vmem:[%s833 + $0x8] sm:$0x3] %vm6964, %v6961
      %p6966 = scmp.lt.s32.totalorder %s39, 1
      %s6967 = scalar_select %p6966, %s39, 1
      %s6968 = smul.addr %s6967, 2
      %s6969 = smul.addr %s6968, 8
      %s6970 = scalar_lea.vmem %s26, %s6969
      // Predicated region
      $region125: #{bert_base_cls_forward.1} parent=123 // pred_check
        %p6971 = pneg %p618
      $region126: #{bert_base_cls_forward.1} parent=123 // pred_check_branch
        %6973 = sbr.rel (%p6971) target = $region128
      $region127: #{bert_base_cls_forward.1} parent=123 // pred_region
        _
      $region128: #{bert_base_cls_forward.1} parent=123 // pred_fallthru
        _
    $region124: #{bert_base_cls_forward.1} parent=5 // pred_fallthru
      _
    %p6974 = scmp.le.s32.totalorder 2, %s34
    // Predicated region
    $region129: #{bert_base_cls_forward.1} parent=5 // pred_check
      %p6975 = pneg %p6974
    $region130: #{bert_base_cls_forward.1} parent=5 // pred_check_branch
      %6977 = sbr.rel (%p6975) target = $region132
    $region131: #{bert_base_cls_forward.1} parent=5 // pred_region
      %s6978 = ssub.s32 %s34, 2
      // Predicated region
      $region133: #{bert_base_cls_forward.1} parent=131 // pred_check
        %p6979 = pneg %p624
      $region134: #{bert_base_cls_forward.1} parent=131 // pred_check_branch
        %6981 = sbr.rel (%p6979) target = $region136
      $region135: #{bert_base_cls_forward.1} parent=131 // pred_region
        %p6982 = scmp.lt.s32.totalorder %s40, 1
        %s6983 = scalar_select %p6982, %s40, 1
        %s6984 = smul.addr %s6983, 2
        %s6985 = smul.addr %s6984, 8
        %s6986 = scalar_lea.vmem %s26, %s6985
      $region136: #{bert_base_cls_forward.1} parent=131 // pred_fallthru
        _
    $region132: #{bert_base_cls_forward.1} parent=5 // pred_fallthru
      _
  $region6: #{bert_base_cls_forward.1} parent=0 // loop_footer
    %s38 = sadd.s32 1, %s34
  $region7: #{bert_base_cls_forward.1} parent=0 // loop_footer_branch
    %33 = sbr.rel target = $region3
  $region8: #{bert_base_cls_forward.1} parent=0 // loop_exit
    _

</llo_original>
